<compile_context>
chip_gen: v7x
topology: tpu7x:2x2x1
jax: 0.10.0
libtpu: 0.0.40
codegen_flags: <defaults>
</compile_context>

<pallas_src>
import functools

import jax
import jax.numpy as jnp
from jax import lax
from jax.experimental import pallas as pl
from jax.experimental.pallas import tpu as pltpu

EPS = 1e-5
F32 = jnp.float32
H = 128          # LSTM hidden size
G = 4 * H        # gates per direction


# ---------------------------------------------------------------------------
# In-kernel helpers
# ---------------------------------------------------------------------------
def _bn_train(y, gamma, beta):
    """BatchNorm1d forward with batch statistics (biased variance, one pass)."""
    mean = jnp.mean(y, axis=0, keepdims=True)
    var = jnp.mean(y * y, axis=0, keepdims=True) - mean * mean
    var = jnp.maximum(var, 0.0)  # one-pass E[y^2]-mean^2 can go slightly negative
    return (y - mean) * lax.rsqrt(var + EPS) * gamma + beta


def _dense_bn_relu(y, w_ref, b_ref, g_ref, be_ref):
    z = jnp.dot(y, w_ref[...], preferred_element_type=F32) + b_ref[...]
    return jnp.maximum(_bn_train(z, g_ref[...], be_ref[...]), 0.0)


# ---------------------------------------------------------------------------
# Fused forward kernel
# ---------------------------------------------------------------------------
def _aeblstmft_kernel(
    x_ref,
    # MultiTaskAutoEncoder
    a1w, a1b, a1g, a1be,
    a2w, a2b, a2g, a2be,
    a3w, a3b, a3g, a3be,
    prw, prb,
    # BLSTMClassifier
    auxw, auxb,
    wih_hbm, bih_hbm, whhf_hbm, whhb_hbm,   # stay in HBM; manual DMA below
    lng, lnbe,
    d1w, d1b, d1g, d1be,
    d2w, d2b, d2g, d2be,
    d3w, d3b, d3g, d3be,
    # outputs
    recons_ref, z_ref, probs_ref,
    # scratch
    wih_v, bih_v, whhf_v, whhb_v, gate_scr, lstm_scr, dma_sems,
):
    # ---- Kick off the ~1 MiB of LSTM weight DMAs immediately; they overlap
    # ---- the whole AE dense/BN/ReLU stack and the aux projection below.
    cp_wih = pltpu.make_async_copy(wih_hbm, wih_v, dma_sems.at[0])
    cp_bih = pltpu.make_async_copy(bih_hbm, bih_v, dma_sems.at[1])
    cp_whhf = pltpu.make_async_copy(whhf_hbm, whhf_v, dma_sems.at[2])
    cp_whhb = pltpu.make_async_copy(whhb_hbm, whhb_v, dma_sems.at[3])
    cp_wih.start()
    cp_bih.start()
    cp_whhf.start()
    cp_whhb.start()

    x = x_ref[...]

    # ---------------- MultiTaskAutoEncoder (frozen, forward only) -----------
    h1 = _dense_bn_relu(x, a1w, a1b, a1g, a1be)          # (N, 70)
    z = _dense_bn_relu(h1, a2w, a2b, a2g, a2be)          # (N, 54)
    h3 = _dense_bn_relu(z, a3w, a3b, a3g, a3be)          # (N, 70)
    recons_ref[...] = (
        jnp.dot(h3, prw[...], preferred_element_type=F32) + prb[...])  # (N, 88)
    z_ref[...] = z
    # The AE aux/softmax head is discarded by AEBLSTMFT -> not computed.

    # ---------------- BLSTMClassifier on the latent z ------------------------
    a = jnp.dot(z, auxw[...], preferred_element_type=F32) + auxb[...]   # (N,128)

    # Both directions' input projections in one matmul; columns = [fwd | bwd].
    cp_wih.wait()
    cp_bih.wait()
    pre = jnp.dot(a, wih_v[...], preferred_element_type=F32) + bih_v[...]  # (N,2G)

    # Recurrent weights become visible only now; the DMA ran under the AE
    # stack + the (N,128)x(128,1024) matmul above.
    cp_whhf.wait()
    cp_whhb.wait()

    L = x.shape[0]
    hc = jnp.zeros((2, H), F32)   # stacked hidden state: row 0 = fwd, row 1 = bwd
    cc = jnp.zeros((2, H), F32)   # stacked cell state

    # sigmoid(x) = 0.5*(1 + tanh(x/2)) -> pre-scale i/f/o gate columns by 0.5
    # so a SINGLE wide tanh covers all four gates of both directions.
    col = lax.broadcasted_iota(jnp.int32, (1, G), 1)
    gate_scale = jnp.where((col >= 2 * H) & (col < 3 * H), 1.0, 0.5).astype(F32)

    # Fully-unrolled, merged forward/backward recurrence (L static & small).
    for t in range(L):
        tb = L - 1 - t
        gates_f = pre[t:t + 1, 0:G]            # static slices of vreg-resident pre
        gates_b = pre[tb:tb + 1, G:2 * G]
        if t > 0:  # h0 = c0 = 0 -> no recurrent contribution on the first step
            # Weights are read from VMEM scratch each step (on-chip, cheap);
            # NOT hoisted into values to avoid >64-vreg live ranges / spills.
            gates_f = gates_f + jnp.dot(hc[0:1, :], whhf_v[...],
                                        preferred_element_type=F32)
            gates_b = gates_b + jnp.dot(hc[1:2, :], whhb_v[...],
                                        preferred_element_type=F32)
        # Stack the two directions into one (2, 4H) block via a tiny VMEM
        # staging buffer (avoids an unaligned sublane concat; a handful of
        # vst/vld off the MXU critical path).
        gate_scr[0:1, :] = gates_f
        gate_scr[1:2, :] = gates_b
        gates = gate_scr[...] * gate_scale                     # (2, 4H)
        tg = jnp.tanh(gates)                                   # ONE wide EUP pass
        ig = 0.5 * (tg[:, 0:H] + 1.0)          # sigmoid(i)
        fg = 0.5 * (tg[:, H:2 * H] + 1.0)      # sigmoid(f)
        gg = tg[:, 2 * H:3 * H]                # tanh(g)
        og = 0.5 * (tg[:, 3 * H:4 * H] + 1.0)  # sigmoid(o)
        cc = fg * cc + ig * gg
        hc = og * jnp.tanh(cc)                                 # second EUP pass
        # Collect hidden states in VMEM scratch (static offsets, off the
        # recurrence critical path); consumed as one dense block below.
        lstm_scr[t:t + 1, 0:H] = hc[0:1, :]
        lstm_scr[tb:tb + 1, H:2 * H] = hc[1:2, :]

    lstm_out = lstm_scr[...]                                   # (N, 2H)
    lb = _bn_train(lstm_out, lng[...], lnbe[...])

    d1 = _dense_bn_relu(lb, d1w, d1b, d1g, d1be)               # (N, 128)
    d2 = _dense_bn_relu(d1, d2w, d2b, d2g, d2be)               # (N, 64)
    d3 = _dense_bn_relu(d2, d3w, d3b, d3g, d3be)               # (N, 2)

    m = jnp.max(d3, axis=-1, keepdims=True)
    e = jnp.exp(d3 - m)
    # (PyTorch returns softmax probabilities and calls them "logits".)
    probs_ref[...] = e / jnp.sum(e, axis=-1, keepdims=True)


# ---------------------------------------------------------------------------
# Wrapper: single pallas_call, params/activations in VMEM (no grid — tiny),
# LSTM weights left in HBM (pl.ANY) and DMA'd inside the kernel.
# ---------------------------------------------------------------------------
_HBM_ARG_IDX = (17, 18, 19, 20)   # wih, bih, whhf, whhb positions in `args`


def aeblstmft_forward(params, x):
    p = params
    N = x.shape[0]
    # Fuse the two LSTM directions' input projections once, outside the kernel.
    wih = jnp.concatenate([p['lstm_wihf'], p['lstm_wihb']], axis=1)  # (128,1024)
    bih = jnp.concatenate([p['lstm_bf'], p['lstm_bb']], axis=1)      # (1, 1024)

    args = (
        x,
        p['ae_d1_w'], p['ae_d1_b'], p['ae_d1_g'], p['ae_d1_be'],
        p['ae_d2_w'], p['ae_d2_b'], p['ae_d2_g'], p['ae_d2_be'],
        p['ae_d3_w'], p['ae_d3_b'], p['ae_d3_g'], p['ae_d3_be'],
        p['ae_pr_w'], p['ae_pr_b'],
        p['cl_aux_w'], p['cl_aux_b'],
        wih, bih, p['lstm_whhf'], p['lstm_whhb'],
        p['lstm_g'], p['lstm_be'],
        p['cl_d1_w'], p['cl_d1_b'], p['cl_d1_g'], p['cl_d1_be'],
        p['cl_d2_w'], p['cl_d2_b'], p['cl_d2_g'], p['cl_d2_be'],
        p['cl_d3_w'], p['cl_d3_b'], p['cl_d3_g'], p['cl_d3_be'],
    )
    vmem = pl.BlockSpec(memory_space=pltpu.MemorySpace.VMEM)
    hbm = pl.BlockSpec(memory_space=pl.ANY)
    in_specs = [hbm if i in _HBM_ARG_IDX else vmem for i in range(len(args))]

    return pl.pallas_call(
        _aeblstmft_kernel,
        out_shape=(
            jax.ShapeDtypeStruct((N, 88), F32),   # recons
            jax.ShapeDtypeStruct((N, 54), F32),   # h (latent z)
            jax.ShapeDtypeStruct((N, 2), F32),    # softmax probabilities
        ),
        in_specs=in_specs,
        out_specs=(vmem, vmem, vmem),
        scratch_shapes=[
            pltpu.VMEM((H, 2 * G), F32),      # wih_v   (128, 1024)
            pltpu.VMEM((1, 2 * G), F32),      # bih_v   (1, 1024)
            pltpu.VMEM((H, G), F32),          # whhf_v  (128, 512)
            pltpu.VMEM((H, G), F32),          # whhb_v  (128, 512)
            pltpu.VMEM((2, G), F32),          # gate staging (2, 512)
            pltpu.VMEM((N, 2 * H), F32),      # LSTM hidden collect (N, 256)
            pltpu.SemaphoreType.DMA((4,)),
        ],
    )(*args)


# ---------------------------------------------------------------------------
# Parameters (deterministic synthetic init; shapes from the PyTorch __init__)
# ---------------------------------------------------------------------------
def init_params(key):
    keys = iter(jax.random.split(key, 64))

    def lin(i, o, scale=0.1):
        w = jax.random.normal(next(keys), (i, o), F32) * scale
        b = jax.random.normal(next(keys), (1, o), F32) * scale
        return w, b

    def bn(o):
        return jnp.ones((1, o), F32), jnp.zeros((1, o), F32)

    def lstm_dir(inp, h, scale=0.05):
        wih = jax.random.normal(next(keys), (inp, 4 * h), F32) * scale
        whh = jax.random.normal(next(keys), (h, 4 * h), F32) * scale
        b_ih = jax.random.normal(next(keys), (1, 4 * h), F32) * scale
        b_hh = jax.random.normal(next(keys), (1, 4 * h), F32) * scale
        return wih, whh, b_ih + b_hh

    p = {}
    # MultiTaskAutoEncoder (frozen; only forward needed)
    p['ae_d1_w'], p['ae_d1_b'] = lin(88, 70); p['ae_d1_g'], p['ae_d1_be'] = bn(70)
    p['ae_d2_w'], p['ae_d2_b'] = lin(70, 54); p['ae_d2_g'], p['ae_d2_be'] = bn(54)
    p['ae_d3_w'], p['ae_d3_b'] = lin(54, 70); p['ae_d3_g'], p['ae_d3_be'] = bn(70)
    p['ae_pr_w'], p['ae_pr_b'] = lin(70, 88)
    # BLSTMClassifier
    p['cl_aux_w'], p['cl_aux_b'] = lin(54, 128)
    p['lstm_wihf'], p['lstm_whhf'], p['lstm_bf'] = lstm_dir(128, 128)
    p['lstm_wihb'], p['lstm_whhb'], p['lstm_bb'] = lstm_dir(128, 128)
    p['lstm_g'], p['lstm_be'] = bn(256)
    p['cl_d1_w'], p['cl_d1_b'] = lin(256, 128); p['cl_d1_g'], p['cl_d1_be'] = bn(128)
    p['cl_d2_w'], p['cl_d2_b'] = lin(128, 64);  p['cl_d2_g'], p['cl_d2_be'] = bn(64)
    p['cl_d3_w'], p['cl_d3_b'] = lin(64, 2);    p['cl_d3_g'], p['cl_d3_be'] = bn(2)
    return p


# ---------------------------------------------------------------------------
# Pure-JAX reference (for correctness check)
# ---------------------------------------------------------------------------
def _reference_forward(p, x):
    hp = lax.Precision.HIGHEST

    def bn(y, g, be):
        mean = jnp.mean(y, axis=0, keepdims=True)
        var = jnp.mean((y - mean) ** 2, axis=0, keepdims=True)
        return (y - mean) / jnp.sqrt(var + EPS) * g + be

    def dbr(y, w, b, g, be):
        return jnp.maximum(bn(jnp.dot(y, w, precision=hp) + b, g, be), 0.0)

    h1 = dbr(x, p['ae_d1_w'], p['ae_d1_b'], p['ae_d1_g'], p['ae_d1_be'])
    z = dbr(h1, p['ae_d2_w'], p['ae_d2_b'], p['ae_d2_g'], p['ae_d2_be'])
    h3 = dbr(z, p['ae_d3_w'], p['ae_d3_b'], p['ae_d3_g'], p['ae_d3_be'])
    recons = jnp.dot(h3, p['ae_pr_w'], precision=hp) + p['ae_pr_b']

    a = jnp.dot(z, p['cl_aux_w'], precision=hp) + p['cl_aux_b']
    L = a.shape[0]

    def cell(x_t, h, c, wih, whh, b):
        gates = jnp.dot(x_t, wih, precision=hp) + jnp.dot(h, whh, precision=hp) + b
        i = jax.nn.sigmoid(gates[:, 0:H]); f = jax.nn.sigmoid(gates[:, H:2 * H])
        g = jnp.tanh(gates[:, 2 * H:3 * H]); o = jax.nn.sigmoid(gates[:, 3 * H:4 * H])
        c = f * c + i * g
        return o * jnp.tanh(c), c

    hf = jnp.zeros((1, H), F32); cf = jnp.zeros((1, H), F32)
    hb = jnp.zeros((1, H), F32); cb = jnp.zeros((1, H), F32)
    out_f = [None] * L; out_b = [None] * L
    for t in range(L):
        hf, cf = cell(a[t:t + 1], hf, cf, p['lstm_wihf'], p['lstm_whhf'], p['lstm_bf'])
        out_f[t] = hf
        tb = L - 1 - t
        hb, cb = cell(a[tb:tb + 1], hb, cb, p['lstm_wihb'], p['lstm_whhb'], p['lstm_bb'])
        out_b[tb] = hb
    lstm_out = jnp.concatenate(
        [jnp.concatenate(out_f, axis=0), jnp.concatenate(out_b, axis=0)], axis=1)

    lb = bn(lstm_out, p['lstm_g'], p['lstm_be'])
    d1 = dbr(lb, p['cl_d1_w'], p['cl_d1_b'], p['cl_d1_g'], p['cl_d1_be'])
    d2 = dbr(d1, p['cl_d2_w'], p['cl_d2_b'], p['cl_d2_g'], p['cl_d2_be'])
    d3 = dbr(d2, p['cl_d3_w'], p['cl_d3_b'], p['cl_d3_g'], p['cl_d3_be'])
    return recons, z, jax.nn.softmax(d3, axis=1)


if __name__ == "__main__":
    key = jax.random.PRNGKey(0)
    pkey, xkey = jax.random.split(key)
    params = init_params(pkey)

    N = 8                      # BN batch dim == LSTM time dim
    x = jax.random.normal(xkey, (N, 88), F32)

    fwd = jax.jit(functools.partial(aeblstmft_forward, params))
    recons, h, probs = fwd(x)
    jax.block_until_ready((recons, h, probs))

    r_ref, h_ref, p_ref = _reference_forward(params, x)

    assert recons.shape == (N, 88)
    assert h.shape == (N, 54)
    assert probs.shape == (N, 2)
    assert bool(jnp.all(jnp.isfinite(recons)))
    assert bool(jnp.allclose(recons, r_ref, atol=5e-3, rtol=5e-3))
    assert bool(jnp.allclose(h, h_ref, atol=5e-3, rtol=5e-3))
    assert bool(jnp.allclose(probs, p_ref, atol=5e-3, rtol=5e-3))
    assert bool(jnp.allclose(jnp.sum(probs, axis=-1), 1.0, atol=1e-5))
    print("KERNEL_OK")
</pallas_src>

<mosaic_0001>
module attributes {stable_mosaic.version = 11 : i64} {
  func.func @_aeblstmft_kernel(%arg0: memref<8x88xf32, #tpu.memory_space<vmem>>, %arg1: memref<88x70xf32, #tpu.memory_space<vmem>>, %arg2: memref<1x70xf32, #tpu.memory_space<vmem>>, %arg3: memref<1x70xf32, #tpu.memory_space<vmem>>, %arg4: memref<1x70xf32, #tpu.memory_space<vmem>>, %arg5: memref<70x54xf32, #tpu.memory_space<vmem>>, %arg6: memref<1x54xf32, #tpu.memory_space<vmem>>, %arg7: memref<1x54xf32, #tpu.memory_space<vmem>>, %arg8: memref<1x54xf32, #tpu.memory_space<vmem>>, %arg9: memref<54x70xf32, #tpu.memory_space<vmem>>, %arg10: memref<1x70xf32, #tpu.memory_space<vmem>>, %arg11: memref<1x70xf32, #tpu.memory_space<vmem>>, %arg12: memref<1x70xf32, #tpu.memory_space<vmem>>, %arg13: memref<70x88xf32, #tpu.memory_space<vmem>>, %arg14: memref<1x88xf32, #tpu.memory_space<vmem>>, %arg15: memref<54x128xf32, #tpu.memory_space<vmem>>, %arg16: memref<1x128xf32, #tpu.memory_space<vmem>>, %arg17: memref<128x1024xf32, #tpu.memory_space<any>>, %arg18: memref<1x1024xf32, #tpu.memory_space<any>>, %arg19: memref<128x512xf32, #tpu.memory_space<any>>, %arg20: memref<128x512xf32, #tpu.memory_space<any>>, %arg21: memref<1x256xf32, #tpu.memory_space<vmem>>, %arg22: memref<1x256xf32, #tpu.memory_space<vmem>>, %arg23: memref<256x128xf32, #tpu.memory_space<vmem>>, %arg24: memref<1x128xf32, #tpu.memory_space<vmem>>, %arg25: memref<1x128xf32, #tpu.memory_space<vmem>>, %arg26: memref<1x128xf32, #tpu.memory_space<vmem>>, %arg27: memref<128x64xf32, #tpu.memory_space<vmem>>, %arg28: memref<1x64xf32, #tpu.memory_space<vmem>>, %arg29: memref<1x64xf32, #tpu.memory_space<vmem>>, %arg30: memref<1x64xf32, #tpu.memory_space<vmem>>, %arg31: memref<64x2xf32, #tpu.memory_space<vmem>>, %arg32: memref<1x2xf32, #tpu.memory_space<vmem>>, %arg33: memref<1x2xf32, #tpu.memory_space<vmem>>, %arg34: memref<1x2xf32, #tpu.memory_space<vmem>>, %arg35: memref<8x88xf32, #tpu.memory_space<vmem>>, %arg36: memref<8x54xf32, #tpu.memory_space<vmem>>, %arg37: memref<8x2xf32, #tpu.memory_space<vmem>>, %arg38: memref<128x1024xf32, #tpu.memory_space<vmem>>, %arg39: memref<1x1024xf32, #tpu.memory_space<vmem>>, %arg40: memref<128x512xf32, #tpu.memory_space<vmem>>, %arg41: memref<128x512xf32, #tpu.memory_space<vmem>>, %arg42: memref<2x512xf32, #tpu.memory_space<vmem>>, %arg43: memref<8x256xf32, #tpu.memory_space<vmem>>, %arg44: memref<4x!tpu.dma_semaphore, #tpu.memory_space<semaphore_mem>>) attributes {dimension_semantics = [], scalar_prefetch = 0 : i64, scratch_operands = 7 : i64, tpu.core_type = #tpu.core_type<tc>} {
    %c0_i32 = arith.constant 0 : i32
    %0 = tpu.memref_slice %arg44[%c0_i32] : memref<4x!tpu.dma_semaphore, #tpu.memory_space<semaphore_mem>> -> memref<1x!tpu.dma_semaphore, #tpu.memory_space<semaphore_mem>>
    %1 = tpu.memref_squeeze %0 : memref<1x!tpu.dma_semaphore, #tpu.memory_space<semaphore_mem>> -> memref<!tpu.dma_semaphore, #tpu.memory_space<semaphore_mem>>
    tpu.enqueue_dma source(%arg17 : memref<128x1024xf32, #tpu.memory_space<any>>) target(%arg38 : memref<128x1024xf32, #tpu.memory_space<vmem>>) target_semaphore(%1 : memref<!tpu.dma_semaphore, #tpu.memory_space<semaphore_mem>>)
    %c1_i32 = arith.constant 1 : i32
    %2 = tpu.memref_slice %arg44[%c1_i32] : memref<4x!tpu.dma_semaphore, #tpu.memory_space<semaphore_mem>> -> memref<1x!tpu.dma_semaphore, #tpu.memory_space<semaphore_mem>>
    %3 = tpu.memref_squeeze %2 : memref<1x!tpu.dma_semaphore, #tpu.memory_space<semaphore_mem>> -> memref<!tpu.dma_semaphore, #tpu.memory_space<semaphore_mem>>
    tpu.enqueue_dma source(%arg18 : memref<1x1024xf32, #tpu.memory_space<any>>) target(%arg39 : memref<1x1024xf32, #tpu.memory_space<vmem>>) target_semaphore(%3 : memref<!tpu.dma_semaphore, #tpu.memory_space<semaphore_mem>>)
    %c2_i32 = arith.constant 2 : i32
    %4 = tpu.memref_slice %arg44[%c2_i32] : memref<4x!tpu.dma_semaphore, #tpu.memory_space<semaphore_mem>> -> memref<1x!tpu.dma_semaphore, #tpu.memory_space<semaphore_mem>>
    %5 = tpu.memref_squeeze %4 : memref<1x!tpu.dma_semaphore, #tpu.memory_space<semaphore_mem>> -> memref<!tpu.dma_semaphore, #tpu.memory_space<semaphore_mem>>
    tpu.enqueue_dma source(%arg19 : memref<128x512xf32, #tpu.memory_space<any>>) target(%arg40 : memref<128x512xf32, #tpu.memory_space<vmem>>) target_semaphore(%5 : memref<!tpu.dma_semaphore, #tpu.memory_space<semaphore_mem>>)
    %c3_i32 = arith.constant 3 : i32
    %6 = tpu.memref_slice %arg44[%c3_i32] : memref<4x!tpu.dma_semaphore, #tpu.memory_space<semaphore_mem>> -> memref<1x!tpu.dma_semaphore, #tpu.memory_space<semaphore_mem>>
    %7 = tpu.memref_squeeze %6 : memref<1x!tpu.dma_semaphore, #tpu.memory_space<semaphore_mem>> -> memref<!tpu.dma_semaphore, #tpu.memory_space<semaphore_mem>>
    tpu.enqueue_dma source(%arg20 : memref<128x512xf32, #tpu.memory_space<any>>) target(%arg41 : memref<128x512xf32, #tpu.memory_space<vmem>>) target_semaphore(%7 : memref<!tpu.dma_semaphore, #tpu.memory_space<semaphore_mem>>)
    %c0 = arith.constant 0 : index
    %c0_0 = arith.constant 0 : index
    %8 = vector.load %arg0[%c0, %c0_0] : memref<8x88xf32, #tpu.memory_space<vmem>>, vector<8x88xf32>
    %c0_1 = arith.constant 0 : index
    %c0_2 = arith.constant 0 : index
    %9 = vector.load %arg1[%c0_1, %c0_2] : memref<88x70xf32, #tpu.memory_space<vmem>>, vector<88x70xf32>
    %cst = arith.constant dense<0.000000e+00> : vector<8x70xf32>
    %10 = tpu.matmul %8, %9, %cst {dimension_numbers = #tpu.dot_dimension_numbers<[1], [0], [0], [1], [0, 0, 1, 1], [], []>} : vector<8x88xf32>, vector<88x70xf32>, vector<8x70xf32> -> vector<8x70xf32>
    %c0_3 = arith.constant 0 : index
    %c0_4 = arith.constant 0 : index
    %11 = vector.load %arg2[%c0_3, %c0_4] : memref<1x70xf32, #tpu.memory_space<vmem>>, vector<1x70xf32>
    %12 = vector.broadcast %11 : vector<1x70xf32> to vector<8x70xf32>
    %13 = arith.addf %10, %12 : vector<8x70xf32>
    %c0_5 = arith.constant 0 : index
    %c0_6 = arith.constant 0 : index
    %14 = vector.load %arg3[%c0_5, %c0_6] : memref<1x70xf32, #tpu.memory_space<vmem>>, vector<1x70xf32>
    %c0_7 = arith.constant 0 : index
    %c0_8 = arith.constant 0 : index
    %15 = vector.load %arg4[%c0_7, %c0_8] : memref<1x70xf32, #tpu.memory_space<vmem>>, vector<1x70xf32>
    %cst_9 = arith.constant dense<0.000000e+00> : vector<70xf32>
    %16 = vector.multi_reduction <add>, %13, %cst_9 [0] : vector<8x70xf32> to vector<70xf32>
    %17 = vector.shape_cast %16 : vector<70xf32> to vector<1x70xf32>
    %cst_10 = arith.constant 8.000000e+00 : f32
    %18 = vector.broadcast %cst_10 : f32 to vector<1x70xf32>
    %19 = arith.divf %17, %18 : vector<1x70xf32>
    %20 = arith.mulf %13, %13 : vector<8x70xf32>
    %cst_11 = arith.constant dense<0.000000e+00> : vector<70xf32>
    %21 = vector.multi_reduction <add>, %20, %cst_11 [0] : vector<8x70xf32> to vector<70xf32>
    %22 = vector.shape_cast %21 : vector<70xf32> to vector<1x70xf32>
    %cst_12 = arith.constant 8.000000e+00 : f32
    %23 = vector.broadcast %cst_12 : f32 to vector<1x70xf32>
    %24 = arith.divf %22, %23 : vector<1x70xf32>
    %25 = arith.mulf %19, %19 : vector<1x70xf32>
    %26 = arith.subf %24, %25 : vector<1x70xf32>
    %cst_13 = arith.constant 0.000000e+00 : f32
    %27 = vector.broadcast %cst_13 : f32 to vector<1x70xf32>
    %28 = arith.maximumf %26, %27 : vector<1x70xf32>
    %29 = vector.broadcast %19 : vector<1x70xf32> to vector<8x70xf32>
    %30 = arith.subf %13, %29 : vector<8x70xf32>
    %cst_14 = arith.constant 9.99999974E-6 : f32
    %31 = vector.broadcast %cst_14 : f32 to vector<1x70xf32>
    %32 = arith.addf %28, %31 : vector<1x70xf32>
    %33 = math.rsqrt %32 : vector<1x70xf32>
    %34 = vector.broadcast %33 : vector<1x70xf32> to vector<8x70xf32>
    %35 = arith.mulf %30, %34 : vector<8x70xf32>
    %36 = vector.broadcast %14 : vector<1x70xf32> to vector<8x70xf32>
    %37 = arith.mulf %35, %36 : vector<8x70xf32>
    %38 = vector.broadcast %15 : vector<1x70xf32> to vector<8x70xf32>
    %39 = arith.addf %37, %38 : vector<8x70xf32>
    %cst_15 = arith.constant 0.000000e+00 : f32
    %40 = vector.broadcast %cst_15 : f32 to vector<8x70xf32>
    %41 = arith.maximumf %39, %40 : vector<8x70xf32>
    %c0_16 = arith.constant 0 : index
    %c0_17 = arith.constant 0 : index
    %42 = vector.load %arg5[%c0_16, %c0_17] : memref<70x54xf32, #tpu.memory_space<vmem>>, vector<70x54xf32>
    %cst_18 = arith.constant dense<0.000000e+00> : vector<8x54xf32>
    %43 = tpu.matmul %41, %42, %cst_18 {dimension_numbers = #tpu.dot_dimension_numbers<[1], [0], [0], [1], [0, 0, 1, 1], [], []>} : vector<8x70xf32>, vector<70x54xf32>, vector<8x54xf32> -> vector<8x54xf32>
    %c0_19 = arith.constant 0 : index
    %c0_20 = arith.constant 0 : index
    %44 = vector.load %arg6[%c0_19, %c0_20] : memref<1x54xf32, #tpu.memory_space<vmem>>, vector<1x54xf32>
    %45 = vector.broadcast %44 : vector<1x54xf32> to vector<8x54xf32>
    %46 = arith.addf %43, %45 : vector<8x54xf32>
    %c0_21 = arith.constant 0 : index
    %c0_22 = arith.constant 0 : index
    %47 = vector.load %arg7[%c0_21, %c0_22] : memref<1x54xf32, #tpu.memory_space<vmem>>, vector<1x54xf32>
    %c0_23 = arith.constant 0 : index
    %c0_24 = arith.constant 0 : index
    %48 = vector.load %arg8[%c0_23, %c0_24] : memref<1x54xf32, #tpu.memory_space<vmem>>, vector<1x54xf32>
    %cst_25 = arith.constant dense<0.000000e+00> : vector<54xf32>
    %49 = vector.multi_reduction <add>, %46, %cst_25 [0] : vector<8x54xf32> to vector<54xf32>
    %50 = vector.shape_cast %49 : vector<54xf32> to vector<1x54xf32>
    %cst_26 = arith.constant 8.000000e+00 : f32
    %51 = vector.broadcast %cst_26 : f32 to vector<1x54xf32>
    %52 = arith.divf %50, %51 : vector<1x54xf32>
    %53 = arith.mulf %46, %46 : vector<8x54xf32>
    %cst_27 = arith.constant dense<0.000000e+00> : vector<54xf32>
    %54 = vector.multi_reduction <add>, %53, %cst_27 [0] : vector<8x54xf32> to vector<54xf32>
    %55 = vector.shape_cast %54 : vector<54xf32> to vector<1x54xf32>
    %cst_28 = arith.constant 8.000000e+00 : f32
    %56 = vector.broadcast %cst_28 : f32 to vector<1x54xf32>
    %57 = arith.divf %55, %56 : vector<1x54xf32>
    %58 = arith.mulf %52, %52 : vector<1x54xf32>
    %59 = arith.subf %57, %58 : vector<1x54xf32>
    %cst_29 = arith.constant 0.000000e+00 : f32
    %60 = vector.broadcast %cst_29 : f32 to vector<1x54xf32>
    %61 = arith.maximumf %59, %60 : vector<1x54xf32>
    %62 = vector.broadcast %52 : vector<1x54xf32> to vector<8x54xf32>
    %63 = arith.subf %46, %62 : vector<8x54xf32>
    %cst_30 = arith.constant 9.99999974E-6 : f32
    %64 = vector.broadcast %cst_30 : f32 to vector<1x54xf32>
    %65 = arith.addf %61, %64 : vector<1x54xf32>
    %66 = math.rsqrt %65 : vector<1x54xf32>
    %67 = vector.broadcast %66 : vector<1x54xf32> to vector<8x54xf32>
    %68 = arith.mulf %63, %67 : vector<8x54xf32>
    %69 = vector.broadcast %47 : vector<1x54xf32> to vector<8x54xf32>
    %70 = arith.mulf %68, %69 : vector<8x54xf32>
    %71 = vector.broadcast %48 : vector<1x54xf32> to vector<8x54xf32>
    %72 = arith.addf %70, %71 : vector<8x54xf32>
    %cst_31 = arith.constant 0.000000e+00 : f32
    %73 = vector.broadcast %cst_31 : f32 to vector<8x54xf32>
    %74 = arith.maximumf %72, %73 : vector<8x54xf32>
    %c0_32 = arith.constant 0 : index
    %c0_33 = arith.constant 0 : index
    %75 = vector.load %arg9[%c0_32, %c0_33] : memref<54x70xf32, #tpu.memory_space<vmem>>, vector<54x70xf32>
    %cst_34 = arith.constant dense<0.000000e+00> : vector<8x70xf32>
    %76 = tpu.matmul %74, %75, %cst_34 {dimension_numbers = #tpu.dot_dimension_numbers<[1], [0], [0], [1], [0, 0, 1, 1], [], []>} : vector<8x54xf32>, vector<54x70xf32>, vector<8x70xf32> -> vector<8x70xf32>
    %c0_35 = arith.constant 0 : index
    %c0_36 = arith.constant 0 : index
    %77 = vector.load %arg10[%c0_35, %c0_36] : memref<1x70xf32, #tpu.memory_space<vmem>>, vector<1x70xf32>
    %78 = vector.broadcast %77 : vector<1x70xf32> to vector<8x70xf32>
    %79 = arith.addf %76, %78 : vector<8x70xf32>
    %c0_37 = arith.constant 0 : index
    %c0_38 = arith.constant 0 : index
    %80 = vector.load %arg11[%c0_37, %c0_38] : memref<1x70xf32, #tpu.memory_space<vmem>>, vector<1x70xf32>
    %c0_39 = arith.constant 0 : index
    %c0_40 = arith.constant 0 : index
    %81 = vector.load %arg12[%c0_39, %c0_40] : memref<1x70xf32, #tpu.memory_space<vmem>>, vector<1x70xf32>
    %cst_41 = arith.constant dense<0.000000e+00> : vector<70xf32>
    %82 = vector.multi_reduction <add>, %79, %cst_41 [0] : vector<8x70xf32> to vector<70xf32>
    %83 = vector.shape_cast %82 : vector<70xf32> to vector<1x70xf32>
    %cst_42 = arith.constant 8.000000e+00 : f32
    %84 = vector.broadcast %cst_42 : f32 to vector<1x70xf32>
    %85 = arith.divf %83, %84 : vector<1x70xf32>
    %86 = arith.mulf %79, %79 : vector<8x70xf32>
    %cst_43 = arith.constant dense<0.000000e+00> : vector<70xf32>
    %87 = vector.multi_reduction <add>, %86, %cst_43 [0] : vector<8x70xf32> to vector<70xf32>
    %88 = vector.shape_cast %87 : vector<70xf32> to vector<1x70xf32>
    %cst_44 = arith.constant 8.000000e+00 : f32
    %89 = vector.broadcast %cst_44 : f32 to vector<1x70xf32>
    %90 = arith.divf %88, %89 : vector<1x70xf32>
    %91 = arith.mulf %85, %85 : vector<1x70xf32>
    %92 = arith.subf %90, %91 : vector<1x70xf32>
    %cst_45 = arith.constant 0.000000e+00 : f32
    %93 = vector.broadcast %cst_45 : f32 to vector<1x70xf32>
    %94 = arith.maximumf %92, %93 : vector<1x70xf32>
    %95 = vector.broadcast %85 : vector<1x70xf32> to vector<8x70xf32>
    %96 = arith.subf %79, %95 : vector<8x70xf32>
    %cst_46 = arith.constant 9.99999974E-6 : f32
    %97 = vector.broadcast %cst_46 : f32 to vector<1x70xf32>
    %98 = arith.addf %94, %97 : vector<1x70xf32>
    %99 = math.rsqrt %98 : vector<1x70xf32>
    %100 = vector.broadcast %99 : vector<1x70xf32> to vector<8x70xf32>
    %101 = arith.mulf %96, %100 : vector<8x70xf32>
    %102 = vector.broadcast %80 : vector<1x70xf32> to vector<8x70xf32>
    %103 = arith.mulf %101, %102 : vector<8x70xf32>
    %104 = vector.broadcast %81 : vector<1x70xf32> to vector<8x70xf32>
    %105 = arith.addf %103, %104 : vector<8x70xf32>
    %cst_47 = arith.constant 0.000000e+00 : f32
    %106 = vector.broadcast %cst_47 : f32 to vector<8x70xf32>
    %107 = arith.maximumf %105, %106 : vector<8x70xf32>
    %c0_48 = arith.constant 0 : index
    %c0_49 = arith.constant 0 : index
    %108 = vector.load %arg13[%c0_48, %c0_49] : memref<70x88xf32, #tpu.memory_space<vmem>>, vector<70x88xf32>
    %cst_50 = arith.constant dense<0.000000e+00> : vector<8x88xf32>
    %109 = tpu.matmul %107, %108, %cst_50 {dimension_numbers = #tpu.dot_dimension_numbers<[1], [0], [0], [1], [0, 0, 1, 1], [], []>} : vector<8x70xf32>, vector<70x88xf32>, vector<8x88xf32> -> vector<8x88xf32>
    %c0_51 = arith.constant 0 : index
    %c0_52 = arith.constant 0 : index
    %110 = vector.load %arg14[%c0_51, %c0_52] : memref<1x88xf32, #tpu.memory_space<vmem>>, vector<1x88xf32>
    %111 = vector.broadcast %110 : vector<1x88xf32> to vector<8x88xf32>
    %112 = arith.addf %109, %111 : vector<8x88xf32>
    %c0_53 = arith.constant 0 : index
    %c0_54 = arith.constant 0 : index
    %113 = vector.load %arg35[%c0_53, %c0_54] : memref<8x88xf32, #tpu.memory_space<vmem>>, vector<8x88xf32>
    tpu.vector_store %arg35[%c0_53, %c0_54], %112 {strides = array<i32>} : memref<8x88xf32, #tpu.memory_space<vmem>>, vector<8x88xf32>,
    %c0_55 = arith.constant 0 : index
    %c0_56 = arith.constant 0 : index
    %114 = vector.load %arg36[%c0_55, %c0_56] : memref<8x54xf32, #tpu.memory_space<vmem>>, vector<8x54xf32>
    tpu.vector_store %arg36[%c0_55, %c0_56], %74 {strides = array<i32>} : memref<8x54xf32, #tpu.memory_space<vmem>>, vector<8x54xf32>,
    %c0_57 = arith.constant 0 : index
    %c0_58 = arith.constant 0 : index
    %115 = vector.load %arg15[%c0_57, %c0_58] : memref<54x128xf32, #tpu.memory_space<vmem>>, vector<54x128xf32>
    %cst_59 = arith.constant dense<0.000000e+00> : vector<8x128xf32>
    %116 = tpu.matmul %74, %115, %cst_59 {dimension_numbers = #tpu.dot_dimension_numbers<[1], [0], [0], [1], [0, 0, 1, 1], [], []>} : vector<8x54xf32>, vector<54x128xf32>, vector<8x128xf32> -> vector<8x128xf32>
    %c0_60 = arith.constant 0 : index
    %c0_61 = arith.constant 0 : index
    %117 = vector.load %arg16[%c0_60, %c0_61] : memref<1x128xf32, #tpu.memory_space<vmem>>, vector<1x128xf32>
    %118 = vector.broadcast %117 : vector<1x128xf32> to vector<8x128xf32>
    %119 = arith.addf %116, %118 : vector<8x128xf32>
    %c0_i32_62 = arith.constant 0 : i32
    %120 = tpu.memref_slice %arg44[%c0_i32_62] : memref<4x!tpu.dma_semaphore, #tpu.memory_space<semaphore_mem>> -> memref<1x!tpu.dma_semaphore, #tpu.memory_space<semaphore_mem>>
    %121 = tpu.memref_squeeze %120 : memref<1x!tpu.dma_semaphore, #tpu.memory_space<semaphore_mem>> -> memref<!tpu.dma_semaphore, #tpu.memory_space<semaphore_mem>>
    tpu.wait_dma2 semaphore(%121 : memref<!tpu.dma_semaphore, #tpu.memory_space<semaphore_mem>>) src(%arg17 : memref<128x1024xf32, #tpu.memory_space<any>>) dst(%arg38 : memref<128x1024xf32, #tpu.memory_space<vmem>>)
    %c1_i32_63 = arith.constant 1 : i32
    %122 = tpu.memref_slice %arg44[%c1_i32_63] : memref<4x!tpu.dma_semaphore, #tpu.memory_space<semaphore_mem>> -> memref<1x!tpu.dma_semaphore, #tpu.memory_space<semaphore_mem>>
    %123 = tpu.memref_squeeze %122 : memref<1x!tpu.dma_semaphore, #tpu.memory_space<semaphore_mem>> -> memref<!tpu.dma_semaphore, #tpu.memory_space<semaphore_mem>>
    tpu.wait_dma2 semaphore(%123 : memref<!tpu.dma_semaphore, #tpu.memory_space<semaphore_mem>>) src(%arg18 : memref<1x1024xf32, #tpu.memory_space<any>>) dst(%arg39 : memref<1x1024xf32, #tpu.memory_space<vmem>>)
    %c0_64 = arith.constant 0 : index
    %c0_65 = arith.constant 0 : index
    %124 = vector.load %arg38[%c0_64, %c0_65] : memref<128x1024xf32, #tpu.memory_space<vmem>>, vector<128x1024xf32>
    %cst_66 = arith.constant dense<0.000000e+00> : vector<8x1024xf32>
    %125 = tpu.matmul %119, %124, %cst_66 {dimension_numbers = #tpu.dot_dimension_numbers<[1], [0], [0], [1], [0, 0, 1, 1], [], []>} : vector<8x128xf32>, vector<128x1024xf32>, vector<8x1024xf32> -> vector<8x1024xf32>
    %c0_67 = arith.constant 0 : index
    %c0_68 = arith.constant 0 : index
    %126 = vector.load %arg39[%c0_67, %c0_68] : memref<1x1024xf32, #tpu.memory_space<vmem>>, vector<1x1024xf32>
    %127 = vector.broadcast %126 : vector<1x1024xf32> to vector<8x1024xf32>
    %128 = arith.addf %125, %127 : vector<8x1024xf32>
    %c2_i32_69 = arith.constant 2 : i32
    %129 = tpu.memref_slice %arg44[%c2_i32_69] : memref<4x!tpu.dma_semaphore, #tpu.memory_space<semaphore_mem>> -> memref<1x!tpu.dma_semaphore, #tpu.memory_space<semaphore_mem>>
    %130 = tpu.memref_squeeze %129 : memref<1x!tpu.dma_semaphore, #tpu.memory_space<semaphore_mem>> -> memref<!tpu.dma_semaphore, #tpu.memory_space<semaphore_mem>>
    tpu.wait_dma2 semaphore(%130 : memref<!tpu.dma_semaphore, #tpu.memory_space<semaphore_mem>>) src(%arg19 : memref<128x512xf32, #tpu.memory_space<any>>) dst(%arg40 : memref<128x512xf32, #tpu.memory_space<vmem>>)
    %c3_i32_70 = arith.constant 3 : i32
    %131 = tpu.memref_slice %arg44[%c3_i32_70] : memref<4x!tpu.dma_semaphore, #tpu.memory_space<semaphore_mem>> -> memref<1x!tpu.dma_semaphore, #tpu.memory_space<semaphore_mem>>
    %132 = tpu.memref_squeeze %131 : memref<1x!tpu.dma_semaphore, #tpu.memory_space<semaphore_mem>> -> memref<!tpu.dma_semaphore, #tpu.memory_space<semaphore_mem>>
    tpu.wait_dma2 semaphore(%132 : memref<!tpu.dma_semaphore, #tpu.memory_space<semaphore_mem>>) src(%arg20 : memref<128x512xf32, #tpu.memory_space<any>>) dst(%arg41 : memref<128x512xf32, #tpu.memory_space<vmem>>)
    %cst_71 = arith.constant 0.000000e+00 : f32
    %133 = vector.broadcast %cst_71 : f32 to vector<2x128xf32>
    %134 = tpu.iota {dimensions = array<i32: 1>} : vector<1x512xi32>
    %c256_i32 = arith.constant 256 : i32
    %135 = vector.broadcast %c256_i32 : i32 to vector<1x512xi32>
    %136 = arith.cmpi sge, %134, %135 : vector<1x512xi32>
    %c384_i32 = arith.constant 384 : i32
    %137 = vector.broadcast %c384_i32 : i32 to vector<1x512xi32>
    %138 = arith.cmpi slt, %134, %137 : vector<1x512xi32>
    %139 = arith.andi %136, %138 : vector<1x512xi1>
    %cst_72 = arith.constant 1.000000e+00 : f32
    %cst_73 = arith.constant 5.000000e-01 : f32
    %140 = vector.broadcast %cst_72 : f32 to vector<1x512xf32>
    %141 = vector.broadcast %cst_73 : f32 to vector<1x512xf32>
    %142 = arith.select %139, %140, %141 : vector<1x512xi1>, vector<1x512xf32>
    %143 = vector.extract_strided_slice %128 {offsets = [0, 0], sizes = [1, 512], strides = [1, 1]} : vector<8x1024xf32> to vector<1x512xf32>
    %144 = vector.extract_strided_slice %128 {offsets = [7, 512], sizes = [1, 512], strides = [1, 1]} : vector<8x1024xf32> to vector<1x512xf32>
    %c0_74 = arith.constant 0 : index
    %c0_75 = arith.constant 0 : index
    %145 = vector.load %arg42[%c0_74, %c0_75] : memref<2x512xf32, #tpu.memory_space<vmem>>, vector<1x512xf32>
    tpu.vector_store %arg42[%c0_74, %c0_75], %143 {strides = array<i32>} : memref<2x512xf32, #tpu.memory_space<vmem>>, vector<1x512xf32>,
    %c1 = arith.constant 1 : index
    %c0_76 = arith.constant 0 : index
    %146 = vector.load %arg42[%c1, %c0_76] : memref<2x512xf32, #tpu.memory_space<vmem>>, vector<1x512xf32>
    tpu.vector_store %arg42[%c1, %c0_76], %144 {strides = array<i32>} : memref<2x512xf32, #tpu.memory_space<vmem>>, vector<1x512xf32>,
    %c0_77 = arith.constant 0 : index
    %c0_78 = arith.constant 0 : index
    %147 = vector.load %arg42[%c0_77, %c0_78] : memref<2x512xf32, #tpu.memory_space<vmem>>, vector<2x512xf32>
    %148 = vector.broadcast %142 : vector<1x512xf32> to vector<2x512xf32>
    %149 = arith.mulf %147, %148 : vector<2x512xf32>
    %150 = math.tanh %149 : vector<2x512xf32>
    %151 = vector.extract_strided_slice %150 {offsets = [0, 0], sizes = [2, 128], strides = [1, 1]} : vector<2x512xf32> to vector<2x128xf32>
    %cst_79 = arith.constant 1.000000e+00 : f32
    %152 = vector.broadcast %cst_79 : f32 to vector<2x128xf32>
    %153 = arith.addf %151, %152 : vector<2x128xf32>
    %cst_80 = arith.constant 5.000000e-01 : f32
    %154 = vector.broadcast %cst_80 : f32 to vector<2x128xf32>
    %155 = arith.mulf %154, %153 : vector<2x128xf32>
    %156 = vector.extract_strided_slice %150 {offsets = [0, 128], sizes = [2, 128], strides = [1, 1]} : vector<2x512xf32> to vector<2x128xf32>
    %cst_81 = arith.constant 1.000000e+00 : f32
    %157 = vector.broadcast %cst_81 : f32 to vector<2x128xf32>
    %158 = arith.addf %156, %157 : vector<2x128xf32>
    %cst_82 = arith.constant 5.000000e-01 : f32
    %159 = vector.broadcast %cst_82 : f32 to vector<2x128xf32>
    %160 = arith.mulf %159, %158 : vector<2x128xf32>
    %161 = vector.extract_strided_slice %150 {offsets = [0, 256], sizes = [2, 128], strides = [1, 1]} : vector<2x512xf32> to vector<2x128xf32>
    %162 = vector.extract_strided_slice %150 {offsets = [0, 384], sizes = [2, 128], strides = [1, 1]} : vector<2x512xf32> to vector<2x128xf32>
    %cst_83 = arith.constant 1.000000e+00 : f32
    %163 = vector.broadcast %cst_83 : f32 to vector<2x128xf32>
    %164 = arith.addf %162, %163 : vector<2x128xf32>
    %cst_84 = arith.constant 5.000000e-01 : f32
    %165 = vector.broadcast %cst_84 : f32 to vector<2x128xf32>
    %166 = arith.mulf %165, %164 : vector<2x128xf32>
    %167 = arith.mulf %160, %133 : vector<2x128xf32>
    %168 = arith.mulf %155, %161 : vector<2x128xf32>
    %169 = arith.addf %167, %168 : vector<2x128xf32>
    %170 = math.tanh %169 : vector<2x128xf32>
    %171 = arith.mulf %166, %170 : vector<2x128xf32>
    %172 = vector.extract_strided_slice %171 {offsets = [0, 0], sizes = [1, 128], strides = [1, 1]} : vector<2x128xf32> to vector<1x128xf32>
    %c0_85 = arith.constant 0 : index
    %c0_86 = arith.constant 0 : index
    %173 = vector.load %arg43[%c0_85, %c0_86] : memref<8x256xf32, #tpu.memory_space<vmem>>, vector<1x128xf32>
    tpu.vector_store %arg43[%c0_85, %c0_86], %172 {strides = array<i32>} : memref<8x256xf32, #tpu.memory_space<vmem>>, vector<1x128xf32>,
    %174 = vector.extract_strided_slice %171 {offsets = [1, 0], sizes = [1, 128], strides = [1, 1]} : vector<2x128xf32> to vector<1x128xf32>
    %c7 = arith.constant 7 : index
    %c128 = arith.constant 128 : index
    %175 = vector.load %arg43[%c7, %c128] : memref<8x256xf32, #tpu.memory_space<vmem>>, vector<1x128xf32>
    tpu.vector_store %arg43[%c7, %c128], %174 {strides = array<i32>} : memref<8x256xf32, #tpu.memory_space<vmem>>, vector<1x128xf32>,
    %176 = vector.extract_strided_slice %128 {offsets = [1, 0], sizes = [1, 512], strides = [1, 1]} : vector<8x1024xf32> to vector<1x512xf32>
    %177 = vector.extract_strided_slice %128 {offsets = [6, 512], sizes = [1, 512], strides = [1, 1]} : vector<8x1024xf32> to vector<1x512xf32>
    %178 = vector.extract_strided_slice %171 {offsets = [0, 0], sizes = [1, 128], strides = [1, 1]} : vector<2x128xf32> to vector<1x128xf32>
    %c0_87 = arith.constant 0 : index
    %c0_88 = arith.constant 0 : index
    %179 = vector.load %arg40[%c0_87, %c0_88] : memref<128x512xf32, #tpu.memory_space<vmem>>, vector<128x512xf32>
    %cst_89 = arith.constant dense<0.000000e+00> : vector<1x512xf32>
    %180 = tpu.matmul %178, %179, %cst_89 {dimension_numbers = #tpu.dot_dimension_numbers<[1], [0], [0], [1], [0, 0, 1, 1], [], []>} : vector<1x128xf32>, vector<128x512xf32>, vector<1x512xf32> -> vector<1x512xf32>
    %181 = arith.addf %176, %180 : vector<1x512xf32>
    %182 = vector.extract_strided_slice %171 {offsets = [1, 0], sizes = [1, 128], strides = [1, 1]} : vector<2x128xf32> to vector<1x128xf32>
    %c0_90 = arith.constant 0 : index
    %c0_91 = arith.constant 0 : index
    %183 = vector.load %arg41[%c0_90, %c0_91] : memref<128x512xf32, #tpu.memory_space<vmem>>, vector<128x512xf32>
    %cst_92 = arith.constant dense<0.000000e+00> : vector<1x512xf32>
    %184 = tpu.matmul %182, %183, %cst_92 {dimension_numbers = #tpu.dot_dimension_numbers<[1], [0], [0], [1], [0, 0, 1, 1], [], []>} : vector<1x128xf32>, vector<128x512xf32>, vector<1x512xf32> -> vector<1x512xf32>
    %185 = arith.addf %177, %184 : vector<1x512xf32>
    %c0_93 = arith.constant 0 : index
    %c0_94 = arith.constant 0 : index
    %186 = vector.load %arg42[%c0_93, %c0_94] : memref<2x512xf32, #tpu.memory_space<vmem>>, vector<1x512xf32>
    tpu.vector_store %arg42[%c0_93, %c0_94], %181 {strides = array<i32>} : memref<2x512xf32, #tpu.memory_space<vmem>>, vector<1x512xf32>,
    %c1_95 = arith.constant 1 : index
    %c0_96 = arith.constant 0 : index
    %187 = vector.load %arg42[%c1_95, %c0_96] : memref<2x512xf32, #tpu.memory_space<vmem>>, vector<1x512xf32>
    tpu.vector_store %arg42[%c1_95, %c0_96], %185 {strides = array<i32>} : memref<2x512xf32, #tpu.memory_space<vmem>>, vector<1x512xf32>,
    %c0_97 = arith.constant 0 : index
    %c0_98 = arith.constant 0 : index
    %188 = vector.load %arg42[%c0_97, %c0_98] : memref<2x512xf32, #tpu.memory_space<vmem>>, vector<2x512xf32>
    %189 = vector.broadcast %142 : vector<1x512xf32> to vector<2x512xf32>
    %190 = arith.mulf %188, %189 : vector<2x512xf32>
    %191 = math.tanh %190 : vector<2x512xf32>
    %192 = vector.extract_strided_slice %191 {offsets = [0, 0], sizes = [2, 128], strides = [1, 1]} : vector<2x512xf32> to vector<2x128xf32>
    %cst_99 = arith.constant 1.000000e+00 : f32
    %193 = vector.broadcast %cst_99 : f32 to vector<2x128xf32>
    %194 = arith.addf %192, %193 : vector<2x128xf32>
    %cst_100 = arith.constant 5.000000e-01 : f32
    %195 = vector.broadcast %cst_100 : f32 to vector<2x128xf32>
    %196 = arith.mulf %195, %194 : vector<2x128xf32>
    %197 = vector.extract_strided_slice %191 {offsets = [0, 128], sizes = [2, 128], strides = [1, 1]} : vector<2x512xf32> to vector<2x128xf32>
    %cst_101 = arith.constant 1.000000e+00 : f32
    %198 = vector.broadcast %cst_101 : f32 to vector<2x128xf32>
    %199 = arith.addf %197, %198 : vector<2x128xf32>
    %cst_102 = arith.constant 5.000000e-01 : f32
    %200 = vector.broadcast %cst_102 : f32 to vector<2x128xf32>
    %201 = arith.mulf %200, %199 : vector<2x128xf32>
    %202 = vector.extract_strided_slice %191 {offsets = [0, 256], sizes = [2, 128], strides = [1, 1]} : vector<2x512xf32> to vector<2x128xf32>
    %203 = vector.extract_strided_slice %191 {offsets = [0, 384], sizes = [2, 128], strides = [1, 1]} : vector<2x512xf32> to vector<2x128xf32>
    %cst_103 = arith.constant 1.000000e+00 : f32
    %204 = vector.broadcast %cst_103 : f32 to vector<2x128xf32>
    %205 = arith.addf %203, %204 : vector<2x128xf32>
    %cst_104 = arith.constant 5.000000e-01 : f32
    %206 = vector.broadcast %cst_104 : f32 to vector<2x128xf32>
    %207 = arith.mulf %206, %205 : vector<2x128xf32>
    %208 = arith.mulf %201, %169 : vector<2x128xf32>
    %209 = arith.mulf %196, %202 : vector<2x128xf32>
    %210 = arith.addf %208, %209 : vector<2x128xf32>
    %211 = math.tanh %210 : vector<2x128xf32>
    %212 = arith.mulf %207, %211 : vector<2x128xf32>
    %213 = vector.extract_strided_slice %212 {offsets = [0, 0], sizes = [1, 128], strides = [1, 1]} : vector<2x128xf32> to vector<1x128xf32>
    %c1_105 = arith.constant 1 : index
    %c0_106 = arith.constant 0 : index
    %214 = vector.load %arg43[%c1_105, %c0_106] : memref<8x256xf32, #tpu.memory_space<vmem>>, vector<1x128xf32>
    tpu.vector_store %arg43[%c1_105, %c0_106], %213 {strides = array<i32>} : memref<8x256xf32, #tpu.memory_space<vmem>>, vector<1x128xf32>,
    %215 = vector.extract_strided_slice %212 {offsets = [1, 0], sizes = [1, 128], strides = [1, 1]} : vector<2x128xf32> to vector<1x128xf32>
    %c6 = arith.constant 6 : index
    %c128_107 = arith.constant 128 : index
    %216 = vector.load %arg43[%c6, %c128_107] : memref<8x256xf32, #tpu.memory_space<vmem>>, vector<1x128xf32>
    tpu.vector_store %arg43[%c6, %c128_107], %215 {strides = array<i32>} : memref<8x256xf32, #tpu.memory_space<vmem>>, vector<1x128xf32>,
    %217 = vector.extract_strided_slice %128 {offsets = [2, 0], sizes = [1, 512], strides = [1, 1]} : vector<8x1024xf32> to vector<1x512xf32>
    %218 = vector.extract_strided_slice %128 {offsets = [5, 512], sizes = [1, 512], strides = [1, 1]} : vector<8x1024xf32> to vector<1x512xf32>
    %219 = vector.extract_strided_slice %212 {offsets = [0, 0], sizes = [1, 128], strides = [1, 1]} : vector<2x128xf32> to vector<1x128xf32>
    %c0_108 = arith.constant 0 : index
    %c0_109 = arith.constant 0 : index
    %220 = vector.load %arg40[%c0_108, %c0_109] : memref<128x512xf32, #tpu.memory_space<vmem>>, vector<128x512xf32>
    %cst_110 = arith.constant dense<0.000000e+00> : vector<1x512xf32>
    %221 = tpu.matmul %219, %220, %cst_110 {dimension_numbers = #tpu.dot_dimension_numbers<[1], [0], [0], [1], [0, 0, 1, 1], [], []>} : vector<1x128xf32>, vector<128x512xf32>, vector<1x512xf32> -> vector<1x512xf32>
    %222 = arith.addf %217, %221 : vector<1x512xf32>
    %223 = vector.extract_strided_slice %212 {offsets = [1, 0], sizes = [1, 128], strides = [1, 1]} : vector<2x128xf32> to vector<1x128xf32>
    %c0_111 = arith.constant 0 : index
    %c0_112 = arith.constant 0 : index
    %224 = vector.load %arg41[%c0_111, %c0_112] : memref<128x512xf32, #tpu.memory_space<vmem>>, vector<128x512xf32>
    %cst_113 = arith.constant dense<0.000000e+00> : vector<1x512xf32>
    %225 = tpu.matmul %223, %224, %cst_113 {dimension_numbers = #tpu.dot_dimension_numbers<[1], [0], [0], [1], [0, 0, 1, 1], [], []>} : vector<1x128xf32>, vector<128x512xf32>, vector<1x512xf32> -> vector<1x512xf32>
    %226 = arith.addf %218, %225 : vector<1x512xf32>
    %c0_114 = arith.constant 0 : index
    %c0_115 = arith.constant 0 : index
    %227 = vector.load %arg42[%c0_114, %c0_115] : memref<2x512xf32, #tpu.memory_space<vmem>>, vector<1x512xf32>
    tpu.vector_store %arg42[%c0_114, %c0_115], %222 {strides = array<i32>} : memref<2x512xf32, #tpu.memory_space<vmem>>, vector<1x512xf32>,
    %c1_116 = arith.constant 1 : index
    %c0_117 = arith.constant 0 : index
    %228 = vector.load %arg42[%c1_116, %c0_117] : memref<2x512xf32, #tpu.memory_space<vmem>>, vector<1x512xf32>
    tpu.vector_store %arg42[%c1_116, %c0_117], %226 {strides = array<i32>} : memref<2x512xf32, #tpu.memory_space<vmem>>, vector<1x512xf32>,
    %c0_118 = arith.constant 0 : index
    %c0_119 = arith.constant 0 : index
    %229 = vector.load %arg42[%c0_118, %c0_119] : memref<2x512xf32, #tpu.memory_space<vmem>>, vector<2x512xf32>
    %230 = vector.broadcast %142 : vector<1x512xf32> to vector<2x512xf32>
    %231 = arith.mulf %229, %230 : vector<2x512xf32>
    %232 = math.tanh %231 : vector<2x512xf32>
    %233 = vector.extract_strided_slice %232 {offsets = [0, 0], sizes = [2, 128], strides = [1, 1]} : vector<2x512xf32> to vector<2x128xf32>
    %cst_120 = arith.constant 1.000000e+00 : f32
    %234 = vector.broadcast %cst_120 : f32 to vector<2x128xf32>
    %235 = arith.addf %233, %234 : vector<2x128xf32>
    %cst_121 = arith.constant 5.000000e-01 : f32
    %236 = vector.broadcast %cst_121 : f32 to vector<2x128xf32>
    %237 = arith.mulf %236, %235 : vector<2x128xf32>
    %238 = vector.extract_strided_slice %232 {offsets = [0, 128], sizes = [2, 128], strides = [1, 1]} : vector<2x512xf32> to vector<2x128xf32>
    %cst_122 = arith.constant 1.000000e+00 : f32
    %239 = vector.broadcast %cst_122 : f32 to vector<2x128xf32>
    %240 = arith.addf %238, %239 : vector<2x128xf32>
    %cst_123 = arith.constant 5.000000e-01 : f32
    %241 = vector.broadcast %cst_123 : f32 to vector<2x128xf32>
    %242 = arith.mulf %241, %240 : vector<2x128xf32>
    %243 = vector.extract_strided_slice %232 {offsets = [0, 256], sizes = [2, 128], strides = [1, 1]} : vector<2x512xf32> to vector<2x128xf32>
    %244 = vector.extract_strided_slice %232 {offsets = [0, 384], sizes = [2, 128], strides = [1, 1]} : vector<2x512xf32> to vector<2x128xf32>
    %cst_124 = arith.constant 1.000000e+00 : f32
    %245 = vector.broadcast %cst_124 : f32 to vector<2x128xf32>
    %246 = arith.addf %244, %245 : vector<2x128xf32>
    %cst_125 = arith.constant 5.000000e-01 : f32
    %247 = vector.broadcast %cst_125 : f32 to vector<2x128xf32>
    %248 = arith.mulf %247, %246 : vector<2x128xf32>
    %249 = arith.mulf %242, %210 : vector<2x128xf32>
    %250 = arith.mulf %237, %243 : vector<2x128xf32>
    %251 = arith.addf %249, %250 : vector<2x128xf32>
    %252 = math.tanh %251 : vector<2x128xf32>
    %253 = arith.mulf %248, %252 : vector<2x128xf32>
    %254 = vector.extract_strided_slice %253 {offsets = [0, 0], sizes = [1, 128], strides = [1, 1]} : vector<2x128xf32> to vector<1x128xf32>
    %c2 = arith.constant 2 : index
    %c0_126 = arith.constant 0 : index
    %255 = vector.load %arg43[%c2, %c0_126] : memref<8x256xf32, #tpu.memory_space<vmem>>, vector<1x128xf32>
    tpu.vector_store %arg43[%c2, %c0_126], %254 {strides = array<i32>} : memref<8x256xf32, #tpu.memory_space<vmem>>, vector<1x128xf32>,
    %256 = vector.extract_strided_slice %253 {offsets = [1, 0], sizes = [1, 128], strides = [1, 1]} : vector<2x128xf32> to vector<1x128xf32>
    %c5 = arith.constant 5 : index
    %c128_127 = arith.constant 128 : index
    %257 = vector.load %arg43[%c5, %c128_127] : memref<8x256xf32, #tpu.memory_space<vmem>>, vector<1x128xf32>
    tpu.vector_store %arg43[%c5, %c128_127], %256 {strides = array<i32>} : memref<8x256xf32, #tpu.memory_space<vmem>>, vector<1x128xf32>,
    %258 = vector.extract_strided_slice %128 {offsets = [3, 0], sizes = [1, 512], strides = [1, 1]} : vector<8x1024xf32> to vector<1x512xf32>
    %259 = vector.extract_strided_slice %128 {offsets = [4, 512], sizes = [1, 512], strides = [1, 1]} : vector<8x1024xf32> to vector<1x512xf32>
    %260 = vector.extract_strided_slice %253 {offsets = [0, 0], sizes = [1, 128], strides = [1, 1]} : vector<2x128xf32> to vector<1x128xf32>
    %c0_128 = arith.constant 0 : index
    %c0_129 = arith.constant 0 : index
    %261 = vector.load %arg40[%c0_128, %c0_129] : memref<128x512xf32, #tpu.memory_space<vmem>>, vector<128x512xf32>
    %cst_130 = arith.constant dense<0.000000e+00> : vector<1x512xf32>
    %262 = tpu.matmul %260, %261, %cst_130 {dimension_numbers = #tpu.dot_dimension_numbers<[1], [0], [0], [1], [0, 0, 1, 1], [], []>} : vector<1x128xf32>, vector<128x512xf32>, vector<1x512xf32> -> vector<1x512xf32>
    %263 = arith.addf %258, %262 : vector<1x512xf32>
    %264 = vector.extract_strided_slice %253 {offsets = [1, 0], sizes = [1, 128], strides = [1, 1]} : vector<2x128xf32> to vector<1x128xf32>
    %c0_131 = arith.constant 0 : index
    %c0_132 = arith.constant 0 : index
    %265 = vector.load %arg41[%c0_131, %c0_132] : memref<128x512xf32, #tpu.memory_space<vmem>>, vector<128x512xf32>
    %cst_133 = arith.constant dense<0.000000e+00> : vector<1x512xf32>
    %266 = tpu.matmul %264, %265, %cst_133 {dimension_numbers = #tpu.dot_dimension_numbers<[1], [0], [0], [1], [0, 0, 1, 1], [], []>} : vector<1x128xf32>, vector<128x512xf32>, vector<1x512xf32> -> vector<1x512xf32>
    %267 = arith.addf %259, %266 : vector<1x512xf32>
    %c0_134 = arith.constant 0 : index
    %c0_135 = arith.constant 0 : index
    %268 = vector.load %arg42[%c0_134, %c0_135] : memref<2x512xf32, #tpu.memory_space<vmem>>, vector<1x512xf32>
    tpu.vector_store %arg42[%c0_134, %c0_135], %263 {strides = array<i32>} : memref<2x512xf32, #tpu.memory_space<vmem>>, vector<1x512xf32>,
    %c1_136 = arith.constant 1 : index
    %c0_137 = arith.constant 0 : index
    %269 = vector.load %arg42[%c1_136, %c0_137] : memref<2x512xf32, #tpu.memory_space<vmem>>, vector<1x512xf32>
    tpu.vector_store %arg42[%c1_136, %c0_137], %267 {strides = array<i32>} : memref<2x512xf32, #tpu.memory_space<vmem>>, vector<1x512xf32>,
    %c0_138 = arith.constant 0 : index
    %c0_139 = arith.constant 0 : index
    %270 = vector.load %arg42[%c0_138, %c0_139] : memref<2x512xf32, #tpu.memory_space<vmem>>, vector<2x512xf32>
    %271 = vector.broadcast %142 : vector<1x512xf32> to vector<2x512xf32>
    %272 = arith.mulf %270, %271 : vector<2x512xf32>
    %273 = math.tanh %272 : vector<2x512xf32>
    %274 = vector.extract_strided_slice %273 {offsets = [0, 0], sizes = [2, 128], strides = [1, 1]} : vector<2x512xf32> to vector<2x128xf32>
    %cst_140 = arith.constant 1.000000e+00 : f32
    %275 = vector.broadcast %cst_140 : f32 to vector<2x128xf32>
    %276 = arith.addf %274, %275 : vector<2x128xf32>
    %cst_141 = arith.constant 5.000000e-01 : f32
    %277 = vector.broadcast %cst_141 : f32 to vector<2x128xf32>
    %278 = arith.mulf %277, %276 : vector<2x128xf32>
    %279 = vector.extract_strided_slice %273 {offsets = [0, 128], sizes = [2, 128], strides = [1, 1]} : vector<2x512xf32> to vector<2x128xf32>
    %cst_142 = arith.constant 1.000000e+00 : f32
    %280 = vector.broadcast %cst_142 : f32 to vector<2x128xf32>
    %281 = arith.addf %279, %280 : vector<2x128xf32>
    %cst_143 = arith.constant 5.000000e-01 : f32
    %282 = vector.broadcast %cst_143 : f32 to vector<2x128xf32>
    %283 = arith.mulf %282, %281 : vector<2x128xf32>
    %284 = vector.extract_strided_slice %273 {offsets = [0, 256], sizes = [2, 128], strides = [1, 1]} : vector<2x512xf32> to vector<2x128xf32>
    %285 = vector.extract_strided_slice %273 {offsets = [0, 384], sizes = [2, 128], strides = [1, 1]} : vector<2x512xf32> to vector<2x128xf32>
    %cst_144 = arith.constant 1.000000e+00 : f32
    %286 = vector.broadcast %cst_144 : f32 to vector<2x128xf32>
    %287 = arith.addf %285, %286 : vector<2x128xf32>
    %cst_145 = arith.constant 5.000000e-01 : f32
    %288 = vector.broadcast %cst_145 : f32 to vector<2x128xf32>
    %289 = arith.mulf %288, %287 : vector<2x128xf32>
    %290 = arith.mulf %283, %251 : vector<2x128xf32>
    %291 = arith.mulf %278, %284 : vector<2x128xf32>
    %292 = arith.addf %290, %291 : vector<2x128xf32>
    %293 = math.tanh %292 : vector<2x128xf32>
    %294 = arith.mulf %289, %293 : vector<2x128xf32>
    %295 = vector.extract_strided_slice %294 {offsets = [0, 0], sizes = [1, 128], strides = [1, 1]} : vector<2x128xf32> to vector<1x128xf32>
    %c3 = arith.constant 3 : index
    %c0_146 = arith.constant 0 : index
    %296 = vector.load %arg43[%c3, %c0_146] : memref<8x256xf32, #tpu.memory_space<vmem>>, vector<1x128xf32>
    tpu.vector_store %arg43[%c3, %c0_146], %295 {strides = array<i32>} : memref<8x256xf32, #tpu.memory_space<vmem>>, vector<1x128xf32>,
    %297 = vector.extract_strided_slice %294 {offsets = [1, 0], sizes = [1, 128], strides = [1, 1]} : vector<2x128xf32> to vector<1x128xf32>
    %c4 = arith.constant 4 : index
    %c128_147 = arith.constant 128 : index
    %298 = vector.load %arg43[%c4, %c128_147] : memref<8x256xf32, #tpu.memory_space<vmem>>, vector<1x128xf32>
    tpu.vector_store %arg43[%c4, %c128_147], %297 {strides = array<i32>} : memref<8x256xf32, #tpu.memory_space<vmem>>, vector<1x128xf32>,
    %299 = vector.extract_strided_slice %128 {offsets = [4, 0], sizes = [1, 512], strides = [1, 1]} : vector<8x1024xf32> to vector<1x512xf32>
    %300 = vector.extract_strided_slice %128 {offsets = [3, 512], sizes = [1, 512], strides = [1, 1]} : vector<8x1024xf32> to vector<1x512xf32>
    %301 = vector.extract_strided_slice %294 {offsets = [0, 0], sizes = [1, 128], strides = [1, 1]} : vector<2x128xf32> to vector<1x128xf32>
    %c0_148 = arith.constant 0 : index
    %c0_149 = arith.constant 0 : index
    %302 = vector.load %arg40[%c0_148, %c0_149] : memref<128x512xf32, #tpu.memory_space<vmem>>, vector<128x512xf32>
    %cst_150 = arith.constant dense<0.000000e+00> : vector<1x512xf32>
    %303 = tpu.matmul %301, %302, %cst_150 {dimension_numbers = #tpu.dot_dimension_numbers<[1], [0], [0], [1], [0, 0, 1, 1], [], []>} : vector<1x128xf32>, vector<128x512xf32>, vector<1x512xf32> -> vector<1x512xf32>
    %304 = arith.addf %299, %303 : vector<1x512xf32>
    %305 = vector.extract_strided_slice %294 {offsets = [1, 0], sizes = [1, 128], strides = [1, 1]} : vector<2x128xf32> to vector<1x128xf32>
    %c0_151 = arith.constant 0 : index
    %c0_152 = arith.constant 0 : index
    %306 = vector.load %arg41[%c0_151, %c0_152] : memref<128x512xf32, #tpu.memory_space<vmem>>, vector<128x512xf32>
    %cst_153 = arith.constant dense<0.000000e+00> : vector<1x512xf32>
    %307 = tpu.matmul %305, %306, %cst_153 {dimension_numbers = #tpu.dot_dimension_numbers<[1], [0], [0], [1], [0, 0, 1, 1], [], []>} : vector<1x128xf32>, vector<128x512xf32>, vector<1x512xf32> -> vector<1x512xf32>
    %308 = arith.addf %300, %307 : vector<1x512xf32>
    %c0_154 = arith.constant 0 : index
    %c0_155 = arith.constant 0 : index
    %309 = vector.load %arg42[%c0_154, %c0_155] : memref<2x512xf32, #tpu.memory_space<vmem>>, vector<1x512xf32>
    tpu.vector_store %arg42[%c0_154, %c0_155], %304 {strides = array<i32>} : memref<2x512xf32, #tpu.memory_space<vmem>>, vector<1x512xf32>,
    %c1_156 = arith.constant 1 : index
    %c0_157 = arith.constant 0 : index
    %310 = vector.load %arg42[%c1_156, %c0_157] : memref<2x512xf32, #tpu.memory_space<vmem>>, vector<1x512xf32>
    tpu.vector_store %arg42[%c1_156, %c0_157], %308 {strides = array<i32>} : memref<2x512xf32, #tpu.memory_space<vmem>>, vector<1x512xf32>,
    %c0_158 = arith.constant 0 : index
    %c0_159 = arith.constant 0 : index
    %311 = vector.load %arg42[%c0_158, %c0_159] : memref<2x512xf32, #tpu.memory_space<vmem>>, vector<2x512xf32>
    %312 = vector.broadcast %142 : vector<1x512xf32> to vector<2x512xf32>
    %313 = arith.mulf %311, %312 : vector<2x512xf32>
    %314 = math.tanh %313 : vector<2x512xf32>
    %315 = vector.extract_strided_slice %314 {offsets = [0, 0], sizes = [2, 128], strides = [1, 1]} : vector<2x512xf32> to vector<2x128xf32>
    %cst_160 = arith.constant 1.000000e+00 : f32
    %316 = vector.broadcast %cst_160 : f32 to vector<2x128xf32>
    %317 = arith.addf %315, %316 : vector<2x128xf32>
    %cst_161 = arith.constant 5.000000e-01 : f32
    %318 = vector.broadcast %cst_161 : f32 to vector<2x128xf32>
    %319 = arith.mulf %318, %317 : vector<2x128xf32>
    %320 = vector.extract_strided_slice %314 {offsets = [0, 128], sizes = [2, 128], strides = [1, 1]} : vector<2x512xf32> to vector<2x128xf32>
    %cst_162 = arith.constant 1.000000e+00 : f32
    %321 = vector.broadcast %cst_162 : f32 to vector<2x128xf32>
    %322 = arith.addf %320, %321 : vector<2x128xf32>
    %cst_163 = arith.constant 5.000000e-01 : f32
    %323 = vector.broadcast %cst_163 : f32 to vector<2x128xf32>
    %324 = arith.mulf %323, %322 : vector<2x128xf32>
    %325 = vector.extract_strided_slice %314 {offsets = [0, 256], sizes = [2, 128], strides = [1, 1]} : vector<2x512xf32> to vector<2x128xf32>
    %326 = vector.extract_strided_slice %314 {offsets = [0, 384], sizes = [2, 128], strides = [1, 1]} : vector<2x512xf32> to vector<2x128xf32>
    %cst_164 = arith.constant 1.000000e+00 : f32
    %327 = vector.broadcast %cst_164 : f32 to vector<2x128xf32>
    %328 = arith.addf %326, %327 : vector<2x128xf32>
    %cst_165 = arith.constant 5.000000e-01 : f32
    %329 = vector.broadcast %cst_165 : f32 to vector<2x128xf32>
    %330 = arith.mulf %329, %328 : vector<2x128xf32>
    %331 = arith.mulf %324, %292 : vector<2x128xf32>
    %332 = arith.mulf %319, %325 : vector<2x128xf32>
    %333 = arith.addf %331, %332 : vector<2x128xf32>
    %334 = math.tanh %333 : vector<2x128xf32>
    %335 = arith.mulf %330, %334 : vector<2x128xf32>
    %336 = vector.extract_strided_slice %335 {offsets = [0, 0], sizes = [1, 128], strides = [1, 1]} : vector<2x128xf32> to vector<1x128xf32>
    %c4_166 = arith.constant 4 : index
    %c0_167 = arith.constant 0 : index
    %337 = vector.load %arg43[%c4_166, %c0_167] : memref<8x256xf32, #tpu.memory_space<vmem>>, vector<1x128xf32>
    tpu.vector_store %arg43[%c4_166, %c0_167], %336 {strides = array<i32>} : memref<8x256xf32, #tpu.memory_space<vmem>>, vector<1x128xf32>,
    %338 = vector.extract_strided_slice %335 {offsets = [1, 0], sizes = [1, 128], strides = [1, 1]} : vector<2x128xf32> to vector<1x128xf32>
    %c3_168 = arith.constant 3 : index
    %c128_169 = arith.constant 128 : index
    %339 = vector.load %arg43[%c3_168, %c128_169] : memref<8x256xf32, #tpu.memory_space<vmem>>, vector<1x128xf32>
    tpu.vector_store %arg43[%c3_168, %c128_169], %338 {strides = array<i32>} : memref<8x256xf32, #tpu.memory_space<vmem>>, vector<1x128xf32>,
    %340 = vector.extract_strided_slice %128 {offsets = [5, 0], sizes = [1, 512], strides = [1, 1]} : vector<8x1024xf32> to vector<1x512xf32>
    %341 = vector.extract_strided_slice %128 {offsets = [2, 512], sizes = [1, 512], strides = [1, 1]} : vector<8x1024xf32> to vector<1x512xf32>
    %342 = vector.extract_strided_slice %335 {offsets = [0, 0], sizes = [1, 128], strides = [1, 1]} : vector<2x128xf32> to vector<1x128xf32>
    %c0_170 = arith.constant 0 : index
    %c0_171 = arith.constant 0 : index
    %343 = vector.load %arg40[%c0_170, %c0_171] : memref<128x512xf32, #tpu.memory_space<vmem>>, vector<128x512xf32>
    %cst_172 = arith.constant dense<0.000000e+00> : vector<1x512xf32>
    %344 = tpu.matmul %342, %343, %cst_172 {dimension_numbers = #tpu.dot_dimension_numbers<[1], [0], [0], [1], [0, 0, 1, 1], [], []>} : vector<1x128xf32>, vector<128x512xf32>, vector<1x512xf32> -> vector<1x512xf32>
    %345 = arith.addf %340, %344 : vector<1x512xf32>
    %346 = vector.extract_strided_slice %335 {offsets = [1, 0], sizes = [1, 128], strides = [1, 1]} : vector<2x128xf32> to vector<1x128xf32>
    %c0_173 = arith.constant 0 : index
    %c0_174 = arith.constant 0 : index
    %347 = vector.load %arg41[%c0_173, %c0_174] : memref<128x512xf32, #tpu.memory_space<vmem>>, vector<128x512xf32>
    %cst_175 = arith.constant dense<0.000000e+00> : vector<1x512xf32>
    %348 = tpu.matmul %346, %347, %cst_175 {dimension_numbers = #tpu.dot_dimension_numbers<[1], [0], [0], [1], [0, 0, 1, 1], [], []>} : vector<1x128xf32>, vector<128x512xf32>, vector<1x512xf32> -> vector<1x512xf32>
    %349 = arith.addf %341, %348 : vector<1x512xf32>
    %c0_176 = arith.constant 0 : index
    %c0_177 = arith.constant 0 : index
    %350 = vector.load %arg42[%c0_176, %c0_177] : memref<2x512xf32, #tpu.memory_space<vmem>>, vector<1x512xf32>
    tpu.vector_store %arg42[%c0_176, %c0_177], %345 {strides = array<i32>} : memref<2x512xf32, #tpu.memory_space<vmem>>, vector<1x512xf32>,
    %c1_178 = arith.constant 1 : index
    %c0_179 = arith.constant 0 : index
    %351 = vector.load %arg42[%c1_178, %c0_179] : memref<2x512xf32, #tpu.memory_space<vmem>>, vector<1x512xf32>
    tpu.vector_store %arg42[%c1_178, %c0_179], %349 {strides = array<i32>} : memref<2x512xf32, #tpu.memory_space<vmem>>, vector<1x512xf32>,
    %c0_180 = arith.constant 0 : index
    %c0_181 = arith.constant 0 : index
    %352 = vector.load %arg42[%c0_180, %c0_181] : memref<2x512xf32, #tpu.memory_space<vmem>>, vector<2x512xf32>
    %353 = vector.broadcast %142 : vector<1x512xf32> to vector<2x512xf32>
    %354 = arith.mulf %352, %353 : vector<2x512xf32>
    %355 = math.tanh %354 : vector<2x512xf32>
    %356 = vector.extract_strided_slice %355 {offsets = [0, 0], sizes = [2, 128], strides = [1, 1]} : vector<2x512xf32> to vector<2x128xf32>
    %cst_182 = arith.constant 1.000000e+00 : f32
    %357 = vector.broadcast %cst_182 : f32 to vector<2x128xf32>
    %358 = arith.addf %356, %357 : vector<2x128xf32>
    %cst_183 = arith.constant 5.000000e-01 : f32
    %359 = vector.broadcast %cst_183 : f32 to vector<2x128xf32>
    %360 = arith.mulf %359, %358 : vector<2x128xf32>
    %361 = vector.extract_strided_slice %355 {offsets = [0, 128], sizes = [2, 128], strides = [1, 1]} : vector<2x512xf32> to vector<2x128xf32>
    %cst_184 = arith.constant 1.000000e+00 : f32
    %362 = vector.broadcast %cst_184 : f32 to vector<2x128xf32>
    %363 = arith.addf %361, %362 : vector<2x128xf32>
    %cst_185 = arith.constant 5.000000e-01 : f32
    %364 = vector.broadcast %cst_185 : f32 to vector<2x128xf32>
    %365 = arith.mulf %364, %363 : vector<2x128xf32>
    %366 = vector.extract_strided_slice %355 {offsets = [0, 256], sizes = [2, 128], strides = [1, 1]} : vector<2x512xf32> to vector<2x128xf32>
    %367 = vector.extract_strided_slice %355 {offsets = [0, 384], sizes = [2, 128], strides = [1, 1]} : vector<2x512xf32> to vector<2x128xf32>
    %cst_186 = arith.constant 1.000000e+00 : f32
    %368 = vector.broadcast %cst_186 : f32 to vector<2x128xf32>
    %369 = arith.addf %367, %368 : vector<2x128xf32>
    %cst_187 = arith.constant 5.000000e-01 : f32
    %370 = vector.broadcast %cst_187 : f32 to vector<2x128xf32>
    %371 = arith.mulf %370, %369 : vector<2x128xf32>
    %372 = arith.mulf %365, %333 : vector<2x128xf32>
    %373 = arith.mulf %360, %366 : vector<2x128xf32>
    %374 = arith.addf %372, %373 : vector<2x128xf32>
    %375 = math.tanh %374 : vector<2x128xf32>
    %376 = arith.mulf %371, %375 : vector<2x128xf32>
    %377 = vector.extract_strided_slice %376 {offsets = [0, 0], sizes = [1, 128], strides = [1, 1]} : vector<2x128xf32> to vector<1x128xf32>
    %c5_188 = arith.constant 5 : index
    %c0_189 = arith.constant 0 : index
    %378 = vector.load %arg43[%c5_188, %c0_189] : memref<8x256xf32, #tpu.memory_space<vmem>>, vector<1x128xf32>
    tpu.vector_store %arg43[%c5_188, %c0_189], %377 {strides = array<i32>} : memref<8x256xf32, #tpu.memory_space<vmem>>, vector<1x128xf32>,
    %379 = vector.extract_strided_slice %376 {offsets = [1, 0], sizes = [1, 128], strides = [1, 1]} : vector<2x128xf32> to vector<1x128xf32>
    %c2_190 = arith.constant 2 : index
    %c128_191 = arith.constant 128 : index
    %380 = vector.load %arg43[%c2_190, %c128_191] : memref<8x256xf32, #tpu.memory_space<vmem>>, vector<1x128xf32>
    tpu.vector_store %arg43[%c2_190, %c128_191], %379 {strides = array<i32>} : memref<8x256xf32, #tpu.memory_space<vmem>>, vector<1x128xf32>,
    %381 = vector.extract_strided_slice %128 {offsets = [6, 0], sizes = [1, 512], strides = [1, 1]} : vector<8x1024xf32> to vector<1x512xf32>
    %382 = vector.extract_strided_slice %128 {offsets = [1, 512], sizes = [1, 512], strides = [1, 1]} : vector<8x1024xf32> to vector<1x512xf32>
    %383 = vector.extract_strided_slice %376 {offsets = [0, 0], sizes = [1, 128], strides = [1, 1]} : vector<2x128xf32> to vector<1x128xf32>
    %c0_192 = arith.constant 0 : index
    %c0_193 = arith.constant 0 : index
    %384 = vector.load %arg40[%c0_192, %c0_193] : memref<128x512xf32, #tpu.memory_space<vmem>>, vector<128x512xf32>
    %cst_194 = arith.constant dense<0.000000e+00> : vector<1x512xf32>
    %385 = tpu.matmul %383, %384, %cst_194 {dimension_numbers = #tpu.dot_dimension_numbers<[1], [0], [0], [1], [0, 0, 1, 1], [], []>} : vector<1x128xf32>, vector<128x512xf32>, vector<1x512xf32> -> vector<1x512xf32>
    %386 = arith.addf %381, %385 : vector<1x512xf32>
    %387 = vector.extract_strided_slice %376 {offsets = [1, 0], sizes = [1, 128], strides = [1, 1]} : vector<2x128xf32> to vector<1x128xf32>
    %c0_195 = arith.constant 0 : index
    %c0_196 = arith.constant 0 : index
    %388 = vector.load %arg41[%c0_195, %c0_196] : memref<128x512xf32, #tpu.memory_space<vmem>>, vector<128x512xf32>
    %cst_197 = arith.constant dense<0.000000e+00> : vector<1x512xf32>
    %389 = tpu.matmul %387, %388, %cst_197 {dimension_numbers = #tpu.dot_dimension_numbers<[1], [0], [0], [1], [0, 0, 1, 1], [], []>} : vector<1x128xf32>, vector<128x512xf32>, vector<1x512xf32> -> vector<1x512xf32>
    %390 = arith.addf %382, %389 : vector<1x512xf32>
    %c0_198 = arith.constant 0 : index
    %c0_199 = arith.constant 0 : index
    %391 = vector.load %arg42[%c0_198, %c0_199] : memref<2x512xf32, #tpu.memory_space<vmem>>, vector<1x512xf32>
    tpu.vector_store %arg42[%c0_198, %c0_199], %386 {strides = array<i32>} : memref<2x512xf32, #tpu.memory_space<vmem>>, vector<1x512xf32>,
    %c1_200 = arith.constant 1 : index
    %c0_201 = arith.constant 0 : index
    %392 = vector.load %arg42[%c1_200, %c0_201] : memref<2x512xf32, #tpu.memory_space<vmem>>, vector<1x512xf32>
    tpu.vector_store %arg42[%c1_200, %c0_201], %390 {strides = array<i32>} : memref<2x512xf32, #tpu.memory_space<vmem>>, vector<1x512xf32>,
    %c0_202 = arith.constant 0 : index
    %c0_203 = arith.constant 0 : index
    %393 = vector.load %arg42[%c0_202, %c0_203] : memref<2x512xf32, #tpu.memory_space<vmem>>, vector<2x512xf32>
    %394 = vector.broadcast %142 : vector<1x512xf32> to vector<2x512xf32>
    %395 = arith.mulf %393, %394 : vector<2x512xf32>
    %396 = math.tanh %395 : vector<2x512xf32>
    %397 = vector.extract_strided_slice %396 {offsets = [0, 0], sizes = [2, 128], strides = [1, 1]} : vector<2x512xf32> to vector<2x128xf32>
    %cst_204 = arith.constant 1.000000e+00 : f32
    %398 = vector.broadcast %cst_204 : f32 to vector<2x128xf32>
    %399 = arith.addf %397, %398 : vector<2x128xf32>
    %cst_205 = arith.constant 5.000000e-01 : f32
    %400 = vector.broadcast %cst_205 : f32 to vector<2x128xf32>
    %401 = arith.mulf %400, %399 : vector<2x128xf32>
    %402 = vector.extract_strided_slice %396 {offsets = [0, 128], sizes = [2, 128], strides = [1, 1]} : vector<2x512xf32> to vector<2x128xf32>
    %cst_206 = arith.constant 1.000000e+00 : f32
    %403 = vector.broadcast %cst_206 : f32 to vector<2x128xf32>
    %404 = arith.addf %402, %403 : vector<2x128xf32>
    %cst_207 = arith.constant 5.000000e-01 : f32
    %405 = vector.broadcast %cst_207 : f32 to vector<2x128xf32>
    %406 = arith.mulf %405, %404 : vector<2x128xf32>
    %407 = vector.extract_strided_slice %396 {offsets = [0, 256], sizes = [2, 128], strides = [1, 1]} : vector<2x512xf32> to vector<2x128xf32>
    %408 = vector.extract_strided_slice %396 {offsets = [0, 384], sizes = [2, 128], strides = [1, 1]} : vector<2x512xf32> to vector<2x128xf32>
    %cst_208 = arith.constant 1.000000e+00 : f32
    %409 = vector.broadcast %cst_208 : f32 to vector<2x128xf32>
    %410 = arith.addf %408, %409 : vector<2x128xf32>
    %cst_209 = arith.constant 5.000000e-01 : f32
    %411 = vector.broadcast %cst_209 : f32 to vector<2x128xf32>
    %412 = arith.mulf %411, %410 : vector<2x128xf32>
    %413 = arith.mulf %406, %374 : vector<2x128xf32>
    %414 = arith.mulf %401, %407 : vector<2x128xf32>
    %415 = arith.addf %413, %414 : vector<2x128xf32>
    %416 = math.tanh %415 : vector<2x128xf32>
    %417 = arith.mulf %412, %416 : vector<2x128xf32>
    %418 = vector.extract_strided_slice %417 {offsets = [0, 0], sizes = [1, 128], strides = [1, 1]} : vector<2x128xf32> to vector<1x128xf32>
    %c6_210 = arith.constant 6 : index
    %c0_211 = arith.constant 0 : index
    %419 = vector.load %arg43[%c6_210, %c0_211] : memref<8x256xf32, #tpu.memory_space<vmem>>, vector<1x128xf32>
    tpu.vector_store %arg43[%c6_210, %c0_211], %418 {strides = array<i32>} : memref<8x256xf32, #tpu.memory_space<vmem>>, vector<1x128xf32>,
    %420 = vector.extract_strided_slice %417 {offsets = [1, 0], sizes = [1, 128], strides = [1, 1]} : vector<2x128xf32> to vector<1x128xf32>
    %c1_212 = arith.constant 1 : index
    %c128_213 = arith.constant 128 : index
    %421 = vector.load %arg43[%c1_212, %c128_213] : memref<8x256xf32, #tpu.memory_space<vmem>>, vector<1x128xf32>
    tpu.vector_store %arg43[%c1_212, %c128_213], %420 {strides = array<i32>} : memref<8x256xf32, #tpu.memory_space<vmem>>, vector<1x128xf32>,
    %422 = vector.extract_strided_slice %128 {offsets = [7, 0], sizes = [1, 512], strides = [1, 1]} : vector<8x1024xf32> to vector<1x512xf32>
    %423 = vector.extract_strided_slice %128 {offsets = [0, 512], sizes = [1, 512], strides = [1, 1]} : vector<8x1024xf32> to vector<1x512xf32>
    %424 = vector.extract_strided_slice %417 {offsets = [0, 0], sizes = [1, 128], strides = [1, 1]} : vector<2x128xf32> to vector<1x128xf32>
    %c0_214 = arith.constant 0 : index
    %c0_215 = arith.constant 0 : index
    %425 = vector.load %arg40[%c0_214, %c0_215] : memref<128x512xf32, #tpu.memory_space<vmem>>, vector<128x512xf32>
    %cst_216 = arith.constant dense<0.000000e+00> : vector<1x512xf32>
    %426 = tpu.matmul %424, %425, %cst_216 {dimension_numbers = #tpu.dot_dimension_numbers<[1], [0], [0], [1], [0, 0, 1, 1], [], []>} : vector<1x128xf32>, vector<128x512xf32>, vector<1x512xf32> -> vector<1x512xf32>
    %427 = arith.addf %422, %426 : vector<1x512xf32>
    %428 = vector.extract_strided_slice %417 {offsets = [1, 0], sizes = [1, 128], strides = [1, 1]} : vector<2x128xf32> to vector<1x128xf32>
    %c0_217 = arith.constant 0 : index
    %c0_218 = arith.constant 0 : index
    %429 = vector.load %arg41[%c0_217, %c0_218] : memref<128x512xf32, #tpu.memory_space<vmem>>, vector<128x512xf32>
    %cst_219 = arith.constant dense<0.000000e+00> : vector<1x512xf32>
    %430 = tpu.matmul %428, %429, %cst_219 {dimension_numbers = #tpu.dot_dimension_numbers<[1], [0], [0], [1], [0, 0, 1, 1], [], []>} : vector<1x128xf32>, vector<128x512xf32>, vector<1x512xf32> -> vector<1x512xf32>
    %431 = arith.addf %423, %430 : vector<1x512xf32>
    %c0_220 = arith.constant 0 : index
    %c0_221 = arith.constant 0 : index
    %432 = vector.load %arg42[%c0_220, %c0_221] : memref<2x512xf32, #tpu.memory_space<vmem>>, vector<1x512xf32>
    tpu.vector_store %arg42[%c0_220, %c0_221], %427 {strides = array<i32>} : memref<2x512xf32, #tpu.memory_space<vmem>>, vector<1x512xf32>,
    %c1_222 = arith.constant 1 : index
    %c0_223 = arith.constant 0 : index
    %433 = vector.load %arg42[%c1_222, %c0_223] : memref<2x512xf32, #tpu.memory_space<vmem>>, vector<1x512xf32>
    tpu.vector_store %arg42[%c1_222, %c0_223], %431 {strides = array<i32>} : memref<2x512xf32, #tpu.memory_space<vmem>>, vector<1x512xf32>,
    %c0_224 = arith.constant 0 : index
    %c0_225 = arith.constant 0 : index
    %434 = vector.load %arg42[%c0_224, %c0_225] : memref<2x512xf32, #tpu.memory_space<vmem>>, vector<2x512xf32>
    %435 = vector.broadcast %142 : vector<1x512xf32> to vector<2x512xf32>
    %436 = arith.mulf %434, %435 : vector<2x512xf32>
    %437 = math.tanh %436 : vector<2x512xf32>
    %438 = vector.extract_strided_slice %437 {offsets = [0, 0], sizes = [2, 128], strides = [1, 1]} : vector<2x512xf32> to vector<2x128xf32>
    %cst_226 = arith.constant 1.000000e+00 : f32
    %439 = vector.broadcast %cst_226 : f32 to vector<2x128xf32>
    %440 = arith.addf %438, %439 : vector<2x128xf32>
    %cst_227 = arith.constant 5.000000e-01 : f32
    %441 = vector.broadcast %cst_227 : f32 to vector<2x128xf32>
    %442 = arith.mulf %441, %440 : vector<2x128xf32>
    %443 = vector.extract_strided_slice %437 {offsets = [0, 128], sizes = [2, 128], strides = [1, 1]} : vector<2x512xf32> to vector<2x128xf32>
    %cst_228 = arith.constant 1.000000e+00 : f32
    %444 = vector.broadcast %cst_228 : f32 to vector<2x128xf32>
    %445 = arith.addf %443, %444 : vector<2x128xf32>
    %cst_229 = arith.constant 5.000000e-01 : f32
    %446 = vector.broadcast %cst_229 : f32 to vector<2x128xf32>
    %447 = arith.mulf %446, %445 : vector<2x128xf32>
    %448 = vector.extract_strided_slice %437 {offsets = [0, 256], sizes = [2, 128], strides = [1, 1]} : vector<2x512xf32> to vector<2x128xf32>
    %449 = vector.extract_strided_slice %437 {offsets = [0, 384], sizes = [2, 128], strides = [1, 1]} : vector<2x512xf32> to vector<2x128xf32>
    %cst_230 = arith.constant 1.000000e+00 : f32
    %450 = vector.broadcast %cst_230 : f32 to vector<2x128xf32>
    %451 = arith.addf %449, %450 : vector<2x128xf32>
    %cst_231 = arith.constant 5.000000e-01 : f32
    %452 = vector.broadcast %cst_231 : f32 to vector<2x128xf32>
    %453 = arith.mulf %452, %451 : vector<2x128xf32>
    %454 = arith.mulf %447, %415 : vector<2x128xf32>
    %455 = arith.mulf %442, %448 : vector<2x128xf32>
    %456 = arith.addf %454, %455 : vector<2x128xf32>
    %457 = math.tanh %456 : vector<2x128xf32>
    %458 = arith.mulf %453, %457 : vector<2x128xf32>
    %459 = vector.extract_strided_slice %458 {offsets = [0, 0], sizes = [1, 128], strides = [1, 1]} : vector<2x128xf32> to vector<1x128xf32>
    %c7_232 = arith.constant 7 : index
    %c0_233 = arith.constant 0 : index
    %460 = vector.load %arg43[%c7_232, %c0_233] : memref<8x256xf32, #tpu.memory_space<vmem>>, vector<1x128xf32>
    tpu.vector_store %arg43[%c7_232, %c0_233], %459 {strides = array<i32>} : memref<8x256xf32, #tpu.memory_space<vmem>>, vector<1x128xf32>,
    %461 = vector.extract_strided_slice %458 {offsets = [1, 0], sizes = [1, 128], strides = [1, 1]} : vector<2x128xf32> to vector<1x128xf32>
    %c0_234 = arith.constant 0 : index
    %c128_235 = arith.constant 128 : index
    %462 = vector.load %arg43[%c0_234, %c128_235] : memref<8x256xf32, #tpu.memory_space<vmem>>, vector<1x128xf32>
    tpu.vector_store %arg43[%c0_234, %c128_235], %461 {strides = array<i32>} : memref<8x256xf32, #tpu.memory_space<vmem>>, vector<1x128xf32>,
    %c0_236 = arith.constant 0 : index
    %c0_237 = arith.constant 0 : index
    %463 = vector.load %arg43[%c0_236, %c0_237] : memref<8x256xf32, #tpu.memory_space<vmem>>, vector<8x256xf32>
    %c0_238 = arith.constant 0 : index
    %c0_239 = arith.constant 0 : index
    %464 = vector.load %arg21[%c0_238, %c0_239] : memref<1x256xf32, #tpu.memory_space<vmem>>, vector<1x256xf32>
    %c0_240 = arith.constant 0 : index
    %c0_241 = arith.constant 0 : index
    %465 = vector.load %arg22[%c0_240, %c0_241] : memref<1x256xf32, #tpu.memory_space<vmem>>, vector<1x256xf32>
    %cst_242 = arith.constant dense<0.000000e+00> : vector<256xf32>
    %466 = vector.multi_reduction <add>, %463, %cst_242 [0] : vector<8x256xf32> to vector<256xf32>
    %467 = vector.shape_cast %466 : vector<256xf32> to vector<1x256xf32>
    %cst_243 = arith.constant 8.000000e+00 : f32
    %468 = vector.broadcast %cst_243 : f32 to vector<1x256xf32>
    %469 = arith.divf %467, %468 : vector<1x256xf32>
    %470 = arith.mulf %463, %463 : vector<8x256xf32>
    %cst_244 = arith.constant dense<0.000000e+00> : vector<256xf32>
    %471 = vector.multi_reduction <add>, %470, %cst_244 [0] : vector<8x256xf32> to vector<256xf32>
    %472 = vector.shape_cast %471 : vector<256xf32> to vector<1x256xf32>
    %cst_245 = arith.constant 8.000000e+00 : f32
    %473 = vector.broadcast %cst_245 : f32 to vector<1x256xf32>
    %474 = arith.divf %472, %473 : vector<1x256xf32>
    %475 = arith.mulf %469, %469 : vector<1x256xf32>
    %476 = arith.subf %474, %475 : vector<1x256xf32>
    %cst_246 = arith.constant 0.000000e+00 : f32
    %477 = vector.broadcast %cst_246 : f32 to vector<1x256xf32>
    %478 = arith.maximumf %476, %477 : vector<1x256xf32>
    %479 = vector.broadcast %469 : vector<1x256xf32> to vector<8x256xf32>
    %480 = arith.subf %463, %479 : vector<8x256xf32>
    %cst_247 = arith.constant 9.99999974E-6 : f32
    %481 = vector.broadcast %cst_247 : f32 to vector<1x256xf32>
    %482 = arith.addf %478, %481 : vector<1x256xf32>
    %483 = math.rsqrt %482 : vector<1x256xf32>
    %484 = vector.broadcast %483 : vector<1x256xf32> to vector<8x256xf32>
    %485 = arith.mulf %480, %484 : vector<8x256xf32>
    %486 = vector.broadcast %464 : vector<1x256xf32> to vector<8x256xf32>
    %487 = arith.mulf %485, %486 : vector<8x256xf32>
    %488 = vector.broadcast %465 : vector<1x256xf32> to vector<8x256xf32>
    %489 = arith.addf %487, %488 : vector<8x256xf32>
    %c0_248 = arith.constant 0 : index
    %c0_249 = arith.constant 0 : index
    %490 = vector.load %arg23[%c0_248, %c0_249] : memref<256x128xf32, #tpu.memory_space<vmem>>, vector<256x128xf32>
    %cst_250 = arith.constant dense<0.000000e+00> : vector<8x128xf32>
    %491 = tpu.matmul %489, %490, %cst_250 {dimension_numbers = #tpu.dot_dimension_numbers<[1], [0], [0], [1], [0, 0, 1, 1], [], []>} : vector<8x256xf32>, vector<256x128xf32>, vector<8x128xf32> -> vector<8x128xf32>
    %c0_251 = arith.constant 0 : index
    %c0_252 = arith.constant 0 : index
    %492 = vector.load %arg24[%c0_251, %c0_252] : memref<1x128xf32, #tpu.memory_space<vmem>>, vector<1x128xf32>
    %493 = vector.broadcast %492 : vector<1x128xf32> to vector<8x128xf32>
    %494 = arith.addf %491, %493 : vector<8x128xf32>
    %c0_253 = arith.constant 0 : index
    %c0_254 = arith.constant 0 : index
    %495 = vector.load %arg25[%c0_253, %c0_254] : memref<1x128xf32, #tpu.memory_space<vmem>>, vector<1x128xf32>
    %c0_255 = arith.constant 0 : index
    %c0_256 = arith.constant 0 : index
    %496 = vector.load %arg26[%c0_255, %c0_256] : memref<1x128xf32, #tpu.memory_space<vmem>>, vector<1x128xf32>
    %cst_257 = arith.constant dense<0.000000e+00> : vector<128xf32>
    %497 = vector.multi_reduction <add>, %494, %cst_257 [0] : vector<8x128xf32> to vector<128xf32>
    %498 = vector.shape_cast %497 : vector<128xf32> to vector<1x128xf32>
    %cst_258 = arith.constant 8.000000e+00 : f32
    %499 = vector.broadcast %cst_258 : f32 to vector<1x128xf32>
    %500 = arith.divf %498, %499 : vector<1x128xf32>
    %501 = arith.mulf %494, %494 : vector<8x128xf32>
    %cst_259 = arith.constant dense<0.000000e+00> : vector<128xf32>
    %502 = vector.multi_reduction <add>, %501, %cst_259 [0] : vector<8x128xf32> to vector<128xf32>
    %503 = vector.shape_cast %502 : vector<128xf32> to vector<1x128xf32>
    %cst_260 = arith.constant 8.000000e+00 : f32
    %504 = vector.broadcast %cst_260 : f32 to vector<1x128xf32>
    %505 = arith.divf %503, %504 : vector<1x128xf32>
    %506 = arith.mulf %500, %500 : vector<1x128xf32>
    %507 = arith.subf %505, %506 : vector<1x128xf32>
    %cst_261 = arith.constant 0.000000e+00 : f32
    %508 = vector.broadcast %cst_261 : f32 to vector<1x128xf32>
    %509 = arith.maximumf %507, %508 : vector<1x128xf32>
    %510 = vector.broadcast %500 : vector<1x128xf32> to vector<8x128xf32>
    %511 = arith.subf %494, %510 : vector<8x128xf32>
    %cst_262 = arith.constant 9.99999974E-6 : f32
    %512 = vector.broadcast %cst_262 : f32 to vector<1x128xf32>
    %513 = arith.addf %509, %512 : vector<1x128xf32>
    %514 = math.rsqrt %513 : vector<1x128xf32>
    %515 = vector.broadcast %514 : vector<1x128xf32> to vector<8x128xf32>
    %516 = arith.mulf %511, %515 : vector<8x128xf32>
    %517 = vector.broadcast %495 : vector<1x128xf32> to vector<8x128xf32>
    %518 = arith.mulf %516, %517 : vector<8x128xf32>
    %519 = vector.broadcast %496 : vector<1x128xf32> to vector<8x128xf32>
    %520 = arith.addf %518, %519 : vector<8x128xf32>
    %cst_263 = arith.constant 0.000000e+00 : f32
    %521 = vector.broadcast %cst_263 : f32 to vector<8x128xf32>
    %522 = arith.maximumf %520, %521 : vector<8x128xf32>
    %c0_264 = arith.constant 0 : index
    %c0_265 = arith.constant 0 : index
    %523 = vector.load %arg27[%c0_264, %c0_265] : memref<128x64xf32, #tpu.memory_space<vmem>>, vector<128x64xf32>
    %cst_266 = arith.constant dense<0.000000e+00> : vector<8x64xf32>
    %524 = tpu.matmul %522, %523, %cst_266 {dimension_numbers = #tpu.dot_dimension_numbers<[1], [0], [0], [1], [0, 0, 1, 1], [], []>} : vector<8x128xf32>, vector<128x64xf32>, vector<8x64xf32> -> vector<8x64xf32>
    %c0_267 = arith.constant 0 : index
    %c0_268 = arith.constant 0 : index
    %525 = vector.load %arg28[%c0_267, %c0_268] : memref<1x64xf32, #tpu.memory_space<vmem>>, vector<1x64xf32>
    %526 = vector.broadcast %525 : vector<1x64xf32> to vector<8x64xf32>
    %527 = arith.addf %524, %526 : vector<8x64xf32>
    %c0_269 = arith.constant 0 : index
    %c0_270 = arith.constant 0 : index
    %528 = vector.load %arg29[%c0_269, %c0_270] : memref<1x64xf32, #tpu.memory_space<vmem>>, vector<1x64xf32>
    %c0_271 = arith.constant 0 : index
    %c0_272 = arith.constant 0 : index
    %529 = vector.load %arg30[%c0_271, %c0_272] : memref<1x64xf32, #tpu.memory_space<vmem>>, vector<1x64xf32>
    %cst_273 = arith.constant dense<0.000000e+00> : vector<64xf32>
    %530 = vector.multi_reduction <add>, %527, %cst_273 [0] : vector<8x64xf32> to vector<64xf32>
    %531 = vector.shape_cast %530 : vector<64xf32> to vector<1x64xf32>
    %cst_274 = arith.constant 8.000000e+00 : f32
    %532 = vector.broadcast %cst_274 : f32 to vector<1x64xf32>
    %533 = arith.divf %531, %532 : vector<1x64xf32>
    %534 = arith.mulf %527, %527 : vector<8x64xf32>
    %cst_275 = arith.constant dense<0.000000e+00> : vector<64xf32>
    %535 = vector.multi_reduction <add>, %534, %cst_275 [0] : vector<8x64xf32> to vector<64xf32>
    %536 = vector.shape_cast %535 : vector<64xf32> to vector<1x64xf32>
    %cst_276 = arith.constant 8.000000e+00 : f32
    %537 = vector.broadcast %cst_276 : f32 to vector<1x64xf32>
    %538 = arith.divf %536, %537 : vector<1x64xf32>
    %539 = arith.mulf %533, %533 : vector<1x64xf32>
    %540 = arith.subf %538, %539 : vector<1x64xf32>
    %cst_277 = arith.constant 0.000000e+00 : f32
    %541 = vector.broadcast %cst_277 : f32 to vector<1x64xf32>
    %542 = arith.maximumf %540, %541 : vector<1x64xf32>
    %543 = vector.broadcast %533 : vector<1x64xf32> to vector<8x64xf32>
    %544 = arith.subf %527, %543 : vector<8x64xf32>
    %cst_278 = arith.constant 9.99999974E-6 : f32
    %545 = vector.broadcast %cst_278 : f32 to vector<1x64xf32>
    %546 = arith.addf %542, %545 : vector<1x64xf32>
    %547 = math.rsqrt %546 : vector<1x64xf32>
    %548 = vector.broadcast %547 : vector<1x64xf32> to vector<8x64xf32>
    %549 = arith.mulf %544, %548 : vector<8x64xf32>
    %550 = vector.broadcast %528 : vector<1x64xf32> to vector<8x64xf32>
    %551 = arith.mulf %549, %550 : vector<8x64xf32>
    %552 = vector.broadcast %529 : vector<1x64xf32> to vector<8x64xf32>
    %553 = arith.addf %551, %552 : vector<8x64xf32>
    %cst_279 = arith.constant 0.000000e+00 : f32
    %554 = vector.broadcast %cst_279 : f32 to vector<8x64xf32>
    %555 = arith.maximumf %553, %554 : vector<8x64xf32>
    %c0_280 = arith.constant 0 : index
    %c0_281 = arith.constant 0 : index
    %556 = vector.load %arg31[%c0_280, %c0_281] : memref<64x2xf32, #tpu.memory_space<vmem>>, vector<64x2xf32>
    %cst_282 = arith.constant dense<0.000000e+00> : vector<8x2xf32>
    %557 = tpu.matmul %555, %556, %cst_282 {dimension_numbers = #tpu.dot_dimension_numbers<[1], [0], [0], [1], [0, 0, 1, 1], [], []>} : vector<8x64xf32>, vector<64x2xf32>, vector<8x2xf32> -> vector<8x2xf32>
    %c0_283 = arith.constant 0 : index
    %c0_284 = arith.constant 0 : index
    %558 = vector.load %arg32[%c0_283, %c0_284] : memref<1x2xf32, #tpu.memory_space<vmem>>, vector<1x2xf32>
    %559 = vector.broadcast %558 : vector<1x2xf32> to vector<8x2xf32>
    %560 = arith.addf %557, %559 : vector<8x2xf32>
    %c0_285 = arith.constant 0 : index
    %c0_286 = arith.constant 0 : index
    %561 = vector.load %arg33[%c0_285, %c0_286] : memref<1x2xf32, #tpu.memory_space<vmem>>, vector<1x2xf32>
    %c0_287 = arith.constant 0 : index
    %c0_288 = arith.constant 0 : index
    %562 = vector.load %arg34[%c0_287, %c0_288] : memref<1x2xf32, #tpu.memory_space<vmem>>, vector<1x2xf32>
    %cst_289 = arith.constant dense<0.000000e+00> : vector<2xf32>
    %563 = vector.multi_reduction <add>, %560, %cst_289 [0] : vector<8x2xf32> to vector<2xf32>
    %564 = vector.shape_cast %563 : vector<2xf32> to vector<1x2xf32>
    %cst_290 = arith.constant 8.000000e+00 : f32
    %565 = vector.broadcast %cst_290 : f32 to vector<1x2xf32>
    %566 = arith.divf %564, %565 : vector<1x2xf32>
    %567 = arith.mulf %560, %560 : vector<8x2xf32>
    %cst_291 = arith.constant dense<0.000000e+00> : vector<2xf32>
    %568 = vector.multi_reduction <add>, %567, %cst_291 [0] : vector<8x2xf32> to vector<2xf32>
    %569 = vector.shape_cast %568 : vector<2xf32> to vector<1x2xf32>
    %cst_292 = arith.constant 8.000000e+00 : f32
    %570 = vector.broadcast %cst_292 : f32 to vector<1x2xf32>
    %571 = arith.divf %569, %570 : vector<1x2xf32>
    %572 = arith.mulf %566, %566 : vector<1x2xf32>
    %573 = arith.subf %571, %572 : vector<1x2xf32>
    %cst_293 = arith.constant 0.000000e+00 : f32
    %574 = vector.broadcast %cst_293 : f32 to vector<1x2xf32>
    %575 = arith.maximumf %573, %574 : vector<1x2xf32>
    %576 = vector.broadcast %566 : vector<1x2xf32> to vector<8x2xf32>
    %577 = arith.subf %560, %576 : vector<8x2xf32>
    %cst_294 = arith.constant 9.99999974E-6 : f32
    %578 = vector.broadcast %cst_294 : f32 to vector<1x2xf32>
    %579 = arith.addf %575, %578 : vector<1x2xf32>
    %580 = math.rsqrt %579 : vector<1x2xf32>
    %581 = vector.broadcast %580 : vector<1x2xf32> to vector<8x2xf32>
    %582 = arith.mulf %577, %581 : vector<8x2xf32>
    %583 = vector.broadcast %561 : vector<1x2xf32> to vector<8x2xf32>
    %584 = arith.mulf %582, %583 : vector<8x2xf32>
    %585 = vector.broadcast %562 : vector<1x2xf32> to vector<8x2xf32>
    %586 = arith.addf %584, %585 : vector<8x2xf32>
    %cst_295 = arith.constant 0.000000e+00 : f32
    %587 = vector.broadcast %cst_295 : f32 to vector<8x2xf32>
    %588 = arith.maximumf %586, %587 : vector<8x2xf32>
    %cst_296 = arith.constant dense<0xFF800000> : vector<8xf32>
    %589 = vector.multi_reduction <maximumf>, %588, %cst_296 [1] : vector<8x2xf32> to vector<8xf32>
    %590 = vector.shape_cast %589 : vector<8xf32> to vector<8x1xf32>
    %591 = vector.broadcast %590 : vector<8x1xf32> to vector<8x2xf32>
    %592 = arith.subf %588, %591 : vector<8x2xf32>
    %593 = math.exp %592 : vector<8x2xf32>
    %cst_297 = arith.constant dense<0.000000e+00> : vector<8xf32>
    %594 = vector.multi_reduction <add>, %593, %cst_297 [1] : vector<8x2xf32> to vector<8xf32>
    %595 = vector.shape_cast %594 : vector<8xf32> to vector<8x1xf32>
    %596 = vector.broadcast %595 : vector<8x1xf32> to vector<8x2xf32>
    %597 = arith.divf %593, %596 : vector<8x2xf32>
    %c0_298 = arith.constant 0 : index
    %c0_299 = arith.constant 0 : index
    %598 = vector.load %arg37[%c0_298, %c0_299] : memref<8x2xf32, #tpu.memory_space<vmem>>, vector<8x2xf32>
    tpu.vector_store %arg37[%c0_298, %c0_299], %597 {strides = array<i32>} : memref<8x2xf32, #tpu.memory_space<vmem>>, vector<8x2xf32>,
    return
  }
}

</mosaic_0001>

<llo_original>
// kernel: aeblstmft_forward.1
$region0: #{aeblstmft_forward.1}
  #allocation0 [shape = 'u32[]', space=smem, size = 0x4, offset = 0x4, fixed_abs, tag = 'smem constant byte address 0x4 - core index']
  #allocation1 [shape = 'u32[144,128]{1,0:T(1,128)}', space=vmem, size = 0x12000, scoped, tag = 'internal scratch']
  #allocation2 [shape = 'f32[128,1024]{1,0:T(8,128)}', space=vmem, size = 0x80000, scoped, tag = 'scratch operand']
  #allocation3 [shape = 'f32[1,1024]{1,0:T(1,128)}', space=vmem, size = 0x1000, scoped, tag = 'scratch operand']
  #allocation4 [shape = 'f32[128,512]{1,0:T(8,128)}', space=vmem, size = 0x40000, scoped, tag = 'scratch operand']
  #allocation5 [shape = 'f32[128,512]{1,0:T(8,128)}', space=vmem, size = 0x40000, scoped, tag = 'scratch operand']
  #allocation6 [shape = 'f32[2,512]{1,0:T(2,128)}', space=vmem, size = 0x1000, scoped, tag = 'scratch operand']
  #allocation7 [shape = 'f32[8,256]{1,0:T(8,128)}', space=vmem, size = 0x2000, scoped, tag = 'scratch operand']
  #allocation8 [shape = 's32[4]{0}', space=sflag, size = 0x10, scoped, tag = 'scratch operand']
  #allocation29 [shape = 's32[]', space=sflag, size = 0x4, offset = 0, fixed_abs, tag = 'sflag constant byte address 0x0 - dummy sync flag']
  #allocation30 [shape = 's32[]', space=sflag, size = 0x4, offset = 0, fixed_abs, tag = 'sflag constant byte address 0x0 - dummy sync flag']
  #allocation31 [shape = 'u32[]', space=smem, size = 0x4, offset = 0x44, fixed_abs, tag = 'smem constant byte address 0x44 - assertion arg 0']
  #allocation32 [shape = 'u32[]', space=smem, size = 0x4, offset = 0x48, fixed_abs, tag = 'smem constant byte address 0x48 - assertion arg 1']
  #allocation33 [shape = 's32[]', space=sflag, size = 0x4, offset = 0, fixed_abs, tag = 'sflag constant byte address 0x0 - dummy sync flag']
  #allocation34 [shape = 's32[]', space=sflag, size = 0x4, offset = 0, fixed_abs, tag = 'sflag constant byte address 0x0 - dummy sync flag']
  #allocation35 [shape = 's32[]', space=sflag, size = 0x4, offset = 0, fixed_abs, tag = 'sflag constant byte address 0x0 - dummy sync flag']
  #allocation36 [shape = 's32[]', space=sflag, size = 0x4, offset = 0, fixed_abs, tag = 'sflag constant byte address 0x0 - dummy sync flag']
  #allocation37 [shape = 's32[]', space=sflag, size = 0x4, offset = 0, fixed_abs, tag = 'sflag constant byte address 0x0 - dummy sync flag']
  #allocation38 [shape = 's32[]', space=sflag, size = 0x4, offset = 0, fixed_abs, tag = 'sflag constant byte address 0x0 - dummy sync flag']
  %s0 = inlined_call_operand.smem [shape: u32[38], index: -1, kind: input, shape index: {}]
  %s1 = sld [smem:[%s0]]
  %s2 = scalar_lea.smem %s0, 1
  %s3 = sld [smem:[%s2]]
  %s4 = scalar_lea.smem %s0, 2
  %s5 = sld [smem:[%s4]]
  %s6 = scalar_lea.smem %s0, 3
  %s7 = sld [smem:[%s6]]
  %s8 = scalar_lea.smem %s0, 4
  %s9 = sld [smem:[%s8]]
  %s10 = scalar_lea.smem %s0, 5
  %s11 = sld [smem:[%s10]]
  %s12 = scalar_lea.smem %s0, 6
  %s13 = sld [smem:[%s12]]
  %s14 = scalar_lea.smem %s0, 7
  %s15 = sld [smem:[%s14]]
  %s16 = scalar_lea.smem %s0, 8
  %s17 = sld [smem:[%s16]]
  %s18 = scalar_lea.smem %s0, 9
  %s19 = sld [smem:[%s18]]
  %s20 = scalar_lea.smem %s0, 10
  %s21 = sld [smem:[%s20]]
  %s22 = scalar_lea.smem %s0, 11
  %s23 = sld [smem:[%s22]]
  %s24 = scalar_lea.smem %s0, 12
  %s25 = sld [smem:[%s24]]
  %s26 = scalar_lea.smem %s0, 13
  %s27 = sld [smem:[%s26]]
  %s28 = scalar_lea.smem %s0, 14
  %s29 = sld [smem:[%s28]]
  %s30 = scalar_lea.smem %s0, 15
  %s31 = sld [smem:[%s30]]
  %s32 = scalar_lea.smem %s0, 16
  %s33 = sld [smem:[%s32]]
  %s34 = scalar_lea.smem %s0, 17
  %s35 = sld [smem:[%s34]]
  %s36 = scalar_lea.smem %s0, 18
  %s37 = sld [smem:[%s36]]
  %s38 = scalar_lea.smem %s0, 19
  %s39 = sld [smem:[%s38]]
  %s40 = scalar_lea.smem %s0, 20
  %s41 = sld [smem:[%s40]]
  %s42 = scalar_lea.smem %s0, 21
  %s43 = sld [smem:[%s42]]
  %s44 = scalar_lea.smem %s0, 22
  %s45 = sld [smem:[%s44]]
  %s46 = scalar_lea.smem %s0, 23
  %s47 = sld [smem:[%s46]]
  %s48 = scalar_lea.smem %s0, 24
  %s49 = sld [smem:[%s48]]
  %s50 = scalar_lea.smem %s0, 25
  %s51 = sld [smem:[%s50]]
  %s52 = scalar_lea.smem %s0, 26
  %s53 = sld [smem:[%s52]]
  %s54 = scalar_lea.smem %s0, 27
  %s55 = sld [smem:[%s54]]
  %s56 = scalar_lea.smem %s0, 28
  %s57 = sld [smem:[%s56]]
  %s58 = scalar_lea.smem %s0, 29
  %s59 = sld [smem:[%s58]]
  %s60 = scalar_lea.smem %s0, 30
  %s61 = sld [smem:[%s60]]
  %s62 = scalar_lea.smem %s0, 31
  %s63 = sld [smem:[%s62]]
  %s64 = scalar_lea.smem %s0, 32
  %s65 = sld [smem:[%s64]]
  %s66 = scalar_lea.smem %s0, 33
  %s67 = sld [smem:[%s66]]
  %s68 = scalar_lea.smem %s0, 34
  %s69 = sld [smem:[%s68]]
  %s70 = scalar_lea.smem %s0, 35
  %s71 = sld [smem:[%s70]]
  %s72 = scalar_lea.smem %s0, 36
  %s73 = sld [smem:[%s72]]
  %s74 = scalar_lea.smem %s0, 37
  %s75 = sld [smem:[%s74]]
  %76 = xla_tuple %s71, %s73, %s75
  %s77 = sld [smem:[#allocation0]]
  $region206: #{aeblstmft_forward.1} parent=0
    _
  %s79 = ssub.s32 1, %s77
  %s80 = scalar_select 0, %s79, %s77
  $region1: #{aeblstmft_forward.1} parent=0
    #allocation9 [shape = 'u8[45056]{0}', space=vmem, size = 0xb000, scoped, tag = 'input window, operand 1, single buffered']
    #allocation10 [shape = 's32[1]{0}', space=sflag, size = 0x4, scoped, tag = 'scoped memory for aeblstmft_forward.1']
    #allocation11 [shape = 's32[1]{0}', space=sflag, size = 0x4, scoped, tag = 'scoped memory for aeblstmft_forward.1']
    #allocation12 [shape = 'u8[512]{0}', space=vmem, size = 0x400, scoped, tag = 'input window, operand 2, single buffered']
    #allocation13 [shape = 's32[1]{0}', space=sflag, size = 0x4, scoped, tag = 'scoped memory for aeblstmft_forward.1']
    #allocation14 [shape = 'u8[36864]{0}', space=vmem, size = 0x9000, scoped, tag = 'input window, operand 5, single buffered']
    #allocation15 [shape = 'u8[512]{0}', space=vmem, size = 0x400, scoped, tag = 'input window, operand 6, single buffered']
    #allocation16 [shape = 's32[1]{0}', space=sflag, size = 0x4, scoped, tag = 'scoped memory for aeblstmft_forward.1']
    #allocation17 [shape = 'u8[28672]{0}', space=vmem, size = 0x7000, scoped, tag = 'input window, operand 9, single buffered']
    #allocation18 [shape = 'u8[512]{0}', space=vmem, size = 0x400, scoped, tag = 'input window, operand 10, single buffered']
    #allocation19 [shape = 's32[1]{0}', space=sflag, size = 0x4, scoped, tag = 'scoped memory for aeblstmft_forward.1']
    #allocation20 [shape = 'u8[28672]{0}', space=vmem, size = 0x7000, scoped, tag = 'input window, operand 15, single buffered']
    #allocation21 [shape = 'u8[131072]{0}', space=vmem, size = 0x20000, scoped, tag = 'input window, operand 23, single buffered']
    #allocation22 [shape = 's32[1]{0}', space=sflag, size = 0x4, scoped, tag = 'scoped memory for aeblstmft_forward.1']
    #allocation23 [shape = 'u8[65536]{0}', space=vmem, size = 0x10000, scoped, tag = 'input window, operand 27, single buffered']
    #allocation24 [shape = 'u8[32768]{0}', space=vmem, size = 0x8000, scoped, tag = 'input window, operand 31, single buffered']
    #allocation25 [shape = 's32[1]{0}', space=sflag, size = 0x4, scoped, tag = 'scoped memory for aeblstmft_forward.1']
    #allocation26 [shape = 'u8[4096]{0}', space=vmem, size = 0x1000, scoped, tag = 'output window, operand 0, single buffered']
    #allocation27 [shape = 'u8[4096]{0}', space=vmem, size = 0x1000, scoped, tag = 'output window, operand 1, single buffered']
    #allocation28 [shape = 's32[1]{0}', space=sflag, size = 0x4, scoped, tag = 'scoped memory for aeblstmft_forward.1']
    %81 = vsyncpa [#allocation10], 0
    %82 = vsyncpa [#allocation13], 0
    %83 = vsyncpa [#allocation16], 0
    %84 = vsyncpa [#allocation19], 0
    %85 = vsyncpa [#allocation22], 0
    %86 = vsyncpa [#allocation25], 0
    %87 = vsyncpa [#allocation11], 0
    %88 = vsyncpa [#allocation28], 0
    // Predicated region
    $region2: #{aeblstmft_forward.1} parent=1 // pred_check
      _
    $region3: #{aeblstmft_forward.1} parent=1 // pred_check_branch
      %90 = sbr.rel (0) target = $region5
    $region4: #{aeblstmft_forward.1} parent=1 // pred_region
      _
    $region5: #{aeblstmft_forward.1} parent=1 // pred_fallthru
      _
    // Predicated region
    $region6: #{aeblstmft_forward.1} parent=1 // pred_check
      _
    $region7: #{aeblstmft_forward.1} parent=1 // pred_check_branch
      %92 = sbr.rel (0) target = $region9
    $region8: #{aeblstmft_forward.1} parent=1 // pred_region
      %s94 = ssub.s32 1408, 1408
      %95 = vsyncadd [#allocation10], %s94
      %s96 = sshll.u32 [#allocation9], 4
      %s97 = int_to_ptr.vmem [resolvable:$true] %s96
      %102 = dma.hbm_to_vmem [thread:$0]  %s3, 1408, %s97, [#allocation10], 128, 128, 8
    $region9: #{aeblstmft_forward.1} parent=1 // pred_fallthru
      _
    // Predicated region
    $region10: #{aeblstmft_forward.1} parent=1 // pred_check
      _
    $region11: #{aeblstmft_forward.1} parent=1 // pred_check_branch
      %104 = sbr.rel (0) target = $region13
    $region12: #{aeblstmft_forward.1} parent=1 // pred_region
      %s106 = ssub.s32 16, 16
      %107 = vsyncadd [#allocation13], %s106
      %s109 = sshll.u32 [#allocation12], 4
      %s110 = int_to_ptr.vmem [resolvable:$true] %s109
      %112 = dma.hbm_to_vmem [thread:$0]  %s5, 16, %s110, [#allocation13]
    $region13: #{aeblstmft_forward.1} parent=1 // pred_fallthru
      _
    // Predicated region
    $region14: #{aeblstmft_forward.1} parent=1 // pred_check
      _
    $region15: #{aeblstmft_forward.1} parent=1 // pred_check_branch
      %114 = sbr.rel (0) target = $region17
    $region16: #{aeblstmft_forward.1} parent=1 // pred_region
      _
    $region17: #{aeblstmft_forward.1} parent=1 // pred_fallthru
      _
    // Predicated region
    $region18: #{aeblstmft_forward.1} parent=1 // pred_check
      _
    $region19: #{aeblstmft_forward.1} parent=1 // pred_check_branch
      %116 = sbr.rel (0) target = $region21
    $region20: #{aeblstmft_forward.1} parent=1 // pred_region
      _
    $region21: #{aeblstmft_forward.1} parent=1 // pred_fallthru
      _
    // Predicated region
    $region22: #{aeblstmft_forward.1} parent=1 // pred_check
      _
    $region23: #{aeblstmft_forward.1} parent=1 // pred_check_branch
      %118 = sbr.rel (0) target = $region25
    $region24: #{aeblstmft_forward.1} parent=1 // pred_region
      %s120 = ssub.s32 1152, 1152
      %121 = vsyncadd [#allocation13], %s120
      %s122 = sshll.u32 [#allocation14], 4
      %s123 = int_to_ptr.vmem [resolvable:$true] %s122
      %128 = dma.hbm_to_vmem [thread:$0]  %s11, 1152, %s123, [#allocation13], 128, 128, 8
    $region25: #{aeblstmft_forward.1} parent=1 // pred_fallthru
      _
    // Predicated region
    $region26: #{aeblstmft_forward.1} parent=1 // pred_check
      _
    $region27: #{aeblstmft_forward.1} parent=1 // pred_check_branch
      %130 = sbr.rel (0) target = $region29
    $region28: #{aeblstmft_forward.1} parent=1 // pred_region
      %s132 = ssub.s32 16, 16
      %133 = vsyncadd [#allocation16], %s132
      %s135 = sshll.u32 [#allocation15], 4
      %s136 = int_to_ptr.vmem [resolvable:$true] %s135
      %138 = dma.hbm_to_vmem [thread:$0]  %s13, 16, %s136, [#allocation16]
    $region29: #{aeblstmft_forward.1} parent=1 // pred_fallthru
      _
    // Predicated region
    $region30: #{aeblstmft_forward.1} parent=1 // pred_check
      _
    $region31: #{aeblstmft_forward.1} parent=1 // pred_check_branch
      %140 = sbr.rel (0) target = $region33
    $region32: #{aeblstmft_forward.1} parent=1 // pred_region
      _
    $region33: #{aeblstmft_forward.1} parent=1 // pred_fallthru
      _
    // Predicated region
    $region34: #{aeblstmft_forward.1} parent=1 // pred_check
      _
    $region35: #{aeblstmft_forward.1} parent=1 // pred_check_branch
      %142 = sbr.rel (0) target = $region37
    $region36: #{aeblstmft_forward.1} parent=1 // pred_region
      _
    $region37: #{aeblstmft_forward.1} parent=1 // pred_fallthru
      _
    // Predicated region
    $region38: #{aeblstmft_forward.1} parent=1 // pred_check
      _
    $region39: #{aeblstmft_forward.1} parent=1 // pred_check_branch
      %144 = sbr.rel (0) target = $region41
    $region40: #{aeblstmft_forward.1} parent=1 // pred_region
      %s146 = ssub.s32 896, 896
      %147 = vsyncadd [#allocation16], %s146
      %s148 = sshll.u32 [#allocation17], 4
      %s149 = int_to_ptr.vmem [resolvable:$true] %s148
      %154 = dma.hbm_to_vmem [thread:$0]  %s19, 896, %s149, [#allocation16], 128, 128, 8
    $region41: #{aeblstmft_forward.1} parent=1 // pred_fallthru
      _
    // Predicated region
    $region42: #{aeblstmft_forward.1} parent=1 // pred_check
      _
    $region43: #{aeblstmft_forward.1} parent=1 // pred_check_branch
      %156 = sbr.rel (0) target = $region45
    $region44: #{aeblstmft_forward.1} parent=1 // pred_region
      %s158 = ssub.s32 16, 16
      %159 = vsyncadd [#allocation19], %s158
      %s161 = sshll.u32 [#allocation18], 4
      %s162 = int_to_ptr.vmem [resolvable:$true] %s161
      %164 = dma.hbm_to_vmem [thread:$0]  %s21, 16, %s162, [#allocation19]
    $region45: #{aeblstmft_forward.1} parent=1 // pred_fallthru
      _
    // Predicated region
    $region46: #{aeblstmft_forward.1} parent=1 // pred_check
      _
    $region47: #{aeblstmft_forward.1} parent=1 // pred_check_branch
      %166 = sbr.rel (0) target = $region49
    $region48: #{aeblstmft_forward.1} parent=1 // pred_region
      _
    $region49: #{aeblstmft_forward.1} parent=1 // pred_fallthru
      _
    // Predicated region
    $region50: #{aeblstmft_forward.1} parent=1 // pred_check
      _
    $region51: #{aeblstmft_forward.1} parent=1 // pred_check_branch
      %168 = sbr.rel (0) target = $region53
    $region52: #{aeblstmft_forward.1} parent=1 // pred_region
      _
    $region53: #{aeblstmft_forward.1} parent=1 // pred_fallthru
      _
    // Predicated region
    $region54: #{aeblstmft_forward.1} parent=1 // pred_check
      _
    $region55: #{aeblstmft_forward.1} parent=1 // pred_check_branch
      %170 = sbr.rel (0) target = $region57
    $region56: #{aeblstmft_forward.1} parent=1 // pred_region
      _
    $region57: #{aeblstmft_forward.1} parent=1 // pred_fallthru
      _
    // Predicated region
    $region58: #{aeblstmft_forward.1} parent=1 // pred_check
      _
    $region59: #{aeblstmft_forward.1} parent=1 // pred_check_branch
      %172 = sbr.rel (0) target = $region61
    $region60: #{aeblstmft_forward.1} parent=1 // pred_region
      _
    $region61: #{aeblstmft_forward.1} parent=1 // pred_fallthru
      _
    // Predicated region
    $region62: #{aeblstmft_forward.1} parent=1 // pred_check
      _
    $region63: #{aeblstmft_forward.1} parent=1 // pred_check_branch
      %174 = sbr.rel (0) target = $region65
    $region64: #{aeblstmft_forward.1} parent=1 // pred_region
      %s176 = ssub.s32 896, 896
      %177 = vsyncadd [#allocation19], %s176
      %s178 = sshll.u32 [#allocation20], 4
      %s179 = int_to_ptr.vmem [resolvable:$true] %s178
      %184 = dma.hbm_to_vmem [thread:$0]  %s31, 896, %s179, [#allocation19], 128, 128, 8
    $region65: #{aeblstmft_forward.1} parent=1 // pred_fallthru
      _
    // Predicated region
    $region66: #{aeblstmft_forward.1} parent=1 // pred_check
      _
    $region67: #{aeblstmft_forward.1} parent=1 // pred_check_branch
      %186 = sbr.rel (0) target = $region69
    $region68: #{aeblstmft_forward.1} parent=1 // pred_region
      _
    $region69: #{aeblstmft_forward.1} parent=1 // pred_fallthru
      _
    // Predicated region
    $region70: #{aeblstmft_forward.1} parent=1 // pred_check
      _
    $region71: #{aeblstmft_forward.1} parent=1 // pred_check_branch
      %188 = sbr.rel (0) target = $region73
    $region72: #{aeblstmft_forward.1} parent=1 // pred_region
      _
    $region73: #{aeblstmft_forward.1} parent=1 // pred_fallthru
      _
    // Predicated region
    $region74: #{aeblstmft_forward.1} parent=1 // pred_check
      _
    $region75: #{aeblstmft_forward.1} parent=1 // pred_check_branch
      %190 = sbr.rel (0) target = $region77
    $region76: #{aeblstmft_forward.1} parent=1 // pred_region
      _
    $region77: #{aeblstmft_forward.1} parent=1 // pred_fallthru
      _
    // Predicated region
    $region78: #{aeblstmft_forward.1} parent=1 // pred_check
      _
    $region79: #{aeblstmft_forward.1} parent=1 // pred_check_branch
      %192 = sbr.rel (0) target = $region81
    $region80: #{aeblstmft_forward.1} parent=1 // pred_region
      %s194 = ssub.s32 4096, 4096
      %195 = vsyncadd [#allocation22], %s194
      %s196 = sshll.u32 [#allocation21], 4
      %s197 = int_to_ptr.vmem [resolvable:$true] %s196
      %202 = dma.hbm_to_vmem [thread:$0]  %s47, 4096, %s197, [#allocation22], 128, 128, 8
    $region81: #{aeblstmft_forward.1} parent=1 // pred_fallthru
      _
    // Predicated region
    $region82: #{aeblstmft_forward.1} parent=1 // pred_check
      _
    $region83: #{aeblstmft_forward.1} parent=1 // pred_check_branch
      %204 = sbr.rel (0) target = $region85
    $region84: #{aeblstmft_forward.1} parent=1 // pred_region
      _
    $region85: #{aeblstmft_forward.1} parent=1 // pred_fallthru
      _
    // Predicated region
    $region86: #{aeblstmft_forward.1} parent=1 // pred_check
      _
    $region87: #{aeblstmft_forward.1} parent=1 // pred_check_branch
      %206 = sbr.rel (0) target = $region89
    $region88: #{aeblstmft_forward.1} parent=1 // pred_region
      _
    $region89: #{aeblstmft_forward.1} parent=1 // pred_fallthru
      _
    // Predicated region
    $region90: #{aeblstmft_forward.1} parent=1 // pred_check
      _
    $region91: #{aeblstmft_forward.1} parent=1 // pred_check_branch
      %208 = sbr.rel (0) target = $region93
    $region92: #{aeblstmft_forward.1} parent=1 // pred_region
      _
    $region93: #{aeblstmft_forward.1} parent=1 // pred_fallthru
      _
    // Predicated region
    $region94: #{aeblstmft_forward.1} parent=1 // pred_check
      _
    $region95: #{aeblstmft_forward.1} parent=1 // pred_check_branch
      %210 = sbr.rel (0) target = $region97
    $region96: #{aeblstmft_forward.1} parent=1 // pred_region
      %s212 = ssub.s32 2048, 2048
      %213 = vsyncadd [#allocation22], %s212
      %s214 = sshll.u32 [#allocation23], 4
      %s215 = int_to_ptr.vmem [resolvable:$true] %s214
      %220 = dma.hbm_to_vmem [thread:$0]  %s55, 2048, %s215, [#allocation22], 128, 128, 8
    $region97: #{aeblstmft_forward.1} parent=1 // pred_fallthru
      _
    // Predicated region
    $region98: #{aeblstmft_forward.1} parent=1 // pred_check
      _
    $region99: #{aeblstmft_forward.1} parent=1 // pred_check_branch
      %222 = sbr.rel (0) target = $region101
    $region100: #{aeblstmft_forward.1} parent=1 // pred_region
      _
    $region101: #{aeblstmft_forward.1} parent=1 // pred_fallthru
      _
    // Predicated region
    $region102: #{aeblstmft_forward.1} parent=1 // pred_check
      _
    $region103: #{aeblstmft_forward.1} parent=1 // pred_check_branch
      %224 = sbr.rel (0) target = $region105
    $region104: #{aeblstmft_forward.1} parent=1 // pred_region
      _
    $region105: #{aeblstmft_forward.1} parent=1 // pred_fallthru
      _
    // Predicated region
    $region106: #{aeblstmft_forward.1} parent=1 // pred_check
      _
    $region107: #{aeblstmft_forward.1} parent=1 // pred_check_branch
      %226 = sbr.rel (0) target = $region109
    $region108: #{aeblstmft_forward.1} parent=1 // pred_region
      _
    $region109: #{aeblstmft_forward.1} parent=1 // pred_fallthru
      _
    // Predicated region
    $region110: #{aeblstmft_forward.1} parent=1 // pred_check
      _
    $region111: #{aeblstmft_forward.1} parent=1 // pred_check_branch
      %228 = sbr.rel (0) target = $region113
    $region112: #{aeblstmft_forward.1} parent=1 // pred_region
      %s230 = ssub.s32 1024, 1024
      %231 = vsyncadd [#allocation25], %s230
      %s232 = sshll.u32 [#allocation24], 4
      %s233 = int_to_ptr.vmem [resolvable:$true] %s232
      %238 = dma.hbm_to_vmem [thread:$0]  %s63, 1024, %s233, [#allocation25], 128, 128, 8
    $region113: #{aeblstmft_forward.1} parent=1 // pred_fallthru
      _
    // Predicated region
    $region114: #{aeblstmft_forward.1} parent=1 // pred_check
      _
    $region115: #{aeblstmft_forward.1} parent=1 // pred_check_branch
      %240 = sbr.rel (0) target = $region117
    $region116: #{aeblstmft_forward.1} parent=1 // pred_region
      _
    $region117: #{aeblstmft_forward.1} parent=1 // pred_fallthru
      _
    // Predicated region
    $region118: #{aeblstmft_forward.1} parent=1 // pred_check
      _
    $region119: #{aeblstmft_forward.1} parent=1 // pred_check_branch
      %242 = sbr.rel (0) target = $region121
    $region120: #{aeblstmft_forward.1} parent=1 // pred_region
      _
    $region121: #{aeblstmft_forward.1} parent=1 // pred_fallthru
      _
    // Predicated region
    $region122: #{aeblstmft_forward.1} parent=1 // pred_check
      _
    $region123: #{aeblstmft_forward.1} parent=1 // pred_check_branch
      %244 = sbr.rel (0) target = $region125
    $region124: #{aeblstmft_forward.1} parent=1 // pred_region
      _
    $region125: #{aeblstmft_forward.1} parent=1 // pred_fallthru
      _
    // Predicated region
    $region126: #{aeblstmft_forward.1} parent=1 // pred_check
      _
    $region127: #{aeblstmft_forward.1} parent=1 // pred_check_branch
      %246 = sbr.rel (0) target = $region129
    $region128: #{aeblstmft_forward.1} parent=1 // pred_region
      %247 = dma.done [#allocation10], 1408
    $region129: #{aeblstmft_forward.1} parent=1 // pred_fallthru
      _
    // Predicated region
    $region130: #{aeblstmft_forward.1} parent=1 // pred_check
      _
    $region131: #{aeblstmft_forward.1} parent=1 // pred_check_branch
      %249 = sbr.rel (0) target = $region133
    $region132: #{aeblstmft_forward.1} parent=1 // pred_region
      %250 = dma.done [#allocation13], 16
    $region133: #{aeblstmft_forward.1} parent=1 // pred_fallthru
      _
    // Predicated region
    $region134: #{aeblstmft_forward.1} parent=1 // pred_check
      _
    $region135: #{aeblstmft_forward.1} parent=1 // pred_check_branch
      %252 = sbr.rel (0) target = $region137
    $region136: #{aeblstmft_forward.1} parent=1 // pred_region
      %253 = dma.done [#allocation13], 1152
    $region137: #{aeblstmft_forward.1} parent=1 // pred_fallthru
      _
    // Predicated region
    $region138: #{aeblstmft_forward.1} parent=1 // pred_check
      _
    $region139: #{aeblstmft_forward.1} parent=1 // pred_check_branch
      %255 = sbr.rel (0) target = $region141
    $region140: #{aeblstmft_forward.1} parent=1 // pred_region
      %256 = dma.done [#allocation16], 16
    $region141: #{aeblstmft_forward.1} parent=1 // pred_fallthru
      _
    // Predicated region
    $region142: #{aeblstmft_forward.1} parent=1 // pred_check
      _
    $region143: #{aeblstmft_forward.1} parent=1 // pred_check_branch
      %258 = sbr.rel (0) target = $region145
    $region144: #{aeblstmft_forward.1} parent=1 // pred_region
      %259 = dma.done [#allocation16], 896
    $region145: #{aeblstmft_forward.1} parent=1 // pred_fallthru
      _
    // Predicated region
    $region146: #{aeblstmft_forward.1} parent=1 // pred_check
      _
    $region147: #{aeblstmft_forward.1} parent=1 // pred_check_branch
      %261 = sbr.rel (0) target = $region149
    $region148: #{aeblstmft_forward.1} parent=1 // pred_region
      %262 = dma.done [#allocation19], 16
    $region149: #{aeblstmft_forward.1} parent=1 // pred_fallthru
      _
    // Predicated region
    $region150: #{aeblstmft_forward.1} parent=1 // pred_check
      _
    $region151: #{aeblstmft_forward.1} parent=1 // pred_check_branch
      %264 = sbr.rel (0) target = $region153
    $region152: #{aeblstmft_forward.1} parent=1 // pred_region
      %265 = dma.done [#allocation19], 896
    $region153: #{aeblstmft_forward.1} parent=1 // pred_fallthru
      _
    // Predicated region
    $region154: #{aeblstmft_forward.1} parent=1 // pred_check
      _
    $region155: #{aeblstmft_forward.1} parent=1 // pred_check_branch
      %267 = sbr.rel (0) target = $region157
    $region156: #{aeblstmft_forward.1} parent=1 // pred_region
      %268 = dma.done [#allocation22], 4096
    $region157: #{aeblstmft_forward.1} parent=1 // pred_fallthru
      _
    // Predicated region
    $region158: #{aeblstmft_forward.1} parent=1 // pred_check
      _
    $region159: #{aeblstmft_forward.1} parent=1 // pred_check_branch
      %270 = sbr.rel (0) target = $region161
    $region160: #{aeblstmft_forward.1} parent=1 // pred_region
      %271 = dma.done [#allocation22], 2048
    $region161: #{aeblstmft_forward.1} parent=1 // pred_fallthru
      _
    // Predicated region
    $region162: #{aeblstmft_forward.1} parent=1 // pred_check
      _
    $region163: #{aeblstmft_forward.1} parent=1 // pred_check_branch
      %273 = sbr.rel (0) target = $region165
    $region164: #{aeblstmft_forward.1} parent=1 // pred_region
      %274 = dma.done [#allocation25], 1024
    $region165: #{aeblstmft_forward.1} parent=1 // pred_fallthru
      _
    // Predicated region
    $region166: #{aeblstmft_forward.1} parent=1 // pred_check
      _
    $region167: #{aeblstmft_forward.1} parent=1 // pred_check_branch
      %276 = sbr.rel target = $region169
    $region168: #{aeblstmft_forward.1} parent=1 // pred_region
      %277 = sst [smem:[#allocation31]] [#allocation30]
      %278 = sst [smem:[#allocation32]] [#allocation29]
    $region169: #{aeblstmft_forward.1} parent=1 // pred_fallthru
      _
    %280 = shalt.err (0)
    %s282 = sshll.u32 [#allocation2], 4
    %s283 = int_to_ptr.vmem [resolvable:$true] %s282
    %285 = dma.hbm_to_vmem [thread:$0]  %s35, 16384, %s283, [#allocation8]
    %s286 = scalar_lea.sflag [#allocation8], 1
    // Predicated region
    $region170: #{aeblstmft_forward.1} parent=1 // pred_check
      _
    $region171: #{aeblstmft_forward.1} parent=1 // pred_check_branch
      %288 = sbr.rel target = $region173
    $region172: #{aeblstmft_forward.1} parent=1 // pred_region
      %289 = sst [smem:[#allocation31]] [#allocation34]
      %290 = sst [smem:[#allocation32]] [#allocation33]
    $region173: #{aeblstmft_forward.1} parent=1 // pred_fallthru
      _
    %292 = shalt.err (0)
    %s294 = sshll.u32 [#allocation3], 4
    %s295 = int_to_ptr.vmem [resolvable:$true] %s294
    %297 = dma.hbm_to_vmem [thread:$0]  %s37, 128, %s295, %s286
    %s298 = scalar_lea.sflag [#allocation8], 2
    // Predicated region
    $region174: #{aeblstmft_forward.1} parent=1 // pred_check
      _
    $region175: #{aeblstmft_forward.1} parent=1 // pred_check_branch
      %300 = sbr.rel target = $region177
    $region176: #{aeblstmft_forward.1} parent=1 // pred_region
      %301 = sst [smem:[#allocation31]] [#allocation36]
      %302 = sst [smem:[#allocation32]] [#allocation35]
    $region177: #{aeblstmft_forward.1} parent=1 // pred_fallthru
      _
    %304 = shalt.err (0)
    %s306 = sshll.u32 [#allocation4], 4
    %s307 = int_to_ptr.vmem [resolvable:$true] %s306
    %309 = dma.hbm_to_vmem [thread:$0]  %s39, 8192, %s307, %s298
    %s310 = scalar_lea.sflag [#allocation8], 3
    // Predicated region
    $region178: #{aeblstmft_forward.1} parent=1 // pred_check
      _
    $region179: #{aeblstmft_forward.1} parent=1 // pred_check_branch
      %312 = sbr.rel target = $region181
    $region180: #{aeblstmft_forward.1} parent=1 // pred_region
      %313 = sst [smem:[#allocation31]] [#allocation38]
      %314 = sst [smem:[#allocation32]] [#allocation37]
    $region181: #{aeblstmft_forward.1} parent=1 // pred_fallthru
      _
    %316 = shalt.err (0)
    %s318 = sshll.u32 [#allocation5], 4
    %s319 = int_to_ptr.vmem [resolvable:$true] %s318
    %321 = dma.hbm_to_vmem [thread:$0]  %s41, 8192, %s319, %s310
    %v322 = vld [vmem:[%s1] sm:$0xff]
    %v323 = vld [vmem:[#allocation9] sm:$0xff]
    %v324 = vld [vmem:[#allocation9 + $0x8] sm:$0xff]
    %v325 = vld [vmem:[#allocation9 + $0x10] sm:$0xff]
    %v326 = vld [vmem:[#allocation9 + $0x18] sm:$0xff]
    %v327 = vld [vmem:[#allocation9 + $0x20] sm:$0xff]
    %v328 = vld [vmem:[#allocation9 + $0x28] sm:$0xff]
    %v329 = vld [vmem:[#allocation9 + $0x30] sm:$0xff]
    %v330 = vld [vmem:[#allocation9 + $0x38] sm:$0xff]
    %v331 = vld [vmem:[#allocation9 + $0x40] sm:$0xff]
    %v332 = vld [vmem:[#allocation9 + $0x48] sm:$0xff]
    %v333 = vld [vmem:[#allocation9 + $0x50] sm:$0xff]
    %v334 = vld [vmem:[#allocation12] sm:$0x1]
    %v336 = vlaneseq
    %v337 = vshrl.u32 %v336, 7
    %v338 = vsub.s32 0, %v337
    %v339 = vrot.slane %v334, %v338
    %vm341 = vcmask 719872
    %v343 = vsel %vm341, %v322, 0
    %345 = vmatprep.subr.mxu0 0.0
    %346 = vmatpush1.msra.mxu0 %v323
    %347 = vmatprep.subr.mxu0 0.0
    %348 = vmatpush1.msra.mxu0 %v324
    %349 = vmatprep.subr.mxu0 0.0
    %350 = vmatpush1.msra.mxu0 %v325
    %351 = vmatprep.subr.mxu0 0.0
    %352 = vmatpush1.msra.mxu0 %v326
    %353 = vmatprep.subr.mxu0 0.0
    %354 = vmatpush1.msra.mxu0 %v327
    %355 = vmatprep.subr.mxu0 0.0
    %356 = vmatpush1.msra.mxu0 %v328
    %357 = vmatprep.subr.mxu0 0.0
    %358 = vmatpush1.msra.mxu0 %v329
    %359 = vmatprep.subr.mxu0 0.0
    %360 = vmatpush1.msra.mxu0 %v330
    %361 = vmatprep.subr.mxu0 0.0
    %362 = vmatpush1.msra.mxu0 %v331
    %363 = vmatprep.subr.mxu0 0.0
    %364 = vmatpush1.msra.mxu0 %v332
    %365 = vmatprep.subr.mxu0 0.0
    %366 = vmatpush1.msra.mxu0 %v333
    %367 = vmatprep.subr.mxu0 0.0
    %368 = vmatpush1.msra.mxu0 0.0
    %369 = vmatprep.subr.mxu0 0.0
    %370 = vmatpush1.msra.mxu0 0.0
    %371 = vmatprep.subr.mxu0 0.0
    %372 = vmatpush1.msra.mxu0 0.0
    %373 = vmatprep.subr.mxu0 0.0
    %374 = vmatpush1.msra.mxu0 0.0
    %375 = vmatprep.subr.mxu0 0.0
    %376 = vmatpush1.msra.mxu0 0.0
    %377 = vmatprep.subr.mxu0 0.0
    %378 = vmatpush1.msra.mxu0 0.0
    %379 = vmatprep.subr.mxu0 0.0
    %380 = vmatpush1.msra.mxu0 0.0
    %381 = vmatprep.subr.mxu0 0.0
    %382 = vmatpush1.msra.mxu0 0.0
    %383 = vmatprep.subr.mxu0 0.0
    %384 = vmatpush1.msra.mxu0 0.0
    %385 = vmatprep.subr.mxu0 0.0
    %386 = vmatpush1.msra.mxu0 0.0
    %387 = vmatprep.subr.mxu0 0.0
    %388 = vmatpush1.msra.mxu0 0.0
    %389 = vmatprep.subr.mxu0 0.0
    %390 = vmatpush1.msra.mxu0 0.0
    %391 = vmatprep.subr.mxu0 0.0
    %392 = vmatpush1.msra.mxu0 0.0
    %393 = vmatprep.subr.mxu0 0.0
    %394 = vmatpush1.msra.mxu0 0.0
    %395 = vmatprep.subr.mxu0 0.0
    %396 = vmatpush1.msra.mxu0 0.0
    %397 = vmatprep.subr.mxu0 0.0
    %398 = vmatpush1.msra.mxu0 0.0
    %399 = vmatprep.subr.mxu0 0.0
    %400 = vmatpush1.msra.mxu0 0.0
    %401 = vmatprep.subr.mxu0 0.0
    %402 = vmatpush1.msra.mxu0 0.0
    %403 = vmatprep.subr.mxu0 0.0
    %404 = vmatpush1.msra.mxu0 0.0
    %405 = vmatprep.subr.mxu0 0.0
    %406 = vmatpush1.msra.mxu0 0.0
    %407 = vmatprep.subr.mxu0 0.0
    %408 = vmatpush1.msra.mxu0 0.0
    %409 = vmatprep.mubr.f32.mxu0 0.0
    %410 = vmatmul.mubr.f32.gmra.mrb[0].mxu0 %v343
    %v411 = vpop.f32.mrb[0].mxu0
    %v412 = vadd.f32 %v339, %v411
    %v413 = vpop.f32.mrb[0].mxu0
    %414 = vdwg.mxu0
    %v415 = vld [vmem:[%s7] sm:$0x1]
    %v416 = vld [vmem:[%s9] sm:$0x1]
    %vm417 = vcmask 572416
    %v418 = vsel %vm417, %v412, 0.0
    %v419 = vrot.slane %v418, 4
    %v420 = vadd.f32 %v418, %v419
    %v421 = vrot.slane %v420, 2
    %v422 = vadd.f32 %v420, %v421
    %v423 = vrot.slane %v422, 1
    %v424 = vadd.f32 %v422, %v423
    %v425 = vrcp.pop 8.0
    %v426 = vmul.f32 %v424, %v425
    %v427 = vmul.f32 %v412, %v412
    %v428 = vsel %vm417, %v427, 0.0
    %v429 = vrot.slane %v428, 4
    %v430 = vadd.f32 %v428, %v429
    %v431 = vrot.slane %v430, 2
    %v432 = vadd.f32 %v430, %v431
    %v433 = vrot.slane %v432, 1
    %v434 = vadd.f32 %v432, %v433
    %v435 = vmul.f32 %v434, %v425
    %v436 = vmul.f32 %v426, %v426
    %v437 = vsub.f32 %v435, %v436
    %v438 = vmax.f32 %v437, 0.0
    %v439 = vsub.f32 %v412, %v426
    %v440 = vadd.f32 %v438, 1e-05
    %v441 = vrsqrt.pop %v440
    %v442 = vmul.f32 %v439, %v441
    %v444 = vlaneseq
    %v445 = vshrl.u32 %v444, 7
    %v446 = vsub.s32 0, %v445
    %v447 = vrot.slane %v415, %v446
    %v449 = vmul.f32 %v442, %v447
    %v451 = vlaneseq
    %v452 = vshrl.u32 %v451, 7
    %v453 = vsub.s32 0, %v452
    %v454 = vrot.slane %v416, %v453
    %v456 = vadd.f32 %v449, %v454
    %v457 = vmax.f32 %v456, 0.0
    %v458 = vld [vmem:[#allocation14] sm:$0xff]
    %v459 = vld [vmem:[#allocation14 + $0x8] sm:$0xff]
    %v460 = vld [vmem:[#allocation14 + $0x10] sm:$0xff]
    %v461 = vld [vmem:[#allocation14 + $0x18] sm:$0xff]
    %v462 = vld [vmem:[#allocation14 + $0x20] sm:$0xff]
    %v463 = vld [vmem:[#allocation14 + $0x28] sm:$0xff]
    %v464 = vld [vmem:[#allocation14 + $0x30] sm:$0xff]
    %v465 = vld [vmem:[#allocation14 + $0x38] sm:$0xff]
    %v466 = vld [vmem:[#allocation14 + $0x40] sm:$0x3f]
    %v467 = vld [vmem:[#allocation15] sm:$0x1]
    %v469 = vlaneseq
    %v470 = vshrl.u32 %v469, 7
    %v471 = vsub.s32 0, %v470
    %v472 = vrot.slane %v467, %v471
    %v475 = vsel %vm417, %v457, 0
    %vm477 = vcmask 1045504
    %v479 = vsel %vm477, %v466, 0
    %481 = vmatprep.subr.mxu0 0.0
    %482 = vmatpush1.msra.mxu0 %v458
    %483 = vmatprep.subr.mxu0 0.0
    %484 = vmatpush1.msra.mxu0 %v459
    %485 = vmatprep.subr.mxu0 0.0
    %486 = vmatpush1.msra.mxu0 %v460
    %487 = vmatprep.subr.mxu0 0.0
    %488 = vmatpush1.msra.mxu0 %v461
    %489 = vmatprep.subr.mxu0 0.0
    %490 = vmatpush1.msra.mxu0 %v462
    %491 = vmatprep.subr.mxu0 0.0
    %492 = vmatpush1.msra.mxu0 %v463
    %493 = vmatprep.subr.mxu0 0.0
    %494 = vmatpush1.msra.mxu0 %v464
    %495 = vmatprep.subr.mxu0 0.0
    %496 = vmatpush1.msra.mxu0 %v465
    %497 = vmatprep.subr.mxu0 0.0
    %498 = vmatpush1.msra.mxu0 %v479
    %499 = vmatprep.subr.mxu0 0.0
    %500 = vmatpush1.msra.mxu0 0.0
    %501 = vmatprep.subr.mxu0 0.0
    %502 = vmatpush1.msra.mxu0 0.0
    %503 = vmatprep.subr.mxu0 0.0
    %504 = vmatpush1.msra.mxu0 0.0
    %505 = vmatprep.subr.mxu0 0.0
    %506 = vmatpush1.msra.mxu0 0.0
    %507 = vmatprep.subr.mxu0 0.0
    %508 = vmatpush1.msra.mxu0 0.0
    %509 = vmatprep.subr.mxu0 0.0
    %510 = vmatpush1.msra.mxu0 0.0
    %511 = vmatprep.subr.mxu0 0.0
    %512 = vmatpush1.msra.mxu0 0.0
    %513 = vmatprep.subr.mxu0 0.0
    %514 = vmatpush1.msra.mxu0 0.0
    %515 = vmatprep.subr.mxu0 0.0
    %516 = vmatpush1.msra.mxu0 0.0
    %517 = vmatprep.subr.mxu0 0.0
    %518 = vmatpush1.msra.mxu0 0.0
    %519 = vmatprep.subr.mxu0 0.0
    %520 = vmatpush1.msra.mxu0 0.0
    %521 = vmatprep.subr.mxu0 0.0
    %522 = vmatpush1.msra.mxu0 0.0
    %523 = vmatprep.subr.mxu0 0.0
    %524 = vmatpush1.msra.mxu0 0.0
    %525 = vmatprep.subr.mxu0 0.0
    %526 = vmatpush1.msra.mxu0 0.0
    %527 = vmatprep.subr.mxu0 0.0
    %528 = vmatpush1.msra.mxu0 0.0
    %529 = vmatprep.subr.mxu0 0.0
    %530 = vmatpush1.msra.mxu0 0.0
    %531 = vmatprep.subr.mxu0 0.0
    %532 = vmatpush1.msra.mxu0 0.0
    %533 = vmatprep.subr.mxu0 0.0
    %534 = vmatpush1.msra.mxu0 0.0
    %535 = vmatprep.subr.mxu0 0.0
    %536 = vmatpush1.msra.mxu0 0.0
    %537 = vmatprep.subr.mxu0 0.0
    %538 = vmatpush1.msra.mxu0 0.0
    %539 = vmatprep.subr.mxu0 0.0
    %540 = vmatpush1.msra.mxu0 0.0
    %541 = vmatprep.subr.mxu0 0.0
    %542 = vmatpush1.msra.mxu0 0.0
    %543 = vmatprep.subr.mxu0 0.0
    %544 = vmatpush1.msra.mxu0 0.0
    %545 = vmatprep.mubr.f32.mxu0 0.0
    %546 = vmatmul.mubr.f32.gmra.mrb[0].mxu0 %v475
    %v547 = vpop.f32.mrb[0].mxu0
    %v548 = vadd.f32 %v472, %v547
    %v549 = vpop.f32.mrb[0].mxu0
    %550 = vdwg.mxu0
    %v551 = vld [vmem:[%s15] sm:$0x1]
    %v552 = vld [vmem:[%s17] sm:$0x1]
    %vm553 = vcmask 441344
    %v554 = vsel %vm553, %v548, 0.0
    %v555 = vrot.slane %v554, 4
    %v556 = vadd.f32 %v554, %v555
    %v557 = vrot.slane %v556, 2
    %v558 = vadd.f32 %v556, %v557
    %v559 = vrot.slane %v558, 1
    %v560 = vadd.f32 %v558, %v559
    %v561 = vmul.f32 %v560, %v425
    %v562 = vmul.f32 %v548, %v548
    %v563 = vsel %vm553, %v562, 0.0
    %v564 = vrot.slane %v563, 4
    %v565 = vadd.f32 %v563, %v564
    %v566 = vrot.slane %v565, 2
    %v567 = vadd.f32 %v565, %v566
    %v568 = vrot.slane %v567, 1
    %v569 = vadd.f32 %v567, %v568
    %v570 = vmul.f32 %v569, %v425
    %v571 = vmul.f32 %v561, %v561
    %v572 = vsub.f32 %v570, %v571
    %v573 = vmax.f32 %v572, 0.0
    %v574 = vsub.f32 %v548, %v561
    %v575 = vadd.f32 %v573, 1e-05
    %v576 = vrsqrt.pop %v575
    %v577 = vmul.f32 %v574, %v576
    %v579 = vlaneseq
    %v580 = vshrl.u32 %v579, 7
    %v581 = vsub.s32 0, %v580
    %v582 = vrot.slane %v551, %v581
    %v584 = vmul.f32 %v577, %v582
    %v586 = vlaneseq
    %v587 = vshrl.u32 %v586, 7
    %v588 = vsub.s32 0, %v587
    %v589 = vrot.slane %v552, %v588
    %v591 = vadd.f32 %v584, %v589
    %v592 = vmax.f32 %v591, 0.0
    %v593 = vld [vmem:[#allocation17] sm:$0xff]
    %v594 = vld [vmem:[#allocation17 + $0x8] sm:$0xff]
    %v595 = vld [vmem:[#allocation17 + $0x10] sm:$0xff]
    %v596 = vld [vmem:[#allocation17 + $0x18] sm:$0xff]
    %v597 = vld [vmem:[#allocation17 + $0x20] sm:$0xff]
    %v598 = vld [vmem:[#allocation17 + $0x28] sm:$0xff]
    %v599 = vld [vmem:[#allocation17 + $0x30] sm:$0x3f]
    %v600 = vld [vmem:[#allocation18] sm:$0x1]
    %v602 = vlaneseq
    %v603 = vshrl.u32 %v602, 7
    %v604 = vsub.s32 0, %v603
    %v605 = vrot.slane %v600, %v604
    %v608 = vsel %vm553, %v592, 0
    %v611 = vsel %vm477, %v599, 0
    %613 = vmatprep.subr.mxu0 0.0
    %614 = vmatpush1.msra.mxu0 %v593
    %615 = vmatprep.subr.mxu0 0.0
    %616 = vmatpush1.msra.mxu0 %v594
    %617 = vmatprep.subr.mxu0 0.0
    %618 = vmatpush1.msra.mxu0 %v595
    %619 = vmatprep.subr.mxu0 0.0
    %620 = vmatpush1.msra.mxu0 %v596
    %621 = vmatprep.subr.mxu0 0.0
    %622 = vmatpush1.msra.mxu0 %v597
    %623 = vmatprep.subr.mxu0 0.0
    %624 = vmatpush1.msra.mxu0 %v598
    %625 = vmatprep.subr.mxu0 0.0
    %626 = vmatpush1.msra.mxu0 %v611
    %627 = vmatprep.subr.mxu0 0.0
    %628 = vmatpush1.msra.mxu0 0.0
    %629 = vmatprep.subr.mxu0 0.0
    %630 = vmatpush1.msra.mxu0 0.0
    %631 = vmatprep.subr.mxu0 0.0
    %632 = vmatpush1.msra.mxu0 0.0
    %633 = vmatprep.subr.mxu0 0.0
    %634 = vmatpush1.msra.mxu0 0.0
    %635 = vmatprep.subr.mxu0 0.0
    %636 = vmatpush1.msra.mxu0 0.0
    %637 = vmatprep.subr.mxu0 0.0
    %638 = vmatpush1.msra.mxu0 0.0
    %639 = vmatprep.subr.mxu0 0.0
    %640 = vmatpush1.msra.mxu0 0.0
    %641 = vmatprep.subr.mxu0 0.0
    %642 = vmatpush1.msra.mxu0 0.0
    %643 = vmatprep.subr.mxu0 0.0
    %644 = vmatpush1.msra.mxu0 0.0
    %645 = vmatprep.subr.mxu0 0.0
    %646 = vmatpush1.msra.mxu0 0.0
    %647 = vmatprep.subr.mxu0 0.0
    %648 = vmatpush1.msra.mxu0 0.0
    %649 = vmatprep.subr.mxu0 0.0
    %650 = vmatpush1.msra.mxu0 0.0
    %651 = vmatprep.subr.mxu0 0.0
    %652 = vmatpush1.msra.mxu0 0.0
    %653 = vmatprep.subr.mxu0 0.0
    %654 = vmatpush1.msra.mxu0 0.0
    %655 = vmatprep.subr.mxu0 0.0
    %656 = vmatpush1.msra.mxu0 0.0
    %657 = vmatprep.subr.mxu0 0.0
    %658 = vmatpush1.msra.mxu0 0.0
    %659 = vmatprep.subr.mxu0 0.0
    %660 = vmatpush1.msra.mxu0 0.0
    %661 = vmatprep.subr.mxu0 0.0
    %662 = vmatpush1.msra.mxu0 0.0
    %663 = vmatprep.subr.mxu0 0.0
    %664 = vmatpush1.msra.mxu0 0.0
    %665 = vmatprep.subr.mxu0 0.0
    %666 = vmatpush1.msra.mxu0 0.0
    %667 = vmatprep.subr.mxu0 0.0
    %668 = vmatpush1.msra.mxu0 0.0
    %669 = vmatprep.subr.mxu0 0.0
    %670 = vmatpush1.msra.mxu0 0.0
    %671 = vmatprep.subr.mxu0 0.0
    %672 = vmatpush1.msra.mxu0 0.0
    %673 = vmatprep.subr.mxu0 0.0
    %674 = vmatpush1.msra.mxu0 0.0
    %675 = vmatprep.subr.mxu0 0.0
    %676 = vmatpush1.msra.mxu0 0.0
    %677 = vmatprep.mubr.f32.mxu0 0.0
    %678 = vmatmul.mubr.f32.gmra.mrb[0].mxu0 %v608
    %v679 = vpop.f32.mrb[0].mxu0
    %v680 = vadd.f32 %v605, %v679
    %v681 = vpop.f32.mrb[0].mxu0
    %682 = vdwg.mxu0
    %v683 = vld [vmem:[%s23] sm:$0x1]
    %v684 = vld [vmem:[%s25] sm:$0x1]
    %v685 = vsel %vm417, %v680, 0.0
    %v686 = vrot.slane %v685, 4
    %v687 = vadd.f32 %v685, %v686
    %v688 = vrot.slane %v687, 2
    %v689 = vadd.f32 %v687, %v688
    %v690 = vrot.slane %v689, 1
    %v691 = vadd.f32 %v689, %v690
    %v692 = vmul.f32 %v691, %v425
    %v693 = vmul.f32 %v680, %v680
    %v694 = vsel %vm417, %v693, 0.0
    %v695 = vrot.slane %v694, 4
    %v696 = vadd.f32 %v694, %v695
    %v697 = vrot.slane %v696, 2
    %v698 = vadd.f32 %v696, %v697
    %v699 = vrot.slane %v698, 1
    %v700 = vadd.f32 %v698, %v699
    %v701 = vmul.f32 %v700, %v425
    %v702 = vmul.f32 %v692, %v692
    %v703 = vsub.f32 %v701, %v702
    %v704 = vmax.f32 %v703, 0.0
    %v705 = vsub.f32 %v680, %v692
    %v706 = vadd.f32 %v704, 1e-05
    %v707 = vrsqrt.pop %v706
    %v708 = vmul.f32 %v705, %v707
    %v710 = vlaneseq
    %v711 = vshrl.u32 %v710, 7
    %v712 = vsub.s32 0, %v711
    %v713 = vrot.slane %v683, %v712
    %v715 = vmul.f32 %v708, %v713
    %v717 = vlaneseq
    %v718 = vshrl.u32 %v717, 7
    %v719 = vsub.s32 0, %v718
    %v720 = vrot.slane %v684, %v719
    %v722 = vadd.f32 %v715, %v720
    %v723 = vmax.f32 %v722, 0.0
    %v724 = vld [vmem:[%s27] sm:$0xff]
    %v725 = vld [vmem:[%s27 + $0x8] sm:$0xff]
    %v726 = vld [vmem:[%s27 + $0x10] sm:$0xff]
    %v727 = vld [vmem:[%s27 + $0x18] sm:$0xff]
    %v728 = vld [vmem:[%s27 + $0x20] sm:$0xff]
    %v729 = vld [vmem:[%s27 + $0x28] sm:$0xff]
    %v730 = vld [vmem:[%s27 + $0x30] sm:$0xff]
    %v731 = vld [vmem:[%s27 + $0x38] sm:$0xff]
    %v732 = vld [vmem:[%s27 + $0x40] sm:$0x3f]
    %v733 = vld [vmem:[%s29] sm:$0x1]
    %v735 = vlaneseq
    %v736 = vshrl.u32 %v735, 7
    %v737 = vsub.s32 0, %v736
    %v738 = vrot.slane %v733, %v737
    %v741 = vsel %vm417, %v723, 0
    %v744 = vsel %vm477, %v732, 0
    %746 = vmatprep.subr.mxu0 0.0
    %747 = vmatpush1.msra.mxu0 %v724
    %748 = vmatprep.subr.mxu0 0.0
    %749 = vmatpush1.msra.mxu0 %v725
    %750 = vmatprep.subr.mxu0 0.0
    %751 = vmatpush1.msra.mxu0 %v726
    %752 = vmatprep.subr.mxu0 0.0
    %753 = vmatpush1.msra.mxu0 %v727
    %754 = vmatprep.subr.mxu0 0.0
    %755 = vmatpush1.msra.mxu0 %v728
    %756 = vmatprep.subr.mxu0 0.0
    %757 = vmatpush1.msra.mxu0 %v729
    %758 = vmatprep.subr.mxu0 0.0
    %759 = vmatpush1.msra.mxu0 %v730
    %760 = vmatprep.subr.mxu0 0.0
    %761 = vmatpush1.msra.mxu0 %v731
    %762 = vmatprep.subr.mxu0 0.0
    %763 = vmatpush1.msra.mxu0 %v744
    %764 = vmatprep.subr.mxu0 0.0
    %765 = vmatpush1.msra.mxu0 0.0
    %766 = vmatprep.subr.mxu0 0.0
    %767 = vmatpush1.msra.mxu0 0.0
    %768 = vmatprep.subr.mxu0 0.0
    %769 = vmatpush1.msra.mxu0 0.0
    %770 = vmatprep.subr.mxu0 0.0
    %771 = vmatpush1.msra.mxu0 0.0
    %772 = vmatprep.subr.mxu0 0.0
    %773 = vmatpush1.msra.mxu0 0.0
    %774 = vmatprep.subr.mxu0 0.0
    %775 = vmatpush1.msra.mxu0 0.0
    %776 = vmatprep.subr.mxu0 0.0
    %777 = vmatpush1.msra.mxu0 0.0
    %778 = vmatprep.subr.mxu0 0.0
    %779 = vmatpush1.msra.mxu0 0.0
    %780 = vmatprep.subr.mxu0 0.0
    %781 = vmatpush1.msra.mxu0 0.0
    %782 = vmatprep.subr.mxu0 0.0
    %783 = vmatpush1.msra.mxu0 0.0
    %784 = vmatprep.subr.mxu0 0.0
    %785 = vmatpush1.msra.mxu0 0.0
    %786 = vmatprep.subr.mxu0 0.0
    %787 = vmatpush1.msra.mxu0 0.0
    %788 = vmatprep.subr.mxu0 0.0
    %789 = vmatpush1.msra.mxu0 0.0
    %790 = vmatprep.subr.mxu0 0.0
    %791 = vmatpush1.msra.mxu0 0.0
    %792 = vmatprep.subr.mxu0 0.0
    %793 = vmatpush1.msra.mxu0 0.0
    %794 = vmatprep.subr.mxu0 0.0
    %795 = vmatpush1.msra.mxu0 0.0
    %796 = vmatprep.subr.mxu0 0.0
    %797 = vmatpush1.msra.mxu0 0.0
    %798 = vmatprep.subr.mxu0 0.0
    %799 = vmatpush1.msra.mxu0 0.0
    %800 = vmatprep.subr.mxu0 0.0
    %801 = vmatpush1.msra.mxu0 0.0
    %802 = vmatprep.subr.mxu0 0.0
    %803 = vmatpush1.msra.mxu0 0.0
    %804 = vmatprep.subr.mxu0 0.0
    %805 = vmatpush1.msra.mxu0 0.0
    %806 = vmatprep.subr.mxu0 0.0
    %807 = vmatpush1.msra.mxu0 0.0
    %808 = vmatprep.subr.mxu0 0.0
    %809 = vmatpush1.msra.mxu0 0.0
    %810 = vmatprep.mubr.f32.mxu0 0.0
    %811 = vmatmul.mubr.f32.gmra.mrb[0].mxu0 %v741
    %v812 = vpop.f32.mrb[0].mxu0
    %v813 = vadd.f32 %v738, %v812
    %v814 = vpop.f32.mrb[0].mxu0
    %815 = vdwg.mxu0
    %816 = vst.msk [vmem:[#allocation26] sm:$0xff] %vm341, %v813
    %817 = vst.msk [vmem:[#allocation27] sm:$0xff] %vm553, %v592
    %v818 = vld [vmem:[#allocation20] sm:$0xff]
    %v819 = vld [vmem:[#allocation20 + $0x8] sm:$0xff]
    %v820 = vld [vmem:[#allocation20 + $0x10] sm:$0xff]
    %v821 = vld [vmem:[#allocation20 + $0x18] sm:$0xff]
    %v822 = vld [vmem:[#allocation20 + $0x20] sm:$0xff]
    %v823 = vld [vmem:[#allocation20 + $0x28] sm:$0xff]
    %v824 = vld [vmem:[#allocation20 + $0x30] sm:$0x3f]
    %v825 = vld [vmem:[%s33] sm:$0x1]
    %v827 = vlaneseq
    %v828 = vshrl.u32 %v827, 7
    %v829 = vsub.s32 0, %v828
    %v830 = vrot.slane %v825, %v829
    %v833 = vsel %vm477, %v824, 0
    %835 = vmatprep.subr.mxu0 0.0
    %836 = vmatpush1.msra.mxu0 %v818
    %837 = vmatprep.subr.mxu0 0.0
    %838 = vmatpush1.msra.mxu0 %v819
    %839 = vmatprep.subr.mxu0 0.0
    %840 = vmatpush1.msra.mxu0 %v820
    %841 = vmatprep.subr.mxu0 0.0
    %842 = vmatpush1.msra.mxu0 %v821
    %843 = vmatprep.subr.mxu0 0.0
    %844 = vmatpush1.msra.mxu0 %v822
    %845 = vmatprep.subr.mxu0 0.0
    %846 = vmatpush1.msra.mxu0 %v823
    %847 = vmatprep.subr.mxu0 0.0
    %848 = vmatpush1.msra.mxu0 %v833
    %849 = vmatprep.subr.mxu0 0.0
    %850 = vmatpush1.msra.mxu0 0.0
    %851 = vmatprep.subr.mxu0 0.0
    %852 = vmatpush1.msra.mxu0 0.0
    %853 = vmatprep.subr.mxu0 0.0
    %854 = vmatpush1.msra.mxu0 0.0
    %855 = vmatprep.subr.mxu0 0.0
    %856 = vmatpush1.msra.mxu0 0.0
    %857 = vmatprep.subr.mxu0 0.0
    %858 = vmatpush1.msra.mxu0 0.0
    %859 = vmatprep.subr.mxu0 0.0
    %860 = vmatpush1.msra.mxu0 0.0
    %861 = vmatprep.subr.mxu0 0.0
    %862 = vmatpush1.msra.mxu0 0.0
    %863 = vmatprep.subr.mxu0 0.0
    %864 = vmatpush1.msra.mxu0 0.0
    %865 = vmatprep.subr.mxu0 0.0
    %866 = vmatpush1.msra.mxu0 0.0
    %867 = vmatprep.subr.mxu0 0.0
    %868 = vmatpush1.msra.mxu0 0.0
    %869 = vmatprep.subr.mxu0 0.0
    %870 = vmatpush1.msra.mxu0 0.0
    %871 = vmatprep.subr.mxu0 0.0
    %872 = vmatpush1.msra.mxu0 0.0
    %873 = vmatprep.subr.mxu0 0.0
    %874 = vmatpush1.msra.mxu0 0.0
    %875 = vmatprep.subr.mxu0 0.0
    %876 = vmatpush1.msra.mxu0 0.0
    %877 = vmatprep.subr.mxu0 0.0
    %878 = vmatpush1.msra.mxu0 0.0
    %879 = vmatprep.subr.mxu0 0.0
    %880 = vmatpush1.msra.mxu0 0.0
    %881 = vmatprep.subr.mxu0 0.0
    %882 = vmatpush1.msra.mxu0 0.0
    %883 = vmatprep.subr.mxu0 0.0
    %884 = vmatpush1.msra.mxu0 0.0
    %885 = vmatprep.subr.mxu0 0.0
    %886 = vmatpush1.msra.mxu0 0.0
    %887 = vmatprep.subr.mxu0 0.0
    %888 = vmatpush1.msra.mxu0 0.0
    %889 = vmatprep.subr.mxu0 0.0
    %890 = vmatpush1.msra.mxu0 0.0
    %891 = vmatprep.subr.mxu0 0.0
    %892 = vmatpush1.msra.mxu0 0.0
    %893 = vmatprep.subr.mxu0 0.0
    %894 = vmatpush1.msra.mxu0 0.0
    %895 = vmatprep.subr.mxu0 0.0
    %896 = vmatpush1.msra.mxu0 0.0
    %897 = vmatprep.subr.mxu0 0.0
    %898 = vmatpush1.msra.mxu0 0.0
    %899 = vmatprep.mubr.f32.mxu0 0.0
    %900 = vmatmul.mubr.f32.gmra.mrb[0].mxu0 %v608
    %v901 = vpop.f32.mrb[0].mxu0
    %v902 = vadd.f32 %v830, %v901
    %v903 = vpop.f32.mrb[0].mxu0
    %904 = vdwg.mxu0
    %s905 = smul.u32 8, 16
    %s906 = smul.u32 %s905, 8
    %s907 = sshll.u32 %s906, 4
    %908 = dma.done [#allocation8], %s907
    %s909 = smul.u32 1, 8
    %s910 = sshll.u32 %s909, 4
    %911 = dma.done %s286, %s910
    %v912 = vld [vmem:[#allocation2] sm:$0xff]
    %v913 = vld [vmem:[#allocation2 + $0x8] sm:$0xff]
    %v914 = vld [vmem:[#allocation2 + $0x10] sm:$0xff]
    %v915 = vld [vmem:[#allocation2 + $0x18] sm:$0xff]
    %v916 = vld [vmem:[#allocation2 + $0x20] sm:$0xff]
    %v917 = vld [vmem:[#allocation2 + $0x28] sm:$0xff]
    %v918 = vld [vmem:[#allocation2 + $0x30] sm:$0xff]
    %v919 = vld [vmem:[#allocation2 + $0x38] sm:$0xff]
    %v920 = vld [vmem:[#allocation2 + $0x40] sm:$0xff]
    %v921 = vld [vmem:[#allocation2 + $0x48] sm:$0xff]
    %v922 = vld [vmem:[#allocation2 + $0x50] sm:$0xff]
    %v923 = vld [vmem:[#allocation2 + $0x58] sm:$0xff]
    %v924 = vld [vmem:[#allocation2 + $0x60] sm:$0xff]
    %v925 = vld [vmem:[#allocation2 + $0x68] sm:$0xff]
    %v926 = vld [vmem:[#allocation2 + $0x70] sm:$0xff]
    %v927 = vld [vmem:[#allocation2 + $0x78] sm:$0xff]
    %v928 = vld [vmem:[#allocation2 + $0x80] sm:$0xff]
    %v929 = vld [vmem:[#allocation2 + $0x88] sm:$0xff]
    %v930 = vld [vmem:[#allocation2 + $0x90] sm:$0xff]
    %v931 = vld [vmem:[#allocation2 + $0x98] sm:$0xff]
    %v932 = vld [vmem:[#allocation2 + $0xa0] sm:$0xff]
    %v933 = vld [vmem:[#allocation2 + $0xa8] sm:$0xff]
    %v934 = vld [vmem:[#allocation2 + $0xb0] sm:$0xff]
    %v935 = vld [vmem:[#allocation2 + $0xb8] sm:$0xff]
    %v936 = vld [vmem:[#allocation2 + $0xc0] sm:$0xff]
    %v937 = vld [vmem:[#allocation2 + $0xc8] sm:$0xff]
    %v938 = vld [vmem:[#allocation2 + $0xd0] sm:$0xff]
    %v939 = vld [vmem:[#allocation2 + $0xd8] sm:$0xff]
    %v940 = vld [vmem:[#allocation2 + $0xe0] sm:$0xff]
    %v941 = vld [vmem:[#allocation2 + $0xe8] sm:$0xff]
    %v942 = vld [vmem:[#allocation2 + $0xf0] sm:$0xff]
    %v943 = vld [vmem:[#allocation2 + $0xf8] sm:$0xff]
    %v944 = vld [vmem:[#allocation2 + $0x100] sm:$0xff]
    %v945 = vld [vmem:[#allocation2 + $0x108] sm:$0xff]
    %v946 = vld [vmem:[#allocation2 + $0x110] sm:$0xff]
    %v947 = vld [vmem:[#allocation2 + $0x118] sm:$0xff]
    %v948 = vld [vmem:[#allocation2 + $0x120] sm:$0xff]
    %v949 = vld [vmem:[#allocation2 + $0x128] sm:$0xff]
    %v950 = vld [vmem:[#allocation2 + $0x130] sm:$0xff]
    %v951 = vld [vmem:[#allocation2 + $0x138] sm:$0xff]
    %v952 = vld [vmem:[#allocation2 + $0x140] sm:$0xff]
    %v953 = vld [vmem:[#allocation2 + $0x148] sm:$0xff]
    %v954 = vld [vmem:[#allocation2 + $0x150] sm:$0xff]
    %v955 = vld [vmem:[#allocation2 + $0x158] sm:$0xff]
    %v956 = vld [vmem:[#allocation2 + $0x160] sm:$0xff]
    %v957 = vld [vmem:[#allocation2 + $0x168] sm:$0xff]
    %v958 = vld [vmem:[#allocation2 + $0x170] sm:$0xff]
    %v959 = vld [vmem:[#allocation2 + $0x178] sm:$0xff]
    %v960 = vld [vmem:[#allocation2 + $0x180] sm:$0xff]
    %v961 = vld [vmem:[#allocation2 + $0x188] sm:$0xff]
    %v962 = vld [vmem:[#allocation2 + $0x190] sm:$0xff]
    %v963 = vld [vmem:[#allocation2 + $0x198] sm:$0xff]
    %v964 = vld [vmem:[#allocation2 + $0x1a0] sm:$0xff]
    %v965 = vld [vmem:[#allocation2 + $0x1a8] sm:$0xff]
    %v966 = vld [vmem:[#allocation2 + $0x1b0] sm:$0xff]
    %v967 = vld [vmem:[#allocation2 + $0x1b8] sm:$0xff]
    %v968 = vld [vmem:[#allocation2 + $0x1c0] sm:$0xff]
    %v969 = vld [vmem:[#allocation2 + $0x1c8] sm:$0xff]
    %v970 = vld [vmem:[#allocation2 + $0x1d0] sm:$0xff]
    %v971 = vld [vmem:[#allocation2 + $0x1d8] sm:$0xff]
    %v972 = vld [vmem:[#allocation2 + $0x1e0] sm:$0xff]
    %v973 = vld [vmem:[#allocation2 + $0x1e8] sm:$0xff]
    %v974 = vld [vmem:[#allocation2 + $0x1f0] sm:$0xff]
    %v975 = vld [vmem:[#allocation2 + $0x1f8] sm:$0xff]
    %v976 = vld [vmem:[#allocation2 + $0x200] sm:$0xff]
    %v977 = vld [vmem:[#allocation2 + $0x208] sm:$0xff]
    %v978 = vld [vmem:[#allocation2 + $0x210] sm:$0xff]
    %v979 = vld [vmem:[#allocation2 + $0x218] sm:$0xff]
    %v980 = vld [vmem:[#allocation2 + $0x220] sm:$0xff]
    %v981 = vld [vmem:[#allocation2 + $0x228] sm:$0xff]
    %v982 = vld [vmem:[#allocation2 + $0x230] sm:$0xff]
    %v983 = vld [vmem:[#allocation2 + $0x238] sm:$0xff]
    %v984 = vld [vmem:[#allocation2 + $0x240] sm:$0xff]
    %v985 = vld [vmem:[#allocation2 + $0x248] sm:$0xff]
    %v986 = vld [vmem:[#allocation2 + $0x250] sm:$0xff]
    %v987 = vld [vmem:[#allocation2 + $0x258] sm:$0xff]
    %v988 = vld [vmem:[#allocation2 + $0x260] sm:$0xff]
    %v989 = vld [vmem:[#allocation2 + $0x268] sm:$0xff]
    %v990 = vld [vmem:[#allocation2 + $0x270] sm:$0xff]
    %v991 = vld [vmem:[#allocation2 + $0x278] sm:$0xff]
    %v992 = vld [vmem:[#allocation2 + $0x280] sm:$0xff]
    %v993 = vld [vmem:[#allocation2 + $0x288] sm:$0xff]
    %v994 = vld [vmem:[#allocation2 + $0x290] sm:$0xff]
    %v995 = vld [vmem:[#allocation2 + $0x298] sm:$0xff]
    %v996 = vld [vmem:[#allocation2 + $0x2a0] sm:$0xff]
    %v997 = vld [vmem:[#allocation2 + $0x2a8] sm:$0xff]
    %v998 = vld [vmem:[#allocation2 + $0x2b0] sm:$0xff]
    %v999 = vld [vmem:[#allocation2 + $0x2b8] sm:$0xff]
    %v1000 = vld [vmem:[#allocation2 + $0x2c0] sm:$0xff]
    %v1001 = vld [vmem:[#allocation2 + $0x2c8] sm:$0xff]
    %v1002 = vld [vmem:[#allocation2 + $0x2d0] sm:$0xff]
    %v1003 = vld [vmem:[#allocation2 + $0x2d8] sm:$0xff]
    %v1004 = vld [vmem:[#allocation2 + $0x2e0] sm:$0xff]
    %v1005 = vld [vmem:[#allocation2 + $0x2e8] sm:$0xff]
    %v1006 = vld [vmem:[#allocation2 + $0x2f0] sm:$0xff]
    %v1007 = vld [vmem:[#allocation2 + $0x2f8] sm:$0xff]
    %v1008 = vld [vmem:[#allocation2 + $0x300] sm:$0xff]
    %v1009 = vld [vmem:[#allocation2 + $0x308] sm:$0xff]
    %v1010 = vld [vmem:[#allocation2 + $0x310] sm:$0xff]
    %v1011 = vld [vmem:[#allocation2 + $0x318] sm:$0xff]
    %v1012 = vld [vmem:[#allocation2 + $0x320] sm:$0xff]
    %v1013 = vld [vmem:[#allocation2 + $0x328] sm:$0xff]
    %v1014 = vld [vmem:[#allocation2 + $0x330] sm:$0xff]
    %v1015 = vld [vmem:[#allocation2 + $0x338] sm:$0xff]
    %v1016 = vld [vmem:[#allocation2 + $0x340] sm:$0xff]
    %v1017 = vld [vmem:[#allocation2 + $0x348] sm:$0xff]
    %v1018 = vld [vmem:[#allocation2 + $0x350] sm:$0xff]
    %v1019 = vld [vmem:[#allocation2 + $0x358] sm:$0xff]
    %v1020 = vld [vmem:[#allocation2 + $0x360] sm:$0xff]
    %v1021 = vld [vmem:[#allocation2 + $0x368] sm:$0xff]
    %v1022 = vld [vmem:[#allocation2 + $0x370] sm:$0xff]
    %v1023 = vld [vmem:[#allocation2 + $0x378] sm:$0xff]
    %v1024 = vld [vmem:[#allocation2 + $0x380] sm:$0xff]
    %v1025 = vld [vmem:[#allocation2 + $0x388] sm:$0xff]
    %v1026 = vld [vmem:[#allocation2 + $0x390] sm:$0xff]
    %v1027 = vld [vmem:[#allocation2 + $0x398] sm:$0xff]
    %v1028 = vld [vmem:[#allocation2 + $0x3a0] sm:$0xff]
    %v1029 = vld [vmem:[#allocation2 + $0x3a8] sm:$0xff]
    %v1030 = vld [vmem:[#allocation2 + $0x3b0] sm:$0xff]
    %v1031 = vld [vmem:[#allocation2 + $0x3b8] sm:$0xff]
    %v1032 = vld [vmem:[#allocation2 + $0x3c0] sm:$0xff]
    %v1033 = vld [vmem:[#allocation2 + $0x3c8] sm:$0xff]
    %v1034 = vld [vmem:[#allocation2 + $0x3d0] sm:$0xff]
    %v1035 = vld [vmem:[#allocation2 + $0x3d8] sm:$0xff]
    %v1036 = vld [vmem:[#allocation2 + $0x3e0] sm:$0xff]
    %v1037 = vld [vmem:[#allocation2 + $0x3e8] sm:$0xff]
    %v1038 = vld [vmem:[#allocation2 + $0x3f0] sm:$0xff]
    %v1039 = vld [vmem:[#allocation2 + $0x3f8] sm:$0xff]
    %v1040 = vld [vmem:[#allocation3] sm:$0xff]
    %v1042 = vlaneseq
    %v1043 = vshrl.u32 %v1042, 7
    %v1044 = vsub.s32 0, %v1043
    %v1045 = vrot.slane %v1040, %v1044
    %v1046 = vlaneseq
    %v1047 = vshrl.u32 %v1046, 7
    %v1048 = vsub.s32 1, %v1047
    %v1049 = vrot.slane %v1040, %v1048
    %v1050 = vlaneseq
    %v1051 = vshrl.u32 %v1050, 7
    %v1052 = vsub.s32 2, %v1051
    %v1053 = vrot.slane %v1040, %v1052
    %v1054 = vlaneseq
    %v1055 = vshrl.u32 %v1054, 7
    %v1056 = vsub.s32 3, %v1055
    %v1057 = vrot.slane %v1040, %v1056
    %v1058 = vlaneseq
    %v1059 = vshrl.u32 %v1058, 7
    %v1060 = vsub.s32 4, %v1059
    %v1061 = vrot.slane %v1040, %v1060
    %v1062 = vlaneseq
    %v1063 = vshrl.u32 %v1062, 7
    %v1064 = vsub.s32 5, %v1063
    %v1065 = vrot.slane %v1040, %v1064
    %v1066 = vlaneseq
    %v1067 = vshrl.u32 %v1066, 7
    %v1068 = vsub.s32 6, %v1067
    %v1069 = vrot.slane %v1040, %v1068
    %v1070 = vlaneseq
    %v1071 = vshrl.u32 %v1070, 7
    %v1072 = vsub.s32 7, %v1071
    %v1073 = vrot.slane %v1040, %v1072
    %1082 = vmatprep.subr.mxu0 %v913
    %1083 = vmatpush1.msra.mxu0 %v912
    %1084 = vmatprep.subr.mxu0 %v921
    %1085 = vmatpush1.msra.mxu0 %v920
    %1086 = vmatprep.subr.mxu0 %v929
    %1087 = vmatpush1.msra.mxu0 %v928
    %1088 = vmatprep.subr.mxu0 %v937
    %1089 = vmatpush1.msra.mxu0 %v936
    %1090 = vmatprep.subr.mxu0 %v945
    %1091 = vmatpush1.msra.mxu0 %v944
    %1092 = vmatprep.subr.mxu0 %v953
    %1093 = vmatpush1.msra.mxu0 %v952
    %1094 = vmatprep.subr.mxu0 %v961
    %1095 = vmatpush1.msra.mxu0 %v960
    %1096 = vmatprep.subr.mxu0 %v969
    %1097 = vmatpush1.msra.mxu0 %v968
    %1098 = vmatprep.subr.mxu0 %v977
    %1099 = vmatpush1.msra.mxu0 %v976
    %1100 = vmatprep.subr.mxu0 %v985
    %1101 = vmatpush1.msra.mxu0 %v984
    %1102 = vmatprep.subr.mxu0 %v993
    %1103 = vmatpush1.msra.mxu0 %v992
    %1104 = vmatprep.subr.mxu0 %v1001
    %1105 = vmatpush1.msra.mxu0 %v1000
    %1106 = vmatprep.subr.mxu0 %v1009
    %1107 = vmatpush1.msra.mxu0 %v1008
    %1108 = vmatprep.subr.mxu0 %v1017
    %1109 = vmatpush1.msra.mxu0 %v1016
    %1110 = vmatprep.subr.mxu0 %v1025
    %1111 = vmatpush1.msra.mxu0 %v1024
    %1112 = vmatprep.subr.mxu0 %v1033
    %1113 = vmatpush1.msra.mxu0 %v1032
    %1114 = vmatprep.subr.mxu0 0.0
    %1115 = vmatpush1.msra.mxu0 0.0
    %1116 = vmatprep.subr.mxu0 0.0
    %1117 = vmatpush1.msra.mxu0 0.0
    %1118 = vmatprep.subr.mxu0 0.0
    %1119 = vmatpush1.msra.mxu0 0.0
    %1120 = vmatprep.subr.mxu0 0.0
    %1121 = vmatpush1.msra.mxu0 0.0
    %1122 = vmatprep.subr.mxu0 0.0
    %1123 = vmatpush1.msra.mxu0 0.0
    %1124 = vmatprep.subr.mxu0 0.0
    %1125 = vmatpush1.msra.mxu0 0.0
    %1126 = vmatprep.subr.mxu0 0.0
    %1127 = vmatpush1.msra.mxu0 0.0
    %1128 = vmatprep.subr.mxu0 0.0
    %1129 = vmatpush1.msra.mxu0 0.0
    %1130 = vmatprep.subr.mxu0 0.0
    %1131 = vmatpush1.msra.mxu0 0.0
    %1132 = vmatprep.subr.mxu0 0.0
    %1133 = vmatpush1.msra.mxu0 0.0
    %1134 = vmatprep.subr.mxu0 0.0
    %1135 = vmatpush1.msra.mxu0 0.0
    %1136 = vmatprep.subr.mxu0 0.0
    %1137 = vmatpush1.msra.mxu0 0.0
    %1138 = vmatprep.subr.mxu0 0.0
    %1139 = vmatpush1.msra.mxu0 0.0
    %1140 = vmatprep.subr.mxu0 0.0
    %1141 = vmatpush1.msra.mxu0 0.0
    %1142 = vmatprep.subr.mxu0 0.0
    %1143 = vmatpush1.msra.mxu0 0.0
    %1144 = vmatprep.subr.mxu0 0.0
    %1145 = vmatpush1.msra.mxu0 0.0
    %1146 = vmatprep.mubr.f32.mxu0 0.0
    %1147 = vmatmul.mubr.f32.gmra.mrb[0].mxu0 %v902
    %v1148 = vpop.f32.mrb[0].mxu0
    %v1149 = vadd.f32 %v1045, %v1148
    %v1150 = vpop.f32.mrb[0].mxu0
    %v1151 = vadd.f32 %v1049, %v1150
    %1152 = vdwg.mxu0
    %1153 = vmatprep.subr.mxu0 %v915
    %1154 = vmatpush1.msra.mxu0 %v914
    %1155 = vmatprep.subr.mxu0 %v923
    %1156 = vmatpush1.msra.mxu0 %v922
    %1157 = vmatprep.subr.mxu0 %v931
    %1158 = vmatpush1.msra.mxu0 %v930
    %1159 = vmatprep.subr.mxu0 %v939
    %1160 = vmatpush1.msra.mxu0 %v938
    %1161 = vmatprep.subr.mxu0 %v947
    %1162 = vmatpush1.msra.mxu0 %v946
    %1163 = vmatprep.subr.mxu0 %v955
    %1164 = vmatpush1.msra.mxu0 %v954
    %1165 = vmatprep.subr.mxu0 %v963
    %1166 = vmatpush1.msra.mxu0 %v962
    %1167 = vmatprep.subr.mxu0 %v971
    %1168 = vmatpush1.msra.mxu0 %v970
    %1169 = vmatprep.subr.mxu0 %v979
    %1170 = vmatpush1.msra.mxu0 %v978
    %1171 = vmatprep.subr.mxu0 %v987
    %1172 = vmatpush1.msra.mxu0 %v986
    %1173 = vmatprep.subr.mxu0 %v995
    %1174 = vmatpush1.msra.mxu0 %v994
    %1175 = vmatprep.subr.mxu0 %v1003
    %1176 = vmatpush1.msra.mxu0 %v1002
    %1177 = vmatprep.subr.mxu0 %v1011
    %1178 = vmatpush1.msra.mxu0 %v1010
    %1179 = vmatprep.subr.mxu0 %v1019
    %1180 = vmatpush1.msra.mxu0 %v1018
    %1181 = vmatprep.subr.mxu0 %v1027
    %1182 = vmatpush1.msra.mxu0 %v1026
    %1183 = vmatprep.subr.mxu0 %v1035
    %1184 = vmatpush1.msra.mxu0 %v1034
    %1185 = vmatprep.subr.mxu0 0.0
    %1186 = vmatpush1.msra.mxu0 0.0
    %1187 = vmatprep.subr.mxu0 0.0
    %1188 = vmatpush1.msra.mxu0 0.0
    %1189 = vmatprep.subr.mxu0 0.0
    %1190 = vmatpush1.msra.mxu0 0.0
    %1191 = vmatprep.subr.mxu0 0.0
    %1192 = vmatpush1.msra.mxu0 0.0
    %1193 = vmatprep.subr.mxu0 0.0
    %1194 = vmatpush1.msra.mxu0 0.0
    %1195 = vmatprep.subr.mxu0 0.0
    %1196 = vmatpush1.msra.mxu0 0.0
    %1197 = vmatprep.subr.mxu0 0.0
    %1198 = vmatpush1.msra.mxu0 0.0
    %1199 = vmatprep.subr.mxu0 0.0
    %1200 = vmatpush1.msra.mxu0 0.0
    %1201 = vmatprep.subr.mxu0 0.0
    %1202 = vmatpush1.msra.mxu0 0.0
    %1203 = vmatprep.subr.mxu0 0.0
    %1204 = vmatpush1.msra.mxu0 0.0
    %1205 = vmatprep.subr.mxu0 0.0
    %1206 = vmatpush1.msra.mxu0 0.0
    %1207 = vmatprep.subr.mxu0 0.0
    %1208 = vmatpush1.msra.mxu0 0.0
    %1209 = vmatprep.subr.mxu0 0.0
    %1210 = vmatpush1.msra.mxu0 0.0
    %1211 = vmatprep.subr.mxu0 0.0
    %1212 = vmatpush1.msra.mxu0 0.0
    %1213 = vmatprep.subr.mxu0 0.0
    %1214 = vmatpush1.msra.mxu0 0.0
    %1215 = vmatprep.subr.mxu0 0.0
    %1216 = vmatpush1.msra.mxu0 0.0
    %1217 = vmatprep.mubr.f32.mxu0 0.0
    %1218 = vmatmul.mubr.f32.gmra.mrb[0].mxu0 %v902
    %v1219 = vpop.f32.mrb[0].mxu0
    %v1220 = vadd.f32 %v1053, %v1219
    %v1221 = vpop.f32.mrb[0].mxu0
    %v1222 = vadd.f32 %v1057, %v1221
    %1223 = vdwg.mxu0
    %1224 = vmatprep.subr.mxu0 %v917
    %1225 = vmatpush1.msra.mxu0 %v916
    %1226 = vmatprep.subr.mxu0 %v925
    %1227 = vmatpush1.msra.mxu0 %v924
    %1228 = vmatprep.subr.mxu0 %v933
    %1229 = vmatpush1.msra.mxu0 %v932
    %1230 = vmatprep.subr.mxu0 %v941
    %1231 = vmatpush1.msra.mxu0 %v940
    %1232 = vmatprep.subr.mxu0 %v949
    %1233 = vmatpush1.msra.mxu0 %v948
    %1234 = vmatprep.subr.mxu0 %v957
    %1235 = vmatpush1.msra.mxu0 %v956
    %1236 = vmatprep.subr.mxu0 %v965
    %1237 = vmatpush1.msra.mxu0 %v964
    %1238 = vmatprep.subr.mxu0 %v973
    %1239 = vmatpush1.msra.mxu0 %v972
    %1240 = vmatprep.subr.mxu0 %v981
    %1241 = vmatpush1.msra.mxu0 %v980
    %1242 = vmatprep.subr.mxu0 %v989
    %1243 = vmatpush1.msra.mxu0 %v988
    %1244 = vmatprep.subr.mxu0 %v997
    %1245 = vmatpush1.msra.mxu0 %v996
    %1246 = vmatprep.subr.mxu0 %v1005
    %1247 = vmatpush1.msra.mxu0 %v1004
    %1248 = vmatprep.subr.mxu0 %v1013
    %1249 = vmatpush1.msra.mxu0 %v1012
    %1250 = vmatprep.subr.mxu0 %v1021
    %1251 = vmatpush1.msra.mxu0 %v1020
    %1252 = vmatprep.subr.mxu0 %v1029
    %1253 = vmatpush1.msra.mxu0 %v1028
    %1254 = vmatprep.subr.mxu0 %v1037
    %1255 = vmatpush1.msra.mxu0 %v1036
    %1256 = vmatprep.subr.mxu0 0.0
    %1257 = vmatpush1.msra.mxu0 0.0
    %1258 = vmatprep.subr.mxu0 0.0
    %1259 = vmatpush1.msra.mxu0 0.0
    %1260 = vmatprep.subr.mxu0 0.0
    %1261 = vmatpush1.msra.mxu0 0.0
    %1262 = vmatprep.subr.mxu0 0.0
    %1263 = vmatpush1.msra.mxu0 0.0
    %1264 = vmatprep.subr.mxu0 0.0
    %1265 = vmatpush1.msra.mxu0 0.0
    %1266 = vmatprep.subr.mxu0 0.0
    %1267 = vmatpush1.msra.mxu0 0.0
    %1268 = vmatprep.subr.mxu0 0.0
    %1269 = vmatpush1.msra.mxu0 0.0
    %1270 = vmatprep.subr.mxu0 0.0
    %1271 = vmatpush1.msra.mxu0 0.0
    %1272 = vmatprep.subr.mxu0 0.0
    %1273 = vmatpush1.msra.mxu0 0.0
    %1274 = vmatprep.subr.mxu0 0.0
    %1275 = vmatpush1.msra.mxu0 0.0
    %1276 = vmatprep.subr.mxu0 0.0
    %1277 = vmatpush1.msra.mxu0 0.0
    %1278 = vmatprep.subr.mxu0 0.0
    %1279 = vmatpush1.msra.mxu0 0.0
    %1280 = vmatprep.subr.mxu0 0.0
    %1281 = vmatpush1.msra.mxu0 0.0
    %1282 = vmatprep.subr.mxu0 0.0
    %1283 = vmatpush1.msra.mxu0 0.0
    %1284 = vmatprep.subr.mxu0 0.0
    %1285 = vmatpush1.msra.mxu0 0.0
    %1286 = vmatprep.subr.mxu0 0.0
    %1287 = vmatpush1.msra.mxu0 0.0
    %1288 = vmatprep.mubr.f32.mxu0 0.0
    %1289 = vmatmul.mubr.f32.gmra.mrb[0].mxu0 %v902
    %v1290 = vpop.f32.mrb[0].mxu0
    %v1291 = vadd.f32 %v1061, %v1290
    %v1292 = vpop.f32.mrb[0].mxu0
    %v1293 = vadd.f32 %v1065, %v1292
    %1294 = vdwg.mxu0
    %1295 = vmatprep.subr.mxu0 %v919
    %1296 = vmatpush1.msra.mxu0 %v918
    %1297 = vmatprep.subr.mxu0 %v927
    %1298 = vmatpush1.msra.mxu0 %v926
    %1299 = vmatprep.subr.mxu0 %v935
    %1300 = vmatpush1.msra.mxu0 %v934
    %1301 = vmatprep.subr.mxu0 %v943
    %1302 = vmatpush1.msra.mxu0 %v942
    %1303 = vmatprep.subr.mxu0 %v951
    %1304 = vmatpush1.msra.mxu0 %v950
    %1305 = vmatprep.subr.mxu0 %v959
    %1306 = vmatpush1.msra.mxu0 %v958
    %1307 = vmatprep.subr.mxu0 %v967
    %1308 = vmatpush1.msra.mxu0 %v966
    %1309 = vmatprep.subr.mxu0 %v975
    %1310 = vmatpush1.msra.mxu0 %v974
    %1311 = vmatprep.subr.mxu0 %v983
    %1312 = vmatpush1.msra.mxu0 %v982
    %1313 = vmatprep.subr.mxu0 %v991
    %1314 = vmatpush1.msra.mxu0 %v990
    %1315 = vmatprep.subr.mxu0 %v999
    %1316 = vmatpush1.msra.mxu0 %v998
    %1317 = vmatprep.subr.mxu0 %v1007
    %1318 = vmatpush1.msra.mxu0 %v1006
    %1319 = vmatprep.subr.mxu0 %v1015
    %1320 = vmatpush1.msra.mxu0 %v1014
    %1321 = vmatprep.subr.mxu0 %v1023
    %1322 = vmatpush1.msra.mxu0 %v1022
    %1323 = vmatprep.subr.mxu0 %v1031
    %1324 = vmatpush1.msra.mxu0 %v1030
    %1325 = vmatprep.subr.mxu0 %v1039
    %1326 = vmatpush1.msra.mxu0 %v1038
    %1327 = vmatprep.subr.mxu0 0.0
    %1328 = vmatpush1.msra.mxu0 0.0
    %1329 = vmatprep.subr.mxu0 0.0
    %1330 = vmatpush1.msra.mxu0 0.0
    %1331 = vmatprep.subr.mxu0 0.0
    %1332 = vmatpush1.msra.mxu0 0.0
    %1333 = vmatprep.subr.mxu0 0.0
    %1334 = vmatpush1.msra.mxu0 0.0
    %1335 = vmatprep.subr.mxu0 0.0
    %1336 = vmatpush1.msra.mxu0 0.0
    %1337 = vmatprep.subr.mxu0 0.0
    %1338 = vmatpush1.msra.mxu0 0.0
    %1339 = vmatprep.subr.mxu0 0.0
    %1340 = vmatpush1.msra.mxu0 0.0
    %1341 = vmatprep.subr.mxu0 0.0
    %1342 = vmatpush1.msra.mxu0 0.0
    %1343 = vmatprep.subr.mxu0 0.0
    %1344 = vmatpush1.msra.mxu0 0.0
    %1345 = vmatprep.subr.mxu0 0.0
    %1346 = vmatpush1.msra.mxu0 0.0
    %1347 = vmatprep.subr.mxu0 0.0
    %1348 = vmatpush1.msra.mxu0 0.0
    %1349 = vmatprep.subr.mxu0 0.0
    %1350 = vmatpush1.msra.mxu0 0.0
    %1351 = vmatprep.subr.mxu0 0.0
    %1352 = vmatpush1.msra.mxu0 0.0
    %1353 = vmatprep.subr.mxu0 0.0
    %1354 = vmatpush1.msra.mxu0 0.0
    %1355 = vmatprep.subr.mxu0 0.0
    %1356 = vmatpush1.msra.mxu0 0.0
    %1357 = vmatprep.subr.mxu0 0.0
    %1358 = vmatpush1.msra.mxu0 0.0
    %1359 = vmatprep.mubr.f32.mxu0 0.0
    %1360 = vmatmul.mubr.f32.gmra.mrb[0].mxu0 %v902
    %v1361 = vpop.f32.mrb[0].mxu0
    %v1362 = vadd.f32 %v1069, %v1361
    %v1363 = vpop.f32.mrb[0].mxu0
    %v1364 = vadd.f32 %v1073, %v1363
    %1365 = vdwg.mxu0
    %s1366 = smul.u32 %s905, 4
    %s1367 = sshll.u32 %s1366, 4
    %1368 = dma.done %s298, %s1367
    %s1369 = sshll.u32 %s1366, 4
    %1370 = dma.done %s310, %s1369
    %v1371 = vlaneseq
    %v1372 = vand.u32 %v1371, 127
    %v1373 = vadd.s32 %v1372, 128
    %v1374 = vadd.s32 %v1372, 256
    %v1375 = vadd.s32 %v1372, 384
    %vm1376 = vcmp.ge.s32.totalorder %v1372, 256
    %vm1377 = vcmp.ge.s32.totalorder %v1373, 256
    %vm1378 = vcmp.ge.s32.totalorder %v1374, 256
    %vm1379 = vcmp.ge.s32.totalorder %v1375, 256
    %vm1380 = vcmp.lt.s32.totalorder %v1372, 384
    %vm1381 = vcmp.lt.s32.totalorder %v1373, 384
    %vm1382 = vcmp.lt.s32.totalorder %v1374, 384
    %vm1383 = vcmp.lt.s32.totalorder %v1375, 384
    %vm1384 = vmand %vm1376, %vm1380
    %vm1385 = vmand %vm1377, %vm1381
    %vm1386 = vmand %vm1378, %vm1382
    %vm1387 = vmand %vm1379, %vm1383
    %v1388 = vsel %vm1384, 1.0, 0.5
    %v1389 = vsel %vm1385, 1.0, 0.5
    %v1390 = vsel %vm1386, 1.0, 0.5
    %v1391 = vsel %vm1387, 1.0, 0.5
    %v1396 = vcombine.low %v1149, %v1151
    %v1397 = vcombine.low %v1220, %v1222
    %v1399 = vunpack.c.l.s4 1966171168
    %v1400 = vunpack.c.0.s8 %v1399
    %v1401 = vlaneseq
    %v1402 = vshrl.u32 %v1401, 7
    %v1403 = vsub.s32 %v1400, %v1402
    %v1404 = vrot.slane %v1396, %v1403
    %v1406 = vunpack.c.l.s4 1966171168
    %v1407 = vunpack.c.0.s8 %v1406
    %v1408 = vlaneseq
    %v1409 = vshrl.u32 %v1408, 7
    %v1410 = vsub.s32 %v1407, %v1409
    %v1411 = vrot.slane %v1397, %v1410
    %v1412 = vcombine.low %v1404, %v1411
    %v1414 = vunpack.c.l.s4 1966171168
    %v1415 = vunpack.c.0.s8 %v1414
    %v1416 = vlaneseq
    %v1417 = vshrl.u32 %v1416, 7
    %v1418 = vsub.s32 %v1415, %v1417
    %v1419 = vrot.slane %v1412, %v1418
    %v1421 = vlaneseq
    %vm1422 = vcmp.ge.s32.totalorder %v1421, 0
    %vm1423 = vcmp.lt.s32.totalorder %v1421, 512
    %vm1424 = vmand %vm1422, %vm1423
    %1425 = vst.msk [vmem:[#allocation6] ss:$2 sm:$0xf] %vm1424, %v1419
    %v1430 = vcombine.high %v1291, %v1293
    %v1431 = vcombine.high %v1362, %v1364
    %v1433 = vunpack.c.l.s4 1966171168
    %v1434 = vunpack.c.0.s8 %v1433
    %v1435 = vlaneseq
    %v1436 = vshrl.u32 %v1435, 7
    %v1437 = vsub.s32 %v1434, %v1436
    %v1438 = vrot.slane %v1430, %v1437
    %v1440 = vunpack.c.l.s4 1966171168
    %v1441 = vunpack.c.0.s8 %v1440
    %v1442 = vlaneseq
    %v1443 = vshrl.u32 %v1442, 7
    %v1444 = vsub.s32 %v1441, %v1443
    %v1445 = vrot.slane %v1431, %v1444
    %v1446 = vcombine.high %v1438, %v1445
    %v1448 = vunpack.c.l.s4 1966171168
    %v1449 = vunpack.c.0.s8 %v1448
    %v1450 = vlaneseq
    %v1451 = vshrl.u32 %v1450, 7
    %v1452 = vsub.s32 %v1449, %v1451
    %v1453 = vrot.slane %v1446, %v1452
    %v1454 = vcombine.high %v1453, %v1453
    %s1456 = scalar_lea.vmem [#allocation6], 1
    %1457 = vst.msk [vmem:[%s1456] ss:$2 sm:$0xf] %vm1424, %v1454
    %v1458 = vld [vmem:[#allocation6] sm:$0xff]
    %v1463 = vcombine.low %v1388, %v1389
    %v1464 = vcombine.low %v1390, %v1391
    %v1466 = vunpack.c.l.s4 1983009808
    %v1467 = vunpack.c.0.s8 %v1466
    %v1468 = vlaneseq
    %v1469 = vshrl.u32 %v1468, 7
    %v1470 = vsub.s32 %v1467, %v1469
    %v1471 = vrot.slane %v1463, %v1470
    %v1473 = vunpack.c.l.s4 1983009808
    %v1474 = vunpack.c.0.s8 %v1473
    %v1475 = vlaneseq
    %v1476 = vshrl.u32 %v1475, 7
    %v1477 = vsub.s32 %v1474, %v1476
    %v1478 = vrot.slane %v1464, %v1477
    %v1479 = vcombine.low %v1471, %v1478
    %v1481 = vmul.f32 %v1458, %v1479
    %v1482 = vtanh.pop %v1481
    %v1483 = vadd.f32 %v1482, 1.0
    %v1484 = vmul.f32 %v1483, 0.5
    %v1486 = vrot.slane %v1482, 2
    %v1488 = vadd.f32 %v1486, 1.0
    %v1489 = vmul.f32 %v1488, 0.5
    %v1490 = vrot.slane %v1482, 6
    %v1492 = vadd.f32 %v1490, 1.0
    %v1493 = vmul.f32 %v1492, 0.5
    %v1494 = vmul.f32 %v1489, 0.0
    %v1495 = vrot.slane %v1482, 4
    %v1497 = vmul.f32 %v1484, %v1495
    %v1498 = vadd.f32 %v1494, %v1497
    %v1499 = vtanh.pop %v1498
    %v1500 = vmul.f32 %v1493, %v1499
    %1501 = vst [vmem:[#allocation7] sm:$0x1] %v1500
    %v1503 = vlaneseq
    %v1504 = vshrl.u32 %v1503, 7
    %v1505 = vsub.s32 1, %v1504
    %v1506 = vrot.slane %v1500, %v1505
    %1508 = vst [vmem:[#allocation7 + $0xf] sm:$0x1] %v1506
    %v1509 = vld [vmem:[#allocation4] sm:$0xff]
    %v1510 = vld [vmem:[#allocation4 + $0x8] sm:$0xff]
    %v1511 = vld [vmem:[#allocation4 + $0x10] sm:$0xff]
    %v1512 = vld [vmem:[#allocation4 + $0x18] sm:$0xff]
    %v1513 = vld [vmem:[#allocation4 + $0x20] sm:$0xff]
    %v1514 = vld [vmem:[#allocation4 + $0x28] sm:$0xff]
    %v1515 = vld [vmem:[#allocation4 + $0x30] sm:$0xff]
    %v1516 = vld [vmem:[#allocation4 + $0x38] sm:$0xff]
    %v1517 = vld [vmem:[#allocation4 + $0x40] sm:$0xff]
    %v1518 = vld [vmem:[#allocation4 + $0x48] sm:$0xff]
    %v1519 = vld [vmem:[#allocation4 + $0x50] sm:$0xff]
    %v1520 = vld [vmem:[#allocation4 + $0x58] sm:$0xff]
    %v1521 = vld [vmem:[#allocation4 + $0x60] sm:$0xff]
    %v1522 = vld [vmem:[#allocation4 + $0x68] sm:$0xff]
    %v1523 = vld [vmem:[#allocation4 + $0x70] sm:$0xff]
    %v1524 = vld [vmem:[#allocation4 + $0x78] sm:$0xff]
    %v1525 = vld [vmem:[#allocation4 + $0x80] sm:$0xff]
    %v1526 = vld [vmem:[#allocation4 + $0x88] sm:$0xff]
    %v1527 = vld [vmem:[#allocation4 + $0x90] sm:$0xff]
    %v1528 = vld [vmem:[#allocation4 + $0x98] sm:$0xff]
    %v1529 = vld [vmem:[#allocation4 + $0xa0] sm:$0xff]
    %v1530 = vld [vmem:[#allocation4 + $0xa8] sm:$0xff]
    %v1531 = vld [vmem:[#allocation4 + $0xb0] sm:$0xff]
    %v1532 = vld [vmem:[#allocation4 + $0xb8] sm:$0xff]
    %v1533 = vld [vmem:[#allocation4 + $0xc0] sm:$0xff]
    %v1534 = vld [vmem:[#allocation4 + $0xc8] sm:$0xff]
    %v1535 = vld [vmem:[#allocation4 + $0xd0] sm:$0xff]
    %v1536 = vld [vmem:[#allocation4 + $0xd8] sm:$0xff]
    %v1537 = vld [vmem:[#allocation4 + $0xe0] sm:$0xff]
    %v1538 = vld [vmem:[#allocation4 + $0xe8] sm:$0xff]
    %v1539 = vld [vmem:[#allocation4 + $0xf0] sm:$0xff]
    %v1540 = vld [vmem:[#allocation4 + $0xf8] sm:$0xff]
    %v1541 = vld [vmem:[#allocation4 + $0x100] sm:$0xff]
    %v1542 = vld [vmem:[#allocation4 + $0x108] sm:$0xff]
    %v1543 = vld [vmem:[#allocation4 + $0x110] sm:$0xff]
    %v1544 = vld [vmem:[#allocation4 + $0x118] sm:$0xff]
    %v1545 = vld [vmem:[#allocation4 + $0x120] sm:$0xff]
    %v1546 = vld [vmem:[#allocation4 + $0x128] sm:$0xff]
    %v1547 = vld [vmem:[#allocation4 + $0x130] sm:$0xff]
    %v1548 = vld [vmem:[#allocation4 + $0x138] sm:$0xff]
    %v1549 = vld [vmem:[#allocation4 + $0x140] sm:$0xff]
    %v1550 = vld [vmem:[#allocation4 + $0x148] sm:$0xff]
    %v1551 = vld [vmem:[#allocation4 + $0x150] sm:$0xff]
    %v1552 = vld [vmem:[#allocation4 + $0x158] sm:$0xff]
    %v1553 = vld [vmem:[#allocation4 + $0x160] sm:$0xff]
    %v1554 = vld [vmem:[#allocation4 + $0x168] sm:$0xff]
    %v1555 = vld [vmem:[#allocation4 + $0x170] sm:$0xff]
    %v1556 = vld [vmem:[#allocation4 + $0x178] sm:$0xff]
    %v1557 = vld [vmem:[#allocation4 + $0x180] sm:$0xff]
    %v1558 = vld [vmem:[#allocation4 + $0x188] sm:$0xff]
    %v1559 = vld [vmem:[#allocation4 + $0x190] sm:$0xff]
    %v1560 = vld [vmem:[#allocation4 + $0x198] sm:$0xff]
    %v1561 = vld [vmem:[#allocation4 + $0x1a0] sm:$0xff]
    %v1562 = vld [vmem:[#allocation4 + $0x1a8] sm:$0xff]
    %v1563 = vld [vmem:[#allocation4 + $0x1b0] sm:$0xff]
    %v1564 = vld [vmem:[#allocation4 + $0x1b8] sm:$0xff]
    %v1565 = vld [vmem:[#allocation4 + $0x1c0] sm:$0xff]
    %v1566 = vld [vmem:[#allocation4 + $0x1c8] sm:$0xff]
    %v1567 = vld [vmem:[#allocation4 + $0x1d0] sm:$0xff]
    %v1568 = vld [vmem:[#allocation4 + $0x1d8] sm:$0xff]
    %v1569 = vld [vmem:[#allocation4 + $0x1e0] sm:$0xff]
    %v1570 = vld [vmem:[#allocation4 + $0x1e8] sm:$0xff]
    %v1571 = vld [vmem:[#allocation4 + $0x1f0] sm:$0xff]
    %v1572 = vld [vmem:[#allocation4 + $0x1f8] sm:$0xff]
    %1573 = vmatprep.subr.mxu0 %v1510
    %1574 = vmatpush1.msra.mxu0 %v1509
    %1575 = vmatprep.subr.mxu0 %v1514
    %1576 = vmatpush1.msra.mxu0 %v1513
    %1577 = vmatprep.subr.mxu0 %v1518
    %1578 = vmatpush1.msra.mxu0 %v1517
    %1579 = vmatprep.subr.mxu0 %v1522
    %1580 = vmatpush1.msra.mxu0 %v1521
    %1581 = vmatprep.subr.mxu0 %v1526
    %1582 = vmatpush1.msra.mxu0 %v1525
    %1583 = vmatprep.subr.mxu0 %v1530
    %1584 = vmatpush1.msra.mxu0 %v1529
    %1585 = vmatprep.subr.mxu0 %v1534
    %1586 = vmatpush1.msra.mxu0 %v1533
    %1587 = vmatprep.subr.mxu0 %v1538
    %1588 = vmatpush1.msra.mxu0 %v1537
    %1589 = vmatprep.subr.mxu0 %v1542
    %1590 = vmatpush1.msra.mxu0 %v1541
    %1591 = vmatprep.subr.mxu0 %v1546
    %1592 = vmatpush1.msra.mxu0 %v1545
    %1593 = vmatprep.subr.mxu0 %v1550
    %1594 = vmatpush1.msra.mxu0 %v1549
    %1595 = vmatprep.subr.mxu0 %v1554
    %1596 = vmatpush1.msra.mxu0 %v1553
    %1597 = vmatprep.subr.mxu0 %v1558
    %1598 = vmatpush1.msra.mxu0 %v1557
    %1599 = vmatprep.subr.mxu0 %v1562
    %1600 = vmatpush1.msra.mxu0 %v1561
    %1601 = vmatprep.subr.mxu0 %v1566
    %1602 = vmatpush1.msra.mxu0 %v1565
    %1603 = vmatprep.subr.mxu0 %v1570
    %1604 = vmatpush1.msra.mxu0 %v1569
    %1605 = vmatprep.subr.mxu0 0.0
    %1606 = vmatpush1.msra.mxu0 0.0
    %1607 = vmatprep.subr.mxu0 0.0
    %1608 = vmatpush1.msra.mxu0 0.0
    %1609 = vmatprep.subr.mxu0 0.0
    %1610 = vmatpush1.msra.mxu0 0.0
    %1611 = vmatprep.subr.mxu0 0.0
    %1612 = vmatpush1.msra.mxu0 0.0
    %1613 = vmatprep.subr.mxu0 0.0
    %1614 = vmatpush1.msra.mxu0 0.0
    %1615 = vmatprep.subr.mxu0 0.0
    %1616 = vmatpush1.msra.mxu0 0.0
    %1617 = vmatprep.subr.mxu0 0.0
    %1618 = vmatpush1.msra.mxu0 0.0
    %1619 = vmatprep.subr.mxu0 0.0
    %1620 = vmatpush1.msra.mxu0 0.0
    %1621 = vmatprep.subr.mxu0 0.0
    %1622 = vmatpush1.msra.mxu0 0.0
    %1623 = vmatprep.subr.mxu0 0.0
    %1624 = vmatpush1.msra.mxu0 0.0
    %1625 = vmatprep.subr.mxu0 0.0
    %1626 = vmatpush1.msra.mxu0 0.0
    %1627 = vmatprep.subr.mxu0 0.0
    %1628 = vmatpush1.msra.mxu0 0.0
    %1629 = vmatprep.subr.mxu0 0.0
    %1630 = vmatpush1.msra.mxu0 0.0
    %1631 = vmatprep.subr.mxu0 0.0
    %1632 = vmatpush1.msra.mxu0 0.0
    %1633 = vmatprep.subr.mxu0 0.0
    %1634 = vmatpush1.msra.mxu0 0.0
    %1635 = vmatprep.subr.mxu0 0.0
    %1636 = vmatpush1.msra.mxu0 0.0
    %1637 = vmatprep.mubr.f32.mxu0 0.0
    %1638 = vmatmul.mubr.f32.gmra.mrb[0].mxu0 %v1500
    %v1639 = vpop.f32.mrb[0].mxu0
    %v1640 = vadd.f32 0.0, %v1639
    %v1641 = vpop.f32.mrb[0].mxu0
    %v1642 = vadd.f32 0.0, %v1641
    %1643 = vdwg.mxu0
    %1644 = vmatprep.subr.mxu0 %v1512
    %1645 = vmatpush1.msra.mxu0 %v1511
    %1646 = vmatprep.subr.mxu0 %v1516
    %1647 = vmatpush1.msra.mxu0 %v1515
    %1648 = vmatprep.subr.mxu0 %v1520
    %1649 = vmatpush1.msra.mxu0 %v1519
    %1650 = vmatprep.subr.mxu0 %v1524
    %1651 = vmatpush1.msra.mxu0 %v1523
    %1652 = vmatprep.subr.mxu0 %v1528
    %1653 = vmatpush1.msra.mxu0 %v1527
    %1654 = vmatprep.subr.mxu0 %v1532
    %1655 = vmatpush1.msra.mxu0 %v1531
    %1656 = vmatprep.subr.mxu0 %v1536
    %1657 = vmatpush1.msra.mxu0 %v1535
    %1658 = vmatprep.subr.mxu0 %v1540
    %1659 = vmatpush1.msra.mxu0 %v1539
    %1660 = vmatprep.subr.mxu0 %v1544
    %1661 = vmatpush1.msra.mxu0 %v1543
    %1662 = vmatprep.subr.mxu0 %v1548
    %1663 = vmatpush1.msra.mxu0 %v1547
    %1664 = vmatprep.subr.mxu0 %v1552
    %1665 = vmatpush1.msra.mxu0 %v1551
    %1666 = vmatprep.subr.mxu0 %v1556
    %1667 = vmatpush1.msra.mxu0 %v1555
    %1668 = vmatprep.subr.mxu0 %v1560
    %1669 = vmatpush1.msra.mxu0 %v1559
    %1670 = vmatprep.subr.mxu0 %v1564
    %1671 = vmatpush1.msra.mxu0 %v1563
    %1672 = vmatprep.subr.mxu0 %v1568
    %1673 = vmatpush1.msra.mxu0 %v1567
    %1674 = vmatprep.subr.mxu0 %v1572
    %1675 = vmatpush1.msra.mxu0 %v1571
    %1676 = vmatprep.subr.mxu0 0.0
    %1677 = vmatpush1.msra.mxu0 0.0
    %1678 = vmatprep.subr.mxu0 0.0
    %1679 = vmatpush1.msra.mxu0 0.0
    %1680 = vmatprep.subr.mxu0 0.0
    %1681 = vmatpush1.msra.mxu0 0.0
    %1682 = vmatprep.subr.mxu0 0.0
    %1683 = vmatpush1.msra.mxu0 0.0
    %1684 = vmatprep.subr.mxu0 0.0
    %1685 = vmatpush1.msra.mxu0 0.0
    %1686 = vmatprep.subr.mxu0 0.0
    %1687 = vmatpush1.msra.mxu0 0.0
    %1688 = vmatprep.subr.mxu0 0.0
    %1689 = vmatpush1.msra.mxu0 0.0
    %1690 = vmatprep.subr.mxu0 0.0
    %1691 = vmatpush1.msra.mxu0 0.0
    %1692 = vmatprep.subr.mxu0 0.0
    %1693 = vmatpush1.msra.mxu0 0.0
    %1694 = vmatprep.subr.mxu0 0.0
    %1695 = vmatpush1.msra.mxu0 0.0
    %1696 = vmatprep.subr.mxu0 0.0
    %1697 = vmatpush1.msra.mxu0 0.0
    %1698 = vmatprep.subr.mxu0 0.0
    %1699 = vmatpush1.msra.mxu0 0.0
    %1700 = vmatprep.subr.mxu0 0.0
    %1701 = vmatpush1.msra.mxu0 0.0
    %1702 = vmatprep.subr.mxu0 0.0
    %1703 = vmatpush1.msra.mxu0 0.0
    %1704 = vmatprep.subr.mxu0 0.0
    %1705 = vmatpush1.msra.mxu0 0.0
    %1706 = vmatprep.subr.mxu0 0.0
    %1707 = vmatpush1.msra.mxu0 0.0
    %1708 = vmatprep.mubr.f32.mxu0 0.0
    %1709 = vmatmul.mubr.f32.gmra.mrb[0].mxu0 %v1500
    %v1710 = vpop.f32.mrb[0].mxu0
    %v1711 = vadd.f32 0.0, %v1710
    %v1712 = vpop.f32.mrb[0].mxu0
    %v1713 = vadd.f32 0.0, %v1712
    %1714 = vdwg.mxu0
    %v1719 = vrot.slane %v1640, 7
    %v1720 = vrot.slane %v1642, 7
    %v1721 = vrot.slane %v1711, 7
    %v1722 = vrot.slane %v1713, 7
    %v1727 = vadd.f32 %v1149, %v1719
    %v1728 = vadd.f32 %v1151, %v1720
    %v1729 = vadd.f32 %v1220, %v1721
    %v1730 = vadd.f32 %v1222, %v1722
    %v1731 = vld [vmem:[#allocation5] sm:$0xff]
    %v1732 = vld [vmem:[#allocation5 + $0x8] sm:$0xff]
    %v1733 = vld [vmem:[#allocation5 + $0x10] sm:$0xff]
    %v1734 = vld [vmem:[#allocation5 + $0x18] sm:$0xff]
    %v1735 = vld [vmem:[#allocation5 + $0x20] sm:$0xff]
    %v1736 = vld [vmem:[#allocation5 + $0x28] sm:$0xff]
    %v1737 = vld [vmem:[#allocation5 + $0x30] sm:$0xff]
    %v1738 = vld [vmem:[#allocation5 + $0x38] sm:$0xff]
    %v1739 = vld [vmem:[#allocation5 + $0x40] sm:$0xff]
    %v1740 = vld [vmem:[#allocation5 + $0x48] sm:$0xff]
    %v1741 = vld [vmem:[#allocation5 + $0x50] sm:$0xff]
    %v1742 = vld [vmem:[#allocation5 + $0x58] sm:$0xff]
    %v1743 = vld [vmem:[#allocation5 + $0x60] sm:$0xff]
    %v1744 = vld [vmem:[#allocation5 + $0x68] sm:$0xff]
    %v1745 = vld [vmem:[#allocation5 + $0x70] sm:$0xff]
    %v1746 = vld [vmem:[#allocation5 + $0x78] sm:$0xff]
    %v1747 = vld [vmem:[#allocation5 + $0x80] sm:$0xff]
    %v1748 = vld [vmem:[#allocation5 + $0x88] sm:$0xff]
    %v1749 = vld [vmem:[#allocation5 + $0x90] sm:$0xff]
    %v1750 = vld [vmem:[#allocation5 + $0x98] sm:$0xff]
    %v1751 = vld [vmem:[#allocation5 + $0xa0] sm:$0xff]
    %v1752 = vld [vmem:[#allocation5 + $0xa8] sm:$0xff]
    %v1753 = vld [vmem:[#allocation5 + $0xb0] sm:$0xff]
    %v1754 = vld [vmem:[#allocation5 + $0xb8] sm:$0xff]
    %v1755 = vld [vmem:[#allocation5 + $0xc0] sm:$0xff]
    %v1756 = vld [vmem:[#allocation5 + $0xc8] sm:$0xff]
    %v1757 = vld [vmem:[#allocation5 + $0xd0] sm:$0xff]
    %v1758 = vld [vmem:[#allocation5 + $0xd8] sm:$0xff]
    %v1759 = vld [vmem:[#allocation5 + $0xe0] sm:$0xff]
    %v1760 = vld [vmem:[#allocation5 + $0xe8] sm:$0xff]
    %v1761 = vld [vmem:[#allocation5 + $0xf0] sm:$0xff]
    %v1762 = vld [vmem:[#allocation5 + $0xf8] sm:$0xff]
    %v1763 = vld [vmem:[#allocation5 + $0x100] sm:$0xff]
    %v1764 = vld [vmem:[#allocation5 + $0x108] sm:$0xff]
    %v1765 = vld [vmem:[#allocation5 + $0x110] sm:$0xff]
    %v1766 = vld [vmem:[#allocation5 + $0x118] sm:$0xff]
    %v1767 = vld [vmem:[#allocation5 + $0x120] sm:$0xff]
    %v1768 = vld [vmem:[#allocation5 + $0x128] sm:$0xff]
    %v1769 = vld [vmem:[#allocation5 + $0x130] sm:$0xff]
    %v1770 = vld [vmem:[#allocation5 + $0x138] sm:$0xff]
    %v1771 = vld [vmem:[#allocation5 + $0x140] sm:$0xff]
    %v1772 = vld [vmem:[#allocation5 + $0x148] sm:$0xff]
    %v1773 = vld [vmem:[#allocation5 + $0x150] sm:$0xff]
    %v1774 = vld [vmem:[#allocation5 + $0x158] sm:$0xff]
    %v1775 = vld [vmem:[#allocation5 + $0x160] sm:$0xff]
    %v1776 = vld [vmem:[#allocation5 + $0x168] sm:$0xff]
    %v1777 = vld [vmem:[#allocation5 + $0x170] sm:$0xff]
    %v1778 = vld [vmem:[#allocation5 + $0x178] sm:$0xff]
    %v1779 = vld [vmem:[#allocation5 + $0x180] sm:$0xff]
    %v1780 = vld [vmem:[#allocation5 + $0x188] sm:$0xff]
    %v1781 = vld [vmem:[#allocation5 + $0x190] sm:$0xff]
    %v1782 = vld [vmem:[#allocation5 + $0x198] sm:$0xff]
    %v1783 = vld [vmem:[#allocation5 + $0x1a0] sm:$0xff]
    %v1784 = vld [vmem:[#allocation5 + $0x1a8] sm:$0xff]
    %v1785 = vld [vmem:[#allocation5 + $0x1b0] sm:$0xff]
    %v1786 = vld [vmem:[#allocation5 + $0x1b8] sm:$0xff]
    %v1787 = vld [vmem:[#allocation5 + $0x1c0] sm:$0xff]
    %v1788 = vld [vmem:[#allocation5 + $0x1c8] sm:$0xff]
    %v1789 = vld [vmem:[#allocation5 + $0x1d0] sm:$0xff]
    %v1790 = vld [vmem:[#allocation5 + $0x1d8] sm:$0xff]
    %v1791 = vld [vmem:[#allocation5 + $0x1e0] sm:$0xff]
    %v1792 = vld [vmem:[#allocation5 + $0x1e8] sm:$0xff]
    %v1793 = vld [vmem:[#allocation5 + $0x1f0] sm:$0xff]
    %v1794 = vld [vmem:[#allocation5 + $0x1f8] sm:$0xff]
    %1795 = vmatprep.subr.mxu0 %v1732
    %1796 = vmatpush1.msra.mxu0 %v1731
    %1797 = vmatprep.subr.mxu0 %v1736
    %1798 = vmatpush1.msra.mxu0 %v1735
    %1799 = vmatprep.subr.mxu0 %v1740
    %1800 = vmatpush1.msra.mxu0 %v1739
    %1801 = vmatprep.subr.mxu0 %v1744
    %1802 = vmatpush1.msra.mxu0 %v1743
    %1803 = vmatprep.subr.mxu0 %v1748
    %1804 = vmatpush1.msra.mxu0 %v1747
    %1805 = vmatprep.subr.mxu0 %v1752
    %1806 = vmatpush1.msra.mxu0 %v1751
    %1807 = vmatprep.subr.mxu0 %v1756
    %1808 = vmatpush1.msra.mxu0 %v1755
    %1809 = vmatprep.subr.mxu0 %v1760
    %1810 = vmatpush1.msra.mxu0 %v1759
    %1811 = vmatprep.subr.mxu0 %v1764
    %1812 = vmatpush1.msra.mxu0 %v1763
    %1813 = vmatprep.subr.mxu0 %v1768
    %1814 = vmatpush1.msra.mxu0 %v1767
    %1815 = vmatprep.subr.mxu0 %v1772
    %1816 = vmatpush1.msra.mxu0 %v1771
    %1817 = vmatprep.subr.mxu0 %v1776
    %1818 = vmatpush1.msra.mxu0 %v1775
    %1819 = vmatprep.subr.mxu0 %v1780
    %1820 = vmatpush1.msra.mxu0 %v1779
    %1821 = vmatprep.subr.mxu0 %v1784
    %1822 = vmatpush1.msra.mxu0 %v1783
    %1823 = vmatprep.subr.mxu0 %v1788
    %1824 = vmatpush1.msra.mxu0 %v1787
    %1825 = vmatprep.subr.mxu0 %v1792
    %1826 = vmatpush1.msra.mxu0 %v1791
    %1827 = vmatprep.subr.mxu0 0.0
    %1828 = vmatpush1.msra.mxu0 0.0
    %1829 = vmatprep.subr.mxu0 0.0
    %1830 = vmatpush1.msra.mxu0 0.0
    %1831 = vmatprep.subr.mxu0 0.0
    %1832 = vmatpush1.msra.mxu0 0.0
    %1833 = vmatprep.subr.mxu0 0.0
    %1834 = vmatpush1.msra.mxu0 0.0
    %1835 = vmatprep.subr.mxu0 0.0
    %1836 = vmatpush1.msra.mxu0 0.0
    %1837 = vmatprep.subr.mxu0 0.0
    %1838 = vmatpush1.msra.mxu0 0.0
    %1839 = vmatprep.subr.mxu0 0.0
    %1840 = vmatpush1.msra.mxu0 0.0
    %1841 = vmatprep.subr.mxu0 0.0
    %1842 = vmatpush1.msra.mxu0 0.0
    %1843 = vmatprep.subr.mxu0 0.0
    %1844 = vmatpush1.msra.mxu0 0.0
    %1845 = vmatprep.subr.mxu0 0.0
    %1846 = vmatpush1.msra.mxu0 0.0
    %1847 = vmatprep.subr.mxu0 0.0
    %1848 = vmatpush1.msra.mxu0 0.0
    %1849 = vmatprep.subr.mxu0 0.0
    %1850 = vmatpush1.msra.mxu0 0.0
    %1851 = vmatprep.subr.mxu0 0.0
    %1852 = vmatpush1.msra.mxu0 0.0
    %1853 = vmatprep.subr.mxu0 0.0
    %1854 = vmatpush1.msra.mxu0 0.0
    %1855 = vmatprep.subr.mxu0 0.0
    %1856 = vmatpush1.msra.mxu0 0.0
    %1857 = vmatprep.subr.mxu0 0.0
    %1858 = vmatpush1.msra.mxu0 0.0
    %1859 = vmatprep.mubr.f32.mxu0 0.0
    %1860 = vmatmul.mubr.f32.gmra.mrb[0].mxu0 %v1506
    %v1861 = vpop.f32.mrb[0].mxu0
    %v1862 = vadd.f32 0.0, %v1861
    %v1863 = vpop.f32.mrb[0].mxu0
    %v1864 = vadd.f32 0.0, %v1863
    %1865 = vdwg.mxu0
    %1866 = vmatprep.subr.mxu0 %v1734
    %1867 = vmatpush1.msra.mxu0 %v1733
    %1868 = vmatprep.subr.mxu0 %v1738
    %1869 = vmatpush1.msra.mxu0 %v1737
    %1870 = vmatprep.subr.mxu0 %v1742
    %1871 = vmatpush1.msra.mxu0 %v1741
    %1872 = vmatprep.subr.mxu0 %v1746
    %1873 = vmatpush1.msra.mxu0 %v1745
    %1874 = vmatprep.subr.mxu0 %v1750
    %1875 = vmatpush1.msra.mxu0 %v1749
    %1876 = vmatprep.subr.mxu0 %v1754
    %1877 = vmatpush1.msra.mxu0 %v1753
    %1878 = vmatprep.subr.mxu0 %v1758
    %1879 = vmatpush1.msra.mxu0 %v1757
    %1880 = vmatprep.subr.mxu0 %v1762
    %1881 = vmatpush1.msra.mxu0 %v1761
    %1882 = vmatprep.subr.mxu0 %v1766
    %1883 = vmatpush1.msra.mxu0 %v1765
    %1884 = vmatprep.subr.mxu0 %v1770
    %1885 = vmatpush1.msra.mxu0 %v1769
    %1886 = vmatprep.subr.mxu0 %v1774
    %1887 = vmatpush1.msra.mxu0 %v1773
    %1888 = vmatprep.subr.mxu0 %v1778
    %1889 = vmatpush1.msra.mxu0 %v1777
    %1890 = vmatprep.subr.mxu0 %v1782
    %1891 = vmatpush1.msra.mxu0 %v1781
    %1892 = vmatprep.subr.mxu0 %v1786
    %1893 = vmatpush1.msra.mxu0 %v1785
    %1894 = vmatprep.subr.mxu0 %v1790
    %1895 = vmatpush1.msra.mxu0 %v1789
    %1896 = vmatprep.subr.mxu0 %v1794
    %1897 = vmatpush1.msra.mxu0 %v1793
    %1898 = vmatprep.subr.mxu0 0.0
    %1899 = vmatpush1.msra.mxu0 0.0
    %1900 = vmatprep.subr.mxu0 0.0
    %1901 = vmatpush1.msra.mxu0 0.0
    %1902 = vmatprep.subr.mxu0 0.0
    %1903 = vmatpush1.msra.mxu0 0.0
    %1904 = vmatprep.subr.mxu0 0.0
    %1905 = vmatpush1.msra.mxu0 0.0
    %1906 = vmatprep.subr.mxu0 0.0
    %1907 = vmatpush1.msra.mxu0 0.0
    %1908 = vmatprep.subr.mxu0 0.0
    %1909 = vmatpush1.msra.mxu0 0.0
    %1910 = vmatprep.subr.mxu0 0.0
    %1911 = vmatpush1.msra.mxu0 0.0
    %1912 = vmatprep.subr.mxu0 0.0
    %1913 = vmatpush1.msra.mxu0 0.0
    %1914 = vmatprep.subr.mxu0 0.0
    %1915 = vmatpush1.msra.mxu0 0.0
    %1916 = vmatprep.subr.mxu0 0.0
    %1917 = vmatpush1.msra.mxu0 0.0
    %1918 = vmatprep.subr.mxu0 0.0
    %1919 = vmatpush1.msra.mxu0 0.0
    %1920 = vmatprep.subr.mxu0 0.0
    %1921 = vmatpush1.msra.mxu0 0.0
    %1922 = vmatprep.subr.mxu0 0.0
    %1923 = vmatpush1.msra.mxu0 0.0
    %1924 = vmatprep.subr.mxu0 0.0
    %1925 = vmatpush1.msra.mxu0 0.0
    %1926 = vmatprep.subr.mxu0 0.0
    %1927 = vmatpush1.msra.mxu0 0.0
    %1928 = vmatprep.subr.mxu0 0.0
    %1929 = vmatpush1.msra.mxu0 0.0
    %1930 = vmatprep.mubr.f32.mxu0 0.0
    %1931 = vmatmul.mubr.f32.gmra.mrb[0].mxu0 %v1506
    %v1932 = vpop.f32.mrb[0].mxu0
    %v1933 = vadd.f32 0.0, %v1932
    %v1934 = vpop.f32.mrb[0].mxu0
    %v1935 = vadd.f32 0.0, %v1934
    %1936 = vdwg.mxu0
    %v1941 = vrot.slane %v1862, 2
    %v1942 = vrot.slane %v1864, 2
    %v1943 = vrot.slane %v1933, 2
    %v1944 = vrot.slane %v1935, 2
    %v1949 = vadd.f32 %v1291, %v1941
    %v1950 = vadd.f32 %v1293, %v1942
    %v1951 = vadd.f32 %v1362, %v1943
    %v1952 = vadd.f32 %v1364, %v1944
    %v1957 = vcombine.low %v1727, %v1728
    %v1958 = vcombine.low %v1729, %v1730
    %v1960 = vunpack.c.l.s4 1966171168
    %v1961 = vunpack.c.0.s8 %v1960
    %v1962 = vlaneseq
    %v1963 = vshrl.u32 %v1962, 7
    %v1964 = vsub.s32 %v1961, %v1963
    %v1965 = vrot.slane %v1957, %v1964
    %v1967 = vunpack.c.l.s4 1966171168
    %v1968 = vunpack.c.0.s8 %v1967
    %v1969 = vlaneseq
    %v1970 = vshrl.u32 %v1969, 7
    %v1971 = vsub.s32 %v1968, %v1970
    %v1972 = vrot.slane %v1958, %v1971
    %v1973 = vcombine.high %v1965, %v1972
    %v1975 = vunpack.c.l.s4 1966171168
    %v1976 = vunpack.c.0.s8 %v1975
    %v1977 = vlaneseq
    %v1978 = vshrl.u32 %v1977, 7
    %v1979 = vsub.s32 %v1976, %v1978
    %v1980 = vrot.slane %v1973, %v1979
    %1982 = vst.msk [vmem:[#allocation6] ss:$2 sm:$0xf] %vm1424, %v1980
    %v1987 = vcombine.high %v1949, %v1950
    %v1988 = vcombine.high %v1951, %v1952
    %v1990 = vunpack.c.l.s4 1966171168
    %v1991 = vunpack.c.0.s8 %v1990
    %v1992 = vlaneseq
    %v1993 = vshrl.u32 %v1992, 7
    %v1994 = vsub.s32 %v1991, %v1993
    %v1995 = vrot.slane %v1987, %v1994
    %v1997 = vunpack.c.l.s4 1966171168
    %v1998 = vunpack.c.0.s8 %v1997
    %v1999 = vlaneseq
    %v2000 = vshrl.u32 %v1999, 7
    %v2001 = vsub.s32 %v1998, %v2000
    %v2002 = vrot.slane %v1988, %v2001
    %v2003 = vcombine.low %v1995, %v2002
    %v2005 = vunpack.c.l.s4 1966171168
    %v2006 = vunpack.c.0.s8 %v2005
    %v2007 = vlaneseq
    %v2008 = vshrl.u32 %v2007, 7
    %v2009 = vsub.s32 %v2006, %v2008
    %v2010 = vrot.slane %v2003, %v2009
    %v2011 = vcombine.high %v2010, %v2010
    %2013 = vst.msk [vmem:[%s1456] ss:$2 sm:$0xf] %vm1424, %v2011
    %v2014 = vld [vmem:[#allocation6] sm:$0xff]
    %v2015 = vmul.f32 %v2014, %v1479
    %v2016 = vtanh.pop %v2015
    %v2017 = vadd.f32 %v2016, 1.0
    %v2018 = vmul.f32 %v2017, 0.5
    %v2020 = vrot.slane %v2016, 2
    %v2022 = vadd.f32 %v2020, 1.0
    %v2023 = vmul.f32 %v2022, 0.5
    %v2024 = vrot.slane %v2016, 6
    %v2026 = vadd.f32 %v2024, 1.0
    %v2027 = vmul.f32 %v2026, 0.5
    %v2028 = vmul.f32 %v2023, %v1498
    %v2029 = vrot.slane %v2016, 4
    %v2031 = vmul.f32 %v2018, %v2029
    %v2032 = vadd.f32 %v2028, %v2031
    %v2033 = vtanh.pop %v2032
    %v2034 = vmul.f32 %v2027, %v2033
    %2035 = vst [vmem:[#allocation7 + $0x1] sm:$0x1] %v2034
    %v2037 = vlaneseq
    %v2038 = vshrl.u32 %v2037, 7
    %v2039 = vsub.s32 1, %v2038
    %v2040 = vrot.slane %v2034, %v2039
    %2042 = vst [vmem:[#allocation7 + $0xe] sm:$0x1] %v2040
    %v2043 = vld [vmem:[#allocation4] sm:$0xff]
    %v2044 = vld [vmem:[#allocation4 + $0x8] sm:$0xff]
    %v2045 = vld [vmem:[#allocation4 + $0x10] sm:$0xff]
    %v2046 = vld [vmem:[#allocation4 + $0x18] sm:$0xff]
    %v2047 = vld [vmem:[#allocation4 + $0x20] sm:$0xff]
    %v2048 = vld [vmem:[#allocation4 + $0x28] sm:$0xff]
    %v2049 = vld [vmem:[#allocation4 + $0x30] sm:$0xff]
    %v2050 = vld [vmem:[#allocation4 + $0x38] sm:$0xff]
    %v2051 = vld [vmem:[#allocation4 + $0x40] sm:$0xff]
    %v2052 = vld [vmem:[#allocation4 + $0x48] sm:$0xff]
    %v2053 = vld [vmem:[#allocation4 + $0x50] sm:$0xff]
    %v2054 = vld [vmem:[#allocation4 + $0x58] sm:$0xff]
    %v2055 = vld [vmem:[#allocation4 + $0x60] sm:$0xff]
    %v2056 = vld [vmem:[#allocation4 + $0x68] sm:$0xff]
    %v2057 = vld [vmem:[#allocation4 + $0x70] sm:$0xff]
    %v2058 = vld [vmem:[#allocation4 + $0x78] sm:$0xff]
    %v2059 = vld [vmem:[#allocation4 + $0x80] sm:$0xff]
    %v2060 = vld [vmem:[#allocation4 + $0x88] sm:$0xff]
    %v2061 = vld [vmem:[#allocation4 + $0x90] sm:$0xff]
    %v2062 = vld [vmem:[#allocation4 + $0x98] sm:$0xff]
    %v2063 = vld [vmem:[#allocation4 + $0xa0] sm:$0xff]
    %v2064 = vld [vmem:[#allocation4 + $0xa8] sm:$0xff]
    %v2065 = vld [vmem:[#allocation4 + $0xb0] sm:$0xff]
    %v2066 = vld [vmem:[#allocation4 + $0xb8] sm:$0xff]
    %v2067 = vld [vmem:[#allocation4 + $0xc0] sm:$0xff]
    %v2068 = vld [vmem:[#allocation4 + $0xc8] sm:$0xff]
    %v2069 = vld [vmem:[#allocation4 + $0xd0] sm:$0xff]
    %v2070 = vld [vmem:[#allocation4 + $0xd8] sm:$0xff]
    %v2071 = vld [vmem:[#allocation4 + $0xe0] sm:$0xff]
    %v2072 = vld [vmem:[#allocation4 + $0xe8] sm:$0xff]
    %v2073 = vld [vmem:[#allocation4 + $0xf0] sm:$0xff]
    %v2074 = vld [vmem:[#allocation4 + $0xf8] sm:$0xff]
    %v2075 = vld [vmem:[#allocation4 + $0x100] sm:$0xff]
    %v2076 = vld [vmem:[#allocation4 + $0x108] sm:$0xff]
    %v2077 = vld [vmem:[#allocation4 + $0x110] sm:$0xff]
    %v2078 = vld [vmem:[#allocation4 + $0x118] sm:$0xff]
    %v2079 = vld [vmem:[#allocation4 + $0x120] sm:$0xff]
    %v2080 = vld [vmem:[#allocation4 + $0x128] sm:$0xff]
    %v2081 = vld [vmem:[#allocation4 + $0x130] sm:$0xff]
    %v2082 = vld [vmem:[#allocation4 + $0x138] sm:$0xff]
    %v2083 = vld [vmem:[#allocation4 + $0x140] sm:$0xff]
    %v2084 = vld [vmem:[#allocation4 + $0x148] sm:$0xff]
    %v2085 = vld [vmem:[#allocation4 + $0x150] sm:$0xff]
    %v2086 = vld [vmem:[#allocation4 + $0x158] sm:$0xff]
    %v2087 = vld [vmem:[#allocation4 + $0x160] sm:$0xff]
    %v2088 = vld [vmem:[#allocation4 + $0x168] sm:$0xff]
    %v2089 = vld [vmem:[#allocation4 + $0x170] sm:$0xff]
    %v2090 = vld [vmem:[#allocation4 + $0x178] sm:$0xff]
    %v2091 = vld [vmem:[#allocation4 + $0x180] sm:$0xff]
    %v2092 = vld [vmem:[#allocation4 + $0x188] sm:$0xff]
    %v2093 = vld [vmem:[#allocation4 + $0x190] sm:$0xff]
    %v2094 = vld [vmem:[#allocation4 + $0x198] sm:$0xff]
    %v2095 = vld [vmem:[#allocation4 + $0x1a0] sm:$0xff]
    %v2096 = vld [vmem:[#allocation4 + $0x1a8] sm:$0xff]
    %v2097 = vld [vmem:[#allocation4 + $0x1b0] sm:$0xff]
    %v2098 = vld [vmem:[#allocation4 + $0x1b8] sm:$0xff]
    %v2099 = vld [vmem:[#allocation4 + $0x1c0] sm:$0xff]
    %v2100 = vld [vmem:[#allocation4 + $0x1c8] sm:$0xff]
    %v2101 = vld [vmem:[#allocation4 + $0x1d0] sm:$0xff]
    %v2102 = vld [vmem:[#allocation4 + $0x1d8] sm:$0xff]
    %v2103 = vld [vmem:[#allocation4 + $0x1e0] sm:$0xff]
    %v2104 = vld [vmem:[#allocation4 + $0x1e8] sm:$0xff]
    %v2105 = vld [vmem:[#allocation4 + $0x1f0] sm:$0xff]
    %v2106 = vld [vmem:[#allocation4 + $0x1f8] sm:$0xff]
    %2107 = vmatprep.subr.mxu0 %v2044
    %2108 = vmatpush1.msra.mxu0 %v2043
    %2109 = vmatprep.subr.mxu0 %v2048
    %2110 = vmatpush1.msra.mxu0 %v2047
    %2111 = vmatprep.subr.mxu0 %v2052
    %2112 = vmatpush1.msra.mxu0 %v2051
    %2113 = vmatprep.subr.mxu0 %v2056
    %2114 = vmatpush1.msra.mxu0 %v2055
    %2115 = vmatprep.subr.mxu0 %v2060
    %2116 = vmatpush1.msra.mxu0 %v2059
    %2117 = vmatprep.subr.mxu0 %v2064
    %2118 = vmatpush1.msra.mxu0 %v2063
    %2119 = vmatprep.subr.mxu0 %v2068
    %2120 = vmatpush1.msra.mxu0 %v2067
    %2121 = vmatprep.subr.mxu0 %v2072
    %2122 = vmatpush1.msra.mxu0 %v2071
    %2123 = vmatprep.subr.mxu0 %v2076
    %2124 = vmatpush1.msra.mxu0 %v2075
    %2125 = vmatprep.subr.mxu0 %v2080
    %2126 = vmatpush1.msra.mxu0 %v2079
    %2127 = vmatprep.subr.mxu0 %v2084
    %2128 = vmatpush1.msra.mxu0 %v2083
    %2129 = vmatprep.subr.mxu0 %v2088
    %2130 = vmatpush1.msra.mxu0 %v2087
    %2131 = vmatprep.subr.mxu0 %v2092
    %2132 = vmatpush1.msra.mxu0 %v2091
    %2133 = vmatprep.subr.mxu0 %v2096
    %2134 = vmatpush1.msra.mxu0 %v2095
    %2135 = vmatprep.subr.mxu0 %v2100
    %2136 = vmatpush1.msra.mxu0 %v2099
    %2137 = vmatprep.subr.mxu0 %v2104
    %2138 = vmatpush1.msra.mxu0 %v2103
    %2139 = vmatprep.subr.mxu0 0.0
    %2140 = vmatpush1.msra.mxu0 0.0
    %2141 = vmatprep.subr.mxu0 0.0
    %2142 = vmatpush1.msra.mxu0 0.0
    %2143 = vmatprep.subr.mxu0 0.0
    %2144 = vmatpush1.msra.mxu0 0.0
    %2145 = vmatprep.subr.mxu0 0.0
    %2146 = vmatpush1.msra.mxu0 0.0
    %2147 = vmatprep.subr.mxu0 0.0
    %2148 = vmatpush1.msra.mxu0 0.0
    %2149 = vmatprep.subr.mxu0 0.0
    %2150 = vmatpush1.msra.mxu0 0.0
    %2151 = vmatprep.subr.mxu0 0.0
    %2152 = vmatpush1.msra.mxu0 0.0
    %2153 = vmatprep.subr.mxu0 0.0
    %2154 = vmatpush1.msra.mxu0 0.0
    %2155 = vmatprep.subr.mxu0 0.0
    %2156 = vmatpush1.msra.mxu0 0.0
    %2157 = vmatprep.subr.mxu0 0.0
    %2158 = vmatpush1.msra.mxu0 0.0
    %2159 = vmatprep.subr.mxu0 0.0
    %2160 = vmatpush1.msra.mxu0 0.0
    %2161 = vmatprep.subr.mxu0 0.0
    %2162 = vmatpush1.msra.mxu0 0.0
    %2163 = vmatprep.subr.mxu0 0.0
    %2164 = vmatpush1.msra.mxu0 0.0
    %2165 = vmatprep.subr.mxu0 0.0
    %2166 = vmatpush1.msra.mxu0 0.0
    %2167 = vmatprep.subr.mxu0 0.0
    %2168 = vmatpush1.msra.mxu0 0.0
    %2169 = vmatprep.subr.mxu0 0.0
    %2170 = vmatpush1.msra.mxu0 0.0
    %2171 = vmatprep.mubr.f32.mxu0 0.0
    %2172 = vmatmul.mubr.f32.gmra.mrb[0].mxu0 %v2034
    %v2173 = vpop.f32.mrb[0].mxu0
    %v2174 = vadd.f32 0.0, %v2173
    %v2175 = vpop.f32.mrb[0].mxu0
    %v2176 = vadd.f32 0.0, %v2175
    %2177 = vdwg.mxu0
    %2178 = vmatprep.subr.mxu0 %v2046
    %2179 = vmatpush1.msra.mxu0 %v2045
    %2180 = vmatprep.subr.mxu0 %v2050
    %2181 = vmatpush1.msra.mxu0 %v2049
    %2182 = vmatprep.subr.mxu0 %v2054
    %2183 = vmatpush1.msra.mxu0 %v2053
    %2184 = vmatprep.subr.mxu0 %v2058
    %2185 = vmatpush1.msra.mxu0 %v2057
    %2186 = vmatprep.subr.mxu0 %v2062
    %2187 = vmatpush1.msra.mxu0 %v2061
    %2188 = vmatprep.subr.mxu0 %v2066
    %2189 = vmatpush1.msra.mxu0 %v2065
    %2190 = vmatprep.subr.mxu0 %v2070
    %2191 = vmatpush1.msra.mxu0 %v2069
    %2192 = vmatprep.subr.mxu0 %v2074
    %2193 = vmatpush1.msra.mxu0 %v2073
    %2194 = vmatprep.subr.mxu0 %v2078
    %2195 = vmatpush1.msra.mxu0 %v2077
    %2196 = vmatprep.subr.mxu0 %v2082
    %2197 = vmatpush1.msra.mxu0 %v2081
    %2198 = vmatprep.subr.mxu0 %v2086
    %2199 = vmatpush1.msra.mxu0 %v2085
    %2200 = vmatprep.subr.mxu0 %v2090
    %2201 = vmatpush1.msra.mxu0 %v2089
    %2202 = vmatprep.subr.mxu0 %v2094
    %2203 = vmatpush1.msra.mxu0 %v2093
    %2204 = vmatprep.subr.mxu0 %v2098
    %2205 = vmatpush1.msra.mxu0 %v2097
    %2206 = vmatprep.subr.mxu0 %v2102
    %2207 = vmatpush1.msra.mxu0 %v2101
    %2208 = vmatprep.subr.mxu0 %v2106
    %2209 = vmatpush1.msra.mxu0 %v2105
    %2210 = vmatprep.subr.mxu0 0.0
    %2211 = vmatpush1.msra.mxu0 0.0
    %2212 = vmatprep.subr.mxu0 0.0
    %2213 = vmatpush1.msra.mxu0 0.0
    %2214 = vmatprep.subr.mxu0 0.0
    %2215 = vmatpush1.msra.mxu0 0.0
    %2216 = vmatprep.subr.mxu0 0.0
    %2217 = vmatpush1.msra.mxu0 0.0
    %2218 = vmatprep.subr.mxu0 0.0
    %2219 = vmatpush1.msra.mxu0 0.0
    %2220 = vmatprep.subr.mxu0 0.0
    %2221 = vmatpush1.msra.mxu0 0.0
    %2222 = vmatprep.subr.mxu0 0.0
    %2223 = vmatpush1.msra.mxu0 0.0
    %2224 = vmatprep.subr.mxu0 0.0
    %2225 = vmatpush1.msra.mxu0 0.0
    %2226 = vmatprep.subr.mxu0 0.0
    %2227 = vmatpush1.msra.mxu0 0.0
    %2228 = vmatprep.subr.mxu0 0.0
    %2229 = vmatpush1.msra.mxu0 0.0
    %2230 = vmatprep.subr.mxu0 0.0
    %2231 = vmatpush1.msra.mxu0 0.0
    %2232 = vmatprep.subr.mxu0 0.0
    %2233 = vmatpush1.msra.mxu0 0.0
    %2234 = vmatprep.subr.mxu0 0.0
    %2235 = vmatpush1.msra.mxu0 0.0
    %2236 = vmatprep.subr.mxu0 0.0
    %2237 = vmatpush1.msra.mxu0 0.0
    %2238 = vmatprep.subr.mxu0 0.0
    %2239 = vmatpush1.msra.mxu0 0.0
    %2240 = vmatprep.subr.mxu0 0.0
    %2241 = vmatpush1.msra.mxu0 0.0
    %2242 = vmatprep.mubr.f32.mxu0 0.0
    %2243 = vmatmul.mubr.f32.gmra.mrb[0].mxu0 %v2034
    %v2244 = vpop.f32.mrb[0].mxu0
    %v2245 = vadd.f32 0.0, %v2244
    %v2246 = vpop.f32.mrb[0].mxu0
    %v2247 = vadd.f32 0.0, %v2246
    %2248 = vdwg.mxu0
    %v2253 = vrot.slane %v2174, 6
    %v2254 = vrot.slane %v2176, 6
    %v2255 = vrot.slane %v2245, 6
    %v2256 = vrot.slane %v2247, 6
    %v2261 = vadd.f32 %v1149, %v2253
    %v2262 = vadd.f32 %v1151, %v2254
    %v2263 = vadd.f32 %v1220, %v2255
    %v2264 = vadd.f32 %v1222, %v2256
    %v2265 = vld [vmem:[#allocation5] sm:$0xff]
    %v2266 = vld [vmem:[#allocation5 + $0x8] sm:$0xff]
    %v2267 = vld [vmem:[#allocation5 + $0x10] sm:$0xff]
    %v2268 = vld [vmem:[#allocation5 + $0x18] sm:$0xff]
    %v2269 = vld [vmem:[#allocation5 + $0x20] sm:$0xff]
    %v2270 = vld [vmem:[#allocation5 + $0x28] sm:$0xff]
    %v2271 = vld [vmem:[#allocation5 + $0x30] sm:$0xff]
    %v2272 = vld [vmem:[#allocation5 + $0x38] sm:$0xff]
    %v2273 = vld [vmem:[#allocation5 + $0x40] sm:$0xff]
    %v2274 = vld [vmem:[#allocation5 + $0x48] sm:$0xff]
    %v2275 = vld [vmem:[#allocation5 + $0x50] sm:$0xff]
    %v2276 = vld [vmem:[#allocation5 + $0x58] sm:$0xff]
    %v2277 = vld [vmem:[#allocation5 + $0x60] sm:$0xff]
    %v2278 = vld [vmem:[#allocation5 + $0x68] sm:$0xff]
    %v2279 = vld [vmem:[#allocation5 + $0x70] sm:$0xff]
    %v2280 = vld [vmem:[#allocation5 + $0x78] sm:$0xff]
    %v2281 = vld [vmem:[#allocation5 + $0x80] sm:$0xff]
    %v2282 = vld [vmem:[#allocation5 + $0x88] sm:$0xff]
    %v2283 = vld [vmem:[#allocation5 + $0x90] sm:$0xff]
    %v2284 = vld [vmem:[#allocation5 + $0x98] sm:$0xff]
    %v2285 = vld [vmem:[#allocation5 + $0xa0] sm:$0xff]
    %v2286 = vld [vmem:[#allocation5 + $0xa8] sm:$0xff]
    %v2287 = vld [vmem:[#allocation5 + $0xb0] sm:$0xff]
    %v2288 = vld [vmem:[#allocation5 + $0xb8] sm:$0xff]
    %v2289 = vld [vmem:[#allocation5 + $0xc0] sm:$0xff]
    %v2290 = vld [vmem:[#allocation5 + $0xc8] sm:$0xff]
    %v2291 = vld [vmem:[#allocation5 + $0xd0] sm:$0xff]
    %v2292 = vld [vmem:[#allocation5 + $0xd8] sm:$0xff]
    %v2293 = vld [vmem:[#allocation5 + $0xe0] sm:$0xff]
    %v2294 = vld [vmem:[#allocation5 + $0xe8] sm:$0xff]
    %v2295 = vld [vmem:[#allocation5 + $0xf0] sm:$0xff]
    %v2296 = vld [vmem:[#allocation5 + $0xf8] sm:$0xff]
    %v2297 = vld [vmem:[#allocation5 + $0x100] sm:$0xff]
    %v2298 = vld [vmem:[#allocation5 + $0x108] sm:$0xff]
    %v2299 = vld [vmem:[#allocation5 + $0x110] sm:$0xff]
    %v2300 = vld [vmem:[#allocation5 + $0x118] sm:$0xff]
    %v2301 = vld [vmem:[#allocation5 + $0x120] sm:$0xff]
    %v2302 = vld [vmem:[#allocation5 + $0x128] sm:$0xff]
    %v2303 = vld [vmem:[#allocation5 + $0x130] sm:$0xff]
    %v2304 = vld [vmem:[#allocation5 + $0x138] sm:$0xff]
    %v2305 = vld [vmem:[#allocation5 + $0x140] sm:$0xff]
    %v2306 = vld [vmem:[#allocation5 + $0x148] sm:$0xff]
    %v2307 = vld [vmem:[#allocation5 + $0x150] sm:$0xff]
    %v2308 = vld [vmem:[#allocation5 + $0x158] sm:$0xff]
    %v2309 = vld [vmem:[#allocation5 + $0x160] sm:$0xff]
    %v2310 = vld [vmem:[#allocation5 + $0x168] sm:$0xff]
    %v2311 = vld [vmem:[#allocation5 + $0x170] sm:$0xff]
    %v2312 = vld [vmem:[#allocation5 + $0x178] sm:$0xff]
    %v2313 = vld [vmem:[#allocation5 + $0x180] sm:$0xff]
    %v2314 = vld [vmem:[#allocation5 + $0x188] sm:$0xff]
    %v2315 = vld [vmem:[#allocation5 + $0x190] sm:$0xff]
    %v2316 = vld [vmem:[#allocation5 + $0x198] sm:$0xff]
    %v2317 = vld [vmem:[#allocation5 + $0x1a0] sm:$0xff]
    %v2318 = vld [vmem:[#allocation5 + $0x1a8] sm:$0xff]
    %v2319 = vld [vmem:[#allocation5 + $0x1b0] sm:$0xff]
    %v2320 = vld [vmem:[#allocation5 + $0x1b8] sm:$0xff]
    %v2321 = vld [vmem:[#allocation5 + $0x1c0] sm:$0xff]
    %v2322 = vld [vmem:[#allocation5 + $0x1c8] sm:$0xff]
    %v2323 = vld [vmem:[#allocation5 + $0x1d0] sm:$0xff]
    %v2324 = vld [vmem:[#allocation5 + $0x1d8] sm:$0xff]
    %v2325 = vld [vmem:[#allocation5 + $0x1e0] sm:$0xff]
    %v2326 = vld [vmem:[#allocation5 + $0x1e8] sm:$0xff]
    %v2327 = vld [vmem:[#allocation5 + $0x1f0] sm:$0xff]
    %v2328 = vld [vmem:[#allocation5 + $0x1f8] sm:$0xff]
    %2329 = vmatprep.subr.mxu0 %v2266
    %2330 = vmatpush1.msra.mxu0 %v2265
    %2331 = vmatprep.subr.mxu0 %v2270
    %2332 = vmatpush1.msra.mxu0 %v2269
    %2333 = vmatprep.subr.mxu0 %v2274
    %2334 = vmatpush1.msra.mxu0 %v2273
    %2335 = vmatprep.subr.mxu0 %v2278
    %2336 = vmatpush1.msra.mxu0 %v2277
    %2337 = vmatprep.subr.mxu0 %v2282
    %2338 = vmatpush1.msra.mxu0 %v2281
    %2339 = vmatprep.subr.mxu0 %v2286
    %2340 = vmatpush1.msra.mxu0 %v2285
    %2341 = vmatprep.subr.mxu0 %v2290
    %2342 = vmatpush1.msra.mxu0 %v2289
    %2343 = vmatprep.subr.mxu0 %v2294
    %2344 = vmatpush1.msra.mxu0 %v2293
    %2345 = vmatprep.subr.mxu0 %v2298
    %2346 = vmatpush1.msra.mxu0 %v2297
    %2347 = vmatprep.subr.mxu0 %v2302
    %2348 = vmatpush1.msra.mxu0 %v2301
    %2349 = vmatprep.subr.mxu0 %v2306
    %2350 = vmatpush1.msra.mxu0 %v2305
    %2351 = vmatprep.subr.mxu0 %v2310
    %2352 = vmatpush1.msra.mxu0 %v2309
    %2353 = vmatprep.subr.mxu0 %v2314
    %2354 = vmatpush1.msra.mxu0 %v2313
    %2355 = vmatprep.subr.mxu0 %v2318
    %2356 = vmatpush1.msra.mxu0 %v2317
    %2357 = vmatprep.subr.mxu0 %v2322
    %2358 = vmatpush1.msra.mxu0 %v2321
    %2359 = vmatprep.subr.mxu0 %v2326
    %2360 = vmatpush1.msra.mxu0 %v2325
    %2361 = vmatprep.subr.mxu0 0.0
    %2362 = vmatpush1.msra.mxu0 0.0
    %2363 = vmatprep.subr.mxu0 0.0
    %2364 = vmatpush1.msra.mxu0 0.0
    %2365 = vmatprep.subr.mxu0 0.0
    %2366 = vmatpush1.msra.mxu0 0.0
    %2367 = vmatprep.subr.mxu0 0.0
    %2368 = vmatpush1.msra.mxu0 0.0
    %2369 = vmatprep.subr.mxu0 0.0
    %2370 = vmatpush1.msra.mxu0 0.0
    %2371 = vmatprep.subr.mxu0 0.0
    %2372 = vmatpush1.msra.mxu0 0.0
    %2373 = vmatprep.subr.mxu0 0.0
    %2374 = vmatpush1.msra.mxu0 0.0
    %2375 = vmatprep.subr.mxu0 0.0
    %2376 = vmatpush1.msra.mxu0 0.0
    %2377 = vmatprep.subr.mxu0 0.0
    %2378 = vmatpush1.msra.mxu0 0.0
    %2379 = vmatprep.subr.mxu0 0.0
    %2380 = vmatpush1.msra.mxu0 0.0
    %2381 = vmatprep.subr.mxu0 0.0
    %2382 = vmatpush1.msra.mxu0 0.0
    %2383 = vmatprep.subr.mxu0 0.0
    %2384 = vmatpush1.msra.mxu0 0.0
    %2385 = vmatprep.subr.mxu0 0.0
    %2386 = vmatpush1.msra.mxu0 0.0
    %2387 = vmatprep.subr.mxu0 0.0
    %2388 = vmatpush1.msra.mxu0 0.0
    %2389 = vmatprep.subr.mxu0 0.0
    %2390 = vmatpush1.msra.mxu0 0.0
    %2391 = vmatprep.subr.mxu0 0.0
    %2392 = vmatpush1.msra.mxu0 0.0
    %2393 = vmatprep.mubr.f32.mxu0 0.0
    %2394 = vmatmul.mubr.f32.gmra.mrb[0].mxu0 %v2040
    %v2395 = vpop.f32.mrb[0].mxu0
    %v2396 = vadd.f32 0.0, %v2395
    %v2397 = vpop.f32.mrb[0].mxu0
    %v2398 = vadd.f32 0.0, %v2397
    %2399 = vdwg.mxu0
    %2400 = vmatprep.subr.mxu0 %v2268
    %2401 = vmatpush1.msra.mxu0 %v2267
    %2402 = vmatprep.subr.mxu0 %v2272
    %2403 = vmatpush1.msra.mxu0 %v2271
    %2404 = vmatprep.subr.mxu0 %v2276
    %2405 = vmatpush1.msra.mxu0 %v2275
    %2406 = vmatprep.subr.mxu0 %v2280
    %2407 = vmatpush1.msra.mxu0 %v2279
    %2408 = vmatprep.subr.mxu0 %v2284
    %2409 = vmatpush1.msra.mxu0 %v2283
    %2410 = vmatprep.subr.mxu0 %v2288
    %2411 = vmatpush1.msra.mxu0 %v2287
    %2412 = vmatprep.subr.mxu0 %v2292
    %2413 = vmatpush1.msra.mxu0 %v2291
    %2414 = vmatprep.subr.mxu0 %v2296
    %2415 = vmatpush1.msra.mxu0 %v2295
    %2416 = vmatprep.subr.mxu0 %v2300
    %2417 = vmatpush1.msra.mxu0 %v2299
    %2418 = vmatprep.subr.mxu0 %v2304
    %2419 = vmatpush1.msra.mxu0 %v2303
    %2420 = vmatprep.subr.mxu0 %v2308
    %2421 = vmatpush1.msra.mxu0 %v2307
    %2422 = vmatprep.subr.mxu0 %v2312
    %2423 = vmatpush1.msra.mxu0 %v2311
    %2424 = vmatprep.subr.mxu0 %v2316
    %2425 = vmatpush1.msra.mxu0 %v2315
    %2426 = vmatprep.subr.mxu0 %v2320
    %2427 = vmatpush1.msra.mxu0 %v2319
    %2428 = vmatprep.subr.mxu0 %v2324
    %2429 = vmatpush1.msra.mxu0 %v2323
    %2430 = vmatprep.subr.mxu0 %v2328
    %2431 = vmatpush1.msra.mxu0 %v2327
    %2432 = vmatprep.subr.mxu0 0.0
    %2433 = vmatpush1.msra.mxu0 0.0
    %2434 = vmatprep.subr.mxu0 0.0
    %2435 = vmatpush1.msra.mxu0 0.0
    %2436 = vmatprep.subr.mxu0 0.0
    %2437 = vmatpush1.msra.mxu0 0.0
    %2438 = vmatprep.subr.mxu0 0.0
    %2439 = vmatpush1.msra.mxu0 0.0
    %2440 = vmatprep.subr.mxu0 0.0
    %2441 = vmatpush1.msra.mxu0 0.0
    %2442 = vmatprep.subr.mxu0 0.0
    %2443 = vmatpush1.msra.mxu0 0.0
    %2444 = vmatprep.subr.mxu0 0.0
    %2445 = vmatpush1.msra.mxu0 0.0
    %2446 = vmatprep.subr.mxu0 0.0
    %2447 = vmatpush1.msra.mxu0 0.0
    %2448 = vmatprep.subr.mxu0 0.0
    %2449 = vmatpush1.msra.mxu0 0.0
    %2450 = vmatprep.subr.mxu0 0.0
    %2451 = vmatpush1.msra.mxu0 0.0
    %2452 = vmatprep.subr.mxu0 0.0
    %2453 = vmatpush1.msra.mxu0 0.0
    %2454 = vmatprep.subr.mxu0 0.0
    %2455 = vmatpush1.msra.mxu0 0.0
    %2456 = vmatprep.subr.mxu0 0.0
    %2457 = vmatpush1.msra.mxu0 0.0
    %2458 = vmatprep.subr.mxu0 0.0
    %2459 = vmatpush1.msra.mxu0 0.0
    %2460 = vmatprep.subr.mxu0 0.0
    %2461 = vmatpush1.msra.mxu0 0.0
    %2462 = vmatprep.subr.mxu0 0.0
    %2463 = vmatpush1.msra.mxu0 0.0
    %2464 = vmatprep.mubr.f32.mxu0 0.0
    %2465 = vmatmul.mubr.f32.gmra.mrb[0].mxu0 %v2040
    %v2466 = vpop.f32.mrb[0].mxu0
    %v2467 = vadd.f32 0.0, %v2466
    %v2468 = vpop.f32.mrb[0].mxu0
    %v2469 = vadd.f32 0.0, %v2468
    %2470 = vdwg.mxu0
    %v2475 = vrot.slane %v2396, 3
    %v2476 = vrot.slane %v2398, 3
    %v2477 = vrot.slane %v2467, 3
    %v2478 = vrot.slane %v2469, 3
    %v2483 = vadd.f32 %v1291, %v2475
    %v2484 = vadd.f32 %v1293, %v2476
    %v2485 = vadd.f32 %v1362, %v2477
    %v2486 = vadd.f32 %v1364, %v2478
    %v2491 = vcombine.low %v2261, %v2262
    %v2492 = vcombine.low %v2263, %v2264
    %v2494 = vunpack.c.l.s4 1966171168
    %v2495 = vunpack.c.0.s8 %v2494
    %v2496 = vlaneseq
    %v2497 = vshrl.u32 %v2496, 7
    %v2498 = vsub.s32 %v2495, %v2497
    %v2499 = vrot.slane %v2491, %v2498
    %v2501 = vunpack.c.l.s4 1966171168
    %v2502 = vunpack.c.0.s8 %v2501
    %v2503 = vlaneseq
    %v2504 = vshrl.u32 %v2503, 7
    %v2505 = vsub.s32 %v2502, %v2504
    %v2506 = vrot.slane %v2492, %v2505
    %v2507 = vcombine.low %v2499, %v2506
    %v2509 = vunpack.c.l.s4 1966171168
    %v2510 = vunpack.c.0.s8 %v2509
    %v2511 = vlaneseq
    %v2512 = vshrl.u32 %v2511, 7
    %v2513 = vsub.s32 %v2510, %v2512
    %v2514 = vrot.slane %v2507, %v2513
    %v2515 = vcombine.high %v2514, %v2514
    %2517 = vst.msk [vmem:[#allocation6] ss:$2 sm:$0xf] %vm1424, %v2515
    %v2522 = vcombine.high %v2483, %v2484
    %v2523 = vcombine.high %v2485, %v2486
    %v2525 = vunpack.c.l.s4 1966171168
    %v2526 = vunpack.c.0.s8 %v2525
    %v2527 = vlaneseq
    %v2528 = vshrl.u32 %v2527, 7
    %v2529 = vsub.s32 %v2526, %v2528
    %v2530 = vrot.slane %v2522, %v2529
    %v2532 = vunpack.c.l.s4 1966171168
    %v2533 = vunpack.c.0.s8 %v2532
    %v2534 = vlaneseq
    %v2535 = vshrl.u32 %v2534, 7
    %v2536 = vsub.s32 %v2533, %v2535
    %v2537 = vrot.slane %v2523, %v2536
    %v2538 = vcombine.high %v2530, %v2537
    %v2540 = vunpack.c.l.s4 1966171168
    %v2541 = vunpack.c.0.s8 %v2540
    %v2542 = vlaneseq
    %v2543 = vshrl.u32 %v2542, 7
    %v2544 = vsub.s32 %v2541, %v2543
    %v2545 = vrot.slane %v2538, %v2544
    %2547 = vst.msk [vmem:[%s1456] ss:$2 sm:$0xf] %vm1424, %v2545
    %v2548 = vld [vmem:[#allocation6] sm:$0xff]
    %v2549 = vmul.f32 %v2548, %v1479
    %v2550 = vtanh.pop %v2549
    %v2551 = vadd.f32 %v2550, 1.0
    %v2552 = vmul.f32 %v2551, 0.5
    %v2554 = vrot.slane %v2550, 2
    %v2556 = vadd.f32 %v2554, 1.0
    %v2557 = vmul.f32 %v2556, 0.5
    %v2558 = vrot.slane %v2550, 6
    %v2560 = vadd.f32 %v2558, 1.0
    %v2561 = vmul.f32 %v2560, 0.5
    %v2562 = vmul.f32 %v2557, %v2032
    %v2563 = vrot.slane %v2550, 4
    %v2565 = vmul.f32 %v2552, %v2563
    %v2566 = vadd.f32 %v2562, %v2565
    %v2567 = vtanh.pop %v2566
    %v2568 = vmul.f32 %v2561, %v2567
    %2569 = vst [vmem:[#allocation7 + $0x2] sm:$0x1] %v2568
    %v2571 = vlaneseq
    %v2572 = vshrl.u32 %v2571, 7
    %v2573 = vsub.s32 1, %v2572
    %v2574 = vrot.slane %v2568, %v2573
    %2576 = vst [vmem:[#allocation7 + $0xd] sm:$0x1] %v2574
    %v2577 = vld [vmem:[#allocation4] sm:$0xff]
    %v2578 = vld [vmem:[#allocation4 + $0x8] sm:$0xff]
    %v2579 = vld [vmem:[#allocation4 + $0x10] sm:$0xff]
    %v2580 = vld [vmem:[#allocation4 + $0x18] sm:$0xff]
    %v2581 = vld [vmem:[#allocation4 + $0x20] sm:$0xff]
    %v2582 = vld [vmem:[#allocation4 + $0x28] sm:$0xff]
    %v2583 = vld [vmem:[#allocation4 + $0x30] sm:$0xff]
    %v2584 = vld [vmem:[#allocation4 + $0x38] sm:$0xff]
    %v2585 = vld [vmem:[#allocation4 + $0x40] sm:$0xff]
    %v2586 = vld [vmem:[#allocation4 + $0x48] sm:$0xff]
    %v2587 = vld [vmem:[#allocation4 + $0x50] sm:$0xff]
    %v2588 = vld [vmem:[#allocation4 + $0x58] sm:$0xff]
    %v2589 = vld [vmem:[#allocation4 + $0x60] sm:$0xff]
    %v2590 = vld [vmem:[#allocation4 + $0x68] sm:$0xff]
    %v2591 = vld [vmem:[#allocation4 + $0x70] sm:$0xff]
    %v2592 = vld [vmem:[#allocation4 + $0x78] sm:$0xff]
    %v2593 = vld [vmem:[#allocation4 + $0x80] sm:$0xff]
    %v2594 = vld [vmem:[#allocation4 + $0x88] sm:$0xff]
    %v2595 = vld [vmem:[#allocation4 + $0x90] sm:$0xff]
    %v2596 = vld [vmem:[#allocation4 + $0x98] sm:$0xff]
    %v2597 = vld [vmem:[#allocation4 + $0xa0] sm:$0xff]
    %v2598 = vld [vmem:[#allocation4 + $0xa8] sm:$0xff]
    %v2599 = vld [vmem:[#allocation4 + $0xb0] sm:$0xff]
    %v2600 = vld [vmem:[#allocation4 + $0xb8] sm:$0xff]
    %v2601 = vld [vmem:[#allocation4 + $0xc0] sm:$0xff]
    %v2602 = vld [vmem:[#allocation4 + $0xc8] sm:$0xff]
    %v2603 = vld [vmem:[#allocation4 + $0xd0] sm:$0xff]
    %v2604 = vld [vmem:[#allocation4 + $0xd8] sm:$0xff]
    %v2605 = vld [vmem:[#allocation4 + $0xe0] sm:$0xff]
    %v2606 = vld [vmem:[#allocation4 + $0xe8] sm:$0xff]
    %v2607 = vld [vmem:[#allocation4 + $0xf0] sm:$0xff]
    %v2608 = vld [vmem:[#allocation4 + $0xf8] sm:$0xff]
    %v2609 = vld [vmem:[#allocation4 + $0x100] sm:$0xff]
    %v2610 = vld [vmem:[#allocation4 + $0x108] sm:$0xff]
    %v2611 = vld [vmem:[#allocation4 + $0x110] sm:$0xff]
    %v2612 = vld [vmem:[#allocation4 + $0x118] sm:$0xff]
    %v2613 = vld [vmem:[#allocation4 + $0x120] sm:$0xff]
    %v2614 = vld [vmem:[#allocation4 + $0x128] sm:$0xff]
    %v2615 = vld [vmem:[#allocation4 + $0x130] sm:$0xff]
    %v2616 = vld [vmem:[#allocation4 + $0x138] sm:$0xff]
    %v2617 = vld [vmem:[#allocation4 + $0x140] sm:$0xff]
    %v2618 = vld [vmem:[#allocation4 + $0x148] sm:$0xff]
    %v2619 = vld [vmem:[#allocation4 + $0x150] sm:$0xff]
    %v2620 = vld [vmem:[#allocation4 + $0x158] sm:$0xff]
    %v2621 = vld [vmem:[#allocation4 + $0x160] sm:$0xff]
    %v2622 = vld [vmem:[#allocation4 + $0x168] sm:$0xff]
    %v2623 = vld [vmem:[#allocation4 + $0x170] sm:$0xff]
    %v2624 = vld [vmem:[#allocation4 + $0x178] sm:$0xff]
    %v2625 = vld [vmem:[#allocation4 + $0x180] sm:$0xff]
    %v2626 = vld [vmem:[#allocation4 + $0x188] sm:$0xff]
    %v2627 = vld [vmem:[#allocation4 + $0x190] sm:$0xff]
    %v2628 = vld [vmem:[#allocation4 + $0x198] sm:$0xff]
    %v2629 = vld [vmem:[#allocation4 + $0x1a0] sm:$0xff]
    %v2630 = vld [vmem:[#allocation4 + $0x1a8] sm:$0xff]
    %v2631 = vld [vmem:[#allocation4 + $0x1b0] sm:$0xff]
    %v2632 = vld [vmem:[#allocation4 + $0x1b8] sm:$0xff]
    %v2633 = vld [vmem:[#allocation4 + $0x1c0] sm:$0xff]
    %v2634 = vld [vmem:[#allocation4 + $0x1c8] sm:$0xff]
    %v2635 = vld [vmem:[#allocation4 + $0x1d0] sm:$0xff]
    %v2636 = vld [vmem:[#allocation4 + $0x1d8] sm:$0xff]
    %v2637 = vld [vmem:[#allocation4 + $0x1e0] sm:$0xff]
    %v2638 = vld [vmem:[#allocation4 + $0x1e8] sm:$0xff]
    %v2639 = vld [vmem:[#allocation4 + $0x1f0] sm:$0xff]
    %v2640 = vld [vmem:[#allocation4 + $0x1f8] sm:$0xff]
    %2641 = vmatprep.subr.mxu0 %v2578
    %2642 = vmatpush1.msra.mxu0 %v2577
    %2643 = vmatprep.subr.mxu0 %v2582
    %2644 = vmatpush1.msra.mxu0 %v2581
    %2645 = vmatprep.subr.mxu0 %v2586
    %2646 = vmatpush1.msra.mxu0 %v2585
    %2647 = vmatprep.subr.mxu0 %v2590
    %2648 = vmatpush1.msra.mxu0 %v2589
    %2649 = vmatprep.subr.mxu0 %v2594
    %2650 = vmatpush1.msra.mxu0 %v2593
    %2651 = vmatprep.subr.mxu0 %v2598
    %2652 = vmatpush1.msra.mxu0 %v2597
    %2653 = vmatprep.subr.mxu0 %v2602
    %2654 = vmatpush1.msra.mxu0 %v2601
    %2655 = vmatprep.subr.mxu0 %v2606
    %2656 = vmatpush1.msra.mxu0 %v2605
    %2657 = vmatprep.subr.mxu0 %v2610
    %2658 = vmatpush1.msra.mxu0 %v2609
    %2659 = vmatprep.subr.mxu0 %v2614
    %2660 = vmatpush1.msra.mxu0 %v2613
    %2661 = vmatprep.subr.mxu0 %v2618
    %2662 = vmatpush1.msra.mxu0 %v2617
    %2663 = vmatprep.subr.mxu0 %v2622
    %2664 = vmatpush1.msra.mxu0 %v2621
    %2665 = vmatprep.subr.mxu0 %v2626
    %2666 = vmatpush1.msra.mxu0 %v2625
    %2667 = vmatprep.subr.mxu0 %v2630
    %2668 = vmatpush1.msra.mxu0 %v2629
    %2669 = vmatprep.subr.mxu0 %v2634
    %2670 = vmatpush1.msra.mxu0 %v2633
    %2671 = vmatprep.subr.mxu0 %v2638
    %2672 = vmatpush1.msra.mxu0 %v2637
    %2673 = vmatprep.subr.mxu0 0.0
    %2674 = vmatpush1.msra.mxu0 0.0
    %2675 = vmatprep.subr.mxu0 0.0
    %2676 = vmatpush1.msra.mxu0 0.0
    %2677 = vmatprep.subr.mxu0 0.0
    %2678 = vmatpush1.msra.mxu0 0.0
    %2679 = vmatprep.subr.mxu0 0.0
    %2680 = vmatpush1.msra.mxu0 0.0
    %2681 = vmatprep.subr.mxu0 0.0
    %2682 = vmatpush1.msra.mxu0 0.0
    %2683 = vmatprep.subr.mxu0 0.0
    %2684 = vmatpush1.msra.mxu0 0.0
    %2685 = vmatprep.subr.mxu0 0.0
    %2686 = vmatpush1.msra.mxu0 0.0
    %2687 = vmatprep.subr.mxu0 0.0
    %2688 = vmatpush1.msra.mxu0 0.0
    %2689 = vmatprep.subr.mxu0 0.0
    %2690 = vmatpush1.msra.mxu0 0.0
    %2691 = vmatprep.subr.mxu0 0.0
    %2692 = vmatpush1.msra.mxu0 0.0
    %2693 = vmatprep.subr.mxu0 0.0
    %2694 = vmatpush1.msra.mxu0 0.0
    %2695 = vmatprep.subr.mxu0 0.0
    %2696 = vmatpush1.msra.mxu0 0.0
    %2697 = vmatprep.subr.mxu0 0.0
    %2698 = vmatpush1.msra.mxu0 0.0
    %2699 = vmatprep.subr.mxu0 0.0
    %2700 = vmatpush1.msra.mxu0 0.0
    %2701 = vmatprep.subr.mxu0 0.0
    %2702 = vmatpush1.msra.mxu0 0.0
    %2703 = vmatprep.subr.mxu0 0.0
    %2704 = vmatpush1.msra.mxu0 0.0
    %2705 = vmatprep.mubr.f32.mxu0 0.0
    %2706 = vmatmul.mubr.f32.gmra.mrb[0].mxu0 %v2568
    %v2707 = vpop.f32.mrb[0].mxu0
    %v2708 = vadd.f32 0.0, %v2707
    %v2709 = vpop.f32.mrb[0].mxu0
    %v2710 = vadd.f32 0.0, %v2709
    %2711 = vdwg.mxu0
    %2712 = vmatprep.subr.mxu0 %v2580
    %2713 = vmatpush1.msra.mxu0 %v2579
    %2714 = vmatprep.subr.mxu0 %v2584
    %2715 = vmatpush1.msra.mxu0 %v2583
    %2716 = vmatprep.subr.mxu0 %v2588
    %2717 = vmatpush1.msra.mxu0 %v2587
    %2718 = vmatprep.subr.mxu0 %v2592
    %2719 = vmatpush1.msra.mxu0 %v2591
    %2720 = vmatprep.subr.mxu0 %v2596
    %2721 = vmatpush1.msra.mxu0 %v2595
    %2722 = vmatprep.subr.mxu0 %v2600
    %2723 = vmatpush1.msra.mxu0 %v2599
    %2724 = vmatprep.subr.mxu0 %v2604
    %2725 = vmatpush1.msra.mxu0 %v2603
    %2726 = vmatprep.subr.mxu0 %v2608
    %2727 = vmatpush1.msra.mxu0 %v2607
    %2728 = vmatprep.subr.mxu0 %v2612
    %2729 = vmatpush1.msra.mxu0 %v2611
    %2730 = vmatprep.subr.mxu0 %v2616
    %2731 = vmatpush1.msra.mxu0 %v2615
    %2732 = vmatprep.subr.mxu0 %v2620
    %2733 = vmatpush1.msra.mxu0 %v2619
    %2734 = vmatprep.subr.mxu0 %v2624
    %2735 = vmatpush1.msra.mxu0 %v2623
    %2736 = vmatprep.subr.mxu0 %v2628
    %2737 = vmatpush1.msra.mxu0 %v2627
    %2738 = vmatprep.subr.mxu0 %v2632
    %2739 = vmatpush1.msra.mxu0 %v2631
    %2740 = vmatprep.subr.mxu0 %v2636
    %2741 = vmatpush1.msra.mxu0 %v2635
    %2742 = vmatprep.subr.mxu0 %v2640
    %2743 = vmatpush1.msra.mxu0 %v2639
    %2744 = vmatprep.subr.mxu0 0.0
    %2745 = vmatpush1.msra.mxu0 0.0
    %2746 = vmatprep.subr.mxu0 0.0
    %2747 = vmatpush1.msra.mxu0 0.0
    %2748 = vmatprep.subr.mxu0 0.0
    %2749 = vmatpush1.msra.mxu0 0.0
    %2750 = vmatprep.subr.mxu0 0.0
    %2751 = vmatpush1.msra.mxu0 0.0
    %2752 = vmatprep.subr.mxu0 0.0
    %2753 = vmatpush1.msra.mxu0 0.0
    %2754 = vmatprep.subr.mxu0 0.0
    %2755 = vmatpush1.msra.mxu0 0.0
    %2756 = vmatprep.subr.mxu0 0.0
    %2757 = vmatpush1.msra.mxu0 0.0
    %2758 = vmatprep.subr.mxu0 0.0
    %2759 = vmatpush1.msra.mxu0 0.0
    %2760 = vmatprep.subr.mxu0 0.0
    %2761 = vmatpush1.msra.mxu0 0.0
    %2762 = vmatprep.subr.mxu0 0.0
    %2763 = vmatpush1.msra.mxu0 0.0
    %2764 = vmatprep.subr.mxu0 0.0
    %2765 = vmatpush1.msra.mxu0 0.0
    %2766 = vmatprep.subr.mxu0 0.0
    %2767 = vmatpush1.msra.mxu0 0.0
    %2768 = vmatprep.subr.mxu0 0.0
    %2769 = vmatpush1.msra.mxu0 0.0
    %2770 = vmatprep.subr.mxu0 0.0
    %2771 = vmatpush1.msra.mxu0 0.0
    %2772 = vmatprep.subr.mxu0 0.0
    %2773 = vmatpush1.msra.mxu0 0.0
    %2774 = vmatprep.subr.mxu0 0.0
    %2775 = vmatpush1.msra.mxu0 0.0
    %2776 = vmatprep.mubr.f32.mxu0 0.0
    %2777 = vmatmul.mubr.f32.gmra.mrb[0].mxu0 %v2568
    %v2778 = vpop.f32.mrb[0].mxu0
    %v2779 = vadd.f32 0.0, %v2778
    %v2780 = vpop.f32.mrb[0].mxu0
    %v2781 = vadd.f32 0.0, %v2780
    %2782 = vdwg.mxu0
    %v2787 = vrot.slane %v2708, 5
    %v2788 = vrot.slane %v2710, 5
    %v2789 = vrot.slane %v2779, 5
    %v2790 = vrot.slane %v2781, 5
    %v2795 = vadd.f32 %v1149, %v2787
    %v2796 = vadd.f32 %v1151, %v2788
    %v2797 = vadd.f32 %v1220, %v2789
    %v2798 = vadd.f32 %v1222, %v2790
    %v2799 = vld [vmem:[#allocation5] sm:$0xff]
    %v2800 = vld [vmem:[#allocation5 + $0x8] sm:$0xff]
    %v2801 = vld [vmem:[#allocation5 + $0x10] sm:$0xff]
    %v2802 = vld [vmem:[#allocation5 + $0x18] sm:$0xff]
    %v2803 = vld [vmem:[#allocation5 + $0x20] sm:$0xff]
    %v2804 = vld [vmem:[#allocation5 + $0x28] sm:$0xff]
    %v2805 = vld [vmem:[#allocation5 + $0x30] sm:$0xff]
    %v2806 = vld [vmem:[#allocation5 + $0x38] sm:$0xff]
    %v2807 = vld [vmem:[#allocation5 + $0x40] sm:$0xff]
    %v2808 = vld [vmem:[#allocation5 + $0x48] sm:$0xff]
    %v2809 = vld [vmem:[#allocation5 + $0x50] sm:$0xff]
    %v2810 = vld [vmem:[#allocation5 + $0x58] sm:$0xff]
    %v2811 = vld [vmem:[#allocation5 + $0x60] sm:$0xff]
    %v2812 = vld [vmem:[#allocation5 + $0x68] sm:$0xff]
    %v2813 = vld [vmem:[#allocation5 + $0x70] sm:$0xff]
    %v2814 = vld [vmem:[#allocation5 + $0x78] sm:$0xff]
    %v2815 = vld [vmem:[#allocation5 + $0x80] sm:$0xff]
    %v2816 = vld [vmem:[#allocation5 + $0x88] sm:$0xff]
    %v2817 = vld [vmem:[#allocation5 + $0x90] sm:$0xff]
    %v2818 = vld [vmem:[#allocation5 + $0x98] sm:$0xff]
    %v2819 = vld [vmem:[#allocation5 + $0xa0] sm:$0xff]
    %v2820 = vld [vmem:[#allocation5 + $0xa8] sm:$0xff]
    %v2821 = vld [vmem:[#allocation5 + $0xb0] sm:$0xff]
    %v2822 = vld [vmem:[#allocation5 + $0xb8] sm:$0xff]
    %v2823 = vld [vmem:[#allocation5 + $0xc0] sm:$0xff]
    %v2824 = vld [vmem:[#allocation5 + $0xc8] sm:$0xff]
    %v2825 = vld [vmem:[#allocation5 + $0xd0] sm:$0xff]
    %v2826 = vld [vmem:[#allocation5 + $0xd8] sm:$0xff]
    %v2827 = vld [vmem:[#allocation5 + $0xe0] sm:$0xff]
    %v2828 = vld [vmem:[#allocation5 + $0xe8] sm:$0xff]
    %v2829 = vld [vmem:[#allocation5 + $0xf0] sm:$0xff]
    %v2830 = vld [vmem:[#allocation5 + $0xf8] sm:$0xff]
    %v2831 = vld [vmem:[#allocation5 + $0x100] sm:$0xff]
    %v2832 = vld [vmem:[#allocation5 + $0x108] sm:$0xff]
    %v2833 = vld [vmem:[#allocation5 + $0x110] sm:$0xff]
    %v2834 = vld [vmem:[#allocation5 + $0x118] sm:$0xff]
    %v2835 = vld [vmem:[#allocation5 + $0x120] sm:$0xff]
    %v2836 = vld [vmem:[#allocation5 + $0x128] sm:$0xff]
    %v2837 = vld [vmem:[#allocation5 + $0x130] sm:$0xff]
    %v2838 = vld [vmem:[#allocation5 + $0x138] sm:$0xff]
    %v2839 = vld [vmem:[#allocation5 + $0x140] sm:$0xff]
    %v2840 = vld [vmem:[#allocation5 + $0x148] sm:$0xff]
    %v2841 = vld [vmem:[#allocation5 + $0x150] sm:$0xff]
    %v2842 = vld [vmem:[#allocation5 + $0x158] sm:$0xff]
    %v2843 = vld [vmem:[#allocation5 + $0x160] sm:$0xff]
    %v2844 = vld [vmem:[#allocation5 + $0x168] sm:$0xff]
    %v2845 = vld [vmem:[#allocation5 + $0x170] sm:$0xff]
    %v2846 = vld [vmem:[#allocation5 + $0x178] sm:$0xff]
    %v2847 = vld [vmem:[#allocation5 + $0x180] sm:$0xff]
    %v2848 = vld [vmem:[#allocation5 + $0x188] sm:$0xff]
    %v2849 = vld [vmem:[#allocation5 + $0x190] sm:$0xff]
    %v2850 = vld [vmem:[#allocation5 + $0x198] sm:$0xff]
    %v2851 = vld [vmem:[#allocation5 + $0x1a0] sm:$0xff]
    %v2852 = vld [vmem:[#allocation5 + $0x1a8] sm:$0xff]
    %v2853 = vld [vmem:[#allocation5 + $0x1b0] sm:$0xff]
    %v2854 = vld [vmem:[#allocation5 + $0x1b8] sm:$0xff]
    %v2855 = vld [vmem:[#allocation5 + $0x1c0] sm:$0xff]
    %v2856 = vld [vmem:[#allocation5 + $0x1c8] sm:$0xff]
    %v2857 = vld [vmem:[#allocation5 + $0x1d0] sm:$0xff]
    %v2858 = vld [vmem:[#allocation5 + $0x1d8] sm:$0xff]
    %v2859 = vld [vmem:[#allocation5 + $0x1e0] sm:$0xff]
    %v2860 = vld [vmem:[#allocation5 + $0x1e8] sm:$0xff]
    %v2861 = vld [vmem:[#allocation5 + $0x1f0] sm:$0xff]
    %v2862 = vld [vmem:[#allocation5 + $0x1f8] sm:$0xff]
    %2863 = vmatprep.subr.mxu0 %v2800
    %2864 = vmatpush1.msra.mxu0 %v2799
    %2865 = vmatprep.subr.mxu0 %v2804
    %2866 = vmatpush1.msra.mxu0 %v2803
    %2867 = vmatprep.subr.mxu0 %v2808
    %2868 = vmatpush1.msra.mxu0 %v2807
    %2869 = vmatprep.subr.mxu0 %v2812
    %2870 = vmatpush1.msra.mxu0 %v2811
    %2871 = vmatprep.subr.mxu0 %v2816
    %2872 = vmatpush1.msra.mxu0 %v2815
    %2873 = vmatprep.subr.mxu0 %v2820
    %2874 = vmatpush1.msra.mxu0 %v2819
    %2875 = vmatprep.subr.mxu0 %v2824
    %2876 = vmatpush1.msra.mxu0 %v2823
    %2877 = vmatprep.subr.mxu0 %v2828
    %2878 = vmatpush1.msra.mxu0 %v2827
    %2879 = vmatprep.subr.mxu0 %v2832
    %2880 = vmatpush1.msra.mxu0 %v2831
    %2881 = vmatprep.subr.mxu0 %v2836
    %2882 = vmatpush1.msra.mxu0 %v2835
    %2883 = vmatprep.subr.mxu0 %v2840
    %2884 = vmatpush1.msra.mxu0 %v2839
    %2885 = vmatprep.subr.mxu0 %v2844
    %2886 = vmatpush1.msra.mxu0 %v2843
    %2887 = vmatprep.subr.mxu0 %v2848
    %2888 = vmatpush1.msra.mxu0 %v2847
    %2889 = vmatprep.subr.mxu0 %v2852
    %2890 = vmatpush1.msra.mxu0 %v2851
    %2891 = vmatprep.subr.mxu0 %v2856
    %2892 = vmatpush1.msra.mxu0 %v2855
    %2893 = vmatprep.subr.mxu0 %v2860
    %2894 = vmatpush1.msra.mxu0 %v2859
    %2895 = vmatprep.subr.mxu0 0.0
    %2896 = vmatpush1.msra.mxu0 0.0
    %2897 = vmatprep.subr.mxu0 0.0
    %2898 = vmatpush1.msra.mxu0 0.0
    %2899 = vmatprep.subr.mxu0 0.0
    %2900 = vmatpush1.msra.mxu0 0.0
    %2901 = vmatprep.subr.mxu0 0.0
    %2902 = vmatpush1.msra.mxu0 0.0
    %2903 = vmatprep.subr.mxu0 0.0
    %2904 = vmatpush1.msra.mxu0 0.0
    %2905 = vmatprep.subr.mxu0 0.0
    %2906 = vmatpush1.msra.mxu0 0.0
    %2907 = vmatprep.subr.mxu0 0.0
    %2908 = vmatpush1.msra.mxu0 0.0
    %2909 = vmatprep.subr.mxu0 0.0
    %2910 = vmatpush1.msra.mxu0 0.0
    %2911 = vmatprep.subr.mxu0 0.0
    %2912 = vmatpush1.msra.mxu0 0.0
    %2913 = vmatprep.subr.mxu0 0.0
    %2914 = vmatpush1.msra.mxu0 0.0
    %2915 = vmatprep.subr.mxu0 0.0
    %2916 = vmatpush1.msra.mxu0 0.0
    %2917 = vmatprep.subr.mxu0 0.0
    %2918 = vmatpush1.msra.mxu0 0.0
    %2919 = vmatprep.subr.mxu0 0.0
    %2920 = vmatpush1.msra.mxu0 0.0
    %2921 = vmatprep.subr.mxu0 0.0
    %2922 = vmatpush1.msra.mxu0 0.0
    %2923 = vmatprep.subr.mxu0 0.0
    %2924 = vmatpush1.msra.mxu0 0.0
    %2925 = vmatprep.subr.mxu0 0.0
    %2926 = vmatpush1.msra.mxu0 0.0
    %2927 = vmatprep.mubr.f32.mxu0 0.0
    %2928 = vmatmul.mubr.f32.gmra.mrb[0].mxu0 %v2574
    %v2929 = vpop.f32.mrb[0].mxu0
    %v2930 = vadd.f32 0.0, %v2929
    %v2931 = vpop.f32.mrb[0].mxu0
    %v2932 = vadd.f32 0.0, %v2931
    %2933 = vdwg.mxu0
    %2934 = vmatprep.subr.mxu0 %v2802
    %2935 = vmatpush1.msra.mxu0 %v2801
    %2936 = vmatprep.subr.mxu0 %v2806
    %2937 = vmatpush1.msra.mxu0 %v2805
    %2938 = vmatprep.subr.mxu0 %v2810
    %2939 = vmatpush1.msra.mxu0 %v2809
    %2940 = vmatprep.subr.mxu0 %v2814
    %2941 = vmatpush1.msra.mxu0 %v2813
    %2942 = vmatprep.subr.mxu0 %v2818
    %2943 = vmatpush1.msra.mxu0 %v2817
    %2944 = vmatprep.subr.mxu0 %v2822
    %2945 = vmatpush1.msra.mxu0 %v2821
    %2946 = vmatprep.subr.mxu0 %v2826
    %2947 = vmatpush1.msra.mxu0 %v2825
    %2948 = vmatprep.subr.mxu0 %v2830
    %2949 = vmatpush1.msra.mxu0 %v2829
    %2950 = vmatprep.subr.mxu0 %v2834
    %2951 = vmatpush1.msra.mxu0 %v2833
    %2952 = vmatprep.subr.mxu0 %v2838
    %2953 = vmatpush1.msra.mxu0 %v2837
    %2954 = vmatprep.subr.mxu0 %v2842
    %2955 = vmatpush1.msra.mxu0 %v2841
    %2956 = vmatprep.subr.mxu0 %v2846
    %2957 = vmatpush1.msra.mxu0 %v2845
    %2958 = vmatprep.subr.mxu0 %v2850
    %2959 = vmatpush1.msra.mxu0 %v2849
    %2960 = vmatprep.subr.mxu0 %v2854
    %2961 = vmatpush1.msra.mxu0 %v2853
    %2962 = vmatprep.subr.mxu0 %v2858
    %2963 = vmatpush1.msra.mxu0 %v2857
    %2964 = vmatprep.subr.mxu0 %v2862
    %2965 = vmatpush1.msra.mxu0 %v2861
    %2966 = vmatprep.subr.mxu0 0.0
    %2967 = vmatpush1.msra.mxu0 0.0
    %2968 = vmatprep.subr.mxu0 0.0
    %2969 = vmatpush1.msra.mxu0 0.0
    %2970 = vmatprep.subr.mxu0 0.0
    %2971 = vmatpush1.msra.mxu0 0.0
    %2972 = vmatprep.subr.mxu0 0.0
    %2973 = vmatpush1.msra.mxu0 0.0
    %2974 = vmatprep.subr.mxu0 0.0
    %2975 = vmatpush1.msra.mxu0 0.0
    %2976 = vmatprep.subr.mxu0 0.0
    %2977 = vmatpush1.msra.mxu0 0.0
    %2978 = vmatprep.subr.mxu0 0.0
    %2979 = vmatpush1.msra.mxu0 0.0
    %2980 = vmatprep.subr.mxu0 0.0
    %2981 = vmatpush1.msra.mxu0 0.0
    %2982 = vmatprep.subr.mxu0 0.0
    %2983 = vmatpush1.msra.mxu0 0.0
    %2984 = vmatprep.subr.mxu0 0.0
    %2985 = vmatpush1.msra.mxu0 0.0
    %2986 = vmatprep.subr.mxu0 0.0
    %2987 = vmatpush1.msra.mxu0 0.0
    %2988 = vmatprep.subr.mxu0 0.0
    %2989 = vmatpush1.msra.mxu0 0.0
    %2990 = vmatprep.subr.mxu0 0.0
    %2991 = vmatpush1.msra.mxu0 0.0
    %2992 = vmatprep.subr.mxu0 0.0
    %2993 = vmatpush1.msra.mxu0 0.0
    %2994 = vmatprep.subr.mxu0 0.0
    %2995 = vmatpush1.msra.mxu0 0.0
    %2996 = vmatprep.subr.mxu0 0.0
    %2997 = vmatpush1.msra.mxu0 0.0
    %2998 = vmatprep.mubr.f32.mxu0 0.0
    %2999 = vmatmul.mubr.f32.gmra.mrb[0].mxu0 %v2574
    %v3000 = vpop.f32.mrb[0].mxu0
    %v3001 = vadd.f32 0.0, %v3000
    %v3002 = vpop.f32.mrb[0].mxu0
    %v3003 = vadd.f32 0.0, %v3002
    %3004 = vdwg.mxu0
    %v3009 = vrot.slane %v2930, 4
    %v3010 = vrot.slane %v2932, 4
    %v3011 = vrot.slane %v3001, 4
    %v3012 = vrot.slane %v3003, 4
    %v3017 = vadd.f32 %v1291, %v3009
    %v3018 = vadd.f32 %v1293, %v3010
    %v3019 = vadd.f32 %v1362, %v3011
    %v3020 = vadd.f32 %v1364, %v3012
    %v3025 = vcombine.low %v2795, %v2796
    %v3026 = vcombine.low %v2797, %v2798
    %v3028 = vunpack.c.l.s4 1966171168
    %v3029 = vunpack.c.0.s8 %v3028
    %v3030 = vlaneseq
    %v3031 = vshrl.u32 %v3030, 7
    %v3032 = vsub.s32 %v3029, %v3031
    %v3033 = vrot.slane %v3025, %v3032
    %v3035 = vunpack.c.l.s4 1966171168
    %v3036 = vunpack.c.0.s8 %v3035
    %v3037 = vlaneseq
    %v3038 = vshrl.u32 %v3037, 7
    %v3039 = vsub.s32 %v3036, %v3038
    %v3040 = vrot.slane %v3026, %v3039
    %v3041 = vcombine.high %v3033, %v3040
    %v3043 = vunpack.c.l.s4 1966171168
    %v3044 = vunpack.c.0.s8 %v3043
    %v3045 = vlaneseq
    %v3046 = vshrl.u32 %v3045, 7
    %v3047 = vsub.s32 %v3044, %v3046
    %v3048 = vrot.slane %v3041, %v3047
    %v3049 = vcombine.high %v3048, %v3048
    %3051 = vst.msk [vmem:[#allocation6] ss:$2 sm:$0xf] %vm1424, %v3049
    %v3056 = vcombine.high %v3017, %v3018
    %v3057 = vcombine.high %v3019, %v3020
    %v3059 = vunpack.c.l.s4 1966171168
    %v3060 = vunpack.c.0.s8 %v3059
    %v3061 = vlaneseq
    %v3062 = vshrl.u32 %v3061, 7
    %v3063 = vsub.s32 %v3060, %v3062
    %v3064 = vrot.slane %v3056, %v3063
    %v3066 = vunpack.c.l.s4 1966171168
    %v3067 = vunpack.c.0.s8 %v3066
    %v3068 = vlaneseq
    %v3069 = vshrl.u32 %v3068, 7
    %v3070 = vsub.s32 %v3067, %v3069
    %v3071 = vrot.slane %v3057, %v3070
    %v3072 = vcombine.low %v3064, %v3071
    %v3074 = vunpack.c.l.s4 1966171168
    %v3075 = vunpack.c.0.s8 %v3074
    %v3076 = vlaneseq
    %v3077 = vshrl.u32 %v3076, 7
    %v3078 = vsub.s32 %v3075, %v3077
    %v3079 = vrot.slane %v3072, %v3078
    %3081 = vst.msk [vmem:[%s1456] ss:$2 sm:$0xf] %vm1424, %v3079
    %v3082 = vld [vmem:[#allocation6] sm:$0xff]
    %v3083 = vmul.f32 %v3082, %v1479
    %v3084 = vtanh.pop %v3083
    %v3085 = vadd.f32 %v3084, 1.0
    %v3086 = vmul.f32 %v3085, 0.5
    %v3088 = vrot.slane %v3084, 2
    %v3090 = vadd.f32 %v3088, 1.0
    %v3091 = vmul.f32 %v3090, 0.5
    %v3092 = vrot.slane %v3084, 6
    %v3094 = vadd.f32 %v3092, 1.0
    %v3095 = vmul.f32 %v3094, 0.5
    %v3096 = vmul.f32 %v3091, %v2566
    %v3097 = vrot.slane %v3084, 4
    %v3099 = vmul.f32 %v3086, %v3097
    %v3100 = vadd.f32 %v3096, %v3099
    %v3101 = vtanh.pop %v3100
    %v3102 = vmul.f32 %v3095, %v3101
    %3103 = vst [vmem:[#allocation7 + $0x3] sm:$0x1] %v3102
    %v3105 = vlaneseq
    %v3106 = vshrl.u32 %v3105, 7
    %v3107 = vsub.s32 1, %v3106
    %v3108 = vrot.slane %v3102, %v3107
    %3110 = vst [vmem:[#allocation7 + $0xc] sm:$0x1] %v3108
    %v3111 = vld [vmem:[#allocation4] sm:$0xff]
    %v3112 = vld [vmem:[#allocation4 + $0x8] sm:$0xff]
    %v3113 = vld [vmem:[#allocation4 + $0x10] sm:$0xff]
    %v3114 = vld [vmem:[#allocation4 + $0x18] sm:$0xff]
    %v3115 = vld [vmem:[#allocation4 + $0x20] sm:$0xff]
    %v3116 = vld [vmem:[#allocation4 + $0x28] sm:$0xff]
    %v3117 = vld [vmem:[#allocation4 + $0x30] sm:$0xff]
    %v3118 = vld [vmem:[#allocation4 + $0x38] sm:$0xff]
    %v3119 = vld [vmem:[#allocation4 + $0x40] sm:$0xff]
    %v3120 = vld [vmem:[#allocation4 + $0x48] sm:$0xff]
    %v3121 = vld [vmem:[#allocation4 + $0x50] sm:$0xff]
    %v3122 = vld [vmem:[#allocation4 + $0x58] sm:$0xff]
    %v3123 = vld [vmem:[#allocation4 + $0x60] sm:$0xff]
    %v3124 = vld [vmem:[#allocation4 + $0x68] sm:$0xff]
    %v3125 = vld [vmem:[#allocation4 + $0x70] sm:$0xff]
    %v3126 = vld [vmem:[#allocation4 + $0x78] sm:$0xff]
    %v3127 = vld [vmem:[#allocation4 + $0x80] sm:$0xff]
    %v3128 = vld [vmem:[#allocation4 + $0x88] sm:$0xff]
    %v3129 = vld [vmem:[#allocation4 + $0x90] sm:$0xff]
    %v3130 = vld [vmem:[#allocation4 + $0x98] sm:$0xff]
    %v3131 = vld [vmem:[#allocation4 + $0xa0] sm:$0xff]
    %v3132 = vld [vmem:[#allocation4 + $0xa8] sm:$0xff]
    %v3133 = vld [vmem:[#allocation4 + $0xb0] sm:$0xff]
    %v3134 = vld [vmem:[#allocation4 + $0xb8] sm:$0xff]
    %v3135 = vld [vmem:[#allocation4 + $0xc0] sm:$0xff]
    %v3136 = vld [vmem:[#allocation4 + $0xc8] sm:$0xff]
    %v3137 = vld [vmem:[#allocation4 + $0xd0] sm:$0xff]
    %v3138 = vld [vmem:[#allocation4 + $0xd8] sm:$0xff]
    %v3139 = vld [vmem:[#allocation4 + $0xe0] sm:$0xff]
    %v3140 = vld [vmem:[#allocation4 + $0xe8] sm:$0xff]
    %v3141 = vld [vmem:[#allocation4 + $0xf0] sm:$0xff]
    %v3142 = vld [vmem:[#allocation4 + $0xf8] sm:$0xff]
    %v3143 = vld [vmem:[#allocation4 + $0x100] sm:$0xff]
    %v3144 = vld [vmem:[#allocation4 + $0x108] sm:$0xff]
    %v3145 = vld [vmem:[#allocation4 + $0x110] sm:$0xff]
    %v3146 = vld [vmem:[#allocation4 + $0x118] sm:$0xff]
    %v3147 = vld [vmem:[#allocation4 + $0x120] sm:$0xff]
    %v3148 = vld [vmem:[#allocation4 + $0x128] sm:$0xff]
    %v3149 = vld [vmem:[#allocation4 + $0x130] sm:$0xff]
    %v3150 = vld [vmem:[#allocation4 + $0x138] sm:$0xff]
    %v3151 = vld [vmem:[#allocation4 + $0x140] sm:$0xff]
    %v3152 = vld [vmem:[#allocation4 + $0x148] sm:$0xff]
    %v3153 = vld [vmem:[#allocation4 + $0x150] sm:$0xff]
    %v3154 = vld [vmem:[#allocation4 + $0x158] sm:$0xff]
    %v3155 = vld [vmem:[#allocation4 + $0x160] sm:$0xff]
    %v3156 = vld [vmem:[#allocation4 + $0x168] sm:$0xff]
    %v3157 = vld [vmem:[#allocation4 + $0x170] sm:$0xff]
    %v3158 = vld [vmem:[#allocation4 + $0x178] sm:$0xff]
    %v3159 = vld [vmem:[#allocation4 + $0x180] sm:$0xff]
    %v3160 = vld [vmem:[#allocation4 + $0x188] sm:$0xff]
    %v3161 = vld [vmem:[#allocation4 + $0x190] sm:$0xff]
    %v3162 = vld [vmem:[#allocation4 + $0x198] sm:$0xff]
    %v3163 = vld [vmem:[#allocation4 + $0x1a0] sm:$0xff]
    %v3164 = vld [vmem:[#allocation4 + $0x1a8] sm:$0xff]
    %v3165 = vld [vmem:[#allocation4 + $0x1b0] sm:$0xff]
    %v3166 = vld [vmem:[#allocation4 + $0x1b8] sm:$0xff]
    %v3167 = vld [vmem:[#allocation4 + $0x1c0] sm:$0xff]
    %v3168 = vld [vmem:[#allocation4 + $0x1c8] sm:$0xff]
    %v3169 = vld [vmem:[#allocation4 + $0x1d0] sm:$0xff]
    %v3170 = vld [vmem:[#allocation4 + $0x1d8] sm:$0xff]
    %v3171 = vld [vmem:[#allocation4 + $0x1e0] sm:$0xff]
    %v3172 = vld [vmem:[#allocation4 + $0x1e8] sm:$0xff]
    %v3173 = vld [vmem:[#allocation4 + $0x1f0] sm:$0xff]
    %v3174 = vld [vmem:[#allocation4 + $0x1f8] sm:$0xff]
    %3175 = vmatprep.subr.mxu0 %v3112
    %3176 = vmatpush1.msra.mxu0 %v3111
    %3177 = vmatprep.subr.mxu0 %v3116
    %3178 = vmatpush1.msra.mxu0 %v3115
    %3179 = vmatprep.subr.mxu0 %v3120
    %3180 = vmatpush1.msra.mxu0 %v3119
    %3181 = vmatprep.subr.mxu0 %v3124
    %3182 = vmatpush1.msra.mxu0 %v3123
    %3183 = vmatprep.subr.mxu0 %v3128
    %3184 = vmatpush1.msra.mxu0 %v3127
    %3185 = vmatprep.subr.mxu0 %v3132
    %3186 = vmatpush1.msra.mxu0 %v3131
    %3187 = vmatprep.subr.mxu0 %v3136
    %3188 = vmatpush1.msra.mxu0 %v3135
    %3189 = vmatprep.subr.mxu0 %v3140
    %3190 = vmatpush1.msra.mxu0 %v3139
    %3191 = vmatprep.subr.mxu0 %v3144
    %3192 = vmatpush1.msra.mxu0 %v3143
    %3193 = vmatprep.subr.mxu0 %v3148
    %3194 = vmatpush1.msra.mxu0 %v3147
    %3195 = vmatprep.subr.mxu0 %v3152
    %3196 = vmatpush1.msra.mxu0 %v3151
    %3197 = vmatprep.subr.mxu0 %v3156
    %3198 = vmatpush1.msra.mxu0 %v3155
    %3199 = vmatprep.subr.mxu0 %v3160
    %3200 = vmatpush1.msra.mxu0 %v3159
    %3201 = vmatprep.subr.mxu0 %v3164
    %3202 = vmatpush1.msra.mxu0 %v3163
    %3203 = vmatprep.subr.mxu0 %v3168
    %3204 = vmatpush1.msra.mxu0 %v3167
    %3205 = vmatprep.subr.mxu0 %v3172
    %3206 = vmatpush1.msra.mxu0 %v3171
    %3207 = vmatprep.subr.mxu0 0.0
    %3208 = vmatpush1.msra.mxu0 0.0
    %3209 = vmatprep.subr.mxu0 0.0
    %3210 = vmatpush1.msra.mxu0 0.0
    %3211 = vmatprep.subr.mxu0 0.0
    %3212 = vmatpush1.msra.mxu0 0.0
    %3213 = vmatprep.subr.mxu0 0.0
    %3214 = vmatpush1.msra.mxu0 0.0
    %3215 = vmatprep.subr.mxu0 0.0
    %3216 = vmatpush1.msra.mxu0 0.0
    %3217 = vmatprep.subr.mxu0 0.0
    %3218 = vmatpush1.msra.mxu0 0.0
    %3219 = vmatprep.subr.mxu0 0.0
    %3220 = vmatpush1.msra.mxu0 0.0
    %3221 = vmatprep.subr.mxu0 0.0
    %3222 = vmatpush1.msra.mxu0 0.0
    %3223 = vmatprep.subr.mxu0 0.0
    %3224 = vmatpush1.msra.mxu0 0.0
    %3225 = vmatprep.subr.mxu0 0.0
    %3226 = vmatpush1.msra.mxu0 0.0
    %3227 = vmatprep.subr.mxu0 0.0
    %3228 = vmatpush1.msra.mxu0 0.0
    %3229 = vmatprep.subr.mxu0 0.0
    %3230 = vmatpush1.msra.mxu0 0.0
    %3231 = vmatprep.subr.mxu0 0.0
    %3232 = vmatpush1.msra.mxu0 0.0
    %3233 = vmatprep.subr.mxu0 0.0
    %3234 = vmatpush1.msra.mxu0 0.0
    %3235 = vmatprep.subr.mxu0 0.0
    %3236 = vmatpush1.msra.mxu0 0.0
    %3237 = vmatprep.subr.mxu0 0.0
    %3238 = vmatpush1.msra.mxu0 0.0
    %3239 = vmatprep.mubr.f32.mxu0 0.0
    %3240 = vmatmul.mubr.f32.gmra.mrb[0].mxu0 %v3102
    %v3241 = vpop.f32.mrb[0].mxu0
    %v3242 = vadd.f32 0.0, %v3241
    %v3243 = vpop.f32.mrb[0].mxu0
    %v3244 = vadd.f32 0.0, %v3243
    %3245 = vdwg.mxu0
    %3246 = vmatprep.subr.mxu0 %v3114
    %3247 = vmatpush1.msra.mxu0 %v3113
    %3248 = vmatprep.subr.mxu0 %v3118
    %3249 = vmatpush1.msra.mxu0 %v3117
    %3250 = vmatprep.subr.mxu0 %v3122
    %3251 = vmatpush1.msra.mxu0 %v3121
    %3252 = vmatprep.subr.mxu0 %v3126
    %3253 = vmatpush1.msra.mxu0 %v3125
    %3254 = vmatprep.subr.mxu0 %v3130
    %3255 = vmatpush1.msra.mxu0 %v3129
    %3256 = vmatprep.subr.mxu0 %v3134
    %3257 = vmatpush1.msra.mxu0 %v3133
    %3258 = vmatprep.subr.mxu0 %v3138
    %3259 = vmatpush1.msra.mxu0 %v3137
    %3260 = vmatprep.subr.mxu0 %v3142
    %3261 = vmatpush1.msra.mxu0 %v3141
    %3262 = vmatprep.subr.mxu0 %v3146
    %3263 = vmatpush1.msra.mxu0 %v3145
    %3264 = vmatprep.subr.mxu0 %v3150
    %3265 = vmatpush1.msra.mxu0 %v3149
    %3266 = vmatprep.subr.mxu0 %v3154
    %3267 = vmatpush1.msra.mxu0 %v3153
    %3268 = vmatprep.subr.mxu0 %v3158
    %3269 = vmatpush1.msra.mxu0 %v3157
    %3270 = vmatprep.subr.mxu0 %v3162
    %3271 = vmatpush1.msra.mxu0 %v3161
    %3272 = vmatprep.subr.mxu0 %v3166
    %3273 = vmatpush1.msra.mxu0 %v3165
    %3274 = vmatprep.subr.mxu0 %v3170
    %3275 = vmatpush1.msra.mxu0 %v3169
    %3276 = vmatprep.subr.mxu0 %v3174
    %3277 = vmatpush1.msra.mxu0 %v3173
    %3278 = vmatprep.subr.mxu0 0.0
    %3279 = vmatpush1.msra.mxu0 0.0
    %3280 = vmatprep.subr.mxu0 0.0
    %3281 = vmatpush1.msra.mxu0 0.0
    %3282 = vmatprep.subr.mxu0 0.0
    %3283 = vmatpush1.msra.mxu0 0.0
    %3284 = vmatprep.subr.mxu0 0.0
    %3285 = vmatpush1.msra.mxu0 0.0
    %3286 = vmatprep.subr.mxu0 0.0
    %3287 = vmatpush1.msra.mxu0 0.0
    %3288 = vmatprep.subr.mxu0 0.0
    %3289 = vmatpush1.msra.mxu0 0.0
    %3290 = vmatprep.subr.mxu0 0.0
    %3291 = vmatpush1.msra.mxu0 0.0
    %3292 = vmatprep.subr.mxu0 0.0
    %3293 = vmatpush1.msra.mxu0 0.0
    %3294 = vmatprep.subr.mxu0 0.0
    %3295 = vmatpush1.msra.mxu0 0.0
    %3296 = vmatprep.subr.mxu0 0.0
    %3297 = vmatpush1.msra.mxu0 0.0
    %3298 = vmatprep.subr.mxu0 0.0
    %3299 = vmatpush1.msra.mxu0 0.0
    %3300 = vmatprep.subr.mxu0 0.0
    %3301 = vmatpush1.msra.mxu0 0.0
    %3302 = vmatprep.subr.mxu0 0.0
    %3303 = vmatpush1.msra.mxu0 0.0
    %3304 = vmatprep.subr.mxu0 0.0
    %3305 = vmatpush1.msra.mxu0 0.0
    %3306 = vmatprep.subr.mxu0 0.0
    %3307 = vmatpush1.msra.mxu0 0.0
    %3308 = vmatprep.subr.mxu0 0.0
    %3309 = vmatpush1.msra.mxu0 0.0
    %3310 = vmatprep.mubr.f32.mxu0 0.0
    %3311 = vmatmul.mubr.f32.gmra.mrb[0].mxu0 %v3102
    %v3312 = vpop.f32.mrb[0].mxu0
    %v3313 = vadd.f32 0.0, %v3312
    %v3314 = vpop.f32.mrb[0].mxu0
    %v3315 = vadd.f32 0.0, %v3314
    %3316 = vdwg.mxu0
    %v3321 = vrot.slane %v3242, 4
    %v3322 = vrot.slane %v3244, 4
    %v3323 = vrot.slane %v3313, 4
    %v3324 = vrot.slane %v3315, 4
    %v3329 = vadd.f32 %v1149, %v3321
    %v3330 = vadd.f32 %v1151, %v3322
    %v3331 = vadd.f32 %v1220, %v3323
    %v3332 = vadd.f32 %v1222, %v3324
    %v3333 = vld [vmem:[#allocation5] sm:$0xff]
    %v3334 = vld [vmem:[#allocation5 + $0x8] sm:$0xff]
    %v3335 = vld [vmem:[#allocation5 + $0x10] sm:$0xff]
    %v3336 = vld [vmem:[#allocation5 + $0x18] sm:$0xff]
    %v3337 = vld [vmem:[#allocation5 + $0x20] sm:$0xff]
    %v3338 = vld [vmem:[#allocation5 + $0x28] sm:$0xff]
    %v3339 = vld [vmem:[#allocation5 + $0x30] sm:$0xff]
    %v3340 = vld [vmem:[#allocation5 + $0x38] sm:$0xff]
    %v3341 = vld [vmem:[#allocation5 + $0x40] sm:$0xff]
    %v3342 = vld [vmem:[#allocation5 + $0x48] sm:$0xff]
    %v3343 = vld [vmem:[#allocation5 + $0x50] sm:$0xff]
    %v3344 = vld [vmem:[#allocation5 + $0x58] sm:$0xff]
    %v3345 = vld [vmem:[#allocation5 + $0x60] sm:$0xff]
    %v3346 = vld [vmem:[#allocation5 + $0x68] sm:$0xff]
    %v3347 = vld [vmem:[#allocation5 + $0x70] sm:$0xff]
    %v3348 = vld [vmem:[#allocation5 + $0x78] sm:$0xff]
    %v3349 = vld [vmem:[#allocation5 + $0x80] sm:$0xff]
    %v3350 = vld [vmem:[#allocation5 + $0x88] sm:$0xff]
    %v3351 = vld [vmem:[#allocation5 + $0x90] sm:$0xff]
    %v3352 = vld [vmem:[#allocation5 + $0x98] sm:$0xff]
    %v3353 = vld [vmem:[#allocation5 + $0xa0] sm:$0xff]
    %v3354 = vld [vmem:[#allocation5 + $0xa8] sm:$0xff]
    %v3355 = vld [vmem:[#allocation5 + $0xb0] sm:$0xff]
    %v3356 = vld [vmem:[#allocation5 + $0xb8] sm:$0xff]
    %v3357 = vld [vmem:[#allocation5 + $0xc0] sm:$0xff]
    %v3358 = vld [vmem:[#allocation5 + $0xc8] sm:$0xff]
    %v3359 = vld [vmem:[#allocation5 + $0xd0] sm:$0xff]
    %v3360 = vld [vmem:[#allocation5 + $0xd8] sm:$0xff]
    %v3361 = vld [vmem:[#allocation5 + $0xe0] sm:$0xff]
    %v3362 = vld [vmem:[#allocation5 + $0xe8] sm:$0xff]
    %v3363 = vld [vmem:[#allocation5 + $0xf0] sm:$0xff]
    %v3364 = vld [vmem:[#allocation5 + $0xf8] sm:$0xff]
    %v3365 = vld [vmem:[#allocation5 + $0x100] sm:$0xff]
    %v3366 = vld [vmem:[#allocation5 + $0x108] sm:$0xff]
    %v3367 = vld [vmem:[#allocation5 + $0x110] sm:$0xff]
    %v3368 = vld [vmem:[#allocation5 + $0x118] sm:$0xff]
    %v3369 = vld [vmem:[#allocation5 + $0x120] sm:$0xff]
    %v3370 = vld [vmem:[#allocation5 + $0x128] sm:$0xff]
    %v3371 = vld [vmem:[#allocation5 + $0x130] sm:$0xff]
    %v3372 = vld [vmem:[#allocation5 + $0x138] sm:$0xff]
    %v3373 = vld [vmem:[#allocation5 + $0x140] sm:$0xff]
    %v3374 = vld [vmem:[#allocation5 + $0x148] sm:$0xff]
    %v3375 = vld [vmem:[#allocation5 + $0x150] sm:$0xff]
    %v3376 = vld [vmem:[#allocation5 + $0x158] sm:$0xff]
    %v3377 = vld [vmem:[#allocation5 + $0x160] sm:$0xff]
    %v3378 = vld [vmem:[#allocation5 + $0x168] sm:$0xff]
    %v3379 = vld [vmem:[#allocation5 + $0x170] sm:$0xff]
    %v3380 = vld [vmem:[#allocation5 + $0x178] sm:$0xff]
    %v3381 = vld [vmem:[#allocation5 + $0x180] sm:$0xff]
    %v3382 = vld [vmem:[#allocation5 + $0x188] sm:$0xff]
    %v3383 = vld [vmem:[#allocation5 + $0x190] sm:$0xff]
    %v3384 = vld [vmem:[#allocation5 + $0x198] sm:$0xff]
    %v3385 = vld [vmem:[#allocation5 + $0x1a0] sm:$0xff]
    %v3386 = vld [vmem:[#allocation5 + $0x1a8] sm:$0xff]
    %v3387 = vld [vmem:[#allocation5 + $0x1b0] sm:$0xff]
    %v3388 = vld [vmem:[#allocation5 + $0x1b8] sm:$0xff]
    %v3389 = vld [vmem:[#allocation5 + $0x1c0] sm:$0xff]
    %v3390 = vld [vmem:[#allocation5 + $0x1c8] sm:$0xff]
    %v3391 = vld [vmem:[#allocation5 + $0x1d0] sm:$0xff]
    %v3392 = vld [vmem:[#allocation5 + $0x1d8] sm:$0xff]
    %v3393 = vld [vmem:[#allocation5 + $0x1e0] sm:$0xff]
    %v3394 = vld [vmem:[#allocation5 + $0x1e8] sm:$0xff]
    %v3395 = vld [vmem:[#allocation5 + $0x1f0] sm:$0xff]
    %v3396 = vld [vmem:[#allocation5 + $0x1f8] sm:$0xff]
    %3397 = vmatprep.subr.mxu0 %v3334
    %3398 = vmatpush1.msra.mxu0 %v3333
    %3399 = vmatprep.subr.mxu0 %v3338
    %3400 = vmatpush1.msra.mxu0 %v3337
    %3401 = vmatprep.subr.mxu0 %v3342
    %3402 = vmatpush1.msra.mxu0 %v3341
    %3403 = vmatprep.subr.mxu0 %v3346
    %3404 = vmatpush1.msra.mxu0 %v3345
    %3405 = vmatprep.subr.mxu0 %v3350
    %3406 = vmatpush1.msra.mxu0 %v3349
    %3407 = vmatprep.subr.mxu0 %v3354
    %3408 = vmatpush1.msra.mxu0 %v3353
    %3409 = vmatprep.subr.mxu0 %v3358
    %3410 = vmatpush1.msra.mxu0 %v3357
    %3411 = vmatprep.subr.mxu0 %v3362
    %3412 = vmatpush1.msra.mxu0 %v3361
    %3413 = vmatprep.subr.mxu0 %v3366
    %3414 = vmatpush1.msra.mxu0 %v3365
    %3415 = vmatprep.subr.mxu0 %v3370
    %3416 = vmatpush1.msra.mxu0 %v3369
    %3417 = vmatprep.subr.mxu0 %v3374
    %3418 = vmatpush1.msra.mxu0 %v3373
    %3419 = vmatprep.subr.mxu0 %v3378
    %3420 = vmatpush1.msra.mxu0 %v3377
    %3421 = vmatprep.subr.mxu0 %v3382
    %3422 = vmatpush1.msra.mxu0 %v3381
    %3423 = vmatprep.subr.mxu0 %v3386
    %3424 = vmatpush1.msra.mxu0 %v3385
    %3425 = vmatprep.subr.mxu0 %v3390
    %3426 = vmatpush1.msra.mxu0 %v3389
    %3427 = vmatprep.subr.mxu0 %v3394
    %3428 = vmatpush1.msra.mxu0 %v3393
    %3429 = vmatprep.subr.mxu0 0.0
    %3430 = vmatpush1.msra.mxu0 0.0
    %3431 = vmatprep.subr.mxu0 0.0
    %3432 = vmatpush1.msra.mxu0 0.0
    %3433 = vmatprep.subr.mxu0 0.0
    %3434 = vmatpush1.msra.mxu0 0.0
    %3435 = vmatprep.subr.mxu0 0.0
    %3436 = vmatpush1.msra.mxu0 0.0
    %3437 = vmatprep.subr.mxu0 0.0
    %3438 = vmatpush1.msra.mxu0 0.0
    %3439 = vmatprep.subr.mxu0 0.0
    %3440 = vmatpush1.msra.mxu0 0.0
    %3441 = vmatprep.subr.mxu0 0.0
    %3442 = vmatpush1.msra.mxu0 0.0
    %3443 = vmatprep.subr.mxu0 0.0
    %3444 = vmatpush1.msra.mxu0 0.0
    %3445 = vmatprep.subr.mxu0 0.0
    %3446 = vmatpush1.msra.mxu0 0.0
    %3447 = vmatprep.subr.mxu0 0.0
    %3448 = vmatpush1.msra.mxu0 0.0
    %3449 = vmatprep.subr.mxu0 0.0
    %3450 = vmatpush1.msra.mxu0 0.0
    %3451 = vmatprep.subr.mxu0 0.0
    %3452 = vmatpush1.msra.mxu0 0.0
    %3453 = vmatprep.subr.mxu0 0.0
    %3454 = vmatpush1.msra.mxu0 0.0
    %3455 = vmatprep.subr.mxu0 0.0
    %3456 = vmatpush1.msra.mxu0 0.0
    %3457 = vmatprep.subr.mxu0 0.0
    %3458 = vmatpush1.msra.mxu0 0.0
    %3459 = vmatprep.subr.mxu0 0.0
    %3460 = vmatpush1.msra.mxu0 0.0
    %3461 = vmatprep.mubr.f32.mxu0 0.0
    %3462 = vmatmul.mubr.f32.gmra.mrb[0].mxu0 %v3108
    %v3463 = vpop.f32.mrb[0].mxu0
    %v3464 = vadd.f32 0.0, %v3463
    %v3465 = vpop.f32.mrb[0].mxu0
    %v3466 = vadd.f32 0.0, %v3465
    %3467 = vdwg.mxu0
    %3468 = vmatprep.subr.mxu0 %v3336
    %3469 = vmatpush1.msra.mxu0 %v3335
    %3470 = vmatprep.subr.mxu0 %v3340
    %3471 = vmatpush1.msra.mxu0 %v3339
    %3472 = vmatprep.subr.mxu0 %v3344
    %3473 = vmatpush1.msra.mxu0 %v3343
    %3474 = vmatprep.subr.mxu0 %v3348
    %3475 = vmatpush1.msra.mxu0 %v3347
    %3476 = vmatprep.subr.mxu0 %v3352
    %3477 = vmatpush1.msra.mxu0 %v3351
    %3478 = vmatprep.subr.mxu0 %v3356
    %3479 = vmatpush1.msra.mxu0 %v3355
    %3480 = vmatprep.subr.mxu0 %v3360
    %3481 = vmatpush1.msra.mxu0 %v3359
    %3482 = vmatprep.subr.mxu0 %v3364
    %3483 = vmatpush1.msra.mxu0 %v3363
    %3484 = vmatprep.subr.mxu0 %v3368
    %3485 = vmatpush1.msra.mxu0 %v3367
    %3486 = vmatprep.subr.mxu0 %v3372
    %3487 = vmatpush1.msra.mxu0 %v3371
    %3488 = vmatprep.subr.mxu0 %v3376
    %3489 = vmatpush1.msra.mxu0 %v3375
    %3490 = vmatprep.subr.mxu0 %v3380
    %3491 = vmatpush1.msra.mxu0 %v3379
    %3492 = vmatprep.subr.mxu0 %v3384
    %3493 = vmatpush1.msra.mxu0 %v3383
    %3494 = vmatprep.subr.mxu0 %v3388
    %3495 = vmatpush1.msra.mxu0 %v3387
    %3496 = vmatprep.subr.mxu0 %v3392
    %3497 = vmatpush1.msra.mxu0 %v3391
    %3498 = vmatprep.subr.mxu0 %v3396
    %3499 = vmatpush1.msra.mxu0 %v3395
    %3500 = vmatprep.subr.mxu0 0.0
    %3501 = vmatpush1.msra.mxu0 0.0
    %3502 = vmatprep.subr.mxu0 0.0
    %3503 = vmatpush1.msra.mxu0 0.0
    %3504 = vmatprep.subr.mxu0 0.0
    %3505 = vmatpush1.msra.mxu0 0.0
    %3506 = vmatprep.subr.mxu0 0.0
    %3507 = vmatpush1.msra.mxu0 0.0
    %3508 = vmatprep.subr.mxu0 0.0
    %3509 = vmatpush1.msra.mxu0 0.0
    %3510 = vmatprep.subr.mxu0 0.0
    %3511 = vmatpush1.msra.mxu0 0.0
    %3512 = vmatprep.subr.mxu0 0.0
    %3513 = vmatpush1.msra.mxu0 0.0
    %3514 = vmatprep.subr.mxu0 0.0
    %3515 = vmatpush1.msra.mxu0 0.0
    %3516 = vmatprep.subr.mxu0 0.0
    %3517 = vmatpush1.msra.mxu0 0.0
    %3518 = vmatprep.subr.mxu0 0.0
    %3519 = vmatpush1.msra.mxu0 0.0
    %3520 = vmatprep.subr.mxu0 0.0
    %3521 = vmatpush1.msra.mxu0 0.0
    %3522 = vmatprep.subr.mxu0 0.0
    %3523 = vmatpush1.msra.mxu0 0.0
    %3524 = vmatprep.subr.mxu0 0.0
    %3525 = vmatpush1.msra.mxu0 0.0
    %3526 = vmatprep.subr.mxu0 0.0
    %3527 = vmatpush1.msra.mxu0 0.0
    %3528 = vmatprep.subr.mxu0 0.0
    %3529 = vmatpush1.msra.mxu0 0.0
    %3530 = vmatprep.subr.mxu0 0.0
    %3531 = vmatpush1.msra.mxu0 0.0
    %3532 = vmatprep.mubr.f32.mxu0 0.0
    %3533 = vmatmul.mubr.f32.gmra.mrb[0].mxu0 %v3108
    %v3534 = vpop.f32.mrb[0].mxu0
    %v3535 = vadd.f32 0.0, %v3534
    %v3536 = vpop.f32.mrb[0].mxu0
    %v3537 = vadd.f32 0.0, %v3536
    %3538 = vdwg.mxu0
    %v3543 = vrot.slane %v3464, 5
    %v3544 = vrot.slane %v3466, 5
    %v3545 = vrot.slane %v3535, 5
    %v3546 = vrot.slane %v3537, 5
    %v3551 = vadd.f32 %v1291, %v3543
    %v3552 = vadd.f32 %v1293, %v3544
    %v3553 = vadd.f32 %v1362, %v3545
    %v3554 = vadd.f32 %v1364, %v3546
    %v3559 = vcombine.high %v3329, %v3330
    %v3560 = vcombine.high %v3331, %v3332
    %v3562 = vunpack.c.l.s4 1966171168
    %v3563 = vunpack.c.0.s8 %v3562
    %v3564 = vlaneseq
    %v3565 = vshrl.u32 %v3564, 7
    %v3566 = vsub.s32 %v3563, %v3565
    %v3567 = vrot.slane %v3559, %v3566
    %v3569 = vunpack.c.l.s4 1966171168
    %v3570 = vunpack.c.0.s8 %v3569
    %v3571 = vlaneseq
    %v3572 = vshrl.u32 %v3571, 7
    %v3573 = vsub.s32 %v3570, %v3572
    %v3574 = vrot.slane %v3560, %v3573
    %v3575 = vcombine.low %v3567, %v3574
    %v3577 = vunpack.c.l.s4 1966171168
    %v3578 = vunpack.c.0.s8 %v3577
    %v3579 = vlaneseq
    %v3580 = vshrl.u32 %v3579, 7
    %v3581 = vsub.s32 %v3578, %v3580
    %v3582 = vrot.slane %v3575, %v3581
    %3584 = vst.msk [vmem:[#allocation6] ss:$2 sm:$0xf] %vm1424, %v3582
    %v3589 = vcombine.low %v3551, %v3552
    %v3590 = vcombine.low %v3553, %v3554
    %v3592 = vunpack.c.l.s4 1966171168
    %v3593 = vunpack.c.0.s8 %v3592
    %v3594 = vlaneseq
    %v3595 = vshrl.u32 %v3594, 7
    %v3596 = vsub.s32 %v3593, %v3595
    %v3597 = vrot.slane %v3589, %v3596
    %v3599 = vunpack.c.l.s4 1966171168
    %v3600 = vunpack.c.0.s8 %v3599
    %v3601 = vlaneseq
    %v3602 = vshrl.u32 %v3601, 7
    %v3603 = vsub.s32 %v3600, %v3602
    %v3604 = vrot.slane %v3590, %v3603
    %v3605 = vcombine.high %v3597, %v3604
    %v3607 = vunpack.c.l.s4 1966171168
    %v3608 = vunpack.c.0.s8 %v3607
    %v3609 = vlaneseq
    %v3610 = vshrl.u32 %v3609, 7
    %v3611 = vsub.s32 %v3608, %v3610
    %v3612 = vrot.slane %v3605, %v3611
    %v3613 = vcombine.high %v3612, %v3612
    %3615 = vst.msk [vmem:[%s1456] ss:$2 sm:$0xf] %vm1424, %v3613
    %v3616 = vld [vmem:[#allocation6] sm:$0xff]
    %v3617 = vmul.f32 %v3616, %v1479
    %v3618 = vtanh.pop %v3617
    %v3619 = vadd.f32 %v3618, 1.0
    %v3620 = vmul.f32 %v3619, 0.5
    %v3622 = vrot.slane %v3618, 2
    %v3624 = vadd.f32 %v3622, 1.0
    %v3625 = vmul.f32 %v3624, 0.5
    %v3626 = vrot.slane %v3618, 6
    %v3628 = vadd.f32 %v3626, 1.0
    %v3629 = vmul.f32 %v3628, 0.5
    %v3630 = vmul.f32 %v3625, %v3100
    %v3631 = vrot.slane %v3618, 4
    %v3633 = vmul.f32 %v3620, %v3631
    %v3634 = vadd.f32 %v3630, %v3633
    %v3635 = vtanh.pop %v3634
    %v3636 = vmul.f32 %v3629, %v3635
    %3637 = vst [vmem:[#allocation7 + $0x4] sm:$0x1] %v3636
    %v3639 = vlaneseq
    %v3640 = vshrl.u32 %v3639, 7
    %v3641 = vsub.s32 1, %v3640
    %v3642 = vrot.slane %v3636, %v3641
    %3644 = vst [vmem:[#allocation7 + $0xb] sm:$0x1] %v3642
    %v3645 = vld [vmem:[#allocation4] sm:$0xff]
    %v3646 = vld [vmem:[#allocation4 + $0x8] sm:$0xff]
    %v3647 = vld [vmem:[#allocation4 + $0x10] sm:$0xff]
    %v3648 = vld [vmem:[#allocation4 + $0x18] sm:$0xff]
    %v3649 = vld [vmem:[#allocation4 + $0x20] sm:$0xff]
    %v3650 = vld [vmem:[#allocation4 + $0x28] sm:$0xff]
    %v3651 = vld [vmem:[#allocation4 + $0x30] sm:$0xff]
    %v3652 = vld [vmem:[#allocation4 + $0x38] sm:$0xff]
    %v3653 = vld [vmem:[#allocation4 + $0x40] sm:$0xff]
    %v3654 = vld [vmem:[#allocation4 + $0x48] sm:$0xff]
    %v3655 = vld [vmem:[#allocation4 + $0x50] sm:$0xff]
    %v3656 = vld [vmem:[#allocation4 + $0x58] sm:$0xff]
    %v3657 = vld [vmem:[#allocation4 + $0x60] sm:$0xff]
    %v3658 = vld [vmem:[#allocation4 + $0x68] sm:$0xff]
    %v3659 = vld [vmem:[#allocation4 + $0x70] sm:$0xff]
    %v3660 = vld [vmem:[#allocation4 + $0x78] sm:$0xff]
    %v3661 = vld [vmem:[#allocation4 + $0x80] sm:$0xff]
    %v3662 = vld [vmem:[#allocation4 + $0x88] sm:$0xff]
    %v3663 = vld [vmem:[#allocation4 + $0x90] sm:$0xff]
    %v3664 = vld [vmem:[#allocation4 + $0x98] sm:$0xff]
    %v3665 = vld [vmem:[#allocation4 + $0xa0] sm:$0xff]
    %v3666 = vld [vmem:[#allocation4 + $0xa8] sm:$0xff]
    %v3667 = vld [vmem:[#allocation4 + $0xb0] sm:$0xff]
    %v3668 = vld [vmem:[#allocation4 + $0xb8] sm:$0xff]
    %v3669 = vld [vmem:[#allocation4 + $0xc0] sm:$0xff]
    %v3670 = vld [vmem:[#allocation4 + $0xc8] sm:$0xff]
    %v3671 = vld [vmem:[#allocation4 + $0xd0] sm:$0xff]
    %v3672 = vld [vmem:[#allocation4 + $0xd8] sm:$0xff]
    %v3673 = vld [vmem:[#allocation4 + $0xe0] sm:$0xff]
    %v3674 = vld [vmem:[#allocation4 + $0xe8] sm:$0xff]
    %v3675 = vld [vmem:[#allocation4 + $0xf0] sm:$0xff]
    %v3676 = vld [vmem:[#allocation4 + $0xf8] sm:$0xff]
    %v3677 = vld [vmem:[#allocation4 + $0x100] sm:$0xff]
    %v3678 = vld [vmem:[#allocation4 + $0x108] sm:$0xff]
    %v3679 = vld [vmem:[#allocation4 + $0x110] sm:$0xff]
    %v3680 = vld [vmem:[#allocation4 + $0x118] sm:$0xff]
    %v3681 = vld [vmem:[#allocation4 + $0x120] sm:$0xff]
    %v3682 = vld [vmem:[#allocation4 + $0x128] sm:$0xff]
    %v3683 = vld [vmem:[#allocation4 + $0x130] sm:$0xff]
    %v3684 = vld [vmem:[#allocation4 + $0x138] sm:$0xff]
    %v3685 = vld [vmem:[#allocation4 + $0x140] sm:$0xff]
    %v3686 = vld [vmem:[#allocation4 + $0x148] sm:$0xff]
    %v3687 = vld [vmem:[#allocation4 + $0x150] sm:$0xff]
    %v3688 = vld [vmem:[#allocation4 + $0x158] sm:$0xff]
    %v3689 = vld [vmem:[#allocation4 + $0x160] sm:$0xff]
    %v3690 = vld [vmem:[#allocation4 + $0x168] sm:$0xff]
    %v3691 = vld [vmem:[#allocation4 + $0x170] sm:$0xff]
    %v3692 = vld [vmem:[#allocation4 + $0x178] sm:$0xff]
    %v3693 = vld [vmem:[#allocation4 + $0x180] sm:$0xff]
    %v3694 = vld [vmem:[#allocation4 + $0x188] sm:$0xff]
    %v3695 = vld [vmem:[#allocation4 + $0x190] sm:$0xff]
    %v3696 = vld [vmem:[#allocation4 + $0x198] sm:$0xff]
    %v3697 = vld [vmem:[#allocation4 + $0x1a0] sm:$0xff]
    %v3698 = vld [vmem:[#allocation4 + $0x1a8] sm:$0xff]
    %v3699 = vld [vmem:[#allocation4 + $0x1b0] sm:$0xff]
    %v3700 = vld [vmem:[#allocation4 + $0x1b8] sm:$0xff]
    %v3701 = vld [vmem:[#allocation4 + $0x1c0] sm:$0xff]
    %v3702 = vld [vmem:[#allocation4 + $0x1c8] sm:$0xff]
    %v3703 = vld [vmem:[#allocation4 + $0x1d0] sm:$0xff]
    %v3704 = vld [vmem:[#allocation4 + $0x1d8] sm:$0xff]
    %v3705 = vld [vmem:[#allocation4 + $0x1e0] sm:$0xff]
    %v3706 = vld [vmem:[#allocation4 + $0x1e8] sm:$0xff]
    %v3707 = vld [vmem:[#allocation4 + $0x1f0] sm:$0xff]
    %v3708 = vld [vmem:[#allocation4 + $0x1f8] sm:$0xff]
    %3709 = vmatprep.subr.mxu0 %v3646
    %3710 = vmatpush1.msra.mxu0 %v3645
    %3711 = vmatprep.subr.mxu0 %v3650
    %3712 = vmatpush1.msra.mxu0 %v3649
    %3713 = vmatprep.subr.mxu0 %v3654
    %3714 = vmatpush1.msra.mxu0 %v3653
    %3715 = vmatprep.subr.mxu0 %v3658
    %3716 = vmatpush1.msra.mxu0 %v3657
    %3717 = vmatprep.subr.mxu0 %v3662
    %3718 = vmatpush1.msra.mxu0 %v3661
    %3719 = vmatprep.subr.mxu0 %v3666
    %3720 = vmatpush1.msra.mxu0 %v3665
    %3721 = vmatprep.subr.mxu0 %v3670
    %3722 = vmatpush1.msra.mxu0 %v3669
    %3723 = vmatprep.subr.mxu0 %v3674
    %3724 = vmatpush1.msra.mxu0 %v3673
    %3725 = vmatprep.subr.mxu0 %v3678
    %3726 = vmatpush1.msra.mxu0 %v3677
    %3727 = vmatprep.subr.mxu0 %v3682
    %3728 = vmatpush1.msra.mxu0 %v3681
    %3729 = vmatprep.subr.mxu0 %v3686
    %3730 = vmatpush1.msra.mxu0 %v3685
    %3731 = vmatprep.subr.mxu0 %v3690
    %3732 = vmatpush1.msra.mxu0 %v3689
    %3733 = vmatprep.subr.mxu0 %v3694
    %3734 = vmatpush1.msra.mxu0 %v3693
    %3735 = vmatprep.subr.mxu0 %v3698
    %3736 = vmatpush1.msra.mxu0 %v3697
    %3737 = vmatprep.subr.mxu0 %v3702
    %3738 = vmatpush1.msra.mxu0 %v3701
    %3739 = vmatprep.subr.mxu0 %v3706
    %3740 = vmatpush1.msra.mxu0 %v3705
    %3741 = vmatprep.subr.mxu0 0.0
    %3742 = vmatpush1.msra.mxu0 0.0
    %3743 = vmatprep.subr.mxu0 0.0
    %3744 = vmatpush1.msra.mxu0 0.0
    %3745 = vmatprep.subr.mxu0 0.0
    %3746 = vmatpush1.msra.mxu0 0.0
    %3747 = vmatprep.subr.mxu0 0.0
    %3748 = vmatpush1.msra.mxu0 0.0
    %3749 = vmatprep.subr.mxu0 0.0
    %3750 = vmatpush1.msra.mxu0 0.0
    %3751 = vmatprep.subr.mxu0 0.0
    %3752 = vmatpush1.msra.mxu0 0.0
    %3753 = vmatprep.subr.mxu0 0.0
    %3754 = vmatpush1.msra.mxu0 0.0
    %3755 = vmatprep.subr.mxu0 0.0
    %3756 = vmatpush1.msra.mxu0 0.0
    %3757 = vmatprep.subr.mxu0 0.0
    %3758 = vmatpush1.msra.mxu0 0.0
    %3759 = vmatprep.subr.mxu0 0.0
    %3760 = vmatpush1.msra.mxu0 0.0
    %3761 = vmatprep.subr.mxu0 0.0
    %3762 = vmatpush1.msra.mxu0 0.0
    %3763 = vmatprep.subr.mxu0 0.0
    %3764 = vmatpush1.msra.mxu0 0.0
    %3765 = vmatprep.subr.mxu0 0.0
    %3766 = vmatpush1.msra.mxu0 0.0
    %3767 = vmatprep.subr.mxu0 0.0
    %3768 = vmatpush1.msra.mxu0 0.0
    %3769 = vmatprep.subr.mxu0 0.0
    %3770 = vmatpush1.msra.mxu0 0.0
    %3771 = vmatprep.subr.mxu0 0.0
    %3772 = vmatpush1.msra.mxu0 0.0
    %3773 = vmatprep.mubr.f32.mxu0 0.0
    %3774 = vmatmul.mubr.f32.gmra.mrb[0].mxu0 %v3636
    %v3775 = vpop.f32.mrb[0].mxu0
    %v3776 = vadd.f32 0.0, %v3775
    %v3777 = vpop.f32.mrb[0].mxu0
    %v3778 = vadd.f32 0.0, %v3777
    %3779 = vdwg.mxu0
    %3780 = vmatprep.subr.mxu0 %v3648
    %3781 = vmatpush1.msra.mxu0 %v3647
    %3782 = vmatprep.subr.mxu0 %v3652
    %3783 = vmatpush1.msra.mxu0 %v3651
    %3784 = vmatprep.subr.mxu0 %v3656
    %3785 = vmatpush1.msra.mxu0 %v3655
    %3786 = vmatprep.subr.mxu0 %v3660
    %3787 = vmatpush1.msra.mxu0 %v3659
    %3788 = vmatprep.subr.mxu0 %v3664
    %3789 = vmatpush1.msra.mxu0 %v3663
    %3790 = vmatprep.subr.mxu0 %v3668
    %3791 = vmatpush1.msra.mxu0 %v3667
    %3792 = vmatprep.subr.mxu0 %v3672
    %3793 = vmatpush1.msra.mxu0 %v3671
    %3794 = vmatprep.subr.mxu0 %v3676
    %3795 = vmatpush1.msra.mxu0 %v3675
    %3796 = vmatprep.subr.mxu0 %v3680
    %3797 = vmatpush1.msra.mxu0 %v3679
    %3798 = vmatprep.subr.mxu0 %v3684
    %3799 = vmatpush1.msra.mxu0 %v3683
    %3800 = vmatprep.subr.mxu0 %v3688
    %3801 = vmatpush1.msra.mxu0 %v3687
    %3802 = vmatprep.subr.mxu0 %v3692
    %3803 = vmatpush1.msra.mxu0 %v3691
    %3804 = vmatprep.subr.mxu0 %v3696
    %3805 = vmatpush1.msra.mxu0 %v3695
    %3806 = vmatprep.subr.mxu0 %v3700
    %3807 = vmatpush1.msra.mxu0 %v3699
    %3808 = vmatprep.subr.mxu0 %v3704
    %3809 = vmatpush1.msra.mxu0 %v3703
    %3810 = vmatprep.subr.mxu0 %v3708
    %3811 = vmatpush1.msra.mxu0 %v3707
    %3812 = vmatprep.subr.mxu0 0.0
    %3813 = vmatpush1.msra.mxu0 0.0
    %3814 = vmatprep.subr.mxu0 0.0
    %3815 = vmatpush1.msra.mxu0 0.0
    %3816 = vmatprep.subr.mxu0 0.0
    %3817 = vmatpush1.msra.mxu0 0.0
    %3818 = vmatprep.subr.mxu0 0.0
    %3819 = vmatpush1.msra.mxu0 0.0
    %3820 = vmatprep.subr.mxu0 0.0
    %3821 = vmatpush1.msra.mxu0 0.0
    %3822 = vmatprep.subr.mxu0 0.0
    %3823 = vmatpush1.msra.mxu0 0.0
    %3824 = vmatprep.subr.mxu0 0.0
    %3825 = vmatpush1.msra.mxu0 0.0
    %3826 = vmatprep.subr.mxu0 0.0
    %3827 = vmatpush1.msra.mxu0 0.0
    %3828 = vmatprep.subr.mxu0 0.0
    %3829 = vmatpush1.msra.mxu0 0.0
    %3830 = vmatprep.subr.mxu0 0.0
    %3831 = vmatpush1.msra.mxu0 0.0
    %3832 = vmatprep.subr.mxu0 0.0
    %3833 = vmatpush1.msra.mxu0 0.0
    %3834 = vmatprep.subr.mxu0 0.0
    %3835 = vmatpush1.msra.mxu0 0.0
    %3836 = vmatprep.subr.mxu0 0.0
    %3837 = vmatpush1.msra.mxu0 0.0
    %3838 = vmatprep.subr.mxu0 0.0
    %3839 = vmatpush1.msra.mxu0 0.0
    %3840 = vmatprep.subr.mxu0 0.0
    %3841 = vmatpush1.msra.mxu0 0.0
    %3842 = vmatprep.subr.mxu0 0.0
    %3843 = vmatpush1.msra.mxu0 0.0
    %3844 = vmatprep.mubr.f32.mxu0 0.0
    %3845 = vmatmul.mubr.f32.gmra.mrb[0].mxu0 %v3636
    %v3846 = vpop.f32.mrb[0].mxu0
    %v3847 = vadd.f32 0.0, %v3846
    %v3848 = vpop.f32.mrb[0].mxu0
    %v3849 = vadd.f32 0.0, %v3848
    %3850 = vdwg.mxu0
    %v3855 = vrot.slane %v3776, 3
    %v3856 = vrot.slane %v3778, 3
    %v3857 = vrot.slane %v3847, 3
    %v3858 = vrot.slane %v3849, 3
    %v3863 = vadd.f32 %v1149, %v3855
    %v3864 = vadd.f32 %v1151, %v3856
    %v3865 = vadd.f32 %v1220, %v3857
    %v3866 = vadd.f32 %v1222, %v3858
    %v3867 = vld [vmem:[#allocation5] sm:$0xff]
    %v3868 = vld [vmem:[#allocation5 + $0x8] sm:$0xff]
    %v3869 = vld [vmem:[#allocation5 + $0x10] sm:$0xff]
    %v3870 = vld [vmem:[#allocation5 + $0x18] sm:$0xff]
    %v3871 = vld [vmem:[#allocation5 + $0x20] sm:$0xff]
    %v3872 = vld [vmem:[#allocation5 + $0x28] sm:$0xff]
    %v3873 = vld [vmem:[#allocation5 + $0x30] sm:$0xff]
    %v3874 = vld [vmem:[#allocation5 + $0x38] sm:$0xff]
    %v3875 = vld [vmem:[#allocation5 + $0x40] sm:$0xff]
    %v3876 = vld [vmem:[#allocation5 + $0x48] sm:$0xff]
    %v3877 = vld [vmem:[#allocation5 + $0x50] sm:$0xff]
    %v3878 = vld [vmem:[#allocation5 + $0x58] sm:$0xff]
    %v3879 = vld [vmem:[#allocation5 + $0x60] sm:$0xff]
    %v3880 = vld [vmem:[#allocation5 + $0x68] sm:$0xff]
    %v3881 = vld [vmem:[#allocation5 + $0x70] sm:$0xff]
    %v3882 = vld [vmem:[#allocation5 + $0x78] sm:$0xff]
    %v3883 = vld [vmem:[#allocation5 + $0x80] sm:$0xff]
    %v3884 = vld [vmem:[#allocation5 + $0x88] sm:$0xff]
    %v3885 = vld [vmem:[#allocation5 + $0x90] sm:$0xff]
    %v3886 = vld [vmem:[#allocation5 + $0x98] sm:$0xff]
    %v3887 = vld [vmem:[#allocation5 + $0xa0] sm:$0xff]
    %v3888 = vld [vmem:[#allocation5 + $0xa8] sm:$0xff]
    %v3889 = vld [vmem:[#allocation5 + $0xb0] sm:$0xff]
    %v3890 = vld [vmem:[#allocation5 + $0xb8] sm:$0xff]
    %v3891 = vld [vmem:[#allocation5 + $0xc0] sm:$0xff]
    %v3892 = vld [vmem:[#allocation5 + $0xc8] sm:$0xff]
    %v3893 = vld [vmem:[#allocation5 + $0xd0] sm:$0xff]
    %v3894 = vld [vmem:[#allocation5 + $0xd8] sm:$0xff]
    %v3895 = vld [vmem:[#allocation5 + $0xe0] sm:$0xff]
    %v3896 = vld [vmem:[#allocation5 + $0xe8] sm:$0xff]
    %v3897 = vld [vmem:[#allocation5 + $0xf0] sm:$0xff]
    %v3898 = vld [vmem:[#allocation5 + $0xf8] sm:$0xff]
    %v3899 = vld [vmem:[#allocation5 + $0x100] sm:$0xff]
    %v3900 = vld [vmem:[#allocation5 + $0x108] sm:$0xff]
    %v3901 = vld [vmem:[#allocation5 + $0x110] sm:$0xff]
    %v3902 = vld [vmem:[#allocation5 + $0x118] sm:$0xff]
    %v3903 = vld [vmem:[#allocation5 + $0x120] sm:$0xff]
    %v3904 = vld [vmem:[#allocation5 + $0x128] sm:$0xff]
    %v3905 = vld [vmem:[#allocation5 + $0x130] sm:$0xff]
    %v3906 = vld [vmem:[#allocation5 + $0x138] sm:$0xff]
    %v3907 = vld [vmem:[#allocation5 + $0x140] sm:$0xff]
    %v3908 = vld [vmem:[#allocation5 + $0x148] sm:$0xff]
    %v3909 = vld [vmem:[#allocation5 + $0x150] sm:$0xff]
    %v3910 = vld [vmem:[#allocation5 + $0x158] sm:$0xff]
    %v3911 = vld [vmem:[#allocation5 + $0x160] sm:$0xff]
    %v3912 = vld [vmem:[#allocation5 + $0x168] sm:$0xff]
    %v3913 = vld [vmem:[#allocation5 + $0x170] sm:$0xff]
    %v3914 = vld [vmem:[#allocation5 + $0x178] sm:$0xff]
    %v3915 = vld [vmem:[#allocation5 + $0x180] sm:$0xff]
    %v3916 = vld [vmem:[#allocation5 + $0x188] sm:$0xff]
    %v3917 = vld [vmem:[#allocation5 + $0x190] sm:$0xff]
    %v3918 = vld [vmem:[#allocation5 + $0x198] sm:$0xff]
    %v3919 = vld [vmem:[#allocation5 + $0x1a0] sm:$0xff]
    %v3920 = vld [vmem:[#allocation5 + $0x1a8] sm:$0xff]
    %v3921 = vld [vmem:[#allocation5 + $0x1b0] sm:$0xff]
    %v3922 = vld [vmem:[#allocation5 + $0x1b8] sm:$0xff]
    %v3923 = vld [vmem:[#allocation5 + $0x1c0] sm:$0xff]
    %v3924 = vld [vmem:[#allocation5 + $0x1c8] sm:$0xff]
    %v3925 = vld [vmem:[#allocation5 + $0x1d0] sm:$0xff]
    %v3926 = vld [vmem:[#allocation5 + $0x1d8] sm:$0xff]
    %v3927 = vld [vmem:[#allocation5 + $0x1e0] sm:$0xff]
    %v3928 = vld [vmem:[#allocation5 + $0x1e8] sm:$0xff]
    %v3929 = vld [vmem:[#allocation5 + $0x1f0] sm:$0xff]
    %v3930 = vld [vmem:[#allocation5 + $0x1f8] sm:$0xff]
    %3931 = vmatprep.subr.mxu0 %v3868
    %3932 = vmatpush1.msra.mxu0 %v3867
    %3933 = vmatprep.subr.mxu0 %v3872
    %3934 = vmatpush1.msra.mxu0 %v3871
    %3935 = vmatprep.subr.mxu0 %v3876
    %3936 = vmatpush1.msra.mxu0 %v3875
    %3937 = vmatprep.subr.mxu0 %v3880
    %3938 = vmatpush1.msra.mxu0 %v3879
    %3939 = vmatprep.subr.mxu0 %v3884
    %3940 = vmatpush1.msra.mxu0 %v3883
    %3941 = vmatprep.subr.mxu0 %v3888
    %3942 = vmatpush1.msra.mxu0 %v3887
    %3943 = vmatprep.subr.mxu0 %v3892
    %3944 = vmatpush1.msra.mxu0 %v3891
    %3945 = vmatprep.subr.mxu0 %v3896
    %3946 = vmatpush1.msra.mxu0 %v3895
    %3947 = vmatprep.subr.mxu0 %v3900
    %3948 = vmatpush1.msra.mxu0 %v3899
    %3949 = vmatprep.subr.mxu0 %v3904
    %3950 = vmatpush1.msra.mxu0 %v3903
    %3951 = vmatprep.subr.mxu0 %v3908
    %3952 = vmatpush1.msra.mxu0 %v3907
    %3953 = vmatprep.subr.mxu0 %v3912
    %3954 = vmatpush1.msra.mxu0 %v3911
    %3955 = vmatprep.subr.mxu0 %v3916
    %3956 = vmatpush1.msra.mxu0 %v3915
    %3957 = vmatprep.subr.mxu0 %v3920
    %3958 = vmatpush1.msra.mxu0 %v3919
    %3959 = vmatprep.subr.mxu0 %v3924
    %3960 = vmatpush1.msra.mxu0 %v3923
    %3961 = vmatprep.subr.mxu0 %v3928
    %3962 = vmatpush1.msra.mxu0 %v3927
    %3963 = vmatprep.subr.mxu0 0.0
    %3964 = vmatpush1.msra.mxu0 0.0
    %3965 = vmatprep.subr.mxu0 0.0
    %3966 = vmatpush1.msra.mxu0 0.0
    %3967 = vmatprep.subr.mxu0 0.0
    %3968 = vmatpush1.msra.mxu0 0.0
    %3969 = vmatprep.subr.mxu0 0.0
    %3970 = vmatpush1.msra.mxu0 0.0
    %3971 = vmatprep.subr.mxu0 0.0
    %3972 = vmatpush1.msra.mxu0 0.0
    %3973 = vmatprep.subr.mxu0 0.0
    %3974 = vmatpush1.msra.mxu0 0.0
    %3975 = vmatprep.subr.mxu0 0.0
    %3976 = vmatpush1.msra.mxu0 0.0
    %3977 = vmatprep.subr.mxu0 0.0
    %3978 = vmatpush1.msra.mxu0 0.0
    %3979 = vmatprep.subr.mxu0 0.0
    %3980 = vmatpush1.msra.mxu0 0.0
    %3981 = vmatprep.subr.mxu0 0.0
    %3982 = vmatpush1.msra.mxu0 0.0
    %3983 = vmatprep.subr.mxu0 0.0
    %3984 = vmatpush1.msra.mxu0 0.0
    %3985 = vmatprep.subr.mxu0 0.0
    %3986 = vmatpush1.msra.mxu0 0.0
    %3987 = vmatprep.subr.mxu0 0.0
    %3988 = vmatpush1.msra.mxu0 0.0
    %3989 = vmatprep.subr.mxu0 0.0
    %3990 = vmatpush1.msra.mxu0 0.0
    %3991 = vmatprep.subr.mxu0 0.0
    %3992 = vmatpush1.msra.mxu0 0.0
    %3993 = vmatprep.subr.mxu0 0.0
    %3994 = vmatpush1.msra.mxu0 0.0
    %3995 = vmatprep.mubr.f32.mxu0 0.0
    %3996 = vmatmul.mubr.f32.gmra.mrb[0].mxu0 %v3642
    %v3997 = vpop.f32.mrb[0].mxu0
    %v3998 = vadd.f32 0.0, %v3997
    %v3999 = vpop.f32.mrb[0].mxu0
    %v4000 = vadd.f32 0.0, %v3999
    %4001 = vdwg.mxu0
    %4002 = vmatprep.subr.mxu0 %v3870
    %4003 = vmatpush1.msra.mxu0 %v3869
    %4004 = vmatprep.subr.mxu0 %v3874
    %4005 = vmatpush1.msra.mxu0 %v3873
    %4006 = vmatprep.subr.mxu0 %v3878
    %4007 = vmatpush1.msra.mxu0 %v3877
    %4008 = vmatprep.subr.mxu0 %v3882
    %4009 = vmatpush1.msra.mxu0 %v3881
    %4010 = vmatprep.subr.mxu0 %v3886
    %4011 = vmatpush1.msra.mxu0 %v3885
    %4012 = vmatprep.subr.mxu0 %v3890
    %4013 = vmatpush1.msra.mxu0 %v3889
    %4014 = vmatprep.subr.mxu0 %v3894
    %4015 = vmatpush1.msra.mxu0 %v3893
    %4016 = vmatprep.subr.mxu0 %v3898
    %4017 = vmatpush1.msra.mxu0 %v3897
    %4018 = vmatprep.subr.mxu0 %v3902
    %4019 = vmatpush1.msra.mxu0 %v3901
    %4020 = vmatprep.subr.mxu0 %v3906
    %4021 = vmatpush1.msra.mxu0 %v3905
    %4022 = vmatprep.subr.mxu0 %v3910
    %4023 = vmatpush1.msra.mxu0 %v3909
    %4024 = vmatprep.subr.mxu0 %v3914
    %4025 = vmatpush1.msra.mxu0 %v3913
    %4026 = vmatprep.subr.mxu0 %v3918
    %4027 = vmatpush1.msra.mxu0 %v3917
    %4028 = vmatprep.subr.mxu0 %v3922
    %4029 = vmatpush1.msra.mxu0 %v3921
    %4030 = vmatprep.subr.mxu0 %v3926
    %4031 = vmatpush1.msra.mxu0 %v3925
    %4032 = vmatprep.subr.mxu0 %v3930
    %4033 = vmatpush1.msra.mxu0 %v3929
    %4034 = vmatprep.subr.mxu0 0.0
    %4035 = vmatpush1.msra.mxu0 0.0
    %4036 = vmatprep.subr.mxu0 0.0
    %4037 = vmatpush1.msra.mxu0 0.0
    %4038 = vmatprep.subr.mxu0 0.0
    %4039 = vmatpush1.msra.mxu0 0.0
    %4040 = vmatprep.subr.mxu0 0.0
    %4041 = vmatpush1.msra.mxu0 0.0
    %4042 = vmatprep.subr.mxu0 0.0
    %4043 = vmatpush1.msra.mxu0 0.0
    %4044 = vmatprep.subr.mxu0 0.0
    %4045 = vmatpush1.msra.mxu0 0.0
    %4046 = vmatprep.subr.mxu0 0.0
    %4047 = vmatpush1.msra.mxu0 0.0
    %4048 = vmatprep.subr.mxu0 0.0
    %4049 = vmatpush1.msra.mxu0 0.0
    %4050 = vmatprep.subr.mxu0 0.0
    %4051 = vmatpush1.msra.mxu0 0.0
    %4052 = vmatprep.subr.mxu0 0.0
    %4053 = vmatpush1.msra.mxu0 0.0
    %4054 = vmatprep.subr.mxu0 0.0
    %4055 = vmatpush1.msra.mxu0 0.0
    %4056 = vmatprep.subr.mxu0 0.0
    %4057 = vmatpush1.msra.mxu0 0.0
    %4058 = vmatprep.subr.mxu0 0.0
    %4059 = vmatpush1.msra.mxu0 0.0
    %4060 = vmatprep.subr.mxu0 0.0
    %4061 = vmatpush1.msra.mxu0 0.0
    %4062 = vmatprep.subr.mxu0 0.0
    %4063 = vmatpush1.msra.mxu0 0.0
    %4064 = vmatprep.subr.mxu0 0.0
    %4065 = vmatpush1.msra.mxu0 0.0
    %4066 = vmatprep.mubr.f32.mxu0 0.0
    %4067 = vmatmul.mubr.f32.gmra.mrb[0].mxu0 %v3642
    %v4068 = vpop.f32.mrb[0].mxu0
    %v4069 = vadd.f32 0.0, %v4068
    %v4070 = vpop.f32.mrb[0].mxu0
    %v4071 = vadd.f32 0.0, %v4070
    %4072 = vdwg.mxu0
    %v4077 = vrot.slane %v3998, 6
    %v4078 = vrot.slane %v4000, 6
    %v4079 = vrot.slane %v4069, 6
    %v4080 = vrot.slane %v4071, 6
    %v4085 = vadd.f32 %v1291, %v4077
    %v4086 = vadd.f32 %v1293, %v4078
    %v4087 = vadd.f32 %v1362, %v4079
    %v4088 = vadd.f32 %v1364, %v4080
    %v4093 = vcombine.high %v3863, %v3864
    %v4094 = vcombine.high %v3865, %v3866
    %v4096 = vunpack.c.l.s4 1966171168
    %v4097 = vunpack.c.0.s8 %v4096
    %v4098 = vlaneseq
    %v4099 = vshrl.u32 %v4098, 7
    %v4100 = vsub.s32 %v4097, %v4099
    %v4101 = vrot.slane %v4093, %v4100
    %v4103 = vunpack.c.l.s4 1966171168
    %v4104 = vunpack.c.0.s8 %v4103
    %v4105 = vlaneseq
    %v4106 = vshrl.u32 %v4105, 7
    %v4107 = vsub.s32 %v4104, %v4106
    %v4108 = vrot.slane %v4094, %v4107
    %v4109 = vcombine.high %v4101, %v4108
    %v4111 = vunpack.c.l.s4 1966171168
    %v4112 = vunpack.c.0.s8 %v4111
    %v4113 = vlaneseq
    %v4114 = vshrl.u32 %v4113, 7
    %v4115 = vsub.s32 %v4112, %v4114
    %v4116 = vrot.slane %v4109, %v4115
    %4118 = vst.msk [vmem:[#allocation6] ss:$2 sm:$0xf] %vm1424, %v4116
    %v4123 = vcombine.low %v4085, %v4086
    %v4124 = vcombine.low %v4087, %v4088
    %v4126 = vunpack.c.l.s4 1966171168
    %v4127 = vunpack.c.0.s8 %v4126
    %v4128 = vlaneseq
    %v4129 = vshrl.u32 %v4128, 7
    %v4130 = vsub.s32 %v4127, %v4129
    %v4131 = vrot.slane %v4123, %v4130
    %v4133 = vunpack.c.l.s4 1966171168
    %v4134 = vunpack.c.0.s8 %v4133
    %v4135 = vlaneseq
    %v4136 = vshrl.u32 %v4135, 7
    %v4137 = vsub.s32 %v4134, %v4136
    %v4138 = vrot.slane %v4124, %v4137
    %v4139 = vcombine.low %v4131, %v4138
    %v4141 = vunpack.c.l.s4 1966171168
    %v4142 = vunpack.c.0.s8 %v4141
    %v4143 = vlaneseq
    %v4144 = vshrl.u32 %v4143, 7
    %v4145 = vsub.s32 %v4142, %v4144
    %v4146 = vrot.slane %v4139, %v4145
    %v4147 = vcombine.high %v4146, %v4146
    %4149 = vst.msk [vmem:[%s1456] ss:$2 sm:$0xf] %vm1424, %v4147
    %v4150 = vld [vmem:[#allocation6] sm:$0xff]
    %v4151 = vmul.f32 %v4150, %v1479
    %v4152 = vtanh.pop %v4151
    %v4153 = vadd.f32 %v4152, 1.0
    %v4154 = vmul.f32 %v4153, 0.5
    %v4156 = vrot.slane %v4152, 2
    %v4158 = vadd.f32 %v4156, 1.0
    %v4159 = vmul.f32 %v4158, 0.5
    %v4160 = vrot.slane %v4152, 6
    %v4162 = vadd.f32 %v4160, 1.0
    %v4163 = vmul.f32 %v4162, 0.5
    %v4164 = vmul.f32 %v4159, %v3634
    %v4165 = vrot.slane %v4152, 4
    %v4167 = vmul.f32 %v4154, %v4165
    %v4168 = vadd.f32 %v4164, %v4167
    %v4169 = vtanh.pop %v4168
    %v4170 = vmul.f32 %v4163, %v4169
    %4171 = vst [vmem:[#allocation7 + $0x5] sm:$0x1] %v4170
    %v4173 = vlaneseq
    %v4174 = vshrl.u32 %v4173, 7
    %v4175 = vsub.s32 1, %v4174
    %v4176 = vrot.slane %v4170, %v4175
    %4178 = vst [vmem:[#allocation7 + $0xa] sm:$0x1] %v4176
    %v4179 = vld [vmem:[#allocation4] sm:$0xff]
    %v4180 = vld [vmem:[#allocation4 + $0x8] sm:$0xff]
    %v4181 = vld [vmem:[#allocation4 + $0x10] sm:$0xff]
    %v4182 = vld [vmem:[#allocation4 + $0x18] sm:$0xff]
    %v4183 = vld [vmem:[#allocation4 + $0x20] sm:$0xff]
    %v4184 = vld [vmem:[#allocation4 + $0x28] sm:$0xff]
    %v4185 = vld [vmem:[#allocation4 + $0x30] sm:$0xff]
    %v4186 = vld [vmem:[#allocation4 + $0x38] sm:$0xff]
    %v4187 = vld [vmem:[#allocation4 + $0x40] sm:$0xff]
    %v4188 = vld [vmem:[#allocation4 + $0x48] sm:$0xff]
    %v4189 = vld [vmem:[#allocation4 + $0x50] sm:$0xff]
    %v4190 = vld [vmem:[#allocation4 + $0x58] sm:$0xff]
    %v4191 = vld [vmem:[#allocation4 + $0x60] sm:$0xff]
    %v4192 = vld [vmem:[#allocation4 + $0x68] sm:$0xff]
    %v4193 = vld [vmem:[#allocation4 + $0x70] sm:$0xff]
    %v4194 = vld [vmem:[#allocation4 + $0x78] sm:$0xff]
    %v4195 = vld [vmem:[#allocation4 + $0x80] sm:$0xff]
    %v4196 = vld [vmem:[#allocation4 + $0x88] sm:$0xff]
    %v4197 = vld [vmem:[#allocation4 + $0x90] sm:$0xff]
    %v4198 = vld [vmem:[#allocation4 + $0x98] sm:$0xff]
    %v4199 = vld [vmem:[#allocation4 + $0xa0] sm:$0xff]
    %v4200 = vld [vmem:[#allocation4 + $0xa8] sm:$0xff]
    %v4201 = vld [vmem:[#allocation4 + $0xb0] sm:$0xff]
    %v4202 = vld [vmem:[#allocation4 + $0xb8] sm:$0xff]
    %v4203 = vld [vmem:[#allocation4 + $0xc0] sm:$0xff]
    %v4204 = vld [vmem:[#allocation4 + $0xc8] sm:$0xff]
    %v4205 = vld [vmem:[#allocation4 + $0xd0] sm:$0xff]
    %v4206 = vld [vmem:[#allocation4 + $0xd8] sm:$0xff]
    %v4207 = vld [vmem:[#allocation4 + $0xe0] sm:$0xff]
    %v4208 = vld [vmem:[#allocation4 + $0xe8] sm:$0xff]
    %v4209 = vld [vmem:[#allocation4 + $0xf0] sm:$0xff]
    %v4210 = vld [vmem:[#allocation4 + $0xf8] sm:$0xff]
    %v4211 = vld [vmem:[#allocation4 + $0x100] sm:$0xff]
    %v4212 = vld [vmem:[#allocation4 + $0x108] sm:$0xff]
    %v4213 = vld [vmem:[#allocation4 + $0x110] sm:$0xff]
    %v4214 = vld [vmem:[#allocation4 + $0x118] sm:$0xff]
    %v4215 = vld [vmem:[#allocation4 + $0x120] sm:$0xff]
    %v4216 = vld [vmem:[#allocation4 + $0x128] sm:$0xff]
    %v4217 = vld [vmem:[#allocation4 + $0x130] sm:$0xff]
    %v4218 = vld [vmem:[#allocation4 + $0x138] sm:$0xff]
    %v4219 = vld [vmem:[#allocation4 + $0x140] sm:$0xff]
    %v4220 = vld [vmem:[#allocation4 + $0x148] sm:$0xff]
    %v4221 = vld [vmem:[#allocation4 + $0x150] sm:$0xff]
    %v4222 = vld [vmem:[#allocation4 + $0x158] sm:$0xff]
    %v4223 = vld [vmem:[#allocation4 + $0x160] sm:$0xff]
    %v4224 = vld [vmem:[#allocation4 + $0x168] sm:$0xff]
    %v4225 = vld [vmem:[#allocation4 + $0x170] sm:$0xff]
    %v4226 = vld [vmem:[#allocation4 + $0x178] sm:$0xff]
    %v4227 = vld [vmem:[#allocation4 + $0x180] sm:$0xff]
    %v4228 = vld [vmem:[#allocation4 + $0x188] sm:$0xff]
    %v4229 = vld [vmem:[#allocation4 + $0x190] sm:$0xff]
    %v4230 = vld [vmem:[#allocation4 + $0x198] sm:$0xff]
    %v4231 = vld [vmem:[#allocation4 + $0x1a0] sm:$0xff]
    %v4232 = vld [vmem:[#allocation4 + $0x1a8] sm:$0xff]
    %v4233 = vld [vmem:[#allocation4 + $0x1b0] sm:$0xff]
    %v4234 = vld [vmem:[#allocation4 + $0x1b8] sm:$0xff]
    %v4235 = vld [vmem:[#allocation4 + $0x1c0] sm:$0xff]
    %v4236 = vld [vmem:[#allocation4 + $0x1c8] sm:$0xff]
    %v4237 = vld [vmem:[#allocation4 + $0x1d0] sm:$0xff]
    %v4238 = vld [vmem:[#allocation4 + $0x1d8] sm:$0xff]
    %v4239 = vld [vmem:[#allocation4 + $0x1e0] sm:$0xff]
    %v4240 = vld [vmem:[#allocation4 + $0x1e8] sm:$0xff]
    %v4241 = vld [vmem:[#allocation4 + $0x1f0] sm:$0xff]
    %v4242 = vld [vmem:[#allocation4 + $0x1f8] sm:$0xff]
    %4243 = vmatprep.subr.mxu0 %v4180
    %4244 = vmatpush1.msra.mxu0 %v4179
    %4245 = vmatprep.subr.mxu0 %v4184
    %4246 = vmatpush1.msra.mxu0 %v4183
    %4247 = vmatprep.subr.mxu0 %v4188
    %4248 = vmatpush1.msra.mxu0 %v4187
    %4249 = vmatprep.subr.mxu0 %v4192
    %4250 = vmatpush1.msra.mxu0 %v4191
    %4251 = vmatprep.subr.mxu0 %v4196
    %4252 = vmatpush1.msra.mxu0 %v4195
    %4253 = vmatprep.subr.mxu0 %v4200
    %4254 = vmatpush1.msra.mxu0 %v4199
    %4255 = vmatprep.subr.mxu0 %v4204
    %4256 = vmatpush1.msra.mxu0 %v4203
    %4257 = vmatprep.subr.mxu0 %v4208
    %4258 = vmatpush1.msra.mxu0 %v4207
    %4259 = vmatprep.subr.mxu0 %v4212
    %4260 = vmatpush1.msra.mxu0 %v4211
    %4261 = vmatprep.subr.mxu0 %v4216
    %4262 = vmatpush1.msra.mxu0 %v4215
    %4263 = vmatprep.subr.mxu0 %v4220
    %4264 = vmatpush1.msra.mxu0 %v4219
    %4265 = vmatprep.subr.mxu0 %v4224
    %4266 = vmatpush1.msra.mxu0 %v4223
    %4267 = vmatprep.subr.mxu0 %v4228
    %4268 = vmatpush1.msra.mxu0 %v4227
    %4269 = vmatprep.subr.mxu0 %v4232
    %4270 = vmatpush1.msra.mxu0 %v4231
    %4271 = vmatprep.subr.mxu0 %v4236
    %4272 = vmatpush1.msra.mxu0 %v4235
    %4273 = vmatprep.subr.mxu0 %v4240
    %4274 = vmatpush1.msra.mxu0 %v4239
    %4275 = vmatprep.subr.mxu0 0.0
    %4276 = vmatpush1.msra.mxu0 0.0
    %4277 = vmatprep.subr.mxu0 0.0
    %4278 = vmatpush1.msra.mxu0 0.0
    %4279 = vmatprep.subr.mxu0 0.0
    %4280 = vmatpush1.msra.mxu0 0.0
    %4281 = vmatprep.subr.mxu0 0.0
    %4282 = vmatpush1.msra.mxu0 0.0
    %4283 = vmatprep.subr.mxu0 0.0
    %4284 = vmatpush1.msra.mxu0 0.0
    %4285 = vmatprep.subr.mxu0 0.0
    %4286 = vmatpush1.msra.mxu0 0.0
    %4287 = vmatprep.subr.mxu0 0.0
    %4288 = vmatpush1.msra.mxu0 0.0
    %4289 = vmatprep.subr.mxu0 0.0
    %4290 = vmatpush1.msra.mxu0 0.0
    %4291 = vmatprep.subr.mxu0 0.0
    %4292 = vmatpush1.msra.mxu0 0.0
    %4293 = vmatprep.subr.mxu0 0.0
    %4294 = vmatpush1.msra.mxu0 0.0
    %4295 = vmatprep.subr.mxu0 0.0
    %4296 = vmatpush1.msra.mxu0 0.0
    %4297 = vmatprep.subr.mxu0 0.0
    %4298 = vmatpush1.msra.mxu0 0.0
    %4299 = vmatprep.subr.mxu0 0.0
    %4300 = vmatpush1.msra.mxu0 0.0
    %4301 = vmatprep.subr.mxu0 0.0
    %4302 = vmatpush1.msra.mxu0 0.0
    %4303 = vmatprep.subr.mxu0 0.0
    %4304 = vmatpush1.msra.mxu0 0.0
    %4305 = vmatprep.subr.mxu0 0.0
    %4306 = vmatpush1.msra.mxu0 0.0
    %4307 = vmatprep.mubr.f32.mxu0 0.0
    %4308 = vmatmul.mubr.f32.gmra.mrb[0].mxu0 %v4170
    %v4309 = vpop.f32.mrb[0].mxu0
    %v4310 = vadd.f32 0.0, %v4309
    %v4311 = vpop.f32.mrb[0].mxu0
    %v4312 = vadd.f32 0.0, %v4311
    %4313 = vdwg.mxu0
    %4314 = vmatprep.subr.mxu0 %v4182
    %4315 = vmatpush1.msra.mxu0 %v4181
    %4316 = vmatprep.subr.mxu0 %v4186
    %4317 = vmatpush1.msra.mxu0 %v4185
    %4318 = vmatprep.subr.mxu0 %v4190
    %4319 = vmatpush1.msra.mxu0 %v4189
    %4320 = vmatprep.subr.mxu0 %v4194
    %4321 = vmatpush1.msra.mxu0 %v4193
    %4322 = vmatprep.subr.mxu0 %v4198
    %4323 = vmatpush1.msra.mxu0 %v4197
    %4324 = vmatprep.subr.mxu0 %v4202
    %4325 = vmatpush1.msra.mxu0 %v4201
    %4326 = vmatprep.subr.mxu0 %v4206
    %4327 = vmatpush1.msra.mxu0 %v4205
    %4328 = vmatprep.subr.mxu0 %v4210
    %4329 = vmatpush1.msra.mxu0 %v4209
    %4330 = vmatprep.subr.mxu0 %v4214
    %4331 = vmatpush1.msra.mxu0 %v4213
    %4332 = vmatprep.subr.mxu0 %v4218
    %4333 = vmatpush1.msra.mxu0 %v4217
    %4334 = vmatprep.subr.mxu0 %v4222
    %4335 = vmatpush1.msra.mxu0 %v4221
    %4336 = vmatprep.subr.mxu0 %v4226
    %4337 = vmatpush1.msra.mxu0 %v4225
    %4338 = vmatprep.subr.mxu0 %v4230
    %4339 = vmatpush1.msra.mxu0 %v4229
    %4340 = vmatprep.subr.mxu0 %v4234
    %4341 = vmatpush1.msra.mxu0 %v4233
    %4342 = vmatprep.subr.mxu0 %v4238
    %4343 = vmatpush1.msra.mxu0 %v4237
    %4344 = vmatprep.subr.mxu0 %v4242
    %4345 = vmatpush1.msra.mxu0 %v4241
    %4346 = vmatprep.subr.mxu0 0.0
    %4347 = vmatpush1.msra.mxu0 0.0
    %4348 = vmatprep.subr.mxu0 0.0
    %4349 = vmatpush1.msra.mxu0 0.0
    %4350 = vmatprep.subr.mxu0 0.0
    %4351 = vmatpush1.msra.mxu0 0.0
    %4352 = vmatprep.subr.mxu0 0.0
    %4353 = vmatpush1.msra.mxu0 0.0
    %4354 = vmatprep.subr.mxu0 0.0
    %4355 = vmatpush1.msra.mxu0 0.0
    %4356 = vmatprep.subr.mxu0 0.0
    %4357 = vmatpush1.msra.mxu0 0.0
    %4358 = vmatprep.subr.mxu0 0.0
    %4359 = vmatpush1.msra.mxu0 0.0
    %4360 = vmatprep.subr.mxu0 0.0
    %4361 = vmatpush1.msra.mxu0 0.0
    %4362 = vmatprep.subr.mxu0 0.0
    %4363 = vmatpush1.msra.mxu0 0.0
    %4364 = vmatprep.subr.mxu0 0.0
    %4365 = vmatpush1.msra.mxu0 0.0
    %4366 = vmatprep.subr.mxu0 0.0
    %4367 = vmatpush1.msra.mxu0 0.0
    %4368 = vmatprep.subr.mxu0 0.0
    %4369 = vmatpush1.msra.mxu0 0.0
    %4370 = vmatprep.subr.mxu0 0.0
    %4371 = vmatpush1.msra.mxu0 0.0
    %4372 = vmatprep.subr.mxu0 0.0
    %4373 = vmatpush1.msra.mxu0 0.0
    %4374 = vmatprep.subr.mxu0 0.0
    %4375 = vmatpush1.msra.mxu0 0.0
    %4376 = vmatprep.subr.mxu0 0.0
    %4377 = vmatpush1.msra.mxu0 0.0
    %4378 = vmatprep.mubr.f32.mxu0 0.0
    %4379 = vmatmul.mubr.f32.gmra.mrb[0].mxu0 %v4170
    %v4380 = vpop.f32.mrb[0].mxu0
    %v4381 = vadd.f32 0.0, %v4380
    %v4382 = vpop.f32.mrb[0].mxu0
    %v4383 = vadd.f32 0.0, %v4382
    %4384 = vdwg.mxu0
    %v4389 = vrot.slane %v4310, 2
    %v4390 = vrot.slane %v4312, 2
    %v4391 = vrot.slane %v4381, 2
    %v4392 = vrot.slane %v4383, 2
    %v4397 = vadd.f32 %v1149, %v4389
    %v4398 = vadd.f32 %v1151, %v4390
    %v4399 = vadd.f32 %v1220, %v4391
    %v4400 = vadd.f32 %v1222, %v4392
    %v4401 = vld [vmem:[#allocation5] sm:$0xff]
    %v4402 = vld [vmem:[#allocation5 + $0x8] sm:$0xff]
    %v4403 = vld [vmem:[#allocation5 + $0x10] sm:$0xff]
    %v4404 = vld [vmem:[#allocation5 + $0x18] sm:$0xff]
    %v4405 = vld [vmem:[#allocation5 + $0x20] sm:$0xff]
    %v4406 = vld [vmem:[#allocation5 + $0x28] sm:$0xff]
    %v4407 = vld [vmem:[#allocation5 + $0x30] sm:$0xff]
    %v4408 = vld [vmem:[#allocation5 + $0x38] sm:$0xff]
    %v4409 = vld [vmem:[#allocation5 + $0x40] sm:$0xff]
    %v4410 = vld [vmem:[#allocation5 + $0x48] sm:$0xff]
    %v4411 = vld [vmem:[#allocation5 + $0x50] sm:$0xff]
    %v4412 = vld [vmem:[#allocation5 + $0x58] sm:$0xff]
    %v4413 = vld [vmem:[#allocation5 + $0x60] sm:$0xff]
    %v4414 = vld [vmem:[#allocation5 + $0x68] sm:$0xff]
    %v4415 = vld [vmem:[#allocation5 + $0x70] sm:$0xff]
    %v4416 = vld [vmem:[#allocation5 + $0x78] sm:$0xff]
    %v4417 = vld [vmem:[#allocation5 + $0x80] sm:$0xff]
    %v4418 = vld [vmem:[#allocation5 + $0x88] sm:$0xff]
    %v4419 = vld [vmem:[#allocation5 + $0x90] sm:$0xff]
    %v4420 = vld [vmem:[#allocation5 + $0x98] sm:$0xff]
    %v4421 = vld [vmem:[#allocation5 + $0xa0] sm:$0xff]
    %v4422 = vld [vmem:[#allocation5 + $0xa8] sm:$0xff]
    %v4423 = vld [vmem:[#allocation5 + $0xb0] sm:$0xff]
    %v4424 = vld [vmem:[#allocation5 + $0xb8] sm:$0xff]
    %v4425 = vld [vmem:[#allocation5 + $0xc0] sm:$0xff]
    %v4426 = vld [vmem:[#allocation5 + $0xc8] sm:$0xff]
    %v4427 = vld [vmem:[#allocation5 + $0xd0] sm:$0xff]
    %v4428 = vld [vmem:[#allocation5 + $0xd8] sm:$0xff]
    %v4429 = vld [vmem:[#allocation5 + $0xe0] sm:$0xff]
    %v4430 = vld [vmem:[#allocation5 + $0xe8] sm:$0xff]
    %v4431 = vld [vmem:[#allocation5 + $0xf0] sm:$0xff]
    %v4432 = vld [vmem:[#allocation5 + $0xf8] sm:$0xff]
    %v4433 = vld [vmem:[#allocation5 + $0x100] sm:$0xff]
    %v4434 = vld [vmem:[#allocation5 + $0x108] sm:$0xff]
    %v4435 = vld [vmem:[#allocation5 + $0x110] sm:$0xff]
    %v4436 = vld [vmem:[#allocation5 + $0x118] sm:$0xff]
    %v4437 = vld [vmem:[#allocation5 + $0x120] sm:$0xff]
    %v4438 = vld [vmem:[#allocation5 + $0x128] sm:$0xff]
    %v4439 = vld [vmem:[#allocation5 + $0x130] sm:$0xff]
    %v4440 = vld [vmem:[#allocation5 + $0x138] sm:$0xff]
    %v4441 = vld [vmem:[#allocation5 + $0x140] sm:$0xff]
    %v4442 = vld [vmem:[#allocation5 + $0x148] sm:$0xff]
    %v4443 = vld [vmem:[#allocation5 + $0x150] sm:$0xff]
    %v4444 = vld [vmem:[#allocation5 + $0x158] sm:$0xff]
    %v4445 = vld [vmem:[#allocation5 + $0x160] sm:$0xff]
    %v4446 = vld [vmem:[#allocation5 + $0x168] sm:$0xff]
    %v4447 = vld [vmem:[#allocation5 + $0x170] sm:$0xff]
    %v4448 = vld [vmem:[#allocation5 + $0x178] sm:$0xff]
    %v4449 = vld [vmem:[#allocation5 + $0x180] sm:$0xff]
    %v4450 = vld [vmem:[#allocation5 + $0x188] sm:$0xff]
    %v4451 = vld [vmem:[#allocation5 + $0x190] sm:$0xff]
    %v4452 = vld [vmem:[#allocation5 + $0x198] sm:$0xff]
    %v4453 = vld [vmem:[#allocation5 + $0x1a0] sm:$0xff]
    %v4454 = vld [vmem:[#allocation5 + $0x1a8] sm:$0xff]
    %v4455 = vld [vmem:[#allocation5 + $0x1b0] sm:$0xff]
    %v4456 = vld [vmem:[#allocation5 + $0x1b8] sm:$0xff]
    %v4457 = vld [vmem:[#allocation5 + $0x1c0] sm:$0xff]
    %v4458 = vld [vmem:[#allocation5 + $0x1c8] sm:$0xff]
    %v4459 = vld [vmem:[#allocation5 + $0x1d0] sm:$0xff]
    %v4460 = vld [vmem:[#allocation5 + $0x1d8] sm:$0xff]
    %v4461 = vld [vmem:[#allocation5 + $0x1e0] sm:$0xff]
    %v4462 = vld [vmem:[#allocation5 + $0x1e8] sm:$0xff]
    %v4463 = vld [vmem:[#allocation5 + $0x1f0] sm:$0xff]
    %v4464 = vld [vmem:[#allocation5 + $0x1f8] sm:$0xff]
    %4465 = vmatprep.subr.mxu0 %v4402
    %4466 = vmatpush1.msra.mxu0 %v4401
    %4467 = vmatprep.subr.mxu0 %v4406
    %4468 = vmatpush1.msra.mxu0 %v4405
    %4469 = vmatprep.subr.mxu0 %v4410
    %4470 = vmatpush1.msra.mxu0 %v4409
    %4471 = vmatprep.subr.mxu0 %v4414
    %4472 = vmatpush1.msra.mxu0 %v4413
    %4473 = vmatprep.subr.mxu0 %v4418
    %4474 = vmatpush1.msra.mxu0 %v4417
    %4475 = vmatprep.subr.mxu0 %v4422
    %4476 = vmatpush1.msra.mxu0 %v4421
    %4477 = vmatprep.subr.mxu0 %v4426
    %4478 = vmatpush1.msra.mxu0 %v4425
    %4479 = vmatprep.subr.mxu0 %v4430
    %4480 = vmatpush1.msra.mxu0 %v4429
    %4481 = vmatprep.subr.mxu0 %v4434
    %4482 = vmatpush1.msra.mxu0 %v4433
    %4483 = vmatprep.subr.mxu0 %v4438
    %4484 = vmatpush1.msra.mxu0 %v4437
    %4485 = vmatprep.subr.mxu0 %v4442
    %4486 = vmatpush1.msra.mxu0 %v4441
    %4487 = vmatprep.subr.mxu0 %v4446
    %4488 = vmatpush1.msra.mxu0 %v4445
    %4489 = vmatprep.subr.mxu0 %v4450
    %4490 = vmatpush1.msra.mxu0 %v4449
    %4491 = vmatprep.subr.mxu0 %v4454
    %4492 = vmatpush1.msra.mxu0 %v4453
    %4493 = vmatprep.subr.mxu0 %v4458
    %4494 = vmatpush1.msra.mxu0 %v4457
    %4495 = vmatprep.subr.mxu0 %v4462
    %4496 = vmatpush1.msra.mxu0 %v4461
    %4497 = vmatprep.subr.mxu0 0.0
    %4498 = vmatpush1.msra.mxu0 0.0
    %4499 = vmatprep.subr.mxu0 0.0
    %4500 = vmatpush1.msra.mxu0 0.0
    %4501 = vmatprep.subr.mxu0 0.0
    %4502 = vmatpush1.msra.mxu0 0.0
    %4503 = vmatprep.subr.mxu0 0.0
    %4504 = vmatpush1.msra.mxu0 0.0
    %4505 = vmatprep.subr.mxu0 0.0
    %4506 = vmatpush1.msra.mxu0 0.0
    %4507 = vmatprep.subr.mxu0 0.0
    %4508 = vmatpush1.msra.mxu0 0.0
    %4509 = vmatprep.subr.mxu0 0.0
    %4510 = vmatpush1.msra.mxu0 0.0
    %4511 = vmatprep.subr.mxu0 0.0
    %4512 = vmatpush1.msra.mxu0 0.0
    %4513 = vmatprep.subr.mxu0 0.0
    %4514 = vmatpush1.msra.mxu0 0.0
    %4515 = vmatprep.subr.mxu0 0.0
    %4516 = vmatpush1.msra.mxu0 0.0
    %4517 = vmatprep.subr.mxu0 0.0
    %4518 = vmatpush1.msra.mxu0 0.0
    %4519 = vmatprep.subr.mxu0 0.0
    %4520 = vmatpush1.msra.mxu0 0.0
    %4521 = vmatprep.subr.mxu0 0.0
    %4522 = vmatpush1.msra.mxu0 0.0
    %4523 = vmatprep.subr.mxu0 0.0
    %4524 = vmatpush1.msra.mxu0 0.0
    %4525 = vmatprep.subr.mxu0 0.0
    %4526 = vmatpush1.msra.mxu0 0.0
    %4527 = vmatprep.subr.mxu0 0.0
    %4528 = vmatpush1.msra.mxu0 0.0
    %4529 = vmatprep.mubr.f32.mxu0 0.0
    %4530 = vmatmul.mubr.f32.gmra.mrb[0].mxu0 %v4176
    %v4531 = vpop.f32.mrb[0].mxu0
    %v4532 = vadd.f32 0.0, %v4531
    %v4533 = vpop.f32.mrb[0].mxu0
    %v4534 = vadd.f32 0.0, %v4533
    %4535 = vdwg.mxu0
    %4536 = vmatprep.subr.mxu0 %v4404
    %4537 = vmatpush1.msra.mxu0 %v4403
    %4538 = vmatprep.subr.mxu0 %v4408
    %4539 = vmatpush1.msra.mxu0 %v4407
    %4540 = vmatprep.subr.mxu0 %v4412
    %4541 = vmatpush1.msra.mxu0 %v4411
    %4542 = vmatprep.subr.mxu0 %v4416
    %4543 = vmatpush1.msra.mxu0 %v4415
    %4544 = vmatprep.subr.mxu0 %v4420
    %4545 = vmatpush1.msra.mxu0 %v4419
    %4546 = vmatprep.subr.mxu0 %v4424
    %4547 = vmatpush1.msra.mxu0 %v4423
    %4548 = vmatprep.subr.mxu0 %v4428
    %4549 = vmatpush1.msra.mxu0 %v4427
    %4550 = vmatprep.subr.mxu0 %v4432
    %4551 = vmatpush1.msra.mxu0 %v4431
    %4552 = vmatprep.subr.mxu0 %v4436
    %4553 = vmatpush1.msra.mxu0 %v4435
    %4554 = vmatprep.subr.mxu0 %v4440
    %4555 = vmatpush1.msra.mxu0 %v4439
    %4556 = vmatprep.subr.mxu0 %v4444
    %4557 = vmatpush1.msra.mxu0 %v4443
    %4558 = vmatprep.subr.mxu0 %v4448
    %4559 = vmatpush1.msra.mxu0 %v4447
    %4560 = vmatprep.subr.mxu0 %v4452
    %4561 = vmatpush1.msra.mxu0 %v4451
    %4562 = vmatprep.subr.mxu0 %v4456
    %4563 = vmatpush1.msra.mxu0 %v4455
    %4564 = vmatprep.subr.mxu0 %v4460
    %4565 = vmatpush1.msra.mxu0 %v4459
    %4566 = vmatprep.subr.mxu0 %v4464
    %4567 = vmatpush1.msra.mxu0 %v4463
    %4568 = vmatprep.subr.mxu0 0.0
    %4569 = vmatpush1.msra.mxu0 0.0
    %4570 = vmatprep.subr.mxu0 0.0
    %4571 = vmatpush1.msra.mxu0 0.0
    %4572 = vmatprep.subr.mxu0 0.0
    %4573 = vmatpush1.msra.mxu0 0.0
    %4574 = vmatprep.subr.mxu0 0.0
    %4575 = vmatpush1.msra.mxu0 0.0
    %4576 = vmatprep.subr.mxu0 0.0
    %4577 = vmatpush1.msra.mxu0 0.0
    %4578 = vmatprep.subr.mxu0 0.0
    %4579 = vmatpush1.msra.mxu0 0.0
    %4580 = vmatprep.subr.mxu0 0.0
    %4581 = vmatpush1.msra.mxu0 0.0
    %4582 = vmatprep.subr.mxu0 0.0
    %4583 = vmatpush1.msra.mxu0 0.0
    %4584 = vmatprep.subr.mxu0 0.0
    %4585 = vmatpush1.msra.mxu0 0.0
    %4586 = vmatprep.subr.mxu0 0.0
    %4587 = vmatpush1.msra.mxu0 0.0
    %4588 = vmatprep.subr.mxu0 0.0
    %4589 = vmatpush1.msra.mxu0 0.0
    %4590 = vmatprep.subr.mxu0 0.0
    %4591 = vmatpush1.msra.mxu0 0.0
    %4592 = vmatprep.subr.mxu0 0.0
    %4593 = vmatpush1.msra.mxu0 0.0
    %4594 = vmatprep.subr.mxu0 0.0
    %4595 = vmatpush1.msra.mxu0 0.0
    %4596 = vmatprep.subr.mxu0 0.0
    %4597 = vmatpush1.msra.mxu0 0.0
    %4598 = vmatprep.subr.mxu0 0.0
    %4599 = vmatpush1.msra.mxu0 0.0
    %4600 = vmatprep.mubr.f32.mxu0 0.0
    %4601 = vmatmul.mubr.f32.gmra.mrb[0].mxu0 %v4176
    %v4602 = vpop.f32.mrb[0].mxu0
    %v4603 = vadd.f32 0.0, %v4602
    %v4604 = vpop.f32.mrb[0].mxu0
    %v4605 = vadd.f32 0.0, %v4604
    %4606 = vdwg.mxu0
    %v4611 = vrot.slane %v4532, 7
    %v4612 = vrot.slane %v4534, 7
    %v4613 = vrot.slane %v4603, 7
    %v4614 = vrot.slane %v4605, 7
    %v4619 = vadd.f32 %v1291, %v4611
    %v4620 = vadd.f32 %v1293, %v4612
    %v4621 = vadd.f32 %v1362, %v4613
    %v4622 = vadd.f32 %v1364, %v4614
    %v4627 = vcombine.high %v4397, %v4398
    %v4628 = vcombine.high %v4399, %v4400
    %v4630 = vunpack.c.l.s4 1966171168
    %v4631 = vunpack.c.0.s8 %v4630
    %v4632 = vlaneseq
    %v4633 = vshrl.u32 %v4632, 7
    %v4634 = vsub.s32 %v4631, %v4633
    %v4635 = vrot.slane %v4627, %v4634
    %v4637 = vunpack.c.l.s4 1966171168
    %v4638 = vunpack.c.0.s8 %v4637
    %v4639 = vlaneseq
    %v4640 = vshrl.u32 %v4639, 7
    %v4641 = vsub.s32 %v4638, %v4640
    %v4642 = vrot.slane %v4628, %v4641
    %v4643 = vcombine.low %v4635, %v4642
    %v4645 = vunpack.c.l.s4 1966171168
    %v4646 = vunpack.c.0.s8 %v4645
    %v4647 = vlaneseq
    %v4648 = vshrl.u32 %v4647, 7
    %v4649 = vsub.s32 %v4646, %v4648
    %v4650 = vrot.slane %v4643, %v4649
    %v4651 = vcombine.high %v4650, %v4650
    %4653 = vst.msk [vmem:[#allocation6] ss:$2 sm:$0xf] %vm1424, %v4651
    %v4658 = vcombine.low %v4619, %v4620
    %v4659 = vcombine.low %v4621, %v4622
    %v4661 = vunpack.c.l.s4 1966171168
    %v4662 = vunpack.c.0.s8 %v4661
    %v4663 = vlaneseq
    %v4664 = vshrl.u32 %v4663, 7
    %v4665 = vsub.s32 %v4662, %v4664
    %v4666 = vrot.slane %v4658, %v4665
    %v4668 = vunpack.c.l.s4 1966171168
    %v4669 = vunpack.c.0.s8 %v4668
    %v4670 = vlaneseq
    %v4671 = vshrl.u32 %v4670, 7
    %v4672 = vsub.s32 %v4669, %v4671
    %v4673 = vrot.slane %v4659, %v4672
    %v4674 = vcombine.high %v4666, %v4673
    %v4676 = vunpack.c.l.s4 1966171168
    %v4677 = vunpack.c.0.s8 %v4676
    %v4678 = vlaneseq
    %v4679 = vshrl.u32 %v4678, 7
    %v4680 = vsub.s32 %v4677, %v4679
    %v4681 = vrot.slane %v4674, %v4680
    %4683 = vst.msk [vmem:[%s1456] ss:$2 sm:$0xf] %vm1424, %v4681
    %v4684 = vld [vmem:[#allocation6] sm:$0xff]
    %v4685 = vmul.f32 %v4684, %v1479
    %v4686 = vtanh.pop %v4685
    %v4687 = vadd.f32 %v4686, 1.0
    %v4688 = vmul.f32 %v4687, 0.5
    %v4690 = vrot.slane %v4686, 2
    %v4692 = vadd.f32 %v4690, 1.0
    %v4693 = vmul.f32 %v4692, 0.5
    %v4694 = vrot.slane %v4686, 6
    %v4696 = vadd.f32 %v4694, 1.0
    %v4697 = vmul.f32 %v4696, 0.5
    %v4698 = vmul.f32 %v4693, %v4168
    %v4699 = vrot.slane %v4686, 4
    %v4701 = vmul.f32 %v4688, %v4699
    %v4702 = vadd.f32 %v4698, %v4701
    %v4703 = vtanh.pop %v4702
    %v4704 = vmul.f32 %v4697, %v4703
    %4705 = vst [vmem:[#allocation7 + $0x6] sm:$0x1] %v4704
    %v4707 = vlaneseq
    %v4708 = vshrl.u32 %v4707, 7
    %v4709 = vsub.s32 1, %v4708
    %v4710 = vrot.slane %v4704, %v4709
    %4712 = vst [vmem:[#allocation7 + $0x9] sm:$0x1] %v4710
    %v4713 = vld [vmem:[#allocation4] sm:$0xff]
    %v4714 = vld [vmem:[#allocation4 + $0x8] sm:$0xff]
    %v4715 = vld [vmem:[#allocation4 + $0x10] sm:$0xff]
    %v4716 = vld [vmem:[#allocation4 + $0x18] sm:$0xff]
    %v4717 = vld [vmem:[#allocation4 + $0x20] sm:$0xff]
    %v4718 = vld [vmem:[#allocation4 + $0x28] sm:$0xff]
    %v4719 = vld [vmem:[#allocation4 + $0x30] sm:$0xff]
    %v4720 = vld [vmem:[#allocation4 + $0x38] sm:$0xff]
    %v4721 = vld [vmem:[#allocation4 + $0x40] sm:$0xff]
    %v4722 = vld [vmem:[#allocation4 + $0x48] sm:$0xff]
    %v4723 = vld [vmem:[#allocation4 + $0x50] sm:$0xff]
    %v4724 = vld [vmem:[#allocation4 + $0x58] sm:$0xff]
    %v4725 = vld [vmem:[#allocation4 + $0x60] sm:$0xff]
    %v4726 = vld [vmem:[#allocation4 + $0x68] sm:$0xff]
    %v4727 = vld [vmem:[#allocation4 + $0x70] sm:$0xff]
    %v4728 = vld [vmem:[#allocation4 + $0x78] sm:$0xff]
    %v4729 = vld [vmem:[#allocation4 + $0x80] sm:$0xff]
    %v4730 = vld [vmem:[#allocation4 + $0x88] sm:$0xff]
    %v4731 = vld [vmem:[#allocation4 + $0x90] sm:$0xff]
    %v4732 = vld [vmem:[#allocation4 + $0x98] sm:$0xff]
    %v4733 = vld [vmem:[#allocation4 + $0xa0] sm:$0xff]
    %v4734 = vld [vmem:[#allocation4 + $0xa8] sm:$0xff]
    %v4735 = vld [vmem:[#allocation4 + $0xb0] sm:$0xff]
    %v4736 = vld [vmem:[#allocation4 + $0xb8] sm:$0xff]
    %v4737 = vld [vmem:[#allocation4 + $0xc0] sm:$0xff]
    %v4738 = vld [vmem:[#allocation4 + $0xc8] sm:$0xff]
    %v4739 = vld [vmem:[#allocation4 + $0xd0] sm:$0xff]
    %v4740 = vld [vmem:[#allocation4 + $0xd8] sm:$0xff]
    %v4741 = vld [vmem:[#allocation4 + $0xe0] sm:$0xff]
    %v4742 = vld [vmem:[#allocation4 + $0xe8] sm:$0xff]
    %v4743 = vld [vmem:[#allocation4 + $0xf0] sm:$0xff]
    %v4744 = vld [vmem:[#allocation4 + $0xf8] sm:$0xff]
    %v4745 = vld [vmem:[#allocation4 + $0x100] sm:$0xff]
    %v4746 = vld [vmem:[#allocation4 + $0x108] sm:$0xff]
    %v4747 = vld [vmem:[#allocation4 + $0x110] sm:$0xff]
    %v4748 = vld [vmem:[#allocation4 + $0x118] sm:$0xff]
    %v4749 = vld [vmem:[#allocation4 + $0x120] sm:$0xff]
    %v4750 = vld [vmem:[#allocation4 + $0x128] sm:$0xff]
    %v4751 = vld [vmem:[#allocation4 + $0x130] sm:$0xff]
    %v4752 = vld [vmem:[#allocation4 + $0x138] sm:$0xff]
    %v4753 = vld [vmem:[#allocation4 + $0x140] sm:$0xff]
    %v4754 = vld [vmem:[#allocation4 + $0x148] sm:$0xff]
    %v4755 = vld [vmem:[#allocation4 + $0x150] sm:$0xff]
    %v4756 = vld [vmem:[#allocation4 + $0x158] sm:$0xff]
    %v4757 = vld [vmem:[#allocation4 + $0x160] sm:$0xff]
    %v4758 = vld [vmem:[#allocation4 + $0x168] sm:$0xff]
    %v4759 = vld [vmem:[#allocation4 + $0x170] sm:$0xff]
    %v4760 = vld [vmem:[#allocation4 + $0x178] sm:$0xff]
    %v4761 = vld [vmem:[#allocation4 + $0x180] sm:$0xff]
    %v4762 = vld [vmem:[#allocation4 + $0x188] sm:$0xff]
    %v4763 = vld [vmem:[#allocation4 + $0x190] sm:$0xff]
    %v4764 = vld [vmem:[#allocation4 + $0x198] sm:$0xff]
    %v4765 = vld [vmem:[#allocation4 + $0x1a0] sm:$0xff]
    %v4766 = vld [vmem:[#allocation4 + $0x1a8] sm:$0xff]
    %v4767 = vld [vmem:[#allocation4 + $0x1b0] sm:$0xff]
    %v4768 = vld [vmem:[#allocation4 + $0x1b8] sm:$0xff]
    %v4769 = vld [vmem:[#allocation4 + $0x1c0] sm:$0xff]
    %v4770 = vld [vmem:[#allocation4 + $0x1c8] sm:$0xff]
    %v4771 = vld [vmem:[#allocation4 + $0x1d0] sm:$0xff]
    %v4772 = vld [vmem:[#allocation4 + $0x1d8] sm:$0xff]
    %v4773 = vld [vmem:[#allocation4 + $0x1e0] sm:$0xff]
    %v4774 = vld [vmem:[#allocation4 + $0x1e8] sm:$0xff]
    %v4775 = vld [vmem:[#allocation4 + $0x1f0] sm:$0xff]
    %v4776 = vld [vmem:[#allocation4 + $0x1f8] sm:$0xff]
    %4777 = vmatprep.subr.mxu0 %v4714
    %4778 = vmatpush1.msra.mxu0 %v4713
    %4779 = vmatprep.subr.mxu0 %v4718
    %4780 = vmatpush1.msra.mxu0 %v4717
    %4781 = vmatprep.subr.mxu0 %v4722
    %4782 = vmatpush1.msra.mxu0 %v4721
    %4783 = vmatprep.subr.mxu0 %v4726
    %4784 = vmatpush1.msra.mxu0 %v4725
    %4785 = vmatprep.subr.mxu0 %v4730
    %4786 = vmatpush1.msra.mxu0 %v4729
    %4787 = vmatprep.subr.mxu0 %v4734
    %4788 = vmatpush1.msra.mxu0 %v4733
    %4789 = vmatprep.subr.mxu0 %v4738
    %4790 = vmatpush1.msra.mxu0 %v4737
    %4791 = vmatprep.subr.mxu0 %v4742
    %4792 = vmatpush1.msra.mxu0 %v4741
    %4793 = vmatprep.subr.mxu0 %v4746
    %4794 = vmatpush1.msra.mxu0 %v4745
    %4795 = vmatprep.subr.mxu0 %v4750
    %4796 = vmatpush1.msra.mxu0 %v4749
    %4797 = vmatprep.subr.mxu0 %v4754
    %4798 = vmatpush1.msra.mxu0 %v4753
    %4799 = vmatprep.subr.mxu0 %v4758
    %4800 = vmatpush1.msra.mxu0 %v4757
    %4801 = vmatprep.subr.mxu0 %v4762
    %4802 = vmatpush1.msra.mxu0 %v4761
    %4803 = vmatprep.subr.mxu0 %v4766
    %4804 = vmatpush1.msra.mxu0 %v4765
    %4805 = vmatprep.subr.mxu0 %v4770
    %4806 = vmatpush1.msra.mxu0 %v4769
    %4807 = vmatprep.subr.mxu0 %v4774
    %4808 = vmatpush1.msra.mxu0 %v4773
    %4809 = vmatprep.subr.mxu0 0.0
    %4810 = vmatpush1.msra.mxu0 0.0
    %4811 = vmatprep.subr.mxu0 0.0
    %4812 = vmatpush1.msra.mxu0 0.0
    %4813 = vmatprep.subr.mxu0 0.0
    %4814 = vmatpush1.msra.mxu0 0.0
    %4815 = vmatprep.subr.mxu0 0.0
    %4816 = vmatpush1.msra.mxu0 0.0
    %4817 = vmatprep.subr.mxu0 0.0
    %4818 = vmatpush1.msra.mxu0 0.0
    %4819 = vmatprep.subr.mxu0 0.0
    %4820 = vmatpush1.msra.mxu0 0.0
    %4821 = vmatprep.subr.mxu0 0.0
    %4822 = vmatpush1.msra.mxu0 0.0
    %4823 = vmatprep.subr.mxu0 0.0
    %4824 = vmatpush1.msra.mxu0 0.0
    %4825 = vmatprep.subr.mxu0 0.0
    %4826 = vmatpush1.msra.mxu0 0.0
    %4827 = vmatprep.subr.mxu0 0.0
    %4828 = vmatpush1.msra.mxu0 0.0
    %4829 = vmatprep.subr.mxu0 0.0
    %4830 = vmatpush1.msra.mxu0 0.0
    %4831 = vmatprep.subr.mxu0 0.0
    %4832 = vmatpush1.msra.mxu0 0.0
    %4833 = vmatprep.subr.mxu0 0.0
    %4834 = vmatpush1.msra.mxu0 0.0
    %4835 = vmatprep.subr.mxu0 0.0
    %4836 = vmatpush1.msra.mxu0 0.0
    %4837 = vmatprep.subr.mxu0 0.0
    %4838 = vmatpush1.msra.mxu0 0.0
    %4839 = vmatprep.subr.mxu0 0.0
    %4840 = vmatpush1.msra.mxu0 0.0
    %4841 = vmatprep.mubr.f32.mxu0 0.0
    %4842 = vmatmul.mubr.f32.gmra.mrb[0].mxu0 %v4704
    %v4843 = vpop.f32.mrb[0].mxu0
    %v4844 = vadd.f32 0.0, %v4843
    %v4845 = vpop.f32.mrb[0].mxu0
    %v4846 = vadd.f32 0.0, %v4845
    %4847 = vdwg.mxu0
    %4848 = vmatprep.subr.mxu0 %v4716
    %4849 = vmatpush1.msra.mxu0 %v4715
    %4850 = vmatprep.subr.mxu0 %v4720
    %4851 = vmatpush1.msra.mxu0 %v4719
    %4852 = vmatprep.subr.mxu0 %v4724
    %4853 = vmatpush1.msra.mxu0 %v4723
    %4854 = vmatprep.subr.mxu0 %v4728
    %4855 = vmatpush1.msra.mxu0 %v4727
    %4856 = vmatprep.subr.mxu0 %v4732
    %4857 = vmatpush1.msra.mxu0 %v4731
    %4858 = vmatprep.subr.mxu0 %v4736
    %4859 = vmatpush1.msra.mxu0 %v4735
    %4860 = vmatprep.subr.mxu0 %v4740
    %4861 = vmatpush1.msra.mxu0 %v4739
    %4862 = vmatprep.subr.mxu0 %v4744
    %4863 = vmatpush1.msra.mxu0 %v4743
    %4864 = vmatprep.subr.mxu0 %v4748
    %4865 = vmatpush1.msra.mxu0 %v4747
    %4866 = vmatprep.subr.mxu0 %v4752
    %4867 = vmatpush1.msra.mxu0 %v4751
    %4868 = vmatprep.subr.mxu0 %v4756
    %4869 = vmatpush1.msra.mxu0 %v4755
    %4870 = vmatprep.subr.mxu0 %v4760
    %4871 = vmatpush1.msra.mxu0 %v4759
    %4872 = vmatprep.subr.mxu0 %v4764
    %4873 = vmatpush1.msra.mxu0 %v4763
    %4874 = vmatprep.subr.mxu0 %v4768
    %4875 = vmatpush1.msra.mxu0 %v4767
    %4876 = vmatprep.subr.mxu0 %v4772
    %4877 = vmatpush1.msra.mxu0 %v4771
    %4878 = vmatprep.subr.mxu0 %v4776
    %4879 = vmatpush1.msra.mxu0 %v4775
    %4880 = vmatprep.subr.mxu0 0.0
    %4881 = vmatpush1.msra.mxu0 0.0
    %4882 = vmatprep.subr.mxu0 0.0
    %4883 = vmatpush1.msra.mxu0 0.0
    %4884 = vmatprep.subr.mxu0 0.0
    %4885 = vmatpush1.msra.mxu0 0.0
    %4886 = vmatprep.subr.mxu0 0.0
    %4887 = vmatpush1.msra.mxu0 0.0
    %4888 = vmatprep.subr.mxu0 0.0
    %4889 = vmatpush1.msra.mxu0 0.0
    %4890 = vmatprep.subr.mxu0 0.0
    %4891 = vmatpush1.msra.mxu0 0.0
    %4892 = vmatprep.subr.mxu0 0.0
    %4893 = vmatpush1.msra.mxu0 0.0
    %4894 = vmatprep.subr.mxu0 0.0
    %4895 = vmatpush1.msra.mxu0 0.0
    %4896 = vmatprep.subr.mxu0 0.0
    %4897 = vmatpush1.msra.mxu0 0.0
    %4898 = vmatprep.subr.mxu0 0.0
    %4899 = vmatpush1.msra.mxu0 0.0
    %4900 = vmatprep.subr.mxu0 0.0
    %4901 = vmatpush1.msra.mxu0 0.0
    %4902 = vmatprep.subr.mxu0 0.0
    %4903 = vmatpush1.msra.mxu0 0.0
    %4904 = vmatprep.subr.mxu0 0.0
    %4905 = vmatpush1.msra.mxu0 0.0
    %4906 = vmatprep.subr.mxu0 0.0
    %4907 = vmatpush1.msra.mxu0 0.0
    %4908 = vmatprep.subr.mxu0 0.0
    %4909 = vmatpush1.msra.mxu0 0.0
    %4910 = vmatprep.subr.mxu0 0.0
    %4911 = vmatpush1.msra.mxu0 0.0
    %4912 = vmatprep.mubr.f32.mxu0 0.0
    %4913 = vmatmul.mubr.f32.gmra.mrb[0].mxu0 %v4704
    %v4914 = vpop.f32.mrb[0].mxu0
    %v4915 = vadd.f32 0.0, %v4914
    %v4916 = vpop.f32.mrb[0].mxu0
    %v4917 = vadd.f32 0.0, %v4916
    %4918 = vdwg.mxu0
    %v4923 = vrot.slane %v4844, 1
    %v4924 = vrot.slane %v4846, 1
    %v4925 = vrot.slane %v4915, 1
    %v4926 = vrot.slane %v4917, 1
    %v4931 = vadd.f32 %v1149, %v4923
    %v4932 = vadd.f32 %v1151, %v4924
    %v4933 = vadd.f32 %v1220, %v4925
    %v4934 = vadd.f32 %v1222, %v4926
    %v4935 = vld [vmem:[#allocation5] sm:$0xff]
    %v4936 = vld [vmem:[#allocation5 + $0x8] sm:$0xff]
    %v4937 = vld [vmem:[#allocation5 + $0x10] sm:$0xff]
    %v4938 = vld [vmem:[#allocation5 + $0x18] sm:$0xff]
    %v4939 = vld [vmem:[#allocation5 + $0x20] sm:$0xff]
    %v4940 = vld [vmem:[#allocation5 + $0x28] sm:$0xff]
    %v4941 = vld [vmem:[#allocation5 + $0x30] sm:$0xff]
    %v4942 = vld [vmem:[#allocation5 + $0x38] sm:$0xff]
    %v4943 = vld [vmem:[#allocation5 + $0x40] sm:$0xff]
    %v4944 = vld [vmem:[#allocation5 + $0x48] sm:$0xff]
    %v4945 = vld [vmem:[#allocation5 + $0x50] sm:$0xff]
    %v4946 = vld [vmem:[#allocation5 + $0x58] sm:$0xff]
    %v4947 = vld [vmem:[#allocation5 + $0x60] sm:$0xff]
    %v4948 = vld [vmem:[#allocation5 + $0x68] sm:$0xff]
    %v4949 = vld [vmem:[#allocation5 + $0x70] sm:$0xff]
    %v4950 = vld [vmem:[#allocation5 + $0x78] sm:$0xff]
    %v4951 = vld [vmem:[#allocation5 + $0x80] sm:$0xff]
    %v4952 = vld [vmem:[#allocation5 + $0x88] sm:$0xff]
    %v4953 = vld [vmem:[#allocation5 + $0x90] sm:$0xff]
    %v4954 = vld [vmem:[#allocation5 + $0x98] sm:$0xff]
    %v4955 = vld [vmem:[#allocation5 + $0xa0] sm:$0xff]
    %v4956 = vld [vmem:[#allocation5 + $0xa8] sm:$0xff]
    %v4957 = vld [vmem:[#allocation5 + $0xb0] sm:$0xff]
    %v4958 = vld [vmem:[#allocation5 + $0xb8] sm:$0xff]
    %v4959 = vld [vmem:[#allocation5 + $0xc0] sm:$0xff]
    %v4960 = vld [vmem:[#allocation5 + $0xc8] sm:$0xff]
    %v4961 = vld [vmem:[#allocation5 + $0xd0] sm:$0xff]
    %v4962 = vld [vmem:[#allocation5 + $0xd8] sm:$0xff]
    %v4963 = vld [vmem:[#allocation5 + $0xe0] sm:$0xff]
    %v4964 = vld [vmem:[#allocation5 + $0xe8] sm:$0xff]
    %v4965 = vld [vmem:[#allocation5 + $0xf0] sm:$0xff]
    %v4966 = vld [vmem:[#allocation5 + $0xf8] sm:$0xff]
    %v4967 = vld [vmem:[#allocation5 + $0x100] sm:$0xff]
    %v4968 = vld [vmem:[#allocation5 + $0x108] sm:$0xff]
    %v4969 = vld [vmem:[#allocation5 + $0x110] sm:$0xff]
    %v4970 = vld [vmem:[#allocation5 + $0x118] sm:$0xff]
    %v4971 = vld [vmem:[#allocation5 + $0x120] sm:$0xff]
    %v4972 = vld [vmem:[#allocation5 + $0x128] sm:$0xff]
    %v4973 = vld [vmem:[#allocation5 + $0x130] sm:$0xff]
    %v4974 = vld [vmem:[#allocation5 + $0x138] sm:$0xff]
    %v4975 = vld [vmem:[#allocation5 + $0x140] sm:$0xff]
    %v4976 = vld [vmem:[#allocation5 + $0x148] sm:$0xff]
    %v4977 = vld [vmem:[#allocation5 + $0x150] sm:$0xff]
    %v4978 = vld [vmem:[#allocation5 + $0x158] sm:$0xff]
    %v4979 = vld [vmem:[#allocation5 + $0x160] sm:$0xff]
    %v4980 = vld [vmem:[#allocation5 + $0x168] sm:$0xff]
    %v4981 = vld [vmem:[#allocation5 + $0x170] sm:$0xff]
    %v4982 = vld [vmem:[#allocation5 + $0x178] sm:$0xff]
    %v4983 = vld [vmem:[#allocation5 + $0x180] sm:$0xff]
    %v4984 = vld [vmem:[#allocation5 + $0x188] sm:$0xff]
    %v4985 = vld [vmem:[#allocation5 + $0x190] sm:$0xff]
    %v4986 = vld [vmem:[#allocation5 + $0x198] sm:$0xff]
    %v4987 = vld [vmem:[#allocation5 + $0x1a0] sm:$0xff]
    %v4988 = vld [vmem:[#allocation5 + $0x1a8] sm:$0xff]
    %v4989 = vld [vmem:[#allocation5 + $0x1b0] sm:$0xff]
    %v4990 = vld [vmem:[#allocation5 + $0x1b8] sm:$0xff]
    %v4991 = vld [vmem:[#allocation5 + $0x1c0] sm:$0xff]
    %v4992 = vld [vmem:[#allocation5 + $0x1c8] sm:$0xff]
    %v4993 = vld [vmem:[#allocation5 + $0x1d0] sm:$0xff]
    %v4994 = vld [vmem:[#allocation5 + $0x1d8] sm:$0xff]
    %v4995 = vld [vmem:[#allocation5 + $0x1e0] sm:$0xff]
    %v4996 = vld [vmem:[#allocation5 + $0x1e8] sm:$0xff]
    %v4997 = vld [vmem:[#allocation5 + $0x1f0] sm:$0xff]
    %v4998 = vld [vmem:[#allocation5 + $0x1f8] sm:$0xff]
    %4999 = vmatprep.subr.mxu0 %v4936
    %5000 = vmatpush1.msra.mxu0 %v4935
    %5001 = vmatprep.subr.mxu0 %v4940
    %5002 = vmatpush1.msra.mxu0 %v4939
    %5003 = vmatprep.subr.mxu0 %v4944
    %5004 = vmatpush1.msra.mxu0 %v4943
    %5005 = vmatprep.subr.mxu0 %v4948
    %5006 = vmatpush1.msra.mxu0 %v4947
    %5007 = vmatprep.subr.mxu0 %v4952
    %5008 = vmatpush1.msra.mxu0 %v4951
    %5009 = vmatprep.subr.mxu0 %v4956
    %5010 = vmatpush1.msra.mxu0 %v4955
    %5011 = vmatprep.subr.mxu0 %v4960
    %5012 = vmatpush1.msra.mxu0 %v4959
    %5013 = vmatprep.subr.mxu0 %v4964
    %5014 = vmatpush1.msra.mxu0 %v4963
    %5015 = vmatprep.subr.mxu0 %v4968
    %5016 = vmatpush1.msra.mxu0 %v4967
    %5017 = vmatprep.subr.mxu0 %v4972
    %5018 = vmatpush1.msra.mxu0 %v4971
    %5019 = vmatprep.subr.mxu0 %v4976
    %5020 = vmatpush1.msra.mxu0 %v4975
    %5021 = vmatprep.subr.mxu0 %v4980
    %5022 = vmatpush1.msra.mxu0 %v4979
    %5023 = vmatprep.subr.mxu0 %v4984
    %5024 = vmatpush1.msra.mxu0 %v4983
    %5025 = vmatprep.subr.mxu0 %v4988
    %5026 = vmatpush1.msra.mxu0 %v4987
    %5027 = vmatprep.subr.mxu0 %v4992
    %5028 = vmatpush1.msra.mxu0 %v4991
    %5029 = vmatprep.subr.mxu0 %v4996
    %5030 = vmatpush1.msra.mxu0 %v4995
    %5031 = vmatprep.subr.mxu0 0.0
    %5032 = vmatpush1.msra.mxu0 0.0
    %5033 = vmatprep.subr.mxu0 0.0
    %5034 = vmatpush1.msra.mxu0 0.0
    %5035 = vmatprep.subr.mxu0 0.0
    %5036 = vmatpush1.msra.mxu0 0.0
    %5037 = vmatprep.subr.mxu0 0.0
    %5038 = vmatpush1.msra.mxu0 0.0
    %5039 = vmatprep.subr.mxu0 0.0
    %5040 = vmatpush1.msra.mxu0 0.0
    %5041 = vmatprep.subr.mxu0 0.0
    %5042 = vmatpush1.msra.mxu0 0.0
    %5043 = vmatprep.subr.mxu0 0.0
    %5044 = vmatpush1.msra.mxu0 0.0
    %5045 = vmatprep.subr.mxu0 0.0
    %5046 = vmatpush1.msra.mxu0 0.0
    %5047 = vmatprep.subr.mxu0 0.0
    %5048 = vmatpush1.msra.mxu0 0.0
    %5049 = vmatprep.subr.mxu0 0.0
    %5050 = vmatpush1.msra.mxu0 0.0
    %5051 = vmatprep.subr.mxu0 0.0
    %5052 = vmatpush1.msra.mxu0 0.0
    %5053 = vmatprep.subr.mxu0 0.0
    %5054 = vmatpush1.msra.mxu0 0.0
    %5055 = vmatprep.subr.mxu0 0.0
    %5056 = vmatpush1.msra.mxu0 0.0
    %5057 = vmatprep.subr.mxu0 0.0
    %5058 = vmatpush1.msra.mxu0 0.0
    %5059 = vmatprep.subr.mxu0 0.0
    %5060 = vmatpush1.msra.mxu0 0.0
    %5061 = vmatprep.subr.mxu0 0.0
    %5062 = vmatpush1.msra.mxu0 0.0
    %5063 = vmatprep.mubr.f32.mxu0 0.0
    %5064 = vmatmul.mubr.f32.gmra.mrb[0].mxu0 %v4710
    %v5065 = vpop.f32.mrb[0].mxu0
    %v5066 = vadd.f32 0.0, %v5065
    %v5067 = vpop.f32.mrb[0].mxu0
    %v5068 = vadd.f32 0.0, %v5067
    %5069 = vdwg.mxu0
    %5070 = vmatprep.subr.mxu0 %v4938
    %5071 = vmatpush1.msra.mxu0 %v4937
    %5072 = vmatprep.subr.mxu0 %v4942
    %5073 = vmatpush1.msra.mxu0 %v4941
    %5074 = vmatprep.subr.mxu0 %v4946
    %5075 = vmatpush1.msra.mxu0 %v4945
    %5076 = vmatprep.subr.mxu0 %v4950
    %5077 = vmatpush1.msra.mxu0 %v4949
    %5078 = vmatprep.subr.mxu0 %v4954
    %5079 = vmatpush1.msra.mxu0 %v4953
    %5080 = vmatprep.subr.mxu0 %v4958
    %5081 = vmatpush1.msra.mxu0 %v4957
    %5082 = vmatprep.subr.mxu0 %v4962
    %5083 = vmatpush1.msra.mxu0 %v4961
    %5084 = vmatprep.subr.mxu0 %v4966
    %5085 = vmatpush1.msra.mxu0 %v4965
    %5086 = vmatprep.subr.mxu0 %v4970
    %5087 = vmatpush1.msra.mxu0 %v4969
    %5088 = vmatprep.subr.mxu0 %v4974
    %5089 = vmatpush1.msra.mxu0 %v4973
    %5090 = vmatprep.subr.mxu0 %v4978
    %5091 = vmatpush1.msra.mxu0 %v4977
    %5092 = vmatprep.subr.mxu0 %v4982
    %5093 = vmatpush1.msra.mxu0 %v4981
    %5094 = vmatprep.subr.mxu0 %v4986
    %5095 = vmatpush1.msra.mxu0 %v4985
    %5096 = vmatprep.subr.mxu0 %v4990
    %5097 = vmatpush1.msra.mxu0 %v4989
    %5098 = vmatprep.subr.mxu0 %v4994
    %5099 = vmatpush1.msra.mxu0 %v4993
    %5100 = vmatprep.subr.mxu0 %v4998
    %5101 = vmatpush1.msra.mxu0 %v4997
    %5102 = vmatprep.subr.mxu0 0.0
    %5103 = vmatpush1.msra.mxu0 0.0
    %5104 = vmatprep.subr.mxu0 0.0
    %5105 = vmatpush1.msra.mxu0 0.0
    %5106 = vmatprep.subr.mxu0 0.0
    %5107 = vmatpush1.msra.mxu0 0.0
    %5108 = vmatprep.subr.mxu0 0.0
    %5109 = vmatpush1.msra.mxu0 0.0
    %5110 = vmatprep.subr.mxu0 0.0
    %5111 = vmatpush1.msra.mxu0 0.0
    %5112 = vmatprep.subr.mxu0 0.0
    %5113 = vmatpush1.msra.mxu0 0.0
    %5114 = vmatprep.subr.mxu0 0.0
    %5115 = vmatpush1.msra.mxu0 0.0
    %5116 = vmatprep.subr.mxu0 0.0
    %5117 = vmatpush1.msra.mxu0 0.0
    %5118 = vmatprep.subr.mxu0 0.0
    %5119 = vmatpush1.msra.mxu0 0.0
    %5120 = vmatprep.subr.mxu0 0.0
    %5121 = vmatpush1.msra.mxu0 0.0
    %5122 = vmatprep.subr.mxu0 0.0
    %5123 = vmatpush1.msra.mxu0 0.0
    %5124 = vmatprep.subr.mxu0 0.0
    %5125 = vmatpush1.msra.mxu0 0.0
    %5126 = vmatprep.subr.mxu0 0.0
    %5127 = vmatpush1.msra.mxu0 0.0
    %5128 = vmatprep.subr.mxu0 0.0
    %5129 = vmatpush1.msra.mxu0 0.0
    %5130 = vmatprep.subr.mxu0 0.0
    %5131 = vmatpush1.msra.mxu0 0.0
    %5132 = vmatprep.subr.mxu0 0.0
    %5133 = vmatpush1.msra.mxu0 0.0
    %5134 = vmatprep.mubr.f32.mxu0 0.0
    %5135 = vmatmul.mubr.f32.gmra.mrb[0].mxu0 %v4710
    %v5136 = vpop.f32.mrb[0].mxu0
    %v5137 = vadd.f32 0.0, %v5136
    %v5138 = vpop.f32.mrb[0].mxu0
    %v5139 = vadd.f32 0.0, %v5138
    %5140 = vdwg.mxu0
    %v5141 = vadd.f32 %v1291, %v5066
    %v5142 = vadd.f32 %v1293, %v5068
    %v5143 = vadd.f32 %v1362, %v5137
    %v5144 = vadd.f32 %v1364, %v5139
    %v5149 = vcombine.high %v4931, %v4932
    %v5150 = vcombine.high %v4933, %v4934
    %v5152 = vunpack.c.l.s4 1966171168
    %v5153 = vunpack.c.0.s8 %v5152
    %v5154 = vlaneseq
    %v5155 = vshrl.u32 %v5154, 7
    %v5156 = vsub.s32 %v5153, %v5155
    %v5157 = vrot.slane %v5149, %v5156
    %v5159 = vunpack.c.l.s4 1966171168
    %v5160 = vunpack.c.0.s8 %v5159
    %v5161 = vlaneseq
    %v5162 = vshrl.u32 %v5161, 7
    %v5163 = vsub.s32 %v5160, %v5162
    %v5164 = vrot.slane %v5150, %v5163
    %v5165 = vcombine.high %v5157, %v5164
    %v5167 = vunpack.c.l.s4 1966171168
    %v5168 = vunpack.c.0.s8 %v5167
    %v5169 = vlaneseq
    %v5170 = vshrl.u32 %v5169, 7
    %v5171 = vsub.s32 %v5168, %v5170
    %v5172 = vrot.slane %v5165, %v5171
    %v5173 = vcombine.high %v5172, %v5172
    %5175 = vst.msk [vmem:[#allocation6] ss:$2 sm:$0xf] %vm1424, %v5173
    %v5180 = vcombine.low %v5141, %v5142
    %v5181 = vcombine.low %v5143, %v5144
    %v5183 = vunpack.c.l.s4 1966171168
    %v5184 = vunpack.c.0.s8 %v5183
    %v5185 = vlaneseq
    %v5186 = vshrl.u32 %v5185, 7
    %v5187 = vsub.s32 %v5184, %v5186
    %v5188 = vrot.slane %v5180, %v5187
    %v5190 = vunpack.c.l.s4 1966171168
    %v5191 = vunpack.c.0.s8 %v5190
    %v5192 = vlaneseq
    %v5193 = vshrl.u32 %v5192, 7
    %v5194 = vsub.s32 %v5191, %v5193
    %v5195 = vrot.slane %v5181, %v5194
    %v5196 = vcombine.low %v5188, %v5195
    %v5198 = vunpack.c.l.s4 1966171168
    %v5199 = vunpack.c.0.s8 %v5198
    %v5200 = vlaneseq
    %v5201 = vshrl.u32 %v5200, 7
    %v5202 = vsub.s32 %v5199, %v5201
    %v5203 = vrot.slane %v5196, %v5202
    %5205 = vst.msk [vmem:[%s1456] ss:$2 sm:$0xf] %vm1424, %v5203
    %v5206 = vld [vmem:[#allocation6] sm:$0xff]
    %v5207 = vmul.f32 %v5206, %v1479
    %v5208 = vtanh.pop %v5207
    %v5209 = vadd.f32 %v5208, 1.0
    %v5210 = vmul.f32 %v5209, 0.5
    %v5212 = vrot.slane %v5208, 2
    %v5214 = vadd.f32 %v5212, 1.0
    %v5215 = vmul.f32 %v5214, 0.5
    %v5216 = vrot.slane %v5208, 6
    %v5218 = vadd.f32 %v5216, 1.0
    %v5219 = vmul.f32 %v5218, 0.5
    %v5220 = vmul.f32 %v5215, %v4702
    %v5221 = vrot.slane %v5208, 4
    %v5223 = vmul.f32 %v5210, %v5221
    %v5224 = vadd.f32 %v5220, %v5223
    %v5225 = vtanh.pop %v5224
    %v5226 = vmul.f32 %v5219, %v5225
    %5227 = vst [vmem:[#allocation7 + $0x7] sm:$0x1] %v5226
    %v5229 = vlaneseq
    %v5230 = vshrl.u32 %v5229, 7
    %v5231 = vsub.s32 1, %v5230
    %v5232 = vrot.slane %v5226, %v5231
    %5234 = vst [vmem:[#allocation7 + $0x8] sm:$0x1] %v5232
    %v5235 = vld [vmem:[#allocation7] sm:$0xff]
    %v5236 = vld [vmem:[#allocation7 + $0x8] sm:$0xff]
    %v5237 = vld [vmem:[%s43] sm:$0x3]
    %v5238 = vld [vmem:[%s45] sm:$0x3]
    %v5239 = vrot.slane %v5235, 4
    %v5240 = vadd.f32 %v5235, %v5239
    %v5241 = vrot.slane %v5240, 2
    %v5242 = vadd.f32 %v5240, %v5241
    %v5243 = vrot.slane %v5242, 1
    %v5244 = vadd.f32 %v5242, %v5243
    %v5245 = vrot.slane %v5236, 4
    %v5246 = vadd.f32 %v5236, %v5245
    %v5247 = vrot.slane %v5246, 2
    %v5248 = vadd.f32 %v5246, %v5247
    %v5249 = vrot.slane %v5248, 1
    %v5250 = vadd.f32 %v5248, %v5249
    %v5251 = vmul.f32 %v5244, %v425
    %v5252 = vmul.f32 %v5250, %v425
    %v5253 = vmul.f32 %v5235, %v5235
    %v5254 = vmul.f32 %v5236, %v5236
    %v5255 = vrot.slane %v5253, 4
    %v5256 = vadd.f32 %v5253, %v5255
    %v5257 = vrot.slane %v5256, 2
    %v5258 = vadd.f32 %v5256, %v5257
    %v5259 = vrot.slane %v5258, 1
    %v5260 = vadd.f32 %v5258, %v5259
    %v5261 = vrot.slane %v5254, 4
    %v5262 = vadd.f32 %v5254, %v5261
    %v5263 = vrot.slane %v5262, 2
    %v5264 = vadd.f32 %v5262, %v5263
    %v5265 = vrot.slane %v5264, 1
    %v5266 = vadd.f32 %v5264, %v5265
    %v5267 = vmul.f32 %v5260, %v425
    %v5268 = vmul.f32 %v5266, %v425
    %v5269 = vmul.f32 %v5251, %v5251
    %v5270 = vmul.f32 %v5252, %v5252
    %v5271 = vsub.f32 %v5267, %v5269
    %v5272 = vsub.f32 %v5268, %v5270
    %v5273 = vmax.f32 %v5271, 0.0
    %v5274 = vmax.f32 %v5272, 0.0
    %v5275 = vsub.f32 %v5235, %v5251
    %v5276 = vsub.f32 %v5236, %v5252
    %v5277 = vadd.f32 %v5273, 1e-05
    %v5278 = vadd.f32 %v5274, 1e-05
    %v5279 = vrsqrt.pop %v5277
    %v5280 = vrsqrt.pop %v5278
    %v5281 = vmul.f32 %v5275, %v5279
    %v5282 = vmul.f32 %v5276, %v5280
    %v5284 = vlaneseq
    %v5285 = vshrl.u32 %v5284, 7
    %v5286 = vsub.s32 0, %v5285
    %v5287 = vrot.slane %v5237, %v5286
    %v5288 = vlaneseq
    %v5289 = vshrl.u32 %v5288, 7
    %v5290 = vsub.s32 1, %v5289
    %v5291 = vrot.slane %v5237, %v5290
    %v5294 = vmul.f32 %v5281, %v5287
    %v5295 = vmul.f32 %v5282, %v5291
    %v5297 = vlaneseq
    %v5298 = vshrl.u32 %v5297, 7
    %v5299 = vsub.s32 0, %v5298
    %v5300 = vrot.slane %v5238, %v5299
    %v5301 = vlaneseq
    %v5302 = vshrl.u32 %v5301, 7
    %v5303 = vsub.s32 1, %v5302
    %v5304 = vrot.slane %v5238, %v5303
    %v5307 = vadd.f32 %v5294, %v5300
    %v5308 = vadd.f32 %v5295, %v5304
    %v5309 = vld [vmem:[#allocation21] sm:$0xff]
    %v5310 = vld [vmem:[#allocation21 + $0x8] sm:$0xff]
    %v5311 = vld [vmem:[#allocation21 + $0x10] sm:$0xff]
    %v5312 = vld [vmem:[#allocation21 + $0x18] sm:$0xff]
    %v5313 = vld [vmem:[#allocation21 + $0x20] sm:$0xff]
    %v5314 = vld [vmem:[#allocation21 + $0x28] sm:$0xff]
    %v5315 = vld [vmem:[#allocation21 + $0x30] sm:$0xff]
    %v5316 = vld [vmem:[#allocation21 + $0x38] sm:$0xff]
    %v5317 = vld [vmem:[#allocation21 + $0x40] sm:$0xff]
    %v5318 = vld [vmem:[#allocation21 + $0x48] sm:$0xff]
    %v5319 = vld [vmem:[#allocation21 + $0x50] sm:$0xff]
    %v5320 = vld [vmem:[#allocation21 + $0x58] sm:$0xff]
    %v5321 = vld [vmem:[#allocation21 + $0x60] sm:$0xff]
    %v5322 = vld [vmem:[#allocation21 + $0x68] sm:$0xff]
    %v5323 = vld [vmem:[#allocation21 + $0x70] sm:$0xff]
    %v5324 = vld [vmem:[#allocation21 + $0x78] sm:$0xff]
    %v5325 = vld [vmem:[#allocation21 + $0x80] sm:$0xff]
    %v5326 = vld [vmem:[#allocation21 + $0x88] sm:$0xff]
    %v5327 = vld [vmem:[#allocation21 + $0x90] sm:$0xff]
    %v5328 = vld [vmem:[#allocation21 + $0x98] sm:$0xff]
    %v5329 = vld [vmem:[#allocation21 + $0xa0] sm:$0xff]
    %v5330 = vld [vmem:[#allocation21 + $0xa8] sm:$0xff]
    %v5331 = vld [vmem:[#allocation21 + $0xb0] sm:$0xff]
    %v5332 = vld [vmem:[#allocation21 + $0xb8] sm:$0xff]
    %v5333 = vld [vmem:[#allocation21 + $0xc0] sm:$0xff]
    %v5334 = vld [vmem:[#allocation21 + $0xc8] sm:$0xff]
    %v5335 = vld [vmem:[#allocation21 + $0xd0] sm:$0xff]
    %v5336 = vld [vmem:[#allocation21 + $0xd8] sm:$0xff]
    %v5337 = vld [vmem:[#allocation21 + $0xe0] sm:$0xff]
    %v5338 = vld [vmem:[#allocation21 + $0xe8] sm:$0xff]
    %v5339 = vld [vmem:[#allocation21 + $0xf0] sm:$0xff]
    %v5340 = vld [vmem:[#allocation21 + $0xf8] sm:$0xff]
    %v5341 = vld [vmem:[%s49] sm:$0x1]
    %v5343 = vlaneseq
    %v5344 = vshrl.u32 %v5343, 7
    %v5345 = vsub.s32 0, %v5344
    %v5346 = vrot.slane %v5341, %v5345
    %5348 = vmatprep.subr.mxu0 0.0
    %5349 = vmatpush1.msra.mxu0 %v5309
    %5350 = vmatprep.subr.mxu0 0.0
    %5351 = vmatpush1.msra.mxu0 %v5310
    %5352 = vmatprep.subr.mxu0 0.0
    %5353 = vmatpush1.msra.mxu0 %v5311
    %5354 = vmatprep.subr.mxu0 0.0
    %5355 = vmatpush1.msra.mxu0 %v5312
    %5356 = vmatprep.subr.mxu0 0.0
    %5357 = vmatpush1.msra.mxu0 %v5313
    %5358 = vmatprep.subr.mxu0 0.0
    %5359 = vmatpush1.msra.mxu0 %v5314
    %5360 = vmatprep.subr.mxu0 0.0
    %5361 = vmatpush1.msra.mxu0 %v5315
    %5362 = vmatprep.subr.mxu0 0.0
    %5363 = vmatpush1.msra.mxu0 %v5316
    %5364 = vmatprep.subr.mxu0 0.0
    %5365 = vmatpush1.msra.mxu0 %v5317
    %5366 = vmatprep.subr.mxu0 0.0
    %5367 = vmatpush1.msra.mxu0 %v5318
    %5368 = vmatprep.subr.mxu0 0.0
    %5369 = vmatpush1.msra.mxu0 %v5319
    %5370 = vmatprep.subr.mxu0 0.0
    %5371 = vmatpush1.msra.mxu0 %v5320
    %5372 = vmatprep.subr.mxu0 0.0
    %5373 = vmatpush1.msra.mxu0 %v5321
    %5374 = vmatprep.subr.mxu0 0.0
    %5375 = vmatpush1.msra.mxu0 %v5322
    %5376 = vmatprep.subr.mxu0 0.0
    %5377 = vmatpush1.msra.mxu0 %v5323
    %5378 = vmatprep.subr.mxu0 0.0
    %5379 = vmatpush1.msra.mxu0 %v5324
    %5380 = vmatprep.subr.mxu0 0.0
    %5381 = vmatpush1.msra.mxu0 %v5325
    %5382 = vmatprep.subr.mxu0 0.0
    %5383 = vmatpush1.msra.mxu0 %v5326
    %5384 = vmatprep.subr.mxu0 0.0
    %5385 = vmatpush1.msra.mxu0 %v5327
    %5386 = vmatprep.subr.mxu0 0.0
    %5387 = vmatpush1.msra.mxu0 %v5328
    %5388 = vmatprep.subr.mxu0 0.0
    %5389 = vmatpush1.msra.mxu0 %v5329
    %5390 = vmatprep.subr.mxu0 0.0
    %5391 = vmatpush1.msra.mxu0 %v5330
    %5392 = vmatprep.subr.mxu0 0.0
    %5393 = vmatpush1.msra.mxu0 %v5331
    %5394 = vmatprep.subr.mxu0 0.0
    %5395 = vmatpush1.msra.mxu0 %v5332
    %5396 = vmatprep.subr.mxu0 0.0
    %5397 = vmatpush1.msra.mxu0 %v5333
    %5398 = vmatprep.subr.mxu0 0.0
    %5399 = vmatpush1.msra.mxu0 %v5334
    %5400 = vmatprep.subr.mxu0 0.0
    %5401 = vmatpush1.msra.mxu0 %v5335
    %5402 = vmatprep.subr.mxu0 0.0
    %5403 = vmatpush1.msra.mxu0 %v5336
    %5404 = vmatprep.subr.mxu0 0.0
    %5405 = vmatpush1.msra.mxu0 %v5337
    %5406 = vmatprep.subr.mxu0 0.0
    %5407 = vmatpush1.msra.mxu0 %v5338
    %5408 = vmatprep.subr.mxu0 0.0
    %5409 = vmatpush1.msra.mxu0 %v5339
    %5410 = vmatprep.subr.mxu0 0.0
    %5411 = vmatpush1.msra.mxu0 %v5340
    %5412 = vmatprep.mubr.f32.mxu0 %v5308
    %5413 = vmatmul.mubr.f32.gmra.mrb[0].mxu0 %v5307
    %v5414 = vpop.f32.mrb[0].mxu0
    %v5415 = vadd.f32 %v5346, %v5414
    %v5416 = vpop.f32.mrb[0].mxu0
    %5417 = vdwg.mxu0
    %v5418 = vld [vmem:[%s51] sm:$0x1]
    %v5419 = vld [vmem:[%s53] sm:$0x1]
    %v5420 = vrot.slane %v5415, 4
    %v5421 = vadd.f32 %v5415, %v5420
    %v5422 = vrot.slane %v5421, 2
    %v5423 = vadd.f32 %v5421, %v5422
    %v5424 = vrot.slane %v5423, 1
    %v5425 = vadd.f32 %v5423, %v5424
    %v5426 = vmul.f32 %v5425, %v425
    %v5427 = vmul.f32 %v5415, %v5415
    %v5428 = vrot.slane %v5427, 4
    %v5429 = vadd.f32 %v5427, %v5428
    %v5430 = vrot.slane %v5429, 2
    %v5431 = vadd.f32 %v5429, %v5430
    %v5432 = vrot.slane %v5431, 1
    %v5433 = vadd.f32 %v5431, %v5432
    %v5434 = vmul.f32 %v5433, %v425
    %v5435 = vmul.f32 %v5426, %v5426
    %v5436 = vsub.f32 %v5434, %v5435
    %v5437 = vmax.f32 %v5436, 0.0
    %v5438 = vsub.f32 %v5415, %v5426
    %v5439 = vadd.f32 %v5437, 1e-05
    %v5440 = vrsqrt.pop %v5439
    %v5441 = vmul.f32 %v5438, %v5440
    %v5443 = vlaneseq
    %v5444 = vshrl.u32 %v5443, 7
    %v5445 = vsub.s32 0, %v5444
    %v5446 = vrot.slane %v5418, %v5445
    %v5448 = vmul.f32 %v5441, %v5446
    %v5450 = vlaneseq
    %v5451 = vshrl.u32 %v5450, 7
    %v5452 = vsub.s32 0, %v5451
    %v5453 = vrot.slane %v5419, %v5452
    %v5455 = vadd.f32 %v5448, %v5453
    %v5456 = vmax.f32 %v5455, 0.0
    %v5457 = vld [vmem:[#allocation23] sm:$0xff]
    %v5458 = vld [vmem:[#allocation23 + $0x8] sm:$0xff]
    %v5459 = vld [vmem:[#allocation23 + $0x10] sm:$0xff]
    %v5460 = vld [vmem:[#allocation23 + $0x18] sm:$0xff]
    %v5461 = vld [vmem:[#allocation23 + $0x20] sm:$0xff]
    %v5462 = vld [vmem:[#allocation23 + $0x28] sm:$0xff]
    %v5463 = vld [vmem:[#allocation23 + $0x30] sm:$0xff]
    %v5464 = vld [vmem:[#allocation23 + $0x38] sm:$0xff]
    %v5465 = vld [vmem:[#allocation23 + $0x40] sm:$0xff]
    %v5466 = vld [vmem:[#allocation23 + $0x48] sm:$0xff]
    %v5467 = vld [vmem:[#allocation23 + $0x50] sm:$0xff]
    %v5468 = vld [vmem:[#allocation23 + $0x58] sm:$0xff]
    %v5469 = vld [vmem:[#allocation23 + $0x60] sm:$0xff]
    %v5470 = vld [vmem:[#allocation23 + $0x68] sm:$0xff]
    %v5471 = vld [vmem:[#allocation23 + $0x70] sm:$0xff]
    %v5472 = vld [vmem:[#allocation23 + $0x78] sm:$0xff]
    %v5473 = vld [vmem:[%s57] sm:$0x1]
    %v5475 = vlaneseq
    %v5476 = vshrl.u32 %v5475, 7
    %v5477 = vsub.s32 0, %v5476
    %v5478 = vrot.slane %v5473, %v5477
    %5480 = vmatprep.subr.mxu0 0.0
    %5481 = vmatpush1.msra.mxu0 %v5457
    %5482 = vmatprep.subr.mxu0 0.0
    %5483 = vmatpush1.msra.mxu0 %v5458
    %5484 = vmatprep.subr.mxu0 0.0
    %5485 = vmatpush1.msra.mxu0 %v5459
    %5486 = vmatprep.subr.mxu0 0.0
    %5487 = vmatpush1.msra.mxu0 %v5460
    %5488 = vmatprep.subr.mxu0 0.0
    %5489 = vmatpush1.msra.mxu0 %v5461
    %5490 = vmatprep.subr.mxu0 0.0
    %5491 = vmatpush1.msra.mxu0 %v5462
    %5492 = vmatprep.subr.mxu0 0.0
    %5493 = vmatpush1.msra.mxu0 %v5463
    %5494 = vmatprep.subr.mxu0 0.0
    %5495 = vmatpush1.msra.mxu0 %v5464
    %5496 = vmatprep.subr.mxu0 0.0
    %5497 = vmatpush1.msra.mxu0 %v5465
    %5498 = vmatprep.subr.mxu0 0.0
    %5499 = vmatpush1.msra.mxu0 %v5466
    %5500 = vmatprep.subr.mxu0 0.0
    %5501 = vmatpush1.msra.mxu0 %v5467
    %5502 = vmatprep.subr.mxu0 0.0
    %5503 = vmatpush1.msra.mxu0 %v5468
    %5504 = vmatprep.subr.mxu0 0.0
    %5505 = vmatpush1.msra.mxu0 %v5469
    %5506 = vmatprep.subr.mxu0 0.0
    %5507 = vmatpush1.msra.mxu0 %v5470
    %5508 = vmatprep.subr.mxu0 0.0
    %5509 = vmatpush1.msra.mxu0 %v5471
    %5510 = vmatprep.subr.mxu0 0.0
    %5511 = vmatpush1.msra.mxu0 %v5472
    %5512 = vmatprep.subr.mxu0 0.0
    %5513 = vmatpush1.msra.mxu0 0.0
    %5514 = vmatprep.subr.mxu0 0.0
    %5515 = vmatpush1.msra.mxu0 0.0
    %5516 = vmatprep.subr.mxu0 0.0
    %5517 = vmatpush1.msra.mxu0 0.0
    %5518 = vmatprep.subr.mxu0 0.0
    %5519 = vmatpush1.msra.mxu0 0.0
    %5520 = vmatprep.subr.mxu0 0.0
    %5521 = vmatpush1.msra.mxu0 0.0
    %5522 = vmatprep.subr.mxu0 0.0
    %5523 = vmatpush1.msra.mxu0 0.0
    %5524 = vmatprep.subr.mxu0 0.0
    %5525 = vmatpush1.msra.mxu0 0.0
    %5526 = vmatprep.subr.mxu0 0.0
    %5527 = vmatpush1.msra.mxu0 0.0
    %5528 = vmatprep.subr.mxu0 0.0
    %5529 = vmatpush1.msra.mxu0 0.0
    %5530 = vmatprep.subr.mxu0 0.0
    %5531 = vmatpush1.msra.mxu0 0.0
    %5532 = vmatprep.subr.mxu0 0.0
    %5533 = vmatpush1.msra.mxu0 0.0
    %5534 = vmatprep.subr.mxu0 0.0
    %5535 = vmatpush1.msra.mxu0 0.0
    %5536 = vmatprep.subr.mxu0 0.0
    %5537 = vmatpush1.msra.mxu0 0.0
    %5538 = vmatprep.subr.mxu0 0.0
    %5539 = vmatpush1.msra.mxu0 0.0
    %5540 = vmatprep.subr.mxu0 0.0
    %5541 = vmatpush1.msra.mxu0 0.0
    %5542 = vmatprep.subr.mxu0 0.0
    %5543 = vmatpush1.msra.mxu0 0.0
    %5544 = vmatprep.mubr.f32.mxu0 0.0
    %5545 = vmatmul.mubr.f32.gmra.mrb[0].mxu0 %v5456
    %v5546 = vpop.f32.mrb[0].mxu0
    %v5547 = vadd.f32 %v5478, %v5546
    %v5548 = vpop.f32.mrb[0].mxu0
    %5549 = vdwg.mxu0
    %v5550 = vld [vmem:[%s59] sm:$0x1]
    %v5551 = vld [vmem:[%s61] sm:$0x1]
    %vm5552 = vcmask 523264
    %v5553 = vsel %vm5552, %v5547, 0.0
    %v5554 = vrot.slane %v5553, 4
    %v5555 = vadd.f32 %v5553, %v5554
    %v5556 = vrot.slane %v5555, 2
    %v5557 = vadd.f32 %v5555, %v5556
    %v5558 = vrot.slane %v5557, 1
    %v5559 = vadd.f32 %v5557, %v5558
    %v5560 = vmul.f32 %v5559, %v425
    %v5561 = vmul.f32 %v5547, %v5547
    %v5562 = vsel %vm5552, %v5561, 0.0
    %v5563 = vrot.slane %v5562, 4
    %v5564 = vadd.f32 %v5562, %v5563
    %v5565 = vrot.slane %v5564, 2
    %v5566 = vadd.f32 %v5564, %v5565
    %v5567 = vrot.slane %v5566, 1
    %v5568 = vadd.f32 %v5566, %v5567
    %v5569 = vmul.f32 %v5568, %v425
    %v5570 = vmul.f32 %v5560, %v5560
    %v5571 = vsub.f32 %v5569, %v5570
    %v5572 = vmax.f32 %v5571, 0.0
    %v5573 = vsub.f32 %v5547, %v5560
    %v5574 = vadd.f32 %v5572, 1e-05
    %v5575 = vrsqrt.pop %v5574
    %v5576 = vmul.f32 %v5573, %v5575
    %v5578 = vlaneseq
    %v5579 = vshrl.u32 %v5578, 7
    %v5580 = vsub.s32 0, %v5579
    %v5581 = vrot.slane %v5550, %v5580
    %v5583 = vmul.f32 %v5576, %v5581
    %v5585 = vlaneseq
    %v5586 = vshrl.u32 %v5585, 7
    %v5587 = vsub.s32 0, %v5586
    %v5588 = vrot.slane %v5551, %v5587
    %v5590 = vadd.f32 %v5583, %v5588
    %v5591 = vmax.f32 %v5590, 0.0
    %v5592 = vld [vmem:[#allocation24] sm:$0xff]
    %v5593 = vld [vmem:[#allocation24 + $0x8] sm:$0xff]
    %v5594 = vld [vmem:[#allocation24 + $0x10] sm:$0xff]
    %v5595 = vld [vmem:[#allocation24 + $0x18] sm:$0xff]
    %v5596 = vld [vmem:[#allocation24 + $0x20] sm:$0xff]
    %v5597 = vld [vmem:[#allocation24 + $0x28] sm:$0xff]
    %v5598 = vld [vmem:[#allocation24 + $0x30] sm:$0xff]
    %v5599 = vld [vmem:[#allocation24 + $0x38] sm:$0xff]
    %v5600 = vld [vmem:[%s65] sm:$0x1]
    %v5602 = vlaneseq
    %v5603 = vshrl.u32 %v5602, 7
    %v5604 = vsub.s32 0, %v5603
    %v5605 = vrot.slane %v5600, %v5604
    %v5608 = vsel %vm5552, %v5591, 0
    %5610 = vmatprep.subr.mxu0 0.0
    %5611 = vmatpush1.msra.mxu0 %v5592
    %5612 = vmatprep.subr.mxu0 0.0
    %5613 = vmatpush1.msra.mxu0 %v5593
    %5614 = vmatprep.subr.mxu0 0.0
    %5615 = vmatpush1.msra.mxu0 %v5594
    %5616 = vmatprep.subr.mxu0 0.0
    %5617 = vmatpush1.msra.mxu0 %v5595
    %5618 = vmatprep.subr.mxu0 0.0
    %5619 = vmatpush1.msra.mxu0 %v5596
    %5620 = vmatprep.subr.mxu0 0.0
    %5621 = vmatpush1.msra.mxu0 %v5597
    %5622 = vmatprep.subr.mxu0 0.0
    %5623 = vmatpush1.msra.mxu0 %v5598
    %5624 = vmatprep.subr.mxu0 0.0
    %5625 = vmatpush1.msra.mxu0 %v5599
    %5626 = vmatprep.subr.mxu0 0.0
    %5627 = vmatpush1.msra.mxu0 0.0
    %5628 = vmatprep.subr.mxu0 0.0
    %5629 = vmatpush1.msra.mxu0 0.0
    %5630 = vmatprep.subr.mxu0 0.0
    %5631 = vmatpush1.msra.mxu0 0.0
    %5632 = vmatprep.subr.mxu0 0.0
    %5633 = vmatpush1.msra.mxu0 0.0
    %5634 = vmatprep.subr.mxu0 0.0
    %5635 = vmatpush1.msra.mxu0 0.0
    %5636 = vmatprep.subr.mxu0 0.0
    %5637 = vmatpush1.msra.mxu0 0.0
    %5638 = vmatprep.subr.mxu0 0.0
    %5639 = vmatpush1.msra.mxu0 0.0
    %5640 = vmatprep.subr.mxu0 0.0
    %5641 = vmatpush1.msra.mxu0 0.0
    %5642 = vmatprep.subr.mxu0 0.0
    %5643 = vmatpush1.msra.mxu0 0.0
    %5644 = vmatprep.subr.mxu0 0.0
    %5645 = vmatpush1.msra.mxu0 0.0
    %5646 = vmatprep.subr.mxu0 0.0
    %5647 = vmatpush1.msra.mxu0 0.0
    %5648 = vmatprep.subr.mxu0 0.0
    %5649 = vmatpush1.msra.mxu0 0.0
    %5650 = vmatprep.subr.mxu0 0.0
    %5651 = vmatpush1.msra.mxu0 0.0
    %5652 = vmatprep.subr.mxu0 0.0
    %5653 = vmatpush1.msra.mxu0 0.0
    %5654 = vmatprep.subr.mxu0 0.0
    %5655 = vmatpush1.msra.mxu0 0.0
    %5656 = vmatprep.subr.mxu0 0.0
    %5657 = vmatpush1.msra.mxu0 0.0
    %5658 = vmatprep.subr.mxu0 0.0
    %5659 = vmatpush1.msra.mxu0 0.0
    %5660 = vmatprep.subr.mxu0 0.0
    %5661 = vmatpush1.msra.mxu0 0.0
    %5662 = vmatprep.subr.mxu0 0.0
    %5663 = vmatpush1.msra.mxu0 0.0
    %5664 = vmatprep.subr.mxu0 0.0
    %5665 = vmatpush1.msra.mxu0 0.0
    %5666 = vmatprep.subr.mxu0 0.0
    %5667 = vmatpush1.msra.mxu0 0.0
    %5668 = vmatprep.subr.mxu0 0.0
    %5669 = vmatpush1.msra.mxu0 0.0
    %5670 = vmatprep.subr.mxu0 0.0
    %5671 = vmatpush1.msra.mxu0 0.0
    %5672 = vmatprep.subr.mxu0 0.0
    %5673 = vmatpush1.msra.mxu0 0.0
    %5674 = vmatprep.mubr.f32.mxu0 0.0
    %5675 = vmatmul.mubr.f32.gmra.mrb[0].mxu0 %v5608
    %v5676 = vpop.f32.mrb[0].mxu0
    %v5677 = vadd.f32 %v5605, %v5676
    %v5678 = vpop.f32.mrb[0].mxu0
    %5679 = vdwg.mxu0
    %v5680 = vld [vmem:[%s67] sm:$0x1]
    %v5681 = vld [vmem:[%s69] sm:$0x1]
    %vm5682 = vcmask 15360
    %v5683 = vsel %vm5682, %v5677, 0.0
    %v5684 = vrot.slane %v5683, 4
    %v5685 = vadd.f32 %v5683, %v5684
    %v5686 = vrot.slane %v5685, 2
    %v5687 = vadd.f32 %v5685, %v5686
    %v5688 = vrot.slane %v5687, 1
    %v5689 = vadd.f32 %v5687, %v5688
    %v5690 = vmul.f32 %v5689, %v425
    %v5691 = vmul.f32 %v5677, %v5677
    %v5692 = vsel %vm5682, %v5691, 0.0
    %v5693 = vrot.slane %v5692, 4
    %v5694 = vadd.f32 %v5692, %v5693
    %v5695 = vrot.slane %v5694, 2
    %v5696 = vadd.f32 %v5694, %v5695
    %v5697 = vrot.slane %v5696, 1
    %v5698 = vadd.f32 %v5696, %v5697
    %v5699 = vmul.f32 %v5698, %v425
    %v5700 = vmul.f32 %v5690, %v5690
    %v5701 = vsub.f32 %v5699, %v5700
    %v5702 = vmax.f32 %v5701, 0.0
    %v5703 = vsub.f32 %v5677, %v5690
    %v5704 = vadd.f32 %v5702, 1e-05
    %v5705 = vrsqrt.pop %v5704
    %v5706 = vmul.f32 %v5703, %v5705
    %v5708 = vlaneseq
    %v5709 = vshrl.u32 %v5708, 7
    %v5710 = vsub.s32 0, %v5709
    %v5711 = vrot.slane %v5680, %v5710
    %v5713 = vmul.f32 %v5706, %v5711
    %v5715 = vlaneseq
    %v5716 = vshrl.u32 %v5715, 7
    %v5717 = vsub.s32 0, %v5716
    %v5718 = vrot.slane %v5681, %v5717
    %v5720 = vadd.f32 %v5713, %v5718
    %v5721 = vmax.f32 %v5720, 0.0
    %v5722 = vsel %vm5682, %v5721, -inf
    %5723 = vmax.xlane.f32.xlu0 %v5722
    %v5724 = vpop.xlane.xlu0 %5723
    %v5725 = vsub.f32 %v5721, %v5724
    %v5726 = vmul.f32 %v5725, 1.442695
    %v5727 = vpow.pop %v5726
    %v5728 = vsel %vm5682, %v5727, 0.0
    %5729 = vadd.xlane.f32.xlu0 %v5728
    %v5730 = vpop.xlane.xlu0 %5729
    %v5731 = vrcp.pop %v5730
    %v5732 = vmul.f32 %v5727, %v5731
    %5733 = vst.msk [vmem:[%s75] sm:$0xff] %vm5682, %v5732
    // Predicated region
    $region182: #{aeblstmft_forward.1} parent=1 // pred_check
      _
    $region183: #{aeblstmft_forward.1} parent=1 // pred_check_branch
      %5735 = sbr.rel (0) target = $region185
    $region184: #{aeblstmft_forward.1} parent=1 // pred_region
      %s5737 = ssub.s32 128, 128
      %5738 = vsyncadd [#allocation11], %s5737
      %s5740 = sshll.u32 [#allocation26], 4
      %s5741 = int_to_ptr.vmem [resolvable:$true] %s5740
      %5743 = dma.vmem_to_hbm [thread:$0]  %s5741, 128, %s71, [#allocation11]
    $region185: #{aeblstmft_forward.1} parent=1 // pred_fallthru
      _
    // Predicated region
    $region186: #{aeblstmft_forward.1} parent=1 // pred_check
      _
    $region187: #{aeblstmft_forward.1} parent=1 // pred_check_branch
      %5745 = sbr.rel (0) target = $region189
    $region188: #{aeblstmft_forward.1} parent=1 // pred_region
      %s5747 = ssub.s32 128, 128
      %5748 = vsyncadd [#allocation28], %s5747
      %s5750 = sshll.u32 [#allocation27], 4
      %s5751 = int_to_ptr.vmem [resolvable:$true] %s5750
      %5753 = dma.vmem_to_hbm [thread:$0]  %s5751, 128, %s73, [#allocation28]
    $region189: #{aeblstmft_forward.1} parent=1 // pred_fallthru
      _
    // Predicated region
    $region190: #{aeblstmft_forward.1} parent=1 // pred_check
      _
    $region191: #{aeblstmft_forward.1} parent=1 // pred_check_branch
      %5755 = sbr.rel (0) target = $region193
    $region192: #{aeblstmft_forward.1} parent=1 // pred_region
      _
    $region193: #{aeblstmft_forward.1} parent=1 // pred_fallthru
      _
    // Predicated region
    $region194: #{aeblstmft_forward.1} parent=1 // pred_check
      _
    $region195: #{aeblstmft_forward.1} parent=1 // pred_check_branch
      %5757 = sbr.rel (0) target = $region197
    $region196: #{aeblstmft_forward.1} parent=1 // pred_region
      %5758 = dma.done [#allocation11], 128
    $region197: #{aeblstmft_forward.1} parent=1 // pred_fallthru
      _
    // Predicated region
    $region198: #{aeblstmft_forward.1} parent=1 // pred_check
      _
    $region199: #{aeblstmft_forward.1} parent=1 // pred_check_branch
      %5760 = sbr.rel (0) target = $region201
    $region200: #{aeblstmft_forward.1} parent=1 // pred_region
      %5761 = dma.done [#allocation28], 128
    $region201: #{aeblstmft_forward.1} parent=1 // pred_fallthru
      _
    // Predicated region
    $region202: #{aeblstmft_forward.1} parent=1 // pred_check
      _
    $region203: #{aeblstmft_forward.1} parent=1 // pred_check_branch
      %5763 = sbr.rel (0) target = $region205
    $region204: #{aeblstmft_forward.1} parent=1 // pred_region
      _
    $region205: #{aeblstmft_forward.1} parent=1 // pred_fallthru
      _
    %5764 = vsyncpa [#allocation10], 1
    %5765 = vsyncpa [#allocation13], 1
    %5766 = vsyncpa [#allocation16], 1
    %5767 = vsyncpa [#allocation19], 1
    %5768 = vsyncpa [#allocation22], 1
    %5769 = vsyncpa [#allocation25], 1
    %5770 = vsyncpa [#allocation11], 1
    %5771 = vsyncpa [#allocation28], 1
  %5772 = vsyncmov [#allocation8]
  %s5773 = vpop.sfrf %5772
  %p5774 = scmp.eq.s32.totalorder %s5773, 0
  %p5775 = pneg %p5774
  %5777 = shalt.err (%p5775)
  %s5778 = scalar_lea.sflag [#allocation8], 1
  %5779 = vsyncmov %s5778
  %s5780 = vpop.sfrf %5779
  %p5781 = scmp.eq.s32.totalorder %s5780, 0
  %p5782 = pneg %p5781
  %5784 = shalt.err (%p5782)
  %s5785 = scalar_lea.sflag [#allocation8], 2
  %5786 = vsyncmov %s5785
  %s5787 = vpop.sfrf %5786
  %p5788 = scmp.eq.s32.totalorder %s5787, 0
  %p5789 = pneg %p5788
  %5791 = shalt.err (%p5789)
  %s5792 = scalar_lea.sflag [#allocation8], 3
  %5793 = vsyncmov %s5792
  %s5794 = vpop.sfrf %5793
  %p5795 = scmp.eq.s32.totalorder %s5794, 0
  %p5796 = pneg %p5795
  %5798 = shalt.err (%p5796)

</llo_original>
